<compile_context>
chip_gen: v5e
topology: v5e:2x2
jax: 0.10.0
libtpu: 0.0.40
codegen_flags: <defaults>
</compile_context>

<pallas_src>
import functools

import jax
import jax.numpy as jnp
from jax.experimental import pallas as pl
from jax.experimental.pallas import tpu as pltpu

# Safe on every generation (v7x physical VMEM is 64 MiB / TC).
_VMEM_LIMIT_BYTES = 48 * 1024 * 1024


def _cout_tile(cout):
    """Largest MXU-friendly divisor of Cout (256/128), else the full extent."""
    for t in (256, 128):
        if cout % t == 0:
            return t
    return cout


def _row_tile(rows, cap=1024):
    """Largest divisor of `rows` that is <= cap and a multiple of 8."""
    if rows <= cap:
        return rows
    for d in range(cap, 7, -1):
        if rows % d == 0 and d % 8 == 0:
            return d
    return rows


# ---------------------------------------------------------------------------
# Fused conv kernel:
#   [channel-concat | affine+ReLU prologue] -> bf16 halo scratch (filled once
#   per batch element) -> 9 accumulating K=Cin MXU dots -> +bias ->
#   [bias-free sum / sum-of-squares epilogue]
# ---------------------------------------------------------------------------
def _fused_conv3x3_kernel(*refs, two_inputs, apply_prologue):
    idx = 0
    if two_inputs:
        xa_ref, xb_ref = refs[0], refs[1]
        idx = 2
    else:
        x_ref = refs[0]
        idx = 1
    if apply_prologue:
        scale_ref, bias_ref = refs[idx], refs[idx + 1]
        idx += 2
    w_ref, b_ref, y_ref, stat_ref, xpad_ref = refs[idx:idx + 5]

    H, W = y_ref.shape[1], y_ref.shape[2]
    tc = y_ref.shape[3]
    Cin = xpad_ref.shape[2]

    co = pl.program_id(1)

    # Fill the halo scratch once per batch element; every Cout tile reuses it.
    @pl.when(co == 0)
    def _fill_halo():
        # Zero only the two border rows (major-dim, full-width stores).  The
        # interior rows below are written with their W halo columns included,
        # so no other border zeroing is needed.
        zrow = jnp.zeros((W + 2, Cin), jnp.bfloat16)
        xpad_ref[0, :, :] = zrow
        xpad_ref[H + 1, :, :] = zrow

        if two_inputs:
            # Fused channel concat (cat([x2, x1], C)) done in registers.
            x = jnp.concatenate([xa_ref[0], xb_ref[0]], axis=-1)
        else:
            x = x_ref[0]

        if apply_prologue:
            # Previous conv's folded BatchNorm affine + ReLU (f32 math).
            xf = x.astype(jnp.float32)
            xf = jnp.maximum(xf * scale_ref[...] + bias_ref[...], 0.0)
            x = xf.astype(jnp.bfloat16)
        else:
            x = x.astype(jnp.bfloat16)

        # Pre-pad along W in registers so the store offset is only in the
        # major (H) dim -> no sublane-shifted stores.
        zcol = jnp.zeros((H, 1, Cin), jnp.bfloat16)
        xpad_ref[1:H + 1, :, :] = jnp.concatenate([zcol, x, zcol], axis=1)

    # 9 accumulating K=Cin bf16 MXU dots into an f32 accumulator (no
    # monolithic (H*W, 9*Cin) f32 im2col materialization).
    acc = jnp.zeros((H * W, tc), jnp.float32)
    for dy in range(3):
        for dx in range(3):
            k = dy * 3 + dx
            patch = xpad_ref[dy:dy + H, dx:dx + W, :].reshape(H * W, Cin)
            acc = acc + jnp.dot(patch, w_ref[k * Cin:(k + 1) * Cin, :],
                                preferred_element_type=jnp.float32)

    # BatchNorm batch-stat partials on the bias-free conv output (less f32
    # cancellation in E[x^2]-E[x]^2); the conv bias is re-added analytically
    # in finalize_batchnorm.
    s1 = jnp.sum(acc, axis=0, keepdims=True)            # (1, tc)
    s2 = jnp.sum(acc * acc, axis=0, keepdims=True)      # (1, tc)
    stat_ref[0] = jnp.concatenate([s1, s2], axis=0)     # (2, tc)

    acc = acc + b_ref[...]                               # (1, tc) broadcast
    y_ref[0] = acc.reshape(H, W, tc).astype(y_ref.dtype)


def fused_conv3x3(inputs_nhwc, w_packed, b,
                  prologue_scale=None, prologue_bias=None):
    """inputs_nhwc: list of 1 or 2 NHWC bf16 tensors (channel-concatenated
    in-kernel); w_packed: (9*Cin, Cout) bf16; b: (Cout,) f32.

    Returns (y, stats): y = conv + bias (pre-BatchNorm, bf16); stats =
    per-batch-element [sum, sum_sq] of the bias-free conv output over H*W,
    shape (N, 2, Cout) f32.
    """
    two_inputs = len(inputs_nhwc) == 2
    N, H, W = inputs_nhwc[0].shape[:3]
    Cin = sum(x.shape[-1] for x in inputs_nhwc)
    Cout = w_packed.shape[-1]
    tc = _cout_tile(Cout)
    apply_prologue = prologue_scale is not None

    in_arrays = list(inputs_nhwc)
    in_specs = [
        pl.BlockSpec((1, H, W, x.shape[-1]), lambda n, co: (n, 0, 0, 0))
        for x in inputs_nhwc
    ]
    if apply_prologue:
        in_arrays += [
            prologue_scale.reshape(1, 1, Cin).astype(jnp.float32),
            prologue_bias.reshape(1, 1, Cin).astype(jnp.float32),
        ]
        in_specs += [
            pl.BlockSpec((1, 1, Cin), lambda n, co: (0, 0, 0)),
            pl.BlockSpec((1, 1, Cin), lambda n, co: (0, 0, 0)),
        ]
    in_arrays += [w_packed, b.reshape(1, Cout).astype(jnp.float32)]
    in_specs += [
        pl.BlockSpec((9 * Cin, tc), lambda n, co: (0, co)),
        pl.BlockSpec((1, tc), lambda n, co: (0, co)),
    ]

    # TODO(synk): add H-band spatial tiling (overlapping halo blocks) so very
    # large feature maps fit v7x's 64 MiB VMEM and the spatial axis can also
    # be marked "parallel" for megacore sharding when N is small/odd.
    y, stats = pl.pallas_call(
        functools.partial(_fused_conv3x3_kernel,
                          two_inputs=two_inputs,
                          apply_prologue=apply_prologue),
        out_shape=(
            jax.ShapeDtypeStruct((N, H, W, Cout), jnp.bfloat16),
            jax.ShapeDtypeStruct((N, 2, Cout), jnp.float32),
        ),
        grid=(N, Cout // tc),
        in_specs=in_specs,
        out_specs=(
            pl.BlockSpec((1, H, W, tc), lambda n, co: (n, 0, 0, co)),
            pl.BlockSpec((1, 2, tc), lambda n, co: (n, 0, co)),
        ),
        scratch_shapes=[pltpu.VMEM((H + 2, W + 2, Cin), jnp.bfloat16)],
        compiler_params=pltpu.CompilerParams(
            # Cout axis is "arbitrary" on purpose: the halo scratch is filled
            # at co == 0 and reused by later Cout tiles of the same n.
            dimension_semantics=("parallel", "arbitrary"),
            vmem_limit_bytes=_VMEM_LIMIT_BYTES,
        ),
    )(*in_arrays)
    return y, stats


# ---------------------------------------------------------------------------
# Final BatchNorm-affine + ReLU: row-tiled, lane-dense elementwise kernel
# ---------------------------------------------------------------------------
def _affine_relu_kernel(x_ref, s_ref, b_ref, o_ref):
    o_ref[...] = jnp.maximum(
        x_ref[...].astype(jnp.float32) * s_ref[...] + b_ref[...], 0.0
    ).astype(o_ref.dtype)


def affine_relu_nhwc(x_nhwc, scale, bias):
    """Per-channel affine (folded BatchNorm) + ReLU on a lane-dense view."""
    N, H, W, C = x_nhwc.shape
    total = N * H * W * C
    if total % 128 == 0 and 128 % C == 0:
        lanes = 128                      # full 128-lane vregs, unmasked stores
    else:
        lanes = C                        # fallback: channels-last layout
    rep = lanes // C
    rows = total // lanes
    tr = _row_tile(rows)

    xf = x_nhwc.reshape(rows, lanes)
    sf = jnp.tile(scale.astype(jnp.float32), rep).reshape(1, lanes)
    bf = jnp.tile(bias.astype(jnp.float32), rep).reshape(1, lanes)

    # TODO(synk): fold the trailing NHWC->NCHW transpose into this kernel's
    # out_spec (and optionally emit bf16) to cut epilogue HBM writeback.
    out = pl.pallas_call(
        _affine_relu_kernel,
        out_shape=jax.ShapeDtypeStruct((rows, lanes), jnp.float32),
        grid=(rows // tr,),
        in_specs=[
            pl.BlockSpec((tr, lanes), lambda i: (i, 0)),
            pl.BlockSpec((1, lanes), lambda i: (0, 0)),
            pl.BlockSpec((1, lanes), lambda i: (0, 0)),
        ],
        out_specs=pl.BlockSpec((tr, lanes), lambda i: (i, 0)),
        compiler_params=pltpu.CompilerParams(
            dimension_semantics=("parallel",),
        ),
    )(xf, sf, bf)
    return out.reshape(N, H, W, C)


# ---------------------------------------------------------------------------
# BatchNorm finalization (tiny per-channel math, plain JAX)
# ---------------------------------------------------------------------------
def finalize_batchnorm(stats, conv_bias, gamma, beta, count, eps=1e-5):
    """stats hold sums of the *bias-free* conv output; y = conv + conv_bias."""
    s1 = jnp.sum(stats[:, 0, :], axis=0)
    s2 = jnp.sum(stats[:, 1, :], axis=0)
    mean_c = s1 / count                                   # E[conv]
    var = jnp.maximum(s2 / count - mean_c * mean_c, 0.0)  # var(y) = var(conv)
    mean = mean_c + conv_bias                             # E[y]
    scale = gamma / jnp.sqrt(var + eps)
    bias = beta - mean * scale
    return scale, bias


# ---------------------------------------------------------------------------
# Glue: bilinear upsample (align_corners=True), pad (plain JAX)
# ---------------------------------------------------------------------------
def _bilinear_matrix(n_in, n_out):
    i = jnp.arange(n_out, dtype=jnp.float32)
    s = i * (n_in - 1) / (n_out - 1)
    lo = jnp.floor(s).astype(jnp.int32)
    hi = jnp.minimum(lo + 1, n_in - 1)
    frac = s - lo.astype(jnp.float32)
    A = jnp.zeros((n_out, n_in), jnp.float32)
    A = A.at[jnp.arange(n_out), lo].add(1.0 - frac)
    A = A.at[jnp.arange(n_out), hi].add(frac)
    return A


def bilinear_upsample_x2_nhwc(x):
    """nn.Upsample(scale_factor=2, mode='bilinear', align_corners=True)."""
    N, H, W, C = x.shape
    Ay = _bilinear_matrix(H, 2 * H)
    Ax = _bilinear_matrix(W, 2 * W)
    # TODO(synk): fold the separable upsample + zero-pad of x1 into conv1's
    # prologue (each output row needs at most 2 input rows) to cut HBM trips.
    y = jnp.einsum("oh,nhwc->nowc", Ay, x)
    y = jnp.einsum("pw,nhwc->nhpc", Ax, y)
    return y


@jax.jit
def up_forward(x1_nchw, x2_nchw, params):
    """PyTorch `up.forward(x1, x2)` with bilinear=True. Inputs/outputs NCHW."""
    x1 = jnp.transpose(x1_nchw, (0, 2, 3, 1)).astype(jnp.float32)   # NHWC
    x2 = jnp.transpose(x2_nchw, (0, 2, 3, 1)).astype(jnp.float32)   # NHWC

    x1 = bilinear_upsample_x2_nhwc(x1)
    diffY = x2.shape[1] - x1.shape[1]
    diffX = x2.shape[2] - x1.shape[2]
    x1 = jnp.pad(x1, ((0, 0),
                      (diffY // 2, diffY - diffY // 2),
                      (diffX // 2, diffX - diffX // 2),
                      (0, 0)))

    x2 = x2.astype(jnp.bfloat16)
    x1 = x1.astype(jnp.bfloat16)
    N, H, W, C2 = x2.shape
    C1 = x1.shape[-1]
    Cin = C2 + C1
    count = N * H * W

    Cout = params["w1"].shape[-1]
    w1p = params["w1"].reshape(9 * Cin, Cout).astype(jnp.bfloat16)
    w2p = params["w2"].reshape(9 * Cout, Cout).astype(jnp.bfloat16)

    # conv1 (+bias); channel concat cat([x2, x1], C) fused into the kernel.
    y1, st1 = fused_conv3x3([x2, x1], w1p, params["b1"])
    scale1, bias1 = finalize_batchnorm(st1, params["b1"],
                                       params["g1"], params["be1"], count)

    # BN1 + ReLU fused into conv2's prologue; conv2 (+bias) and its stats.
    y2, st2 = fused_conv3x3([y1], w2p, params["b2"],
                            prologue_scale=scale1, prologue_bias=bias1)
    scale2, bias2 = finalize_batchnorm(st2, params["b2"],
                                       params["g2"], params["be2"], count)

    # Final BN2 + ReLU, row-tiled lane-dense kernel.
    out = affine_relu_nhwc(y2, scale2, bias2)
    return jnp.transpose(out, (0, 3, 1, 2))                          # NCHW


# ---------------------------------------------------------------------------
# Deterministic parameter init (shapes from double_conv(in_ch, out_ch))
# ---------------------------------------------------------------------------
def init_params(key, in_ch, out_ch):
    k1, k2, k3, k4 = jax.random.split(key, 4)
    # Weights stored HWIO (3, 3, Cin, Cout) to match the NHWC kernel layout.
    return {
        "w1": 0.1 * jax.random.normal(k1, (3, 3, in_ch, out_ch), jnp.float32),
        "b1": 0.05 * jax.random.normal(k2, (out_ch,), jnp.float32),
        "g1": jnp.ones((out_ch,), jnp.float32),     # BatchNorm2d default init
        "be1": jnp.zeros((out_ch,), jnp.float32),
        "w2": 0.1 * jax.random.normal(k3, (3, 3, out_ch, out_ch), jnp.float32),
        "b2": 0.05 * jax.random.normal(k4, (out_ch,), jnp.float32),
        "g2": jnp.ones((out_ch,), jnp.float32),
        "be2": jnp.zeros((out_ch,), jnp.float32),
    }


# ---------------------------------------------------------------------------
# Pure-JAX f32 reference (loose correctness check against the bf16 path)
# ---------------------------------------------------------------------------
def _reference_up(x1_nchw, x2_nchw, params):
    x1 = jnp.transpose(x1_nchw, (0, 2, 3, 1))
    x2 = jnp.transpose(x2_nchw, (0, 2, 3, 1))
    x1 = bilinear_upsample_x2_nhwc(x1)
    diffY = x2.shape[1] - x1.shape[1]
    diffX = x2.shape[2] - x1.shape[2]
    x1 = jnp.pad(x1, ((0, 0),
                      (diffY // 2, diffY - diffY // 2),
                      (diffX // 2, diffX - diffX // 2),
                      (0, 0)))
    x = jnp.concatenate([x2, x1], axis=-1)

    def conv_bn_relu(x, w, b, g, be):
        y = jax.lax.conv_general_dilated(
            x, w, window_strides=(1, 1), padding=((1, 1), (1, 1)),
            dimension_numbers=("NHWC", "HWIO", "NHWC"),
            precision=jax.lax.Precision.HIGHEST) + b
        mean = jnp.mean(y, axis=(0, 1, 2))
        var = jnp.var(y, axis=(0, 1, 2))
        yn = (y - mean) / jnp.sqrt(var + 1e-5)
        return jnp.maximum(yn * g + be, 0.0)

    x = conv_bn_relu(x, params["w1"], params["b1"], params["g1"], params["be1"])
    x = conv_bn_relu(x, params["w2"], params["b2"], params["g2"], params["be2"])
    return jnp.transpose(x, (0, 3, 1, 2))


# ---------------------------------------------------------------------------
if __name__ == "__main__":
    key = jax.random.PRNGKey(0)
    kx1, kx2, kp = jax.random.split(key, 3)

    in_ch, out_ch = 8, 8               # concat channels = 4 + 4 = in_ch
    N = 2
    # x1: low-res feature map (NCHW), x2: skip connection (NCHW).
    x1 = jax.random.normal(kx1, (N, in_ch // 2, 7, 7), jnp.float32)
    x2 = jax.random.normal(kx2, (N, in_ch // 2, 16, 16), jnp.float32)

    params = init_params(kp, in_ch, out_ch)

    out = up_forward(x1, x2, params)
    out = jax.block_until_ready(out)

    assert out.shape == (N, out_ch, 16, 16), out.shape
    assert bool(jnp.all(jnp.isfinite(out)))
    assert bool(jnp.all(out >= 0.0))   # ends with ReLU

    # Loose tolerance: Pallas path carries activations/weights in bf16.
    ref = _reference_up(x1, x2, params)
    max_err = float(jnp.max(jnp.abs(out - ref)))
    assert max_err < 0.2, f"max abs error vs f32 reference: {max_err}"

    print("KERNEL_OK")
</pallas_src>

<mosaic_0001>
module attributes {stable_mosaic.version = 11 : i64} {
  func.func @_fused_conv3x3_kernel(%arg0: i32, %arg1: i32, %arg2: memref<1x16x16x4xbf16, #tpu.memory_space<vmem>>, %arg3: memref<1x16x16x4xbf16, #tpu.memory_space<vmem>>, %arg4: memref<72x8xbf16, #tpu.memory_space<vmem>>, %arg5: memref<1x8xf32, #tpu.memory_space<vmem>>, %arg6: memref<1x16x16x8xbf16, #tpu.memory_space<vmem>>, %arg7: memref<1x2x8xf32, #tpu.memory_space<vmem>>, %arg8: memref<18x18x8xbf16, #tpu.memory_space<vmem>>) attributes {dimension_semantics = [#tpu.dimension_semantics<parallel>, #tpu.dimension_semantics<arbitrary>], iteration_bounds = array<i64: 2, 1>, scalar_prefetch = 0 : i64, scratch_operands = 1 : i64, tpu.core_type = #tpu.core_type<tc>, window_params = [{transform_indices = @transform_0, window_bounds = array<i64: 1, 16, 16, 4>}, {transform_indices = @transform_1, window_bounds = array<i64: 1, 16, 16, 4>}, {transform_indices = @transform_2, window_bounds = array<i64: 72, 8>}, {transform_indices = @transform_3, window_bounds = array<i64: 1, 8>}, {transform_indices = @transform_4, window_bounds = array<i64: 1, 16, 16, 8>}, {transform_indices = @transform_5, window_bounds = array<i64: 1, 2, 8>}]} {
    %c0_i32 = arith.constant 0 : i32
    %0 = arith.cmpi eq, %arg1, %c0_i32 : i32
    %1 = arith.extui %0 : i1 to i32
    %c0_i32_0 = arith.constant 0 : i32
    %2 = arith.cmpi ne, %1, %c0_i32_0 : i32
    scf.if %2 {
      %cst_55 = arith.constant 0.000000e+00 : bf16
      %66 = vector.broadcast %cst_55 : bf16 to vector<18x8xbf16>
      %c0_56 = arith.constant 0 : index
      %c0_57 = arith.constant 0 : index
      %c0_58 = arith.constant 0 : index
      %67 = vector.load %arg8[%c0_56, %c0_57, %c0_58] : memref<18x18x8xbf16, #tpu.memory_space<vmem>>, vector<1x18x8xbf16>
      %68 = vector.shape_cast %67 : vector<1x18x8xbf16> to vector<18x8xbf16>
      %69 = vector.shape_cast %66 : vector<18x8xbf16> to vector<1x18x8xbf16>
      tpu.vector_store %arg8[%c0_56, %c0_57, %c0_58], %69 {strides = array<i32>} : memref<18x18x8xbf16, #tpu.memory_space<vmem>>, vector<1x18x8xbf16>,
      %c17 = arith.constant 17 : index
      %c0_59 = arith.constant 0 : index
      %c0_60 = arith.constant 0 : index
      %70 = vector.load %arg8[%c17, %c0_59, %c0_60] : memref<18x18x8xbf16, #tpu.memory_space<vmem>>, vector<1x18x8xbf16>
      %71 = vector.shape_cast %70 : vector<1x18x8xbf16> to vector<18x8xbf16>
      %72 = vector.shape_cast %66 : vector<18x8xbf16> to vector<1x18x8xbf16>
      tpu.vector_store %arg8[%c17, %c0_59, %c0_60], %72 {strides = array<i32>} : memref<18x18x8xbf16, #tpu.memory_space<vmem>>, vector<1x18x8xbf16>,
      %c0_61 = arith.constant 0 : index
      %c0_62 = arith.constant 0 : index
      %c0_63 = arith.constant 0 : index
      %c0_64 = arith.constant 0 : index
      %73 = vector.load %arg2[%c0_61, %c0_62, %c0_63, %c0_64] : memref<1x16x16x4xbf16, #tpu.memory_space<vmem>>, vector<1x16x16x4xbf16>
      %74 = vector.shape_cast %73 : vector<1x16x16x4xbf16> to vector<16x16x4xbf16>
      %c0_65 = arith.constant 0 : index
      %c0_66 = arith.constant 0 : index
      %c0_67 = arith.constant 0 : index
      %c0_68 = arith.constant 0 : index
      %75 = vector.load %arg3[%c0_65, %c0_66, %c0_67, %c0_68] : memref<1x16x16x4xbf16, #tpu.memory_space<vmem>>, vector<1x16x16x4xbf16>
      %76 = vector.shape_cast %75 : vector<1x16x16x4xbf16> to vector<16x16x4xbf16>
      %77 = tpu.concatenate %74, %76 in 2 : vector<16x16x4xbf16>, vector<16x16x4xbf16> -> vector<16x16x8xbf16>
      %cst_69 = arith.constant 0.000000e+00 : bf16
      %78 = vector.broadcast %cst_69 : bf16 to vector<16x1x8xbf16>
      %79 = tpu.concatenate %78, %77, %78 in 1 : vector<16x1x8xbf16>, vector<16x16x8xbf16>, vector<16x1x8xbf16> -> vector<16x18x8xbf16>
      %c1_70 = arith.constant 1 : index
      %c0_71 = arith.constant 0 : index
      %c0_72 = arith.constant 0 : index
      %80 = vector.load %arg8[%c1_70, %c0_71, %c0_72] : memref<18x18x8xbf16, #tpu.memory_space<vmem>>, vector<16x18x8xbf16>
      tpu.vector_store %arg8[%c1_70, %c0_71, %c0_72], %79 {strides = array<i32>} : memref<18x18x8xbf16, #tpu.memory_space<vmem>>, vector<16x18x8xbf16>,
    } else {
    }
    %cst = arith.constant 0.000000e+00 : f32
    %3 = vector.broadcast %cst : f32 to vector<256x8xf32>
    %c0 = arith.constant 0 : index
    %c0_1 = arith.constant 0 : index
    %c0_2 = arith.constant 0 : index
    %4 = vector.load %arg8[%c0, %c0_1, %c0_2] : memref<18x18x8xbf16, #tpu.memory_space<vmem>>, vector<16x16x8xbf16>
    %5 = vector.shape_cast %4 : vector<16x16x8xbf16> to vector<256x8xbf16>
    %c0_3 = arith.constant 0 : index
    %c0_4 = arith.constant 0 : index
    %6 = vector.load %arg4[%c0_3, %c0_4] : memref<72x8xbf16, #tpu.memory_space<vmem>>, vector<8x8xbf16>
    %cst_5 = arith.constant dense<0.000000e+00> : vector<256x8xf32>
    %7 = tpu.matmul %5, %6, %cst_5 {dimension_numbers = #tpu.dot_dimension_numbers<[1], [0], [0], [1], [0, 0, 1, 1], [], []>} : vector<256x8xbf16>, vector<8x8xbf16>, vector<256x8xf32> -> vector<256x8xf32>
    %8 = arith.addf %3, %7 : vector<256x8xf32>
    %c0_6 = arith.constant 0 : index
    %c1 = arith.constant 1 : index
    %c0_7 = arith.constant 0 : index
    %9 = vector.load %arg8[%c0_6, %c1, %c0_7] : memref<18x18x8xbf16, #tpu.memory_space<vmem>>, vector<16x16x8xbf16>
    %10 = vector.shape_cast %9 : vector<16x16x8xbf16> to vector<256x8xbf16>
    %c8 = arith.constant 8 : index
    %c0_8 = arith.constant 0 : index
    %11 = vector.load %arg4[%c8, %c0_8] : memref<72x8xbf16, #tpu.memory_space<vmem>>, vector<8x8xbf16>
    %cst_9 = arith.constant dense<0.000000e+00> : vector<256x8xf32>
    %12 = tpu.matmul %10, %11, %cst_9 {dimension_numbers = #tpu.dot_dimension_numbers<[1], [0], [0], [1], [0, 0, 1, 1], [], []>} : vector<256x8xbf16>, vector<8x8xbf16>, vector<256x8xf32> -> vector<256x8xf32>
    %13 = arith.addf %8, %12 : vector<256x8xf32>
    %c0_10 = arith.constant 0 : index
    %c2 = arith.constant 2 : index
    %c0_11 = arith.constant 0 : index
    %14 = vector.load %arg8[%c0_10, %c2, %c0_11] : memref<18x18x8xbf16, #tpu.memory_space<vmem>>, vector<16x16x8xbf16>
    %15 = vector.shape_cast %14 : vector<16x16x8xbf16> to vector<256x8xbf16>
    %c16 = arith.constant 16 : index
    %c0_12 = arith.constant 0 : index
    %16 = vector.load %arg4[%c16, %c0_12] : memref<72x8xbf16, #tpu.memory_space<vmem>>, vector<8x8xbf16>
    %cst_13 = arith.constant dense<0.000000e+00> : vector<256x8xf32>
    %17 = tpu.matmul %15, %16, %cst_13 {dimension_numbers = #tpu.dot_dimension_numbers<[1], [0], [0], [1], [0, 0, 1, 1], [], []>} : vector<256x8xbf16>, vector<8x8xbf16>, vector<256x8xf32> -> vector<256x8xf32>
    %18 = arith.addf %13, %17 : vector<256x8xf32>
    %c1_14 = arith.constant 1 : index
    %c0_15 = arith.constant 0 : index
    %c0_16 = arith.constant 0 : index
    %19 = vector.load %arg8[%c1_14, %c0_15, %c0_16] : memref<18x18x8xbf16, #tpu.memory_space<vmem>>, vector<16x16x8xbf16>
    %20 = vector.shape_cast %19 : vector<16x16x8xbf16> to vector<256x8xbf16>
    %c24 = arith.constant 24 : index
    %c0_17 = arith.constant 0 : index
    %21 = vector.load %arg4[%c24, %c0_17] : memref<72x8xbf16, #tpu.memory_space<vmem>>, vector<8x8xbf16>
    %cst_18 = arith.constant dense<0.000000e+00> : vector<256x8xf32>
    %22 = tpu.matmul %20, %21, %cst_18 {dimension_numbers = #tpu.dot_dimension_numbers<[1], [0], [0], [1], [0, 0, 1, 1], [], []>} : vector<256x8xbf16>, vector<8x8xbf16>, vector<256x8xf32> -> vector<256x8xf32>
    %23 = arith.addf %18, %22 : vector<256x8xf32>
    %c1_19 = arith.constant 1 : index
    %c1_20 = arith.constant 1 : index
    %c0_21 = arith.constant 0 : index
    %24 = vector.load %arg8[%c1_19, %c1_20, %c0_21] : memref<18x18x8xbf16, #tpu.memory_space<vmem>>, vector<16x16x8xbf16>
    %25 = vector.shape_cast %24 : vector<16x16x8xbf16> to vector<256x8xbf16>
    %c32 = arith.constant 32 : index
    %c0_22 = arith.constant 0 : index
    %26 = vector.load %arg4[%c32, %c0_22] : memref<72x8xbf16, #tpu.memory_space<vmem>>, vector<8x8xbf16>
    %cst_23 = arith.constant dense<0.000000e+00> : vector<256x8xf32>
    %27 = tpu.matmul %25, %26, %cst_23 {dimension_numbers = #tpu.dot_dimension_numbers<[1], [0], [0], [1], [0, 0, 1, 1], [], []>} : vector<256x8xbf16>, vector<8x8xbf16>, vector<256x8xf32> -> vector<256x8xf32>
    %28 = arith.addf %23, %27 : vector<256x8xf32>
    %c1_24 = arith.constant 1 : index
    %c2_25 = arith.constant 2 : index
    %c0_26 = arith.constant 0 : index
    %29 = vector.load %arg8[%c1_24, %c2_25, %c0_26] : memref<18x18x8xbf16, #tpu.memory_space<vmem>>, vector<16x16x8xbf16>
    %30 = vector.shape_cast %29 : vector<16x16x8xbf16> to vector<256x8xbf16>
    %c40 = arith.constant 40 : index
    %c0_27 = arith.constant 0 : index
    %31 = vector.load %arg4[%c40, %c0_27] : memref<72x8xbf16, #tpu.memory_space<vmem>>, vector<8x8xbf16>
    %cst_28 = arith.constant dense<0.000000e+00> : vector<256x8xf32>
    %32 = tpu.matmul %30, %31, %cst_28 {dimension_numbers = #tpu.dot_dimension_numbers<[1], [0], [0], [1], [0, 0, 1, 1], [], []>} : vector<256x8xbf16>, vector<8x8xbf16>, vector<256x8xf32> -> vector<256x8xf32>
    %33 = arith.addf %28, %32 : vector<256x8xf32>
    %c2_29 = arith.constant 2 : index
    %c0_30 = arith.constant 0 : index
    %c0_31 = arith.constant 0 : index
    %34 = vector.load %arg8[%c2_29, %c0_30, %c0_31] : memref<18x18x8xbf16, #tpu.memory_space<vmem>>, vector<16x16x8xbf16>
    %35 = vector.shape_cast %34 : vector<16x16x8xbf16> to vector<256x8xbf16>
    %c48 = arith.constant 48 : index
    %c0_32 = arith.constant 0 : index
    %36 = vector.load %arg4[%c48, %c0_32] : memref<72x8xbf16, #tpu.memory_space<vmem>>, vector<8x8xbf16>
    %cst_33 = arith.constant dense<0.000000e+00> : vector<256x8xf32>
    %37 = tpu.matmul %35, %36, %cst_33 {dimension_numbers = #tpu.dot_dimension_numbers<[1], [0], [0], [1], [0, 0, 1, 1], [], []>} : vector<256x8xbf16>, vector<8x8xbf16>, vector<256x8xf32> -> vector<256x8xf32>
    %38 = arith.addf %33, %37 : vector<256x8xf32>
    %c2_34 = arith.constant 2 : index
    %c1_35 = arith.constant 1 : index
    %c0_36 = arith.constant 0 : index
    %39 = vector.load %arg8[%c2_34, %c1_35, %c0_36] : memref<18x18x8xbf16, #tpu.memory_space<vmem>>, vector<16x16x8xbf16>
    %40 = vector.shape_cast %39 : vector<16x16x8xbf16> to vector<256x8xbf16>
    %c56 = arith.constant 56 : index
    %c0_37 = arith.constant 0 : index
    %41 = vector.load %arg4[%c56, %c0_37] : memref<72x8xbf16, #tpu.memory_space<vmem>>, vector<8x8xbf16>
    %cst_38 = arith.constant dense<0.000000e+00> : vector<256x8xf32>
    %42 = tpu.matmul %40, %41, %cst_38 {dimension_numbers = #tpu.dot_dimension_numbers<[1], [0], [0], [1], [0, 0, 1, 1], [], []>} : vector<256x8xbf16>, vector<8x8xbf16>, vector<256x8xf32> -> vector<256x8xf32>
    %43 = arith.addf %38, %42 : vector<256x8xf32>
    %c2_39 = arith.constant 2 : index
    %c2_40 = arith.constant 2 : index
    %c0_41 = arith.constant 0 : index
    %44 = vector.load %arg8[%c2_39, %c2_40, %c0_41] : memref<18x18x8xbf16, #tpu.memory_space<vmem>>, vector<16x16x8xbf16>
    %45 = vector.shape_cast %44 : vector<16x16x8xbf16> to vector<256x8xbf16>
    %c64 = arith.constant 64 : index
    %c0_42 = arith.constant 0 : index
    %46 = vector.load %arg4[%c64, %c0_42] : memref<72x8xbf16, #tpu.memory_space<vmem>>, vector<8x8xbf16>
    %cst_43 = arith.constant dense<0.000000e+00> : vector<256x8xf32>
    %47 = tpu.matmul %45, %46, %cst_43 {dimension_numbers = #tpu.dot_dimension_numbers<[1], [0], [0], [1], [0, 0, 1, 1], [], []>} : vector<256x8xbf16>, vector<8x8xbf16>, vector<256x8xf32> -> vector<256x8xf32>
    %48 = arith.addf %43, %47 : vector<256x8xf32>
    %cst_44 = arith.constant dense<0.000000e+00> : vector<8xf32>
    %49 = vector.multi_reduction <add>, %48, %cst_44 [0] : vector<256x8xf32> to vector<8xf32>
    %50 = vector.shape_cast %49 : vector<8xf32> to vector<1x8xf32>
    %51 = arith.mulf %48, %48 : vector<256x8xf32>
    %cst_45 = arith.constant dense<0.000000e+00> : vector<8xf32>
    %52 = vector.multi_reduction <add>, %51, %cst_45 [0] : vector<256x8xf32> to vector<8xf32>
    %53 = vector.shape_cast %52 : vector<8xf32> to vector<1x8xf32>
    %54 = tpu.concatenate %50, %53 in 0 : vector<1x8xf32>, vector<1x8xf32> -> vector<2x8xf32>
    %c0_46 = arith.constant 0 : index
    %c0_47 = arith.constant 0 : index
    %c0_48 = arith.constant 0 : index
    %55 = vector.load %arg7[%c0_46, %c0_47, %c0_48] : memref<1x2x8xf32, #tpu.memory_space<vmem>>, vector<1x2x8xf32>
    %56 = vector.shape_cast %55 : vector<1x2x8xf32> to vector<2x8xf32>
    %57 = vector.shape_cast %54 : vector<2x8xf32> to vector<1x2x8xf32>
    tpu.vector_store %arg7[%c0_46, %c0_47, %c0_48], %57 {strides = array<i32>} : memref<1x2x8xf32, #tpu.memory_space<vmem>>, vector<1x2x8xf32>,
    %c0_49 = arith.constant 0 : index
    %c0_50 = arith.constant 0 : index
    %58 = vector.load %arg5[%c0_49, %c0_50] : memref<1x8xf32, #tpu.memory_space<vmem>>, vector<1x8xf32>
    %59 = vector.broadcast %58 : vector<1x8xf32> to vector<256x8xf32>
    %60 = arith.addf %48, %59 : vector<256x8xf32>
    %61 = vector.shape_cast %60 : vector<256x8xf32> to vector<16x16x8xf32>
    %62 = arith.truncf %61 : vector<16x16x8xf32> to vector<16x16x8xbf16>
    %c0_51 = arith.constant 0 : index
    %c0_52 = arith.constant 0 : index
    %c0_53 = arith.constant 0 : index
    %c0_54 = arith.constant 0 : index
    %63 = vector.load %arg6[%c0_51, %c0_52, %c0_53, %c0_54] : memref<1x16x16x8xbf16, #tpu.memory_space<vmem>>, vector<1x16x16x8xbf16>
    %64 = vector.shape_cast %63 : vector<1x16x16x8xbf16> to vector<16x16x8xbf16>
    %65 = vector.shape_cast %62 : vector<16x16x8xbf16> to vector<1x16x16x8xbf16>
    tpu.vector_store %arg6[%c0_51, %c0_52, %c0_53, %c0_54], %65 {strides = array<i32>} : memref<1x16x16x8xbf16, #tpu.memory_space<vmem>>, vector<1x16x16x8xbf16>,
    return
  }
  func.func @transform_0(%arg0: i32, %arg1: i32) -> (i32, i32, i32, i32) {
    %c0_i32 = arith.constant 0 : i32
    %c0_i32_0 = arith.constant 0 : i32
    %c0_i32_1 = arith.constant 0 : i32
    %c0_i32_2 = arith.constant 0 : i32
    return %arg0, %c0_i32, %c0_i32_0, %c0_i32_1 : i32, i32, i32, i32
  }
  func.func @transform_1(%arg0: i32, %arg1: i32) -> (i32, i32, i32, i32) {
    %c0_i32 = arith.constant 0 : i32
    %c0_i32_0 = arith.constant 0 : i32
    %c0_i32_1 = arith.constant 0 : i32
    %c0_i32_2 = arith.constant 0 : i32
    return %arg0, %c0_i32, %c0_i32_0, %c0_i32_1 : i32, i32, i32, i32
  }
  func.func @transform_2(%arg0: i32, %arg1: i32) -> (i32, i32) {
    %c0_i32 = arith.constant 0 : i32
    %c0_i32_0 = arith.constant 0 : i32
    return %c0_i32, %arg1 : i32, i32
  }
  func.func @transform_3(%arg0: i32, %arg1: i32) -> (i32, i32) {
    %c0_i32 = arith.constant 0 : i32
    %c0_i32_0 = arith.constant 0 : i32
    return %c0_i32, %arg1 : i32, i32
  }
  func.func @transform_4(%arg0: i32, %arg1: i32) -> (i32, i32, i32, i32) {
    %c0_i32 = arith.constant 0 : i32
    %c0_i32_0 = arith.constant 0 : i32
    %c0_i32_1 = arith.constant 0 : i32
    return %arg0, %c0_i32, %c0_i32_0, %arg1 : i32, i32, i32, i32
  }
  func.func @transform_5(%arg0: i32, %arg1: i32) -> (i32, i32, i32) {
    %c0_i32 = arith.constant 0 : i32
    %c0_i32_0 = arith.constant 0 : i32
    return %arg0, %c0_i32, %arg1 : i32, i32, i32
  }
}

module attributes {stable_mosaic.version = 11 : i64} {
  func.func @_fused_conv3x3_kernel(%arg0: i32, %arg1: i32, %arg2: memref<1x16x16x8xbf16, #tpu.memory_space<vmem>>, %arg3: memref<1x1x8xf32, #tpu.memory_space<vmem>>, %arg4: memref<1x1x8xf32, #tpu.memory_space<vmem>>, %arg5: memref<72x8xbf16, #tpu.memory_space<vmem>>, %arg6: memref<1x8xf32, #tpu.memory_space<vmem>>, %arg7: memref<1x16x16x8xbf16, #tpu.memory_space<vmem>>, %arg8: memref<1x2x8xf32, #tpu.memory_space<vmem>>, %arg9: memref<18x18x8xbf16, #tpu.memory_space<vmem>>) attributes {dimension_semantics = [#tpu.dimension_semantics<parallel>, #tpu.dimension_semantics<arbitrary>], iteration_bounds = array<i64: 2, 1>, scalar_prefetch = 0 : i64, scratch_operands = 1 : i64, tpu.core_type = #tpu.core_type<tc>, window_params = [{transform_indices = @transform_0, window_bounds = array<i64: 1, 16, 16, 8>}, {pipeline_mode = #tpu.pipeline_mode<synchronous>, transform_indices = @transform_1, window_bounds = array<i64: 1, 1, 8>}, {pipeline_mode = #tpu.pipeline_mode<synchronous>, transform_indices = @transform_2, window_bounds = array<i64: 1, 1, 8>}, {transform_indices = @transform_3, window_bounds = array<i64: 72, 8>}, {transform_indices = @transform_4, window_bounds = array<i64: 1, 8>}, {transform_indices = @transform_5, window_bounds = array<i64: 1, 16, 16, 8>}, {transform_indices = @transform_6, window_bounds = array<i64: 1, 2, 8>}]} {
    %c0_i32 = arith.constant 0 : i32
    %0 = arith.cmpi eq, %arg1, %c0_i32 : i32
    %1 = arith.extui %0 : i1 to i32
    %c0_i32_0 = arith.constant 0 : i32
    %2 = arith.cmpi ne, %1, %c0_i32_0 : i32
    scf.if %2 {
      %cst_55 = arith.constant 0.000000e+00 : bf16
      %66 = vector.broadcast %cst_55 : bf16 to vector<18x8xbf16>
      %c0_56 = arith.constant 0 : index
      %c0_57 = arith.constant 0 : index
      %c0_58 = arith.constant 0 : index
      %67 = vector.load %arg9[%c0_56, %c0_57, %c0_58] : memref<18x18x8xbf16, #tpu.memory_space<vmem>>, vector<1x18x8xbf16>
      %68 = vector.shape_cast %67 : vector<1x18x8xbf16> to vector<18x8xbf16>
      %69 = vector.shape_cast %66 : vector<18x8xbf16> to vector<1x18x8xbf16>
      tpu.vector_store %arg9[%c0_56, %c0_57, %c0_58], %69 {strides = array<i32>} : memref<18x18x8xbf16, #tpu.memory_space<vmem>>, vector<1x18x8xbf16>,
      %c17 = arith.constant 17 : index
      %c0_59 = arith.constant 0 : index
      %c0_60 = arith.constant 0 : index
      %70 = vector.load %arg9[%c17, %c0_59, %c0_60] : memref<18x18x8xbf16, #tpu.memory_space<vmem>>, vector<1x18x8xbf16>
      %71 = vector.shape_cast %70 : vector<1x18x8xbf16> to vector<18x8xbf16>
      %72 = vector.shape_cast %66 : vector<18x8xbf16> to vector<1x18x8xbf16>
      tpu.vector_store %arg9[%c17, %c0_59, %c0_60], %72 {strides = array<i32>} : memref<18x18x8xbf16, #tpu.memory_space<vmem>>, vector<1x18x8xbf16>,
      %c0_61 = arith.constant 0 : index
      %c0_62 = arith.constant 0 : index
      %c0_63 = arith.constant 0 : index
      %c0_64 = arith.constant 0 : index
      %73 = vector.load %arg2[%c0_61, %c0_62, %c0_63, %c0_64] : memref<1x16x16x8xbf16, #tpu.memory_space<vmem>>, vector<1x16x16x8xbf16>
      %74 = vector.shape_cast %73 : vector<1x16x16x8xbf16> to vector<16x16x8xbf16>
      %75 = arith.extf %74 : vector<16x16x8xbf16> to vector<16x16x8xf32>
      %c0_65 = arith.constant 0 : index
      %c0_66 = arith.constant 0 : index
      %c0_67 = arith.constant 0 : index
      %76 = vector.load %arg3[%c0_65, %c0_66, %c0_67] : memref<1x1x8xf32, #tpu.memory_space<vmem>>, vector<1x1x8xf32>
      %77 = vector.broadcast %76 : vector<1x1x8xf32> to vector<16x16x8xf32>
      %78 = arith.mulf %75, %77 : vector<16x16x8xf32>
      %c0_68 = arith.constant 0 : index
      %c0_69 = arith.constant 0 : index
      %c0_70 = arith.constant 0 : index
      %79 = vector.load %arg4[%c0_68, %c0_69, %c0_70] : memref<1x1x8xf32, #tpu.memory_space<vmem>>, vector<1x1x8xf32>
      %80 = vector.broadcast %79 : vector<1x1x8xf32> to vector<16x16x8xf32>
      %81 = arith.addf %78, %80 : vector<16x16x8xf32>
      %cst_71 = arith.constant 0.000000e+00 : f32
      %82 = vector.broadcast %cst_71 : f32 to vector<16x16x8xf32>
      %83 = arith.maximumf %81, %82 : vector<16x16x8xf32>
      %84 = arith.truncf %83 : vector<16x16x8xf32> to vector<16x16x8xbf16>
      %cst_72 = arith.constant 0.000000e+00 : bf16
      %85 = vector.broadcast %cst_72 : bf16 to vector<16x1x8xbf16>
      %86 = tpu.concatenate %85, %84, %85 in 1 : vector<16x1x8xbf16>, vector<16x16x8xbf16>, vector<16x1x8xbf16> -> vector<16x18x8xbf16>
      %c1_73 = arith.constant 1 : index
      %c0_74 = arith.constant 0 : index
      %c0_75 = arith.constant 0 : index
      %87 = vector.load %arg9[%c1_73, %c0_74, %c0_75] : memref<18x18x8xbf16, #tpu.memory_space<vmem>>, vector<16x18x8xbf16>
      tpu.vector_store %arg9[%c1_73, %c0_74, %c0_75], %86 {strides = array<i32>} : memref<18x18x8xbf16, #tpu.memory_space<vmem>>, vector<16x18x8xbf16>,
    } else {
    }
    %cst = arith.constant 0.000000e+00 : f32
    %3 = vector.broadcast %cst : f32 to vector<256x8xf32>
    %c0 = arith.constant 0 : index
    %c0_1 = arith.constant 0 : index
    %c0_2 = arith.constant 0 : index
    %4 = vector.load %arg9[%c0, %c0_1, %c0_2] : memref<18x18x8xbf16, #tpu.memory_space<vmem>>, vector<16x16x8xbf16>
    %5 = vector.shape_cast %4 : vector<16x16x8xbf16> to vector<256x8xbf16>
    %c0_3 = arith.constant 0 : index
    %c0_4 = arith.constant 0 : index
    %6 = vector.load %arg5[%c0_3, %c0_4] : memref<72x8xbf16, #tpu.memory_space<vmem>>, vector<8x8xbf16>
    %cst_5 = arith.constant dense<0.000000e+00> : vector<256x8xf32>
    %7 = tpu.matmul %5, %6, %cst_5 {dimension_numbers = #tpu.dot_dimension_numbers<[1], [0], [0], [1], [0, 0, 1, 1], [], []>} : vector<256x8xbf16>, vector<8x8xbf16>, vector<256x8xf32> -> vector<256x8xf32>
    %8 = arith.addf %3, %7 : vector<256x8xf32>
    %c0_6 = arith.constant 0 : index
    %c1 = arith.constant 1 : index
    %c0_7 = arith.constant 0 : index
    %9 = vector.load %arg9[%c0_6, %c1, %c0_7] : memref<18x18x8xbf16, #tpu.memory_space<vmem>>, vector<16x16x8xbf16>
    %10 = vector.shape_cast %9 : vector<16x16x8xbf16> to vector<256x8xbf16>
    %c8 = arith.constant 8 : index
    %c0_8 = arith.constant 0 : index
    %11 = vector.load %arg5[%c8, %c0_8] : memref<72x8xbf16, #tpu.memory_space<vmem>>, vector<8x8xbf16>
    %cst_9 = arith.constant dense<0.000000e+00> : vector<256x8xf32>
    %12 = tpu.matmul %10, %11, %cst_9 {dimension_numbers = #tpu.dot_dimension_numbers<[1], [0], [0], [1], [0, 0, 1, 1], [], []>} : vector<256x8xbf16>, vector<8x8xbf16>, vector<256x8xf32> -> vector<256x8xf32>
    %13 = arith.addf %8, %12 : vector<256x8xf32>
    %c0_10 = arith.constant 0 : index
    %c2 = arith.constant 2 : index
    %c0_11 = arith.constant 0 : index
    %14 = vector.load %arg9[%c0_10, %c2, %c0_11] : memref<18x18x8xbf16, #tpu.memory_space<vmem>>, vector<16x16x8xbf16>
    %15 = vector.shape_cast %14 : vector<16x16x8xbf16> to vector<256x8xbf16>
    %c16 = arith.constant 16 : index
    %c0_12 = arith.constant 0 : index
    %16 = vector.load %arg5[%c16, %c0_12] : memref<72x8xbf16, #tpu.memory_space<vmem>>, vector<8x8xbf16>
    %cst_13 = arith.constant dense<0.000000e+00> : vector<256x8xf32>
    %17 = tpu.matmul %15, %16, %cst_13 {dimension_numbers = #tpu.dot_dimension_numbers<[1], [0], [0], [1], [0, 0, 1, 1], [], []>} : vector<256x8xbf16>, vector<8x8xbf16>, vector<256x8xf32> -> vector<256x8xf32>
    %18 = arith.addf %13, %17 : vector<256x8xf32>
    %c1_14 = arith.constant 1 : index
    %c0_15 = arith.constant 0 : index
    %c0_16 = arith.constant 0 : index
    %19 = vector.load %arg9[%c1_14, %c0_15, %c0_16] : memref<18x18x8xbf16, #tpu.memory_space<vmem>>, vector<16x16x8xbf16>
    %20 = vector.shape_cast %19 : vector<16x16x8xbf16> to vector<256x8xbf16>
    %c24 = arith.constant 24 : index
    %c0_17 = arith.constant 0 : index
    %21 = vector.load %arg5[%c24, %c0_17] : memref<72x8xbf16, #tpu.memory_space<vmem>>, vector<8x8xbf16>
    %cst_18 = arith.constant dense<0.000000e+00> : vector<256x8xf32>
    %22 = tpu.matmul %20, %21, %cst_18 {dimension_numbers = #tpu.dot_dimension_numbers<[1], [0], [0], [1], [0, 0, 1, 1], [], []>} : vector<256x8xbf16>, vector<8x8xbf16>, vector<256x8xf32> -> vector<256x8xf32>
    %23 = arith.addf %18, %22 : vector<256x8xf32>
    %c1_19 = arith.constant 1 : index
    %c1_20 = arith.constant 1 : index
    %c0_21 = arith.constant 0 : index
    %24 = vector.load %arg9[%c1_19, %c1_20, %c0_21] : memref<18x18x8xbf16, #tpu.memory_space<vmem>>, vector<16x16x8xbf16>
    %25 = vector.shape_cast %24 : vector<16x16x8xbf16> to vector<256x8xbf16>
    %c32 = arith.constant 32 : index
    %c0_22 = arith.constant 0 : index
    %26 = vector.load %arg5[%c32, %c0_22] : memref<72x8xbf16, #tpu.memory_space<vmem>>, vector<8x8xbf16>
    %cst_23 = arith.constant dense<0.000000e+00> : vector<256x8xf32>
    %27 = tpu.matmul %25, %26, %cst_23 {dimension_numbers = #tpu.dot_dimension_numbers<[1], [0], [0], [1], [0, 0, 1, 1], [], []>} : vector<256x8xbf16>, vector<8x8xbf16>, vector<256x8xf32> -> vector<256x8xf32>
    %28 = arith.addf %23, %27 : vector<256x8xf32>
    %c1_24 = arith.constant 1 : index
    %c2_25 = arith.constant 2 : index
    %c0_26 = arith.constant 0 : index
    %29 = vector.load %arg9[%c1_24, %c2_25, %c0_26] : memref<18x18x8xbf16, #tpu.memory_space<vmem>>, vector<16x16x8xbf16>
    %30 = vector.shape_cast %29 : vector<16x16x8xbf16> to vector<256x8xbf16>
    %c40 = arith.constant 40 : index
    %c0_27 = arith.constant 0 : index
    %31 = vector.load %arg5[%c40, %c0_27] : memref<72x8xbf16, #tpu.memory_space<vmem>>, vector<8x8xbf16>
    %cst_28 = arith.constant dense<0.000000e+00> : vector<256x8xf32>
    %32 = tpu.matmul %30, %31, %cst_28 {dimension_numbers = #tpu.dot_dimension_numbers<[1], [0], [0], [1], [0, 0, 1, 1], [], []>} : vector<256x8xbf16>, vector<8x8xbf16>, vector<256x8xf32> -> vector<256x8xf32>
    %33 = arith.addf %28, %32 : vector<256x8xf32>
    %c2_29 = arith.constant 2 : index
    %c0_30 = arith.constant 0 : index
    %c0_31 = arith.constant 0 : index
    %34 = vector.load %arg9[%c2_29, %c0_30, %c0_31] : memref<18x18x8xbf16, #tpu.memory_space<vmem>>, vector<16x16x8xbf16>
    %35 = vector.shape_cast %34 : vector<16x16x8xbf16> to vector<256x8xbf16>
    %c48 = arith.constant 48 : index
    %c0_32 = arith.constant 0 : index
    %36 = vector.load %arg5[%c48, %c0_32] : memref<72x8xbf16, #tpu.memory_space<vmem>>, vector<8x8xbf16>
    %cst_33 = arith.constant dense<0.000000e+00> : vector<256x8xf32>
    %37 = tpu.matmul %35, %36, %cst_33 {dimension_numbers = #tpu.dot_dimension_numbers<[1], [0], [0], [1], [0, 0, 1, 1], [], []>} : vector<256x8xbf16>, vector<8x8xbf16>, vector<256x8xf32> -> vector<256x8xf32>
    %38 = arith.addf %33, %37 : vector<256x8xf32>
    %c2_34 = arith.constant 2 : index
    %c1_35 = arith.constant 1 : index
    %c0_36 = arith.constant 0 : index
    %39 = vector.load %arg9[%c2_34, %c1_35, %c0_36] : memref<18x18x8xbf16, #tpu.memory_space<vmem>>, vector<16x16x8xbf16>
    %40 = vector.shape_cast %39 : vector<16x16x8xbf16> to vector<256x8xbf16>
    %c56 = arith.constant 56 : index
    %c0_37 = arith.constant 0 : index
    %41 = vector.load %arg5[%c56, %c0_37] : memref<72x8xbf16, #tpu.memory_space<vmem>>, vector<8x8xbf16>
    %cst_38 = arith.constant dense<0.000000e+00> : vector<256x8xf32>
    %42 = tpu.matmul %40, %41, %cst_38 {dimension_numbers = #tpu.dot_dimension_numbers<[1], [0], [0], [1], [0, 0, 1, 1], [], []>} : vector<256x8xbf16>, vector<8x8xbf16>, vector<256x8xf32> -> vector<256x8xf32>
    %43 = arith.addf %38, %42 : vector<256x8xf32>
    %c2_39 = arith.constant 2 : index
    %c2_40 = arith.constant 2 : index
    %c0_41 = arith.constant 0 : index
    %44 = vector.load %arg9[%c2_39, %c2_40, %c0_41] : memref<18x18x8xbf16, #tpu.memory_space<vmem>>, vector<16x16x8xbf16>
    %45 = vector.shape_cast %44 : vector<16x16x8xbf16> to vector<256x8xbf16>
    %c64 = arith.constant 64 : index
    %c0_42 = arith.constant 0 : index
    %46 = vector.load %arg5[%c64, %c0_42] : memref<72x8xbf16, #tpu.memory_space<vmem>>, vector<8x8xbf16>
    %cst_43 = arith.constant dense<0.000000e+00> : vector<256x8xf32>
    %47 = tpu.matmul %45, %46, %cst_43 {dimension_numbers = #tpu.dot_dimension_numbers<[1], [0], [0], [1], [0, 0, 1, 1], [], []>} : vector<256x8xbf16>, vector<8x8xbf16>, vector<256x8xf32> -> vector<256x8xf32>
    %48 = arith.addf %43, %47 : vector<256x8xf32>
    %cst_44 = arith.constant dense<0.000000e+00> : vector<8xf32>
    %49 = vector.multi_reduction <add>, %48, %cst_44 [0] : vector<256x8xf32> to vector<8xf32>
    %50 = vector.shape_cast %49 : vector<8xf32> to vector<1x8xf32>
    %51 = arith.mulf %48, %48 : vector<256x8xf32>
    %cst_45 = arith.constant dense<0.000000e+00> : vector<8xf32>
    %52 = vector.multi_reduction <add>, %51, %cst_45 [0] : vector<256x8xf32> to vector<8xf32>
    %53 = vector.shape_cast %52 : vector<8xf32> to vector<1x8xf32>
    %54 = tpu.concatenate %50, %53 in 0 : vector<1x8xf32>, vector<1x8xf32> -> vector<2x8xf32>
    %c0_46 = arith.constant 0 : index
    %c0_47 = arith.constant 0 : index
    %c0_48 = arith.constant 0 : index
    %55 = vector.load %arg8[%c0_46, %c0_47, %c0_48] : memref<1x2x8xf32, #tpu.memory_space<vmem>>, vector<1x2x8xf32>
    %56 = vector.shape_cast %55 : vector<1x2x8xf32> to vector<2x8xf32>
    %57 = vector.shape_cast %54 : vector<2x8xf32> to vector<1x2x8xf32>
    tpu.vector_store %arg8[%c0_46, %c0_47, %c0_48], %57 {strides = array<i32>} : memref<1x2x8xf32, #tpu.memory_space<vmem>>, vector<1x2x8xf32>,
    %c0_49 = arith.constant 0 : index
    %c0_50 = arith.constant 0 : index
    %58 = vector.load %arg6[%c0_49, %c0_50] : memref<1x8xf32, #tpu.memory_space<vmem>>, vector<1x8xf32>
    %59 = vector.broadcast %58 : vector<1x8xf32> to vector<256x8xf32>
    %60 = arith.addf %48, %59 : vector<256x8xf32>
    %61 = vector.shape_cast %60 : vector<256x8xf32> to vector<16x16x8xf32>
    %62 = arith.truncf %61 : vector<16x16x8xf32> to vector<16x16x8xbf16>
    %c0_51 = arith.constant 0 : index
    %c0_52 = arith.constant 0 : index
    %c0_53 = arith.constant 0 : index
    %c0_54 = arith.constant 0 : index
    %63 = vector.load %arg7[%c0_51, %c0_52, %c0_53, %c0_54] : memref<1x16x16x8xbf16, #tpu.memory_space<vmem>>, vector<1x16x16x8xbf16>
    %64 = vector.shape_cast %63 : vector<1x16x16x8xbf16> to vector<16x16x8xbf16>
    %65 = vector.shape_cast %62 : vector<16x16x8xbf16> to vector<1x16x16x8xbf16>
    tpu.vector_store %arg7[%c0_51, %c0_52, %c0_53, %c0_54], %65 {strides = array<i32>} : memref<1x16x16x8xbf16, #tpu.memory_space<vmem>>, vector<1x16x16x8xbf16>,
    return
  }
  func.func @transform_0(%arg0: i32, %arg1: i32) -> (i32, i32, i32, i32) {
    %c0_i32 = arith.constant 0 : i32
    %c0_i32_0 = arith.constant 0 : i32
    %c0_i32_1 = arith.constant 0 : i32
    %c0_i32_2 = arith.constant 0 : i32
    return %arg0, %c0_i32, %c0_i32_0, %c0_i32_1 : i32, i32, i32, i32
  }
  func.func @transform_1(%arg0: i32, %arg1: i32) -> (i32, i32, i32) {
    %c0_i32 = arith.constant 0 : i32
    %c0_i32_0 = arith.constant 0 : i32
    %c0_i32_1 = arith.constant 0 : i32
    %c0_i32_2 = arith.constant 0 : i32
    return %c0_i32, %c0_i32_0, %c0_i32_1 : i32, i32, i32
  }
  func.func @transform_2(%arg0: i32, %arg1: i32) -> (i32, i32, i32) {
    %c0_i32 = arith.constant 0 : i32
    %c0_i32_0 = arith.constant 0 : i32
    %c0_i32_1 = arith.constant 0 : i32
    %c0_i32_2 = arith.constant 0 : i32
    return %c0_i32, %c0_i32_0, %c0_i32_1 : i32, i32, i32
  }
  func.func @transform_3(%arg0: i32, %arg1: i32) -> (i32, i32) {
    %c0_i32 = arith.constant 0 : i32
    %c0_i32_0 = arith.constant 0 : i32
    return %c0_i32, %arg1 : i32, i32
  }
  func.func @transform_4(%arg0: i32, %arg1: i32) -> (i32, i32) {
    %c0_i32 = arith.constant 0 : i32
    %c0_i32_0 = arith.constant 0 : i32
    return %c0_i32, %arg1 : i32, i32
  }
  func.func @transform_5(%arg0: i32, %arg1: i32) -> (i32, i32, i32, i32) {
    %c0_i32 = arith.constant 0 : i32
    %c0_i32_0 = arith.constant 0 : i32
    %c0_i32_1 = arith.constant 0 : i32
    return %arg0, %c0_i32, %c0_i32_0, %arg1 : i32, i32, i32, i32
  }
  func.func @transform_6(%arg0: i32, %arg1: i32) -> (i32, i32, i32) {
    %c0_i32 = arith.constant 0 : i32
    %c0_i32_0 = arith.constant 0 : i32
    return %arg0, %c0_i32, %arg1 : i32, i32, i32
  }
}

module attributes {stable_mosaic.version = 11 : i64} {
  func.func @_affine_relu_kernel(%arg0: i32, %arg1: memref<32x128xbf16, #tpu.memory_space<vmem>>, %arg2: memref<1x128xf32, #tpu.memory_space<vmem>>, %arg3: memref<1x128xf32, #tpu.memory_space<vmem>>, %arg4: memref<32x128xf32, #tpu.memory_space<vmem>>) attributes {dimension_semantics = [#tpu.dimension_semantics<parallel>], iteration_bounds = array<i64: 1>, scalar_prefetch = 0 : i64, scratch_operands = 0 : i64, tpu.core_type = #tpu.core_type<tc>, window_params = [{transform_indices = @transform_0, window_bounds = array<i64: 32, 128>}, {pipeline_mode = #tpu.pipeline_mode<synchronous>, transform_indices = @transform_1, window_bounds = array<i64: 1, 128>}, {pipeline_mode = #tpu.pipeline_mode<synchronous>, transform_indices = @transform_2, window_bounds = array<i64: 1, 128>}, {transform_indices = @transform_3, window_bounds = array<i64: 32, 128>}]} {
    %c0 = arith.constant 0 : index
    %c0_0 = arith.constant 0 : index
    %0 = vector.load %arg1[%c0, %c0_0] : memref<32x128xbf16, #tpu.memory_space<vmem>>, vector<32x128xbf16>
    %1 = arith.extf %0 : vector<32x128xbf16> to vector<32x128xf32>
    %c0_1 = arith.constant 0 : index
    %c0_2 = arith.constant 0 : index
    %2 = vector.load %arg2[%c0_1, %c0_2] : memref<1x128xf32, #tpu.memory_space<vmem>>, vector<1x128xf32>
    %3 = vector.broadcast %2 : vector<1x128xf32> to vector<32x128xf32>
    %4 = arith.mulf %1, %3 : vector<32x128xf32>
    %c0_3 = arith.constant 0 : index
    %c0_4 = arith.constant 0 : index
    %5 = vector.load %arg3[%c0_3, %c0_4] : memref<1x128xf32, #tpu.memory_space<vmem>>, vector<1x128xf32>
    %6 = vector.broadcast %5 : vector<1x128xf32> to vector<32x128xf32>
    %7 = arith.addf %4, %6 : vector<32x128xf32>
    %cst = arith.constant 0.000000e+00 : f32
    %8 = vector.broadcast %cst : f32 to vector<32x128xf32>
    %9 = arith.maximumf %7, %8 : vector<32x128xf32>
    %c0_5 = arith.constant 0 : index
    %c0_6 = arith.constant 0 : index
    %10 = vector.load %arg4[%c0_5, %c0_6] : memref<32x128xf32, #tpu.memory_space<vmem>>, vector<32x128xf32>
    tpu.vector_store %arg4[%c0_5, %c0_6], %9 {strides = array<i32>} : memref<32x128xf32, #tpu.memory_space<vmem>>, vector<32x128xf32>,
    return
  }
  func.func @transform_0(%arg0: i32) -> (i32, i32) {
    %c0_i32 = arith.constant 0 : i32
    %c0_i32_0 = arith.constant 0 : i32
    return %arg0, %c0_i32 : i32, i32
  }
  func.func @transform_1(%arg0: i32) -> (i32, i32) {
    %c0_i32 = arith.constant 0 : i32
    %c0_i32_0 = arith.constant 0 : i32
    %c0_i32_1 = arith.constant 0 : i32
    return %c0_i32, %c0_i32_0 : i32, i32
  }
  func.func @transform_2(%arg0: i32) -> (i32, i32) {
    %c0_i32 = arith.constant 0 : i32
    %c0_i32_0 = arith.constant 0 : i32
    %c0_i32_1 = arith.constant 0 : i32
    return %c0_i32, %c0_i32_0 : i32, i32
  }
  func.func @transform_3(%arg0: i32) -> (i32, i32) {
    %c0_i32 = arith.constant 0 : i32
    %c0_i32_0 = arith.constant 0 : i32
    return %arg0, %c0_i32 : i32, i32
  }
}

</mosaic_0001>

<llo_original>
// kernel: tile.13
$region0: #{tile.13}
  #allocation0 [shape = 's32[1]{0}', space=sflag, size = 0x4, scoped, tag = 'scoped memory for tile.13']
  %s0 = inlined_call_operand.vmem [shape: f32[8], index: 0, kind: input, shape index: {}]
  %s1 = inlined_call_operand.vmem [shape: f32[16,8], index: 1, kind: output, shape index: {}]
  // Predicated region
  $region2: #{tile.13} parent=0 // pred_check
    _
  $region3: #{tile.13} parent=0 // pred_check_branch
    %3 = sbr.rel (0) target = $region5
  $region4: #{tile.13} parent=0 // pred_region
    _
  $region5: #{tile.13} parent=0 // pred_fallthru
    _
  %v4 = vld [vmem:[%s0] ss:$0 sm:$0xff]
  %5 = vst [vmem:[%s1] sm:$0xff] %v4
  %s6 = scalar_lea.vmem %s1, 8
  %7 = vst [vmem:[%s6] sm:$0xff] %v4

// kernel: tile.14
$region0: #{tile.14}
  %s0 = inlined_call_operand.vmem [shape: f32[16,8], index: 0, kind: input, shape index: {}]
  %s1 = inlined_call_operand.vmem [shape: f32[1,128], index: 1, kind: output, shape index: {}]
  $region1: #{tile.14} parent=0
    #allocation0 [shape = 'u8[4096]{0}', space=vmem, size = 0x1000, scoped, tag = 'scoped mem for output reshape']
    %v2 = vld [vmem:[%s0] sm:$0x1]
    %vm3 = vcmask 64512
    %4 = vst.msk [vmem:[#allocation0] sm:$0x1] %vm3, %v2
    %s5 = scalar_lea.vmem %s0, 15
    %v6 = vld [vmem:[%s5] sm:$0x1]
    %7 = vrot.lane.b32.xlu0 %v6, 120
    %v8 = vpop.permute.xlu0 %7
    %vm9 = vcmask 1048512
    %10 = vst.msk [vmem:[#allocation0] sm:$0x1] %vm9, %v8
    %s11 = scalar_lea.vmem %s0, 14
    %v12 = vld [vmem:[%s11] sm:$0x1]
    %13 = vrot.lane.b32.xlu0 %v12, 112
    %v14 = vpop.permute.xlu0 %13
    %vm15 = vcmask 982912
    %16 = vst.msk [vmem:[#allocation0] sm:$0x1] %vm15, %v14
    %s17 = scalar_lea.vmem %s0, 13
    %v18 = vld [vmem:[%s17] sm:$0x1]
    %19 = vrot.lane.b32.xlu0 %v18, 104
    %v20 = vpop.permute.xlu0 %19
    %vm21 = vcmask 917312
    %22 = vst.msk [vmem:[#allocation0] sm:$0x1] %vm21, %v20
    %s23 = scalar_lea.vmem %s0, 12
    %v24 = vld [vmem:[%s23] sm:$0x1]
    %25 = vrot.lane.b32.xlu0 %v24, 96
    %v26 = vpop.permute.xlu0 %25
    %vm27 = vcmask 851712
    %28 = vst.msk [vmem:[#allocation0] sm:$0x1] %vm27, %v26
    %s29 = scalar_lea.vmem %s0, 11
    %v30 = vld [vmem:[%s29] sm:$0x1]
    %31 = vrot.lane.b32.xlu0 %v30, 88
    %v32 = vpop.permute.xlu0 %31
    %vm33 = vcmask 786112
    %34 = vst.msk [vmem:[#allocation0] sm:$0x1] %vm33, %v32
    %s35 = scalar_lea.vmem %s0, 10
    %v36 = vld [vmem:[%s35] sm:$0x1]
    %37 = vrot.lane.b32.xlu0 %v36, 80
    %v38 = vpop.permute.xlu0 %37
    %vm39 = vcmask 720512
    %40 = vst.msk [vmem:[#allocation0] sm:$0x1] %vm39, %v38
    %s41 = scalar_lea.vmem %s0, 9
    %v42 = vld [vmem:[%s41] sm:$0x1]
    %43 = vrot.lane.b32.xlu0 %v42, 72
    %v44 = vpop.permute.xlu0 %43
    %vm45 = vcmask 654912
    %46 = vst.msk [vmem:[#allocation0] sm:$0x1] %vm45, %v44
    %s47 = scalar_lea.vmem %s0, 8
    %v48 = vld [vmem:[%s47] sm:$0x1]
    %49 = vrot.lane.b32.xlu0 %v48, 64
    %v50 = vpop.permute.xlu0 %49
    %vm51 = vcmask 589312
    %52 = vst.msk [vmem:[#allocation0] sm:$0x1] %vm51, %v50
    %s53 = scalar_lea.vmem %s0, 7
    %v54 = vld [vmem:[%s53] sm:$0x1]
    %55 = vrot.lane.b32.xlu0 %v54, 56
    %v56 = vpop.permute.xlu0 %55
    %vm57 = vcmask 523712
    %58 = vst.msk [vmem:[#allocation0] sm:$0x1] %vm57, %v56
    %s59 = scalar_lea.vmem %s0, 6
    %v60 = vld [vmem:[%s59] sm:$0x1]
    %61 = vrot.lane.b32.xlu0 %v60, 48
    %v62 = vpop.permute.xlu0 %61
    %vm63 = vcmask 458112
    %64 = vst.msk [vmem:[#allocation0] sm:$0x1] %vm63, %v62
    %s65 = scalar_lea.vmem %s0, 5
    %v66 = vld [vmem:[%s65] sm:$0x1]
    %67 = vrot.lane.b32.xlu0 %v66, 40
    %v68 = vpop.permute.xlu0 %67
    %vm69 = vcmask 392512
    %70 = vst.msk [vmem:[#allocation0] sm:$0x1] %vm69, %v68
    %s71 = scalar_lea.vmem %s0, 4
    %v72 = vld [vmem:[%s71] sm:$0x1]
    %73 = vrot.lane.b32.xlu0 %v72, 32
    %v74 = vpop.permute.xlu0 %73
    %vm75 = vcmask 326912
    %76 = vst.msk [vmem:[#allocation0] sm:$0x1] %vm75, %v74
    %s77 = scalar_lea.vmem %s0, 3
    %v78 = vld [vmem:[%s77] sm:$0x1]
    %79 = vrot.lane.b32.xlu0 %v78, 24
    %v80 = vpop.permute.xlu0 %79
    %vm81 = vcmask 261312
    %82 = vst.msk [vmem:[#allocation0] sm:$0x1] %vm81, %v80
    %s83 = scalar_lea.vmem %s0, 2
    %v84 = vld [vmem:[%s83] sm:$0x1]
    %85 = vrot.lane.b32.xlu0 %v84, 16
    %v86 = vpop.permute.xlu0 %85
    %vm87 = vcmask 195712
    %88 = vst.msk [vmem:[#allocation0] sm:$0x1] %vm87, %v86
    %s89 = scalar_lea.vmem %s0, 1
    %v90 = vld [vmem:[%s89] sm:$0x1]
    %91 = vrot.lane.b32.xlu0 %v90, 8
    %v92 = vpop.permute.xlu0 %91
    %vm93 = vcmask 130112
    %94 = vst.msk [vmem:[#allocation0] sm:$0x1] %vm93, %v92
    %s96 = ssub.s32 2, 1
    %v97 = vld [vmem:[#allocation0] sm:%s96]
    %s99 = ssub.s32 2, 1
    %100 = vst [vmem:[%s1] sm:%s99] %v97

// kernel: up_forward.5
$region0: #{up_forward.5}
  #allocation0 [shape = 'u32[]', space=smem, size = 0x4, offset = 0x4, fixed_abs, tag = 'smem constant byte address 0x4 - core index']
  #allocation1 [shape = 'u32[72,128]{1,0:T(1,128)}', space=vmem, size = 0x9000, scoped, tag = 'internal scratch']
  %s0 = inlined_call_operand.vmem [shape: bf16[32,128], index: 0, kind: input, shape index: {}]
  %s1 = inlined_call_operand.vmem [shape: f32[1,128], index: 1, kind: input, shape index: {}]
  %s2 = inlined_call_operand.vmem [shape: f32[1,128], index: 2, kind: input, shape index: {}]
  %s3 = inlined_call_operand.vmem [shape: f32[32,128], index: 3, kind: output, shape index: {}]
  %s4 = sld [smem:[#allocation0]]
  $region22: #{up_forward.5} parent=0
    _
  %s6 = ssub.s32 1, %s4
  %s7 = scalar_select 0, %s6, %s4
  // Predicated region
  $region2: #{up_forward.5} parent=0 // pred_check
    _
  $region3: #{up_forward.5} parent=0 // pred_check_branch
    %9 = sbr.rel (0) target = $region5
  $region4: #{up_forward.5} parent=0 // pred_region
    _
  $region5: #{up_forward.5} parent=0 // pred_fallthru
    _
  // Predicated region
  $region6: #{up_forward.5} parent=0 // pred_check
    _
  $region7: #{up_forward.5} parent=0 // pred_check_branch
    %11 = sbr.rel (0) target = $region9
  $region8: #{up_forward.5} parent=0 // pred_region
    _
  $region9: #{up_forward.5} parent=0 // pred_fallthru
    _
  // Predicated region
  $region10: #{up_forward.5} parent=0 // pred_check
    _
  $region11: #{up_forward.5} parent=0 // pred_check_branch
    %13 = sbr.rel (0) target = $region13
  $region12: #{up_forward.5} parent=0 // pred_region
    _
  $region13: #{up_forward.5} parent=0 // pred_fallthru
    _
  %v14 = vld [vmem:[%s0] sm:$0xf]
  %v15 = vld [vmem:[%s0 + $0x4] sm:$0xf]
  %v16 = vld [vmem:[%s0 + $0x8] sm:$0xf]
  %v17 = vld [vmem:[%s0 + $0xc] sm:$0xf]
  %v18 = vunpack.c.l.bf16 %v14
  %v19 = vunpack.c.l.bf16 %v15
  %v20 = vunpack.c.l.bf16 %v16
  %v21 = vunpack.c.l.bf16 %v17
  %v22 = vld [vmem:[%s1] sm:$0x1]
  %v24 = vperm.slane %v22, 0
  %v26 = vmul.f32 %v18, %v24
  %v27 = vmul.f32 %v19, %v24
  %v28 = vmul.f32 %v20, %v24
  %v29 = vmul.f32 %v21, %v24
  %v30 = vld [vmem:[%s2] sm:$0x1]
  %v32 = vperm.slane %v30, 0
  %v34 = vadd.f32 %v26, %v32
  %v35 = vadd.f32 %v27, %v32
  %v36 = vadd.f32 %v28, %v32
  %v37 = vadd.f32 %v29, %v32
  %v38 = vmax.f32 %v34, 0.0
  %v39 = vmax.f32 %v35, 0.0
  %v40 = vmax.f32 %v36, 0.0
  %v41 = vmax.f32 %v37, 0.0
  %42 = vst [vmem:[%s3] sm:$0xff] %v38
  %43 = vst [vmem:[%s3 + $0x8] sm:$0xff] %v39
  %44 = vst [vmem:[%s3 + $0x10] sm:$0xff] %v40
  %45 = vst [vmem:[%s3 + $0x18] sm:$0xff] %v41
  // Predicated region
  $region14: #{up_forward.5} parent=0 // pred_check
    _
  $region15: #{up_forward.5} parent=0 // pred_check_branch
    %47 = sbr.rel (0) target = $region17
  $region16: #{up_forward.5} parent=0 // pred_region
    _
  $region17: #{up_forward.5} parent=0 // pred_fallthru
    _
  // Predicated region
  $region18: #{up_forward.5} parent=0 // pred_check
    _
  $region19: #{up_forward.5} parent=0 // pred_check_branch
    %49 = sbr.rel (0) target = $region21
  $region20: #{up_forward.5} parent=0 // pred_region
    _
  $region21: #{up_forward.5} parent=0 // pred_fallthru
    _

// kernel: up_forward.4
$region0: #{up_forward.4}
  #allocation0 [shape = 'u32[]', space=smem, size = 0x4, offset = 0x4, fixed_abs, tag = 'smem constant byte address 0x4 - core index']
  #allocation1 [shape = 'u32[72,128]{1,0:T(1,128)}', space=vmem, size = 0x9000, scoped, tag = 'internal scratch']
  #allocation2 [shape = 'bf16[18,18,8]{2,1,0:T(8,128)(2,1)}', space=vmem, size = 0x1b000, scoped, tag = 'scratch operand']
  %s0 = inlined_call_operand.vmem [shape: bf16[2,16,16,8], index: 0, kind: input, shape index: {}]
  %s1 = inlined_call_operand.vmem [shape: f32[1,1,8], index: 1, kind: input, shape index: {}]
  %s2 = inlined_call_operand.vmem [shape: f32[1,1,8], index: 2, kind: input, shape index: {}]
  %s3 = inlined_call_operand.vmem [shape: bf16[72,8], index: 3, kind: input, shape index: {}]
  %s4 = inlined_call_operand.vmem [shape: f32[1,8], index: 4, kind: input, shape index: {}]
  %s5 = inlined_call_operand.vmem [shape: bf16[2,16,16,8], index: 5, kind: output, shape index: {0}]
  %s6 = inlined_call_operand.vmem [shape: f32[2,2,8], index: 6, kind: output, shape index: {1}]
  %7 = xla_tuple %s5, %s6
  %s8 = sld [smem:[#allocation0]]
  $region65: #{up_forward.4} parent=0
    _
  %s10 = ssub.s32 1, %s8
  %s11 = scalar_select 0, %s10, %s8
  loop: start=0, step=1, limit=4
  $region2: #{up_forward.4} parent=0 // loop_pre_header
    _
  $region3: #{up_forward.4} parent=0 // loop_header
    %s13 = sphi 0, %s17
    %p14 = scmp.ge.s32.totalorder %s13, 4
    %s20 = sphi 0, %s32
    %s21 = sphi 0, %s28
    %s22 = sphi 0, %s20
    %s23 = sphi 0, %s21
    %s24 = sphi 0, %s22
    %s25 = sphi 0, %s23
    %s35 = sphi 0, %s37
    %s38 = sphi 0, %s35
    %s39 = sphi 0, %s38
    %s55 = sphi 0, %s39
    %s59 = sphi 0, %s59
    %s61 = sphi 0, %s59
    %s62 = sphi 0, %s61
    %s76 = sphi 0, %s62
    %s80 = sphi 0, %s80
    %s82 = sphi 0, %s80
    %s83 = sphi 0, %s82
    %s97 = sphi 0, %s83
    %s103 = sphi 0, %s105
    %s106 = sphi 0, %s103
    %s107 = sphi 0, %s106
    %s123 = sphi 0, %s107
    %s129 = sphi 0, %s131
    %s132 = sphi 0, %s129
    %s133 = sphi 0, %s132
    %s149 = sphi 0, %s133
    %s157 = sphi 0, %s159
    %s160 = sphi 0, %s157
    %s161 = sphi 0, %s160
    %s177 = sphi 0, %s161
    %s185 = sphi 0, %s187
    %s188 = sphi 0, %s185
    %s189 = sphi 0, %s188
    %s205 = sphi 0, %s189
  $region4: #{up_forward.4} parent=0 // loop_header_branch
    %16 = sbr.rel (%p14) target = $region8
  $region5: #{up_forward.4} parent=0 // loop_body
    %s18 = ssub.s32 %s13, 1
    %s19 = ssub.s32 %s13, 2
    %s26 = sadd.s32 1, %s21
    %p27 = scmp.ge.s32.totalorder %s26, 1
    %s28 = scalar_select %p27, 0, %s26
    %s29 = sadd.s32 1, %s20
    %s30 = scalar_select %p27, %s29, %s20
    %p31 = scmp.ge.s32.totalorder %s30, 2
    %s32 = scalar_select %p31, 0, %s30
    %s33 = ssub.s32 %s20, %s32
    %p34 = scmp.eq.s32.totalorder %s33, 0
    %s36 = sadd.s32 %s35, 1
    %s37 = scalar_select %p34, %s35, %s36
    %p40 = pneg %p34
    %p41 = scmp.eq.s32.totalorder %s13, 1
    %p42 = por %p40, %p41
    %p43 = scmp.ne.s32.totalorder %s35, %s38
    %p44 = scmp.eq.s32.totalorder %s13, 0
    %p45 = por %p43, %p44
    %p46 = scmp.ne.s32.totalorder %s35, %s38
    %p47 = scmp.eq.s32.totalorder %s18, 1
    %p48 = por %p46, %p47
    %p49 = scmp.ne.s32.totalorder %s38, %s39
    %p50 = scmp.eq.s32.totalorder %s18, 0
    %p51 = por %p49, %p50
    %p52 = scmp.ne.s32.totalorder %s38, %s39
    %p53 = scmp.eq.s32.totalorder %s19, 1
    %p54 = por %p52, %p53
    %p56 = scmp.ne.s32.totalorder %s39, %s55
    %p57 = scmp.eq.s32.totalorder %s19, 0
    %p58 = por %p56, %p57
    %s60 = sadd.s32 %s59, 1
    %p63 = scmp.eq.s32.totalorder %s13, 1
    %p64 = scmp.ne.s32.totalorder %s59, %s61
    %p65 = scmp.eq.s32.totalorder %s13, 0
    %p66 = por %p64, %p65
    %p67 = scmp.ne.s32.totalorder %s59, %s61
    %p68 = scmp.eq.s32.totalorder %s18, 1
    %p69 = por %p67, %p68
    %p70 = scmp.ne.s32.totalorder %s61, %s62
    %p71 = scmp.eq.s32.totalorder %s18, 0
    %p72 = por %p70, %p71
    %p73 = scmp.ne.s32.totalorder %s61, %s62
    %p74 = scmp.eq.s32.totalorder %s19, 1
    %p75 = por %p73, %p74
    %p77 = scmp.ne.s32.totalorder %s62, %s76
    %p78 = scmp.eq.s32.totalorder %s19, 0
    %p79 = por %p77, %p78
    %s81 = sadd.s32 %s80, 1
    %p84 = scmp.eq.s32.totalorder %s13, 1
    %p85 = scmp.ne.s32.totalorder %s80, %s82
    %p86 = scmp.eq.s32.totalorder %s13, 0
    %p87 = por %p85, %p86
    %p88 = scmp.ne.s32.totalorder %s80, %s82
    %p89 = scmp.eq.s32.totalorder %s18, 1
    %p90 = por %p88, %p89
    %p91 = scmp.ne.s32.totalorder %s82, %s83
    %p92 = scmp.eq.s32.totalorder %s18, 0
    %p93 = por %p91, %p92
    %p94 = scmp.ne.s32.totalorder %s82, %s83
    %p95 = scmp.eq.s32.totalorder %s19, 1
    %p96 = por %p94, %p95
    %p98 = scmp.ne.s32.totalorder %s83, %s97
    %p99 = scmp.eq.s32.totalorder %s19, 0
    %p100 = por %p98, %p99
    %s101 = ssub.s32 %s21, %s28
    %p102 = scmp.eq.s32.totalorder %s101, 0
    %s104 = sadd.s32 %s103, 1
    %s105 = scalar_select %p102, %s103, %s104
    %p108 = pneg %p102
    %p109 = scmp.eq.s32.totalorder %s13, 1
    %p110 = por %p108, %p109
    %p111 = scmp.ne.s32.totalorder %s103, %s106
    %p112 = scmp.eq.s32.totalorder %s13, 0
    %p113 = por %p111, %p112
    %p114 = scmp.ne.s32.totalorder %s103, %s106
    %p115 = scmp.eq.s32.totalorder %s18, 1
    %p116 = por %p114, %p115
    %p117 = scmp.ne.s32.totalorder %s106, %s107
    %p118 = scmp.eq.s32.totalorder %s18, 0
    %p119 = por %p117, %p118
    %p120 = scmp.ne.s32.totalorder %s106, %s107
    %p121 = scmp.eq.s32.totalorder %s19, 1
    %p122 = por %p120, %p121
    %p124 = scmp.ne.s32.totalorder %s107, %s123
    %p125 = scmp.eq.s32.totalorder %s19, 0
    %p126 = por %p124, %p125
    %s127 = ssub.s32 %s21, %s28
    %p128 = scmp.eq.s32.totalorder %s127, 0
    %s130 = sadd.s32 %s129, 1
    %s131 = scalar_select %p128, %s129, %s130
    %p134 = pneg %p128
    %p135 = scmp.eq.s32.totalorder %s13, 1
    %p136 = por %p134, %p135
    %p137 = scmp.ne.s32.totalorder %s129, %s132
    %p138 = scmp.eq.s32.totalorder %s13, 0
    %p139 = por %p137, %p138
    %p140 = scmp.ne.s32.totalorder %s129, %s132
    %p141 = scmp.eq.s32.totalorder %s18, 1
    %p142 = por %p140, %p141
    %p143 = scmp.ne.s32.totalorder %s132, %s133
    %p144 = scmp.eq.s32.totalorder %s18, 0
    %p145 = por %p143, %p144
    %p146 = scmp.ne.s32.totalorder %s132, %s133
    %p147 = scmp.eq.s32.totalorder %s19, 1
    %p148 = por %p146, %p147
    %p150 = scmp.ne.s32.totalorder %s133, %s149
    %p151 = scmp.eq.s32.totalorder %s19, 0
    %p152 = por %p150, %p151
    %s153 = ssub.s32 %s20, %s32
    %s154 = ssub.s32 %s21, %s28
    %s155 = sor.u32 %s153, %s154
    %p156 = scmp.eq.s32.totalorder %s155, 0
    %s158 = sadd.s32 %s157, 1
    %s159 = scalar_select %p156, %s157, %s158
    %p162 = pneg %p156
    %p163 = scmp.eq.s32.totalorder %s13, 1
    %p164 = por %p162, %p163
    %p165 = scmp.ne.s32.totalorder %s157, %s160
    %p166 = scmp.eq.s32.totalorder %s13, 0
    %p167 = por %p165, %p166
    %p168 = scmp.ne.s32.totalorder %s157, %s160
    %p169 = scmp.eq.s32.totalorder %s18, 1
    %p170 = por %p168, %p169
    %p171 = scmp.ne.s32.totalorder %s160, %s161
    %p172 = scmp.eq.s32.totalorder %s18, 0
    %p173 = por %p171, %p172
    %p174 = scmp.ne.s32.totalorder %s160, %s161
    %p175 = scmp.eq.s32.totalorder %s19, 1
    %p176 = por %p174, %p175
    %p178 = scmp.ne.s32.totalorder %s161, %s177
    %p179 = scmp.eq.s32.totalorder %s19, 0
    %p180 = por %p178, %p179
    %s181 = ssub.s32 %s20, %s32
    %s182 = ssub.s32 %s21, %s28
    %s183 = sor.u32 %s181, %s182
    %p184 = scmp.eq.s32.totalorder %s183, 0
    %s186 = sadd.s32 %s185, 1
    %s187 = scalar_select %p184, %s185, %s186
    %p190 = pneg %p184
    %p191 = scmp.eq.s32.totalorder %s13, 1
    %p192 = por %p190, %p191
    %p193 = scmp.ne.s32.totalorder %s185, %s188
    %p194 = scmp.eq.s32.totalorder %s13, 0
    %p195 = por %p193, %p194
    %p196 = scmp.ne.s32.totalorder %s185, %s188
    %p197 = scmp.eq.s32.totalorder %s18, 1
    %p198 = por %p196, %p197
    %p199 = scmp.ne.s32.totalorder %s188, %s189
    %p200 = scmp.eq.s32.totalorder %s18, 0
    %p201 = por %p199, %p200
    %p202 = scmp.ne.s32.totalorder %s188, %s189
    %p203 = scmp.eq.s32.totalorder %s19, 1
    %p204 = por %p202, %p203
    %p206 = scmp.ne.s32.totalorder %s189, %s205
    %p207 = scmp.eq.s32.totalorder %s19, 0
    %p208 = por %p206, %p207
    %p209 = scmp.le.s32.totalorder 1, %s13
    %p210 = scmp.lt.s32.totalorder %s13, 3
    %p211 = pnand %p209, %p210
    %p212 = pneg %p211
    // Predicated region
    $region9: #{up_forward.4} parent=5 // pred_check
      _
    $region10: #{up_forward.4} parent=5 // pred_check_branch
      %214 = sbr.rel (%p211) target = $region12
    $region11: #{up_forward.4} parent=5 // pred_region
      %s215 = ssub.s32 %s13, 1
      // Predicated region
      $region13: #{up_forward.4} parent=11 // pred_check
        %p216 = pneg %p72
      $region14: #{up_forward.4} parent=11 // pred_check_branch
        %218 = sbr.rel (%p216) target = $region16
      $region15: #{up_forward.4} parent=11 // pred_region
        _
      $region16: #{up_forward.4} parent=11 // pred_fallthru
        _
      // Predicated region
      $region17: #{up_forward.4} parent=11 // pred_check
        %p219 = pneg %p93
      $region18: #{up_forward.4} parent=11 // pred_check_branch
        %221 = sbr.rel (%p219) target = $region20
      $region19: #{up_forward.4} parent=11 // pred_region
        _
      $region20: #{up_forward.4} parent=11 // pred_fallthru
        _
      // Predicated region
      $region21: #{up_forward.4} parent=11 // pred_check
        %p222 = pneg %p119
      $region22: #{up_forward.4} parent=11 // pred_check_branch
        %224 = sbr.rel (%p222) target = $region24
      $region23: #{up_forward.4} parent=11 // pred_region
        %p225 = scmp.lt.s32.totalorder %s23, 0
        %s226 = scalar_select %p225, %s23, 0
        %s227 = smul.addr %s226, 4
        %s228 = scalar_lea.vmem %s3, %s227
      $region24: #{up_forward.4} parent=11 // pred_fallthru
        _
      // Predicated region
      $region25: #{up_forward.4} parent=11 // pred_check
        %p229 = pneg %p145
      $region26: #{up_forward.4} parent=11 // pred_check_branch
        %231 = sbr.rel (%p229) target = $region28
      $region27: #{up_forward.4} parent=11 // pred_region
        %p232 = scmp.lt.s32.totalorder %s23, 0
        %s233 = scalar_select %p232, %s23, 0
        %s234 = scalar_lea.vmem %s4, %s233
      $region28: #{up_forward.4} parent=11 // pred_fallthru
        _
    $region12: #{up_forward.4} parent=5 // pred_fallthru
      _
    %p235 = scmp.lt.s32.totalorder %s13, 2
    // Predicated region
    $region29: #{up_forward.4} parent=5 // pred_check
      %p236 = pneg %p235
    $region30: #{up_forward.4} parent=5 // pred_check_branch
      %238 = sbr.rel (%p236) target = $region32
    $region31: #{up_forward.4} parent=5 // pred_region
      // Predicated region
      $region33: #{up_forward.4} parent=31 // pred_check
        %p239 = pneg %p45
      $region34: #{up_forward.4} parent=31 // pred_check_branch
        %241 = sbr.rel (%p239) target = $region36
      $region35: #{up_forward.4} parent=31 // pred_region
        %p242 = scmp.lt.s32.totalorder %s20, 1
        %s243 = scalar_select %p242, %s20, 1
        %s244 = smul.addr %s243, 32
        %s245 = smul.addr %s244, 4
        %s246 = scalar_lea.vmem %s0, %s245
      $region36: #{up_forward.4} parent=31 // pred_fallthru
        _
    $region32: #{up_forward.4} parent=5 // pred_fallthru
      _
    %p247 = scmp.le.s32.totalorder 1, %s13
    %p248 = scmp.lt.s32.totalorder %s13, 3
    %p249 = pnand %p247, %p248
    %p250 = pneg %p249
    // Predicated region
    $region37: #{up_forward.4} parent=5 // pred_check
      _
    $region38: #{up_forward.4} parent=5 // pred_check_branch
      %252 = sbr.rel (%p249) target = $region40
    $region39: #{up_forward.4} parent=5 // pred_region
      %s253 = ssub.s32 %s13, 1
      %p254 = scmp.lt.s32.totalorder %s22, 1
      %s255 = scalar_select %p254, %s22, 1
      %s256 = smul.addr %s255, 32
      %s257 = smul.addr %s256, 4
      %s258 = scalar_lea.vmem %s0, %s257
      %p259 = pneg %p51
      %p260 = pneg %p48
      %p261 = pneg %p72
      %p262 = pneg %p69
      %p263 = pneg %p93
      %p264 = pneg %p90
      %p265 = scmp.lt.s32.totalorder %s23, 0
      %s266 = scalar_select %p265, %s23, 0
      %s267 = smul.addr %s266, 4
      %s268 = scalar_lea.vmem %s3, %s267
      %p269 = pneg %p119
      %p270 = pneg %p116
      %p271 = scmp.lt.s32.totalorder %s23, 0
      %s272 = scalar_select %p271, %s23, 0
      %s273 = scalar_lea.vmem %s4, %s272
      %p274 = pneg %p145
      %p275 = pneg %p142
      %p276 = pneg %p173
      %p277 = pneg %p170
      %p278 = scmp.lt.s32.totalorder %s22, 1
      %s279 = scalar_select %p278, %s22, 1
      %p280 = scmp.lt.s32.totalorder %s23, 0
      %s281 = scalar_select %p280, %s23, 0
      %s282 = smul.addr %s279, 32
      %s283 = sadd.s32 %s281, %s282
      %s284 = smul.addr %s283, 4
      %s285 = scalar_lea.vmem %s5, %s284
      %p286 = pneg %p201
      %p287 = pneg %p198
      %p288 = scmp.lt.s32.totalorder %s22, 1
      %s289 = scalar_select %p288, %s22, 1
      %p290 = scmp.lt.s32.totalorder %s23, 0
      %s291 = scalar_select %p290, %s23, 0
      %s292 = sadd.s32 %s291, %s289
      %s293 = smul.addr %s292, 2
      %s294 = scalar_lea.vmem %s6, %s293
      %p295 = scmp.lt.s32.totalorder %s22, 1
      %s296 = scalar_select %p295, %s22, 1
      %s297 = smul.addr %s296, 32
      %s298 = smul.addr %s297, 4
      %s299 = scalar_lea.vmem %s0, %s298
      %p300 = scmp.lt.s32.totalorder %s23, 0
      %s301 = scalar_select %p300, %s23, 0
      %s302 = smul.addr %s301, 4
      %s303 = scalar_lea.vmem %s3, %s302
      %p304 = scmp.lt.s32.totalorder %s23, 0
      %s305 = scalar_select %p304, %s23, 0
      %s306 = scalar_lea.vmem %s4, %s305
      %p307 = scmp.lt.s32.totalorder %s22, 1
      %s308 = scalar_select %p307, %s22, 1
      %p309 = scmp.lt.s32.totalorder %s23, 0
      %s310 = scalar_select %p309, %s23, 0
      %s311 = smul.addr %s308, 32
      %s312 = sadd.s32 %s310, %s311
      %s313 = smul.addr %s312, 4
      %s314 = scalar_lea.vmem %s5, %s313
      %p315 = scmp.lt.s32.totalorder %s22, 1
      %s316 = scalar_select %p315, %s22, 1
      %p317 = scmp.lt.s32.totalorder %s23, 0
      %s318 = scalar_select %p317, %s23, 0
      %s319 = sadd.s32 %s318, %s316
      %s320 = smul.addr %s319, 2
      %s321 = scalar_lea.vmem %s6, %s320
      %p323 = scmp.eq.s32.totalorder %s23, 0
      // Predicated region
      $region41: #{up_forward.4} parent=39 // pred_check
        %p324 = pneg %p323
      $region42: #{up_forward.4} parent=39 // pred_check_branch
        %326 = sbr.rel (%p324) target = $region44
      $region43: #{up_forward.4} parent=39 // pred_region
        %vm327 = vcmask 60416
        %328 = vst.msk [vmem:[#allocation2] sm:$0xf] %vm327, 0
        %329 = vst.msk [vmem:[#allocation2 + $0x4] sm:$0xf] %vm327, 0
        %vm330 = vcmask 57344
        %331 = vst.msk [vmem:[#allocation2 + $0x8] sm:$0x1] %vm330, 0
        %s332 = scalar_lea.vmem [#allocation2], 204
        %333 = vst.msk [vmem:[%s332] sm:$0xf] %vm327, 0
        %334 = vst.msk [vmem:[%s332 + $0x4] sm:$0xf] %vm327, 0
        %335 = vst.msk [vmem:[%s332 + $0x8] sm:$0x1] %vm330, 0
        %v336 = vld [vmem:[%s299] sm:$0xf]
        %v337 = vld [vmem:[%s299 + $0x4] sm:$0xf]
        %v338 = vld [vmem:[%s299 + $0x8] sm:$0xf]
        %v339 = vld [vmem:[%s299 + $0xc] sm:$0xf]
        %v340 = vld [vmem:[%s299 + $0x10] sm:$0xf]
        %v341 = vld [vmem:[%s299 + $0x14] sm:$0xf]
        %v342 = vld [vmem:[%s299 + $0x18] sm:$0xf]
        %v343 = vld [vmem:[%s299 + $0x1c] sm:$0xf]
        %v344 = vld [vmem:[%s299 + $0x20] sm:$0xf]
        %v345 = vld [vmem:[%s299 + $0x24] sm:$0xf]
        %v346 = vld [vmem:[%s299 + $0x28] sm:$0xf]
        %v347 = vld [vmem:[%s299 + $0x2c] sm:$0xf]
        %v348 = vld [vmem:[%s299 + $0x30] sm:$0xf]
        %v349 = vld [vmem:[%s299 + $0x34] sm:$0xf]
        %v350 = vld [vmem:[%s299 + $0x38] sm:$0xf]
        %v351 = vld [vmem:[%s299 + $0x3c] sm:$0xf]
        %v352 = vld [vmem:[%s299 + $0x40] sm:$0xf]
        %v353 = vld [vmem:[%s299 + $0x44] sm:$0xf]
        %v354 = vld [vmem:[%s299 + $0x48] sm:$0xf]
        %v355 = vld [vmem:[%s299 + $0x4c] sm:$0xf]
        %v356 = vld [vmem:[%s299 + $0x50] sm:$0xf]
        %v357 = vld [vmem:[%s299 + $0x54] sm:$0xf]
        %v358 = vld [vmem:[%s299 + $0x58] sm:$0xf]
        %v359 = vld [vmem:[%s299 + $0x5c] sm:$0xf]
        %v360 = vld [vmem:[%s299 + $0x60] sm:$0xf]
        %v361 = vld [vmem:[%s299 + $0x64] sm:$0xf]
        %v362 = vld [vmem:[%s299 + $0x68] sm:$0xf]
        %v363 = vld [vmem:[%s299 + $0x6c] sm:$0xf]
        %v364 = vld [vmem:[%s299 + $0x70] sm:$0xf]
        %v365 = vld [vmem:[%s299 + $0x74] sm:$0xf]
        %v366 = vld [vmem:[%s299 + $0x78] sm:$0xf]
        %v367 = vld [vmem:[%s299 + $0x7c] sm:$0xf]
        %v368 = vunpack.c.l.bf16 %v336
        %v369 = vunpack.c.l.bf16 %v337
        %v370 = vunpack.c.l.bf16 %v338
        %v371 = vunpack.c.l.bf16 %v339
        %v372 = vunpack.c.l.bf16 %v340
        %v373 = vunpack.c.l.bf16 %v341
        %v374 = vunpack.c.l.bf16 %v342
        %v375 = vunpack.c.l.bf16 %v343
        %v376 = vunpack.c.l.bf16 %v344
        %v377 = vunpack.c.l.bf16 %v345
        %v378 = vunpack.c.l.bf16 %v346
        %v379 = vunpack.c.l.bf16 %v347
        %v380 = vunpack.c.l.bf16 %v348
        %v381 = vunpack.c.l.bf16 %v349
        %v382 = vunpack.c.l.bf16 %v350
        %v383 = vunpack.c.l.bf16 %v351
        %v384 = vunpack.c.l.bf16 %v352
        %v385 = vunpack.c.l.bf16 %v353
        %v386 = vunpack.c.l.bf16 %v354
        %v387 = vunpack.c.l.bf16 %v355
        %v388 = vunpack.c.l.bf16 %v356
        %v389 = vunpack.c.l.bf16 %v357
        %v390 = vunpack.c.l.bf16 %v358
        %v391 = vunpack.c.l.bf16 %v359
        %v392 = vunpack.c.l.bf16 %v360
        %v393 = vunpack.c.l.bf16 %v361
        %v394 = vunpack.c.l.bf16 %v362
        %v395 = vunpack.c.l.bf16 %v363
        %v396 = vunpack.c.l.bf16 %v364
        %v397 = vunpack.c.l.bf16 %v365
        %v398 = vunpack.c.l.bf16 %v366
        %v399 = vunpack.c.l.bf16 %v367
        %v400 = vld [vmem:[%s1] sm:$0x1]
        %v402 = vperm.slane %v400, 0
        %v404 = vmul.f32 %v368, %v402
        %v405 = vmul.f32 %v369, %v402
        %v406 = vmul.f32 %v370, %v402
        %v407 = vmul.f32 %v371, %v402
        %v408 = vmul.f32 %v372, %v402
        %v409 = vmul.f32 %v373, %v402
        %v410 = vmul.f32 %v374, %v402
        %v411 = vmul.f32 %v375, %v402
        %v412 = vmul.f32 %v376, %v402
        %v413 = vmul.f32 %v377, %v402
        %v414 = vmul.f32 %v378, %v402
        %v415 = vmul.f32 %v379, %v402
        %v416 = vmul.f32 %v380, %v402
        %v417 = vmul.f32 %v381, %v402
        %v418 = vmul.f32 %v382, %v402
        %v419 = vmul.f32 %v383, %v402
        %v420 = vmul.f32 %v384, %v402
        %v421 = vmul.f32 %v385, %v402
        %v422 = vmul.f32 %v386, %v402
        %v423 = vmul.f32 %v387, %v402
        %v424 = vmul.f32 %v388, %v402
        %v425 = vmul.f32 %v389, %v402
        %v426 = vmul.f32 %v390, %v402
        %v427 = vmul.f32 %v391, %v402
        %v428 = vmul.f32 %v392, %v402
        %v429 = vmul.f32 %v393, %v402
        %v430 = vmul.f32 %v394, %v402
        %v431 = vmul.f32 %v395, %v402
        %v432 = vmul.f32 %v396, %v402
        %v433 = vmul.f32 %v397, %v402
        %v434 = vmul.f32 %v398, %v402
        %v435 = vmul.f32 %v399, %v402
        %v436 = vld [vmem:[%s2] sm:$0x1]
        %v438 = vperm.slane %v436, 0
        %v440 = vadd.f32 %v404, %v438
        %v441 = vadd.f32 %v405, %v438
        %v442 = vadd.f32 %v406, %v438
        %v443 = vadd.f32 %v407, %v438
        %v444 = vadd.f32 %v408, %v438
        %v445 = vadd.f32 %v409, %v438
        %v446 = vadd.f32 %v410, %v438
        %v447 = vadd.f32 %v411, %v438
        %v448 = vadd.f32 %v412, %v438
        %v449 = vadd.f32 %v413, %v438
        %v450 = vadd.f32 %v414, %v438
        %v451 = vadd.f32 %v415, %v438
        %v452 = vadd.f32 %v416, %v438
        %v453 = vadd.f32 %v417, %v438
        %v454 = vadd.f32 %v418, %v438
        %v455 = vadd.f32 %v419, %v438
        %v456 = vadd.f32 %v420, %v438
        %v457 = vadd.f32 %v421, %v438
        %v458 = vadd.f32 %v422, %v438
        %v459 = vadd.f32 %v423, %v438
        %v460 = vadd.f32 %v424, %v438
        %v461 = vadd.f32 %v425, %v438
        %v462 = vadd.f32 %v426, %v438
        %v463 = vadd.f32 %v427, %v438
        %v464 = vadd.f32 %v428, %v438
        %v465 = vadd.f32 %v429, %v438
        %v466 = vadd.f32 %v430, %v438
        %v467 = vadd.f32 %v431, %v438
        %v468 = vadd.f32 %v432, %v438
        %v469 = vadd.f32 %v433, %v438
        %v470 = vadd.f32 %v434, %v438
        %v471 = vadd.f32 %v435, %v438
        %v472 = vmax.f32 %v440, 0.0
        %v473 = vmax.f32 %v441, 0.0
        %v474 = vmax.f32 %v442, 0.0
        %v475 = vmax.f32 %v443, 0.0
        %v476 = vmax.f32 %v444, 0.0
        %v477 = vmax.f32 %v445, 0.0
        %v478 = vmax.f32 %v446, 0.0
        %v479 = vmax.f32 %v447, 0.0
        %v480 = vmax.f32 %v448, 0.0
        %v481 = vmax.f32 %v449, 0.0
        %v482 = vmax.f32 %v450, 0.0
        %v483 = vmax.f32 %v451, 0.0
        %v484 = vmax.f32 %v452, 0.0
        %v485 = vmax.f32 %v453, 0.0
        %v486 = vmax.f32 %v454, 0.0
        %v487 = vmax.f32 %v455, 0.0
        %v488 = vmax.f32 %v456, 0.0
        %v489 = vmax.f32 %v457, 0.0
        %v490 = vmax.f32 %v458, 0.0
        %v491 = vmax.f32 %v459, 0.0
        %v492 = vmax.f32 %v460, 0.0
        %v493 = vmax.f32 %v461, 0.0
        %v494 = vmax.f32 %v462, 0.0
        %v495 = vmax.f32 %v463, 0.0
        %v496 = vmax.f32 %v464, 0.0
        %v497 = vmax.f32 %v465, 0.0
        %v498 = vmax.f32 %v466, 0.0
        %v499 = vmax.f32 %v467, 0.0
        %v500 = vmax.f32 %v468, 0.0
        %v501 = vmax.f32 %v469, 0.0
        %v502 = vmax.f32 %v470, 0.0
        %v503 = vmax.f32 %v471, 0.0
        %v504 = vpack.c.bf16 %v472, %v472
        %v505 = vpack.c.bf16 %v473, %v473
        %v506 = vpack.c.bf16 %v474, %v474
        %v507 = vpack.c.bf16 %v475, %v475
        %v508 = vpack.c.bf16 %v476, %v476
        %v509 = vpack.c.bf16 %v477, %v477
        %v510 = vpack.c.bf16 %v478, %v478
        %v511 = vpack.c.bf16 %v479, %v479
        %v512 = vpack.c.bf16 %v480, %v480
        %v513 = vpack.c.bf16 %v481, %v481
        %v514 = vpack.c.bf16 %v482, %v482
        %v515 = vpack.c.bf16 %v483, %v483
        %v516 = vpack.c.bf16 %v484, %v484
        %v517 = vpack.c.bf16 %v485, %v485
        %v518 = vpack.c.bf16 %v486, %v486
        %v519 = vpack.c.bf16 %v487, %v487
        %v520 = vpack.c.bf16 %v488, %v488
        %v521 = vpack.c.bf16 %v489, %v489
        %v522 = vpack.c.bf16 %v490, %v490
        %v523 = vpack.c.bf16 %v491, %v491
        %v524 = vpack.c.bf16 %v492, %v492
        %v525 = vpack.c.bf16 %v493, %v493
        %v526 = vpack.c.bf16 %v494, %v494
        %v527 = vpack.c.bf16 %v495, %v495
        %v528 = vpack.c.bf16 %v496, %v496
        %v529 = vpack.c.bf16 %v497, %v497
        %v530 = vpack.c.bf16 %v498, %v498
        %v531 = vpack.c.bf16 %v499, %v499
        %v532 = vpack.c.bf16 %v500, %v500
        %v533 = vpack.c.bf16 %v501, %v501
        %v534 = vpack.c.bf16 %v502, %v502
        %v535 = vpack.c.bf16 %v503, %v503
        %v568 = vunpack.c.l.b16 %v504
        %v569 = vunpack.c.l.b16 %v505
        %v570 = vunpack.c.l.b16 %v506
        %v571 = vunpack.c.l.b16 %v507
        %v572 = vunpack.c.l.b16 %v508
        %v573 = vunpack.c.l.b16 %v509
        %v574 = vunpack.c.l.b16 %v510
        %v575 = vunpack.c.l.b16 %v511
        %v576 = vunpack.c.l.b16 %v512
        %v577 = vunpack.c.l.b16 %v513
        %v578 = vunpack.c.l.b16 %v514
        %v579 = vunpack.c.l.b16 %v515
        %v580 = vunpack.c.l.b16 %v516
        %v581 = vunpack.c.l.b16 %v517
        %v582 = vunpack.c.l.b16 %v518
        %v583 = vunpack.c.l.b16 %v519
        %v584 = vunpack.c.l.b16 %v520
        %v585 = vunpack.c.l.b16 %v521
        %v586 = vunpack.c.l.b16 %v522
        %v587 = vunpack.c.l.b16 %v523
        %v588 = vunpack.c.l.b16 %v524
        %v589 = vunpack.c.l.b16 %v525
        %v590 = vunpack.c.l.b16 %v526
        %v591 = vunpack.c.l.b16 %v527
        %v592 = vunpack.c.l.b16 %v528
        %v593 = vunpack.c.l.b16 %v529
        %v594 = vunpack.c.l.b16 %v530
        %v595 = vunpack.c.l.b16 %v531
        %v596 = vunpack.c.l.b16 %v532
        %v597 = vunpack.c.l.b16 %v533
        %v598 = vunpack.c.l.b16 %v534
        %v599 = vunpack.c.l.b16 %v535
        %v600 = vpack.c.b16 %v569, %v568
        %v601 = vpack.c.b16 %v571, %v570
        %v602 = vpack.c.b16 %v573, %v572
        %v603 = vpack.c.b16 %v575, %v574
        %v604 = vpack.c.b16 %v577, %v576
        %v605 = vpack.c.b16 %v579, %v578
        %v606 = vpack.c.b16 %v581, %v580
        %v607 = vpack.c.b16 %v583, %v582
        %v608 = vpack.c.b16 %v585, %v584
        %v609 = vpack.c.b16 %v587, %v586
        %v610 = vpack.c.b16 %v589, %v588
        %v611 = vpack.c.b16 %v591, %v590
        %v612 = vpack.c.b16 %v593, %v592
        %v613 = vpack.c.b16 %v595, %v594
        %v614 = vpack.c.b16 %v597, %v596
        %v615 = vpack.c.b16 %v599, %v598
        %v617 = vshrl.u32 %v600, 16
        %v619 = vrot.slane %v617, 7
        %v620 = vshll.u32 %v600, 16
        %v622 = vor.u32 %v619, %v620
        %v624 = vshrl.u32 %v601, 16
        %v626 = vrot.slane %v624, 7
        %v627 = vshll.u32 %v601, 16
        %v629 = vor.u32 %v626, %v627
        %v631 = vshrl.u32 %v602, 16
        %v633 = vrot.slane %v631, 7
        %v634 = vshll.u32 %v602, 16
        %v636 = vor.u32 %v633, %v634
        %v638 = vshrl.u32 %v603, 16
        %v640 = vrot.slane %v638, 7
        %v641 = vshll.u32 %v603, 16
        %v643 = vor.u32 %v640, %v641
        %v645 = vshrl.u32 %v604, 16
        %v647 = vrot.slane %v645, 7
        %v648 = vshll.u32 %v604, 16
        %v650 = vor.u32 %v647, %v648
        %v652 = vshrl.u32 %v605, 16
        %v654 = vrot.slane %v652, 7
        %v655 = vshll.u32 %v605, 16
        %v657 = vor.u32 %v654, %v655
        %v659 = vshrl.u32 %v606, 16
        %v661 = vrot.slane %v659, 7
        %v662 = vshll.u32 %v606, 16
        %v664 = vor.u32 %v661, %v662
        %v666 = vshrl.u32 %v607, 16
        %v668 = vrot.slane %v666, 7
        %v669 = vshll.u32 %v607, 16
        %v671 = vor.u32 %v668, %v669
        %v673 = vshrl.u32 %v608, 16
        %v675 = vrot.slane %v673, 7
        %v676 = vshll.u32 %v608, 16
        %v678 = vor.u32 %v675, %v676
        %v680 = vshrl.u32 %v609, 16
        %v682 = vrot.slane %v680, 7
        %v683 = vshll.u32 %v609, 16
        %v685 = vor.u32 %v682, %v683
        %v687 = vshrl.u32 %v610, 16
        %v689 = vrot.slane %v687, 7
        %v690 = vshll.u32 %v610, 16
        %v692 = vor.u32 %v689, %v690
        %v694 = vshrl.u32 %v611, 16
        %v696 = vrot.slane %v694, 7
        %v697 = vshll.u32 %v611, 16
        %v699 = vor.u32 %v696, %v697
        %v701 = vshrl.u32 %v612, 16
        %v703 = vrot.slane %v701, 7
        %v704 = vshll.u32 %v612, 16
        %v706 = vor.u32 %v703, %v704
        %v708 = vshrl.u32 %v613, 16
        %v710 = vrot.slane %v708, 7
        %v711 = vshll.u32 %v613, 16
        %v713 = vor.u32 %v710, %v711
        %v715 = vshrl.u32 %v614, 16
        %v717 = vrot.slane %v715, 7
        %v718 = vshll.u32 %v614, 16
        %v720 = vor.u32 %v717, %v718
        %v722 = vshrl.u32 %v615, 16
        %v724 = vrot.slane %v722, 7
        %v725 = vshll.u32 %v615, 16
        %v727 = vor.u32 %v724, %v725
        %vm760 = vcmask 1040384
        %vm761 = vsmask.f32 256
        %vm762 = vmand %vm760, %vm761
        %v763 = vsel %vm762, 0, %v622
        %v764 = vsel %vm762, 0, %v629
        %v765 = vsel %vm762, 0, %v636
        %v766 = vsel %vm762, 0, %v643
        %v767 = vsel %vm762, 0, %v650
        %v768 = vsel %vm762, 0, %v657
        %v769 = vsel %vm762, 0, %v664
        %v770 = vsel %vm762, 0, %v671
        %v771 = vsel %vm762, 0, %v678
        %v772 = vsel %vm762, 0, %v685
        %v773 = vsel %vm762, 0, %v692
        %v774 = vsel %vm762, 0, %v699
        %v775 = vsel %vm762, 0, %v706
        %v776 = vsel %vm762, 0, %v713
        %v777 = vsel %vm762, 0, %v720
        %v778 = vsel %vm762, 0, %v727
        %v779 = vsel %vm762, %v619, 0
        %v780 = vsel %vm762, %v626, 0
        %v781 = vsel %vm762, %v633, 0
        %v782 = vsel %vm762, %v640, 0
        %v783 = vsel %vm762, %v647, 0
        %v784 = vsel %vm762, %v654, 0
        %v785 = vsel %vm762, %v661, 0
        %v786 = vsel %vm762, %v668, 0
        %v787 = vsel %vm762, %v675, 0
        %v788 = vsel %vm762, %v682, 0
        %v789 = vsel %vm762, %v689, 0
        %v790 = vsel %vm762, %v696, 0
        %v791 = vsel %vm762, %v703, 0
        %v792 = vsel %vm762, %v710, 0
        %v793 = vsel %vm762, %v717, 0
        %v794 = vsel %vm762, %v724, 0
        %v827 = vunpack.c.l.b16 %v763
        %v828 = vunpack.c.h.b16 %v763
        %v829 = vunpack.c.l.b16 %v779
        %v830 = vunpack.c.l.b16 %v764
        %v831 = vunpack.c.h.b16 %v764
        %v832 = vunpack.c.l.b16 %v780
        %v833 = vunpack.c.l.b16 %v765
        %v834 = vunpack.c.h.b16 %v765
        %v835 = vunpack.c.l.b16 %v781
        %v836 = vunpack.c.l.b16 %v766
        %v837 = vunpack.c.h.b16 %v766
        %v838 = vunpack.c.l.b16 %v782
        %v839 = vunpack.c.l.b16 %v767
        %v840 = vunpack.c.h.b16 %v767
        %v841 = vunpack.c.l.b16 %v783
        %v842 = vunpack.c.l.b16 %v768
        %v843 = vunpack.c.h.b16 %v768
        %v844 = vunpack.c.l.b16 %v784
        %v845 = vunpack.c.l.b16 %v769
        %v846 = vunpack.c.h.b16 %v769
        %v847 = vunpack.c.l.b16 %v785
        %v848 = vunpack.c.l.b16 %v770
        %v849 = vunpack.c.h.b16 %v770
        %v850 = vunpack.c.l.b16 %v786
        %v851 = vunpack.c.l.b16 %v771
        %v852 = vunpack.c.h.b16 %v771
        %v853 = vunpack.c.l.b16 %v787
        %v854 = vunpack.c.l.b16 %v772
        %v855 = vunpack.c.h.b16 %v772
        %v856 = vunpack.c.l.b16 %v788
        %v857 = vunpack.c.l.b16 %v773
        %v858 = vunpack.c.h.b16 %v773
        %v859 = vunpack.c.l.b16 %v789
        %v860 = vunpack.c.l.b16 %v774
        %v861 = vunpack.c.h.b16 %v774
        %v862 = vunpack.c.l.b16 %v790
        %v863 = vunpack.c.l.b16 %v775
        %v864 = vunpack.c.h.b16 %v775
        %v865 = vunpack.c.l.b16 %v791
        %v866 = vunpack.c.l.b16 %v776
        %v867 = vunpack.c.h.b16 %v776
        %v868 = vunpack.c.l.b16 %v792
        %v869 = vunpack.c.l.b16 %v777
        %v870 = vunpack.c.h.b16 %v777
        %v871 = vunpack.c.l.b16 %v793
        %v872 = vunpack.c.l.b16 %v778
        %v873 = vunpack.c.h.b16 %v778
        %v874 = vunpack.c.l.b16 %v794
        %v875 = vpack.c.b16 %v827, %v827
        %v876 = vpack.c.b16 %v828, %v828
        %v877 = vpack.c.b16 %v829, %v829
        %v878 = vpack.c.b16 %v830, %v830
        %v879 = vpack.c.b16 %v831, %v831
        %v880 = vpack.c.b16 %v832, %v832
        %v881 = vpack.c.b16 %v833, %v833
        %v882 = vpack.c.b16 %v834, %v834
        %v883 = vpack.c.b16 %v835, %v835
        %v884 = vpack.c.b16 %v836, %v836
        %v885 = vpack.c.b16 %v837, %v837
        %v886 = vpack.c.b16 %v838, %v838
        %v887 = vpack.c.b16 %v839, %v839
        %v888 = vpack.c.b16 %v840, %v840
        %v889 = vpack.c.b16 %v841, %v841
        %v890 = vpack.c.b16 %v842, %v842
        %v891 = vpack.c.b16 %v843, %v843
        %v892 = vpack.c.b16 %v844, %v844
        %v893 = vpack.c.b16 %v845, %v845
        %v894 = vpack.c.b16 %v846, %v846
        %v895 = vpack.c.b16 %v847, %v847
        %v896 = vpack.c.b16 %v848, %v848
        %v897 = vpack.c.b16 %v849, %v849
        %v898 = vpack.c.b16 %v850, %v850
        %v899 = vpack.c.b16 %v851, %v851
        %v900 = vpack.c.b16 %v852, %v852
        %v901 = vpack.c.b16 %v853, %v853
        %v902 = vpack.c.b16 %v854, %v854
        %v903 = vpack.c.b16 %v855, %v855
        %v904 = vpack.c.b16 %v856, %v856
        %v905 = vpack.c.b16 %v857, %v857
        %v906 = vpack.c.b16 %v858, %v858
        %v907 = vpack.c.b16 %v859, %v859
        %v908 = vpack.c.b16 %v860, %v860
        %v909 = vpack.c.b16 %v861, %v861
        %v910 = vpack.c.b16 %v862, %v862
        %v911 = vpack.c.b16 %v863, %v863
        %v912 = vpack.c.b16 %v864, %v864
        %v913 = vpack.c.b16 %v865, %v865
        %v914 = vpack.c.b16 %v866, %v866
        %v915 = vpack.c.b16 %v867, %v867
        %v916 = vpack.c.b16 %v868, %v868
        %v917 = vpack.c.b16 %v869, %v869
        %v918 = vpack.c.b16 %v870, %v870
        %v919 = vpack.c.b16 %v871, %v871
        %v920 = vpack.c.b16 %v872, %v872
        %v921 = vpack.c.b16 %v873, %v873
        %v922 = vpack.c.b16 %v874, %v874
        %s971 = scalar_lea.vmem [#allocation2], 12
        %972 = vst.msk [vmem:[%s971] sm:$0xf] %vm327, %v875
        %973 = vst.msk [vmem:[%s971 + $0x4] sm:$0xf] %vm327, %v876
        %974 = vst.msk [vmem:[%s971 + $0x8] sm:$0x1] %vm330, %v877
        %975 = vst.msk [vmem:[%s971 + $0xc] sm:$0xf] %vm327, %v878
        %976 = vst.msk [vmem:[%s971 + $0x10] sm:$0xf] %vm327, %v879
        %977 = vst.msk [vmem:[%s971 + $0x14] sm:$0x1] %vm330, %v880
        %978 = vst.msk [vmem:[%s971 + $0x18] sm:$0xf] %vm327, %v881
        %979 = vst.msk [vmem:[%s971 + $0x1c] sm:$0xf] %vm327, %v882
        %980 = vst.msk [vmem:[%s971 + $0x20] sm:$0x1] %vm330, %v883
        %981 = vst.msk [vmem:[%s971 + $0x24] sm:$0xf] %vm327, %v884
        %982 = vst.msk [vmem:[%s971 + $0x28] sm:$0xf] %vm327, %v885
        %983 = vst.msk [vmem:[%s971 + $0x2c] sm:$0x1] %vm330, %v886
        %984 = vst.msk [vmem:[%s971 + $0x30] sm:$0xf] %vm327, %v887
        %985 = vst.msk [vmem:[%s971 + $0x34] sm:$0xf] %vm327, %v888
        %986 = vst.msk [vmem:[%s971 + $0x38] sm:$0x1] %vm330, %v889
        %987 = vst.msk [vmem:[%s971 + $0x3c] sm:$0xf] %vm327, %v890
        %988 = vst.msk [vmem:[%s971 + $0x40] sm:$0xf] %vm327, %v891
        %989 = vst.msk [vmem:[%s971 + $0x44] sm:$0x1] %vm330, %v892
        %990 = vst.msk [vmem:[%s971 + $0x48] sm:$0xf] %vm327, %v893
        %991 = vst.msk [vmem:[%s971 + $0x4c] sm:$0xf] %vm327, %v894
        %992 = vst.msk [vmem:[%s971 + $0x50] sm:$0x1] %vm330, %v895
        %993 = vst.msk [vmem:[%s971 + $0x54] sm:$0xf] %vm327, %v896
        %994 = vst.msk [vmem:[%s971 + $0x58] sm:$0xf] %vm327, %v897
        %995 = vst.msk [vmem:[%s971 + $0x5c] sm:$0x1] %vm330, %v898
        %996 = vst.msk [vmem:[%s971 + $0x60] sm:$0xf] %vm327, %v899
        %997 = vst.msk [vmem:[%s971 + $0x64] sm:$0xf] %vm327, %v900
        %998 = vst.msk [vmem:[%s971 + $0x68] sm:$0x1] %vm330, %v901
        %999 = vst.msk [vmem:[%s971 + $0x6c] sm:$0xf] %vm327, %v902
        %1000 = vst.msk [vmem:[%s971 + $0x70] sm:$0xf] %vm327, %v903
        %1001 = vst.msk [vmem:[%s971 + $0x74] sm:$0x1] %vm330, %v904
        %1002 = vst.msk [vmem:[%s971 + $0x78] sm:$0xf] %vm327, %v905
        %1003 = vst.msk [vmem:[%s971 + $0x7c] sm:$0xf] %vm327, %v906
        %1004 = vst.msk [vmem:[%s971 + $0x80] sm:$0x1] %vm330, %v907
        %1005 = vst.msk [vmem:[%s971 + $0x84] sm:$0xf] %vm327, %v908
        %1006 = vst.msk [vmem:[%s971 + $0x88] sm:$0xf] %vm327, %v909
        %1007 = vst.msk [vmem:[%s971 + $0x8c] sm:$0x1] %vm330, %v910
        %1008 = vst.msk [vmem:[%s971 + $0x90] sm:$0xf] %vm327, %v911
        %1009 = vst.msk [vmem:[%s971 + $0x94] sm:$0xf] %vm327, %v912
        %1010 = vst.msk [vmem:[%s971 + $0x98] sm:$0x1] %vm330, %v913
        %1011 = vst.msk [vmem:[%s971 + $0x9c] sm:$0xf] %vm327, %v914
        %1012 = vst.msk [vmem:[%s971 + $0xa0] sm:$0xf] %vm327, %v915
        %1013 = vst.msk [vmem:[%s971 + $0xa4] sm:$0x1] %vm330, %v916
        %1014 = vst.msk [vmem:[%s971 + $0xa8] sm:$0xf] %vm327, %v917
        %1015 = vst.msk [vmem:[%s971 + $0xac] sm:$0xf] %vm327, %v918
        %1016 = vst.msk [vmem:[%s971 + $0xb0] sm:$0x1] %vm330, %v919
        %1017 = vst.msk [vmem:[%s971 + $0xb4] sm:$0xf] %vm327, %v920
        %1018 = vst.msk [vmem:[%s971 + $0xb8] sm:$0xf] %vm327, %v921
        %1019 = vst.msk [vmem:[%s971 + $0xbc] sm:$0x1] %vm330, %v922
      $region44: #{up_forward.4} parent=39 // pred_fallthru
        _
      %v1020 = vld [vmem:[#allocation2] sm:$0xf]
      %v1021 = vld [vmem:[#allocation2 + $0x4] sm:$0xf]
      %v1022 = vld [vmem:[#allocation2 + $0xc] sm:$0xf]
      %v1023 = vld [vmem:[#allocation2 + $0x10] sm:$0xf]
      %v1024 = vld [vmem:[#allocation2 + $0x18] sm:$0xf]
      %v1025 = vld [vmem:[#allocation2 + $0x1c] sm:$0xf]
      %v1026 = vld [vmem:[#allocation2 + $0x24] sm:$0xf]
      %v1027 = vld [vmem:[#allocation2 + $0x28] sm:$0xf]
      %v1028 = vld [vmem:[#allocation2 + $0x30] sm:$0xf]
      %v1029 = vld [vmem:[#allocation2 + $0x34] sm:$0xf]
      %v1030 = vld [vmem:[#allocation2 + $0x3c] sm:$0xf]
      %v1031 = vld [vmem:[#allocation2 + $0x40] sm:$0xf]
      %v1032 = vld [vmem:[#allocation2 + $0x48] sm:$0xf]
      %v1033 = vld [vmem:[#allocation2 + $0x4c] sm:$0xf]
      %v1034 = vld [vmem:[#allocation2 + $0x54] sm:$0xf]
      %v1035 = vld [vmem:[#allocation2 + $0x58] sm:$0xf]
      %v1036 = vld [vmem:[#allocation2 + $0x60] sm:$0xf]
      %v1037 = vld [vmem:[#allocation2 + $0x64] sm:$0xf]
      %v1038 = vld [vmem:[#allocation2 + $0x6c] sm:$0xf]
      %v1039 = vld [vmem:[#allocation2 + $0x70] sm:$0xf]
      %v1040 = vld [vmem:[#allocation2 + $0x78] sm:$0xf]
      %v1041 = vld [vmem:[#allocation2 + $0x7c] sm:$0xf]
      %v1042 = vld [vmem:[#allocation2 + $0x84] sm:$0xf]
      %v1043 = vld [vmem:[#allocation2 + $0x88] sm:$0xf]
      %v1044 = vld [vmem:[#allocation2 + $0x90] sm:$0xf]
      %v1045 = vld [vmem:[#allocation2 + $0x94] sm:$0xf]
      %v1046 = vld [vmem:[#allocation2 + $0x9c] sm:$0xf]
      %v1047 = vld [vmem:[#allocation2 + $0xa0] sm:$0xf]
      %v1048 = vld [vmem:[#allocation2 + $0xa8] sm:$0xf]
      %v1049 = vld [vmem:[#allocation2 + $0xac] sm:$0xf]
      %v1050 = vld [vmem:[#allocation2 + $0xb4] sm:$0xf]
      %v1051 = vld [vmem:[#allocation2 + $0xb8] sm:$0xf]
      %v1052 = vld [vmem:[%s303] sm:$0xf]
      %v1053 = vld [vmem:[#allocation2 + $0x8] sm:$0x1]
      %v1054 = vld [vmem:[#allocation2 + $0x14] sm:$0x1]
      %v1055 = vld [vmem:[#allocation2 + $0x20] sm:$0x1]
      %v1056 = vld [vmem:[#allocation2 + $0x2c] sm:$0x1]
      %v1057 = vld [vmem:[#allocation2 + $0x38] sm:$0x1]
      %v1058 = vld [vmem:[#allocation2 + $0x44] sm:$0x1]
      %v1059 = vld [vmem:[#allocation2 + $0x50] sm:$0x1]
      %v1060 = vld [vmem:[#allocation2 + $0x5c] sm:$0x1]
      %v1061 = vld [vmem:[#allocation2 + $0x68] sm:$0x1]
      %v1062 = vld [vmem:[#allocation2 + $0x74] sm:$0x1]
      %v1063 = vld [vmem:[#allocation2 + $0x80] sm:$0x1]
      %v1064 = vld [vmem:[#allocation2 + $0x8c] sm:$0x1]
      %v1065 = vld [vmem:[#allocation2 + $0x98] sm:$0x1]
      %v1066 = vld [vmem:[#allocation2 + $0xa4] sm:$0x1]
      %v1067 = vld [vmem:[#allocation2 + $0xb0] sm:$0x1]
      %v1068 = vld [vmem:[#allocation2 + $0xbc] sm:$0x1]
      %vm1069 = vsmask.f32 3328
      %vm1070 = vsmask.f32 7440
      %vm1071 = vmor %vm1069, %vm1070
      %v1073 = vshrl.u32 %v1020, 16
      %v1075 = vrot.slane %v1073, 4
      %v1076 = vshll.u32 %v1020, 16
      %v1078 = vrot.slane %v1076, 5
      %v1079 = vor.u32 %v1075, %v1078
      %v1080 = vrot.slane %v1079, 4
      %v1082 = vshll.u32 %v1021, 16
      %v1084 = vrot.slane %v1082, 5
      %v1085 = vsel %vm1071, %v1080, %v1084
      %v1086 = vshrl.u32 %v1021, 16
      %v1088 = vrot.slane %v1086, 4
      %v1089 = vor.u32 %v1088, %v1084
      %v1090 = vrot.slane %v1089, 4
      %v1092 = vshll.u32 %v1053, 16
      %v1094 = vrot.slane %v1092, 5
      %v1095 = vsel %vm1071, %v1090, %v1094
      %v1097 = vshrl.u32 %v1022, 16
      %v1099 = vrot.slane %v1097, 4
      %v1100 = vshll.u32 %v1022, 16
      %v1102 = vrot.slane %v1100, 5
      %v1103 = vor.u32 %v1099, %v1102
      %v1104 = vrot.slane %v1103, 4
      %v1106 = vshll.u32 %v1023, 16
      %v1108 = vrot.slane %v1106, 5
      %v1109 = vsel %vm1071, %v1104, %v1108
      %v1110 = vshrl.u32 %v1023, 16
      %v1112 = vrot.slane %v1110, 4
      %v1113 = vor.u32 %v1112, %v1108
      %v1114 = vrot.slane %v1113, 4
      %v1116 = vshll.u32 %v1054, 16
      %v1118 = vrot.slane %v1116, 5
      %v1119 = vsel %vm1071, %v1114, %v1118
      %v1121 = vshrl.u32 %v1024, 16
      %v1123 = vrot.slane %v1121, 4
      %v1124 = vshll.u32 %v1024, 16
      %v1126 = vrot.slane %v1124, 5
      %v1127 = vor.u32 %v1123, %v1126
      %v1128 = vrot.slane %v1127, 4
      %v1130 = vshll.u32 %v1025, 16
      %v1132 = vrot.slane %v1130, 5
      %v1133 = vsel %vm1071, %v1128, %v1132
      %v1134 = vshrl.u32 %v1025, 16
      %v1136 = vrot.slane %v1134, 4
      %v1137 = vor.u32 %v1136, %v1132
      %v1138 = vrot.slane %v1137, 4
      %v1140 = vshll.u32 %v1055, 16
      %v1142 = vrot.slane %v1140, 5
      %v1143 = vsel %vm1071, %v1138, %v1142
      %v1145 = vshrl.u32 %v1026, 16
      %v1147 = vrot.slane %v1145, 4
      %v1148 = vshll.u32 %v1026, 16
      %v1150 = vrot.slane %v1148, 5
      %v1151 = vor.u32 %v1147, %v1150
      %v1152 = vrot.slane %v1151, 4
      %v1154 = vshll.u32 %v1027, 16
      %v1156 = vrot.slane %v1154, 5
      %v1157 = vsel %vm1071, %v1152, %v1156
      %v1158 = vshrl.u32 %v1027, 16
      %v1160 = vrot.slane %v1158, 4
      %v1161 = vor.u32 %v1160, %v1156
      %v1162 = vrot.slane %v1161, 4
      %v1164 = vshll.u32 %v1056, 16
      %v1166 = vrot.slane %v1164, 5
      %v1167 = vsel %vm1071, %v1162, %v1166
      %v1169 = vshrl.u32 %v1028, 16
      %v1171 = vrot.slane %v1169, 4
      %v1172 = vshll.u32 %v1028, 16
      %v1174 = vrot.slane %v1172, 5
      %v1175 = vor.u32 %v1171, %v1174
      %v1176 = vrot.slane %v1175, 4
      %v1178 = vshll.u32 %v1029, 16
      %v1180 = vrot.slane %v1178, 5
      %v1181 = vsel %vm1071, %v1176, %v1180
      %v1182 = vshrl.u32 %v1029, 16
      %v1184 = vrot.slane %v1182, 4
      %v1185 = vor.u32 %v1184, %v1180
      %v1186 = vrot.slane %v1185, 4
      %v1188 = vshll.u32 %v1057, 16
      %v1190 = vrot.slane %v1188, 5
      %v1191 = vsel %vm1071, %v1186, %v1190
      %v1193 = vshrl.u32 %v1030, 16
      %v1195 = vrot.slane %v1193, 4
      %v1196 = vshll.u32 %v1030, 16
      %v1198 = vrot.slane %v1196, 5
      %v1199 = vor.u32 %v1195, %v1198
      %v1200 = vrot.slane %v1199, 4
      %v1202 = vshll.u32 %v1031, 16
      %v1204 = vrot.slane %v1202, 5
      %v1205 = vsel %vm1071, %v1200, %v1204
      %v1206 = vshrl.u32 %v1031, 16
      %v1208 = vrot.slane %v1206, 4
      %v1209 = vor.u32 %v1208, %v1204
      %v1210 = vrot.slane %v1209, 4
      %v1212 = vshll.u32 %v1058, 16
      %v1214 = vrot.slane %v1212, 5
      %v1215 = vsel %vm1071, %v1210, %v1214
      %v1217 = vshrl.u32 %v1032, 16
      %v1219 = vrot.slane %v1217, 4
      %v1220 = vshll.u32 %v1032, 16
      %v1222 = vrot.slane %v1220, 5
      %v1223 = vor.u32 %v1219, %v1222
      %v1224 = vrot.slane %v1223, 4
      %v1226 = vshll.u32 %v1033, 16
      %v1228 = vrot.slane %v1226, 5
      %v1229 = vsel %vm1071, %v1224, %v1228
      %v1230 = vshrl.u32 %v1033, 16
      %v1232 = vrot.slane %v1230, 4
      %v1233 = vor.u32 %v1232, %v1228
      %v1234 = vrot.slane %v1233, 4
      %v1236 = vshll.u32 %v1059, 16
      %v1238 = vrot.slane %v1236, 5
      %v1239 = vsel %vm1071, %v1234, %v1238
      %v1241 = vshrl.u32 %v1034, 16
      %v1243 = vrot.slane %v1241, 4
      %v1244 = vshll.u32 %v1034, 16
      %v1246 = vrot.slane %v1244, 5
      %v1247 = vor.u32 %v1243, %v1246
      %v1248 = vrot.slane %v1247, 4
      %v1250 = vshll.u32 %v1035, 16
      %v1252 = vrot.slane %v1250, 5
      %v1253 = vsel %vm1071, %v1248, %v1252
      %v1254 = vshrl.u32 %v1035, 16
      %v1256 = vrot.slane %v1254, 4
      %v1257 = vor.u32 %v1256, %v1252
      %v1258 = vrot.slane %v1257, 4
      %v1260 = vshll.u32 %v1060, 16
      %v1262 = vrot.slane %v1260, 5
      %v1263 = vsel %vm1071, %v1258, %v1262
      %v1265 = vshrl.u32 %v1036, 16
      %v1267 = vrot.slane %v1265, 4
      %v1268 = vshll.u32 %v1036, 16
      %v1270 = vrot.slane %v1268, 5
      %v1271 = vor.u32 %v1267, %v1270
      %v1272 = vrot.slane %v1271, 4
      %v1274 = vshll.u32 %v1037, 16
      %v1276 = vrot.slane %v1274, 5
      %v1277 = vsel %vm1071, %v1272, %v1276
      %v1278 = vshrl.u32 %v1037, 16
      %v1280 = vrot.slane %v1278, 4
      %v1281 = vor.u32 %v1280, %v1276
      %v1282 = vrot.slane %v1281, 4
      %v1284 = vshll.u32 %v1061, 16
      %v1286 = vrot.slane %v1284, 5
      %v1287 = vsel %vm1071, %v1282, %v1286
      %v1289 = vshrl.u32 %v1038, 16
      %v1291 = vrot.slane %v1289, 4
      %v1292 = vshll.u32 %v1038, 16
      %v1294 = vrot.slane %v1292, 5
      %v1295 = vor.u32 %v1291, %v1294
      %v1296 = vrot.slane %v1295, 4
      %v1298 = vshll.u32 %v1039, 16
      %v1300 = vrot.slane %v1298, 5
      %v1301 = vsel %vm1071, %v1296, %v1300
      %v1302 = vshrl.u32 %v1039, 16
      %v1304 = vrot.slane %v1302, 4
      %v1305 = vor.u32 %v1304, %v1300
      %v1306 = vrot.slane %v1305, 4
      %v1308 = vshll.u32 %v1062, 16
      %v1310 = vrot.slane %v1308, 5
      %v1311 = vsel %vm1071, %v1306, %v1310
      %v1313 = vshrl.u32 %v1040, 16
      %v1315 = vrot.slane %v1313, 4
      %v1316 = vshll.u32 %v1040, 16
      %v1318 = vrot.slane %v1316, 5
      %v1319 = vor.u32 %v1315, %v1318
      %v1320 = vrot.slane %v1319, 4
      %v1322 = vshll.u32 %v1041, 16
      %v1324 = vrot.slane %v1322, 5
      %v1325 = vsel %vm1071, %v1320, %v1324
      %v1326 = vshrl.u32 %v1041, 16
      %v1328 = vrot.slane %v1326, 4
      %v1329 = vor.u32 %v1328, %v1324
      %v1330 = vrot.slane %v1329, 4
      %v1332 = vshll.u32 %v1063, 16
      %v1334 = vrot.slane %v1332, 5
      %v1335 = vsel %vm1071, %v1330, %v1334
      %v1337 = vshrl.u32 %v1042, 16
      %v1339 = vrot.slane %v1337, 4
      %v1340 = vshll.u32 %v1042, 16
      %v1342 = vrot.slane %v1340, 5
      %v1343 = vor.u32 %v1339, %v1342
      %v1344 = vrot.slane %v1343, 4
      %v1346 = vshll.u32 %v1043, 16
      %v1348 = vrot.slane %v1346, 5
      %v1349 = vsel %vm1071, %v1344, %v1348
      %v1350 = vshrl.u32 %v1043, 16
      %v1352 = vrot.slane %v1350, 4
      %v1353 = vor.u32 %v1352, %v1348
      %v1354 = vrot.slane %v1353, 4
      %v1356 = vshll.u32 %v1064, 16
      %v1358 = vrot.slane %v1356, 5
      %v1359 = vsel %vm1071, %v1354, %v1358
      %v1361 = vshrl.u32 %v1044, 16
      %v1363 = vrot.slane %v1361, 4
      %v1364 = vshll.u32 %v1044, 16
      %v1366 = vrot.slane %v1364, 5
      %v1367 = vor.u32 %v1363, %v1366
      %v1368 = vrot.slane %v1367, 4
      %v1370 = vshll.u32 %v1045, 16
      %v1372 = vrot.slane %v1370, 5
      %v1373 = vsel %vm1071, %v1368, %v1372
      %v1374 = vshrl.u32 %v1045, 16
      %v1376 = vrot.slane %v1374, 4
      %v1377 = vor.u32 %v1376, %v1372
      %v1378 = vrot.slane %v1377, 4
      %v1380 = vshll.u32 %v1065, 16
      %v1382 = vrot.slane %v1380, 5
      %v1383 = vsel %vm1071, %v1378, %v1382
      %v1385 = vshrl.u32 %v1046, 16
      %v1387 = vrot.slane %v1385, 4
      %v1388 = vshll.u32 %v1046, 16
      %v1390 = vrot.slane %v1388, 5
      %v1391 = vor.u32 %v1387, %v1390
      %v1392 = vrot.slane %v1391, 4
      %v1394 = vshll.u32 %v1047, 16
      %v1396 = vrot.slane %v1394, 5
      %v1397 = vsel %vm1071, %v1392, %v1396
      %v1398 = vshrl.u32 %v1047, 16
      %v1400 = vrot.slane %v1398, 4
      %v1401 = vor.u32 %v1400, %v1396
      %v1402 = vrot.slane %v1401, 4
      %v1404 = vshll.u32 %v1066, 16
      %v1406 = vrot.slane %v1404, 5
      %v1407 = vsel %vm1071, %v1402, %v1406
      %v1409 = vshrl.u32 %v1048, 16
      %v1411 = vrot.slane %v1409, 4
      %v1412 = vshll.u32 %v1048, 16
      %v1414 = vrot.slane %v1412, 5
      %v1415 = vor.u32 %v1411, %v1414
      %v1416 = vrot.slane %v1415, 4
      %v1418 = vshll.u32 %v1049, 16
      %v1420 = vrot.slane %v1418, 5
      %v1421 = vsel %vm1071, %v1416, %v1420
      %v1422 = vshrl.u32 %v1049, 16
      %v1424 = vrot.slane %v1422, 4
      %v1425 = vor.u32 %v1424, %v1420
      %v1426 = vrot.slane %v1425, 4
      %v1428 = vshll.u32 %v1067, 16
      %v1430 = vrot.slane %v1428, 5
      %v1431 = vsel %vm1071, %v1426, %v1430
      %v1433 = vshrl.u32 %v1050, 16
      %v1435 = vrot.slane %v1433, 4
      %v1436 = vshll.u32 %v1050, 16
      %v1438 = vrot.slane %v1436, 5
      %v1439 = vor.u32 %v1435, %v1438
      %v1440 = vrot.slane %v1439, 4
      %v1442 = vshll.u32 %v1051, 16
      %v1444 = vrot.slane %v1442, 5
      %v1445 = vsel %vm1071, %v1440, %v1444
      %v1446 = vshrl.u32 %v1051, 16
      %v1448 = vrot.slane %v1446, 4
      %v1449 = vor.u32 %v1448, %v1444
      %v1450 = vrot.slane %v1449, 4
      %v1452 = vshll.u32 %v1068, 16
      %v1454 = vrot.slane %v1452, 5
      %v1455 = vsel %vm1071, %v1450, %v1454
      %v1456 = vld [vmem:[%s303 + $0x4] sm:$0xf]
      %v1457 = vunpack.c.l.b16 %v1085
      %v1458 = vunpack.c.l.b16 %v1095
      %v1459 = vunpack.c.l.b16 %v1109
      %v1460 = vunpack.c.l.b16 %v1119
      %v1461 = vunpack.c.l.b16 %v1133
      %v1462 = vunpack.c.l.b16 %v1143
      %v1463 = vunpack.c.l.b16 %v1157
      %v1464 = vunpack.c.l.b16 %v1167
      %v1465 = vunpack.c.l.b16 %v1181
      %v1466 = vunpack.c.l.b16 %v1191
      %v1467 = vunpack.c.l.b16 %v1205
      %v1468 = vunpack.c.l.b16 %v1215
      %v1469 = vunpack.c.l.b16 %v1229
      %v1470 = vunpack.c.l.b16 %v1239
      %v1471 = vunpack.c.l.b16 %v1253
      %v1472 = vunpack.c.l.b16 %v1263
      %v1473 = vunpack.c.l.b16 %v1277
      %v1474 = vunpack.c.l.b16 %v1287
      %v1475 = vunpack.c.l.b16 %v1301
      %v1476 = vunpack.c.l.b16 %v1311
      %v1477 = vunpack.c.l.b16 %v1325
      %v1478 = vunpack.c.l.b16 %v1335
      %v1479 = vunpack.c.l.b16 %v1349
      %v1480 = vunpack.c.l.b16 %v1359
      %v1481 = vunpack.c.l.b16 %v1373
      %v1482 = vunpack.c.l.b16 %v1383
      %v1483 = vunpack.c.l.b16 %v1397
      %v1484 = vunpack.c.l.b16 %v1407
      %v1485 = vunpack.c.l.b16 %v1421
      %v1486 = vunpack.c.l.b16 %v1431
      %v1487 = vunpack.c.l.b16 %v1445
      %v1488 = vunpack.c.l.b16 %v1455
      %v1489 = vpack.c.b16 %v1458, %v1457
      %v1490 = vpack.c.b16 %v1460, %v1459
      %v1491 = vpack.c.b16 %v1462, %v1461
      %v1492 = vpack.c.b16 %v1464, %v1463
      %v1493 = vpack.c.b16 %v1466, %v1465
      %v1494 = vpack.c.b16 %v1468, %v1467
      %v1495 = vpack.c.b16 %v1470, %v1469
      %v1496 = vpack.c.b16 %v1472, %v1471
      %v1497 = vpack.c.b16 %v1474, %v1473
      %v1498 = vpack.c.b16 %v1476, %v1475
      %v1499 = vpack.c.b16 %v1478, %v1477
      %v1500 = vpack.c.b16 %v1480, %v1479
      %v1501 = vpack.c.b16 %v1482, %v1481
      %v1502 = vpack.c.b16 %v1484, %v1483
      %v1503 = vpack.c.b16 %v1486, %v1485
      %v1504 = vpack.c.b16 %v1488, %v1487
      %vm1505 = vcmask 64512
      %v1507 = vsel %vm1505, %v1489, 0
      %v1510 = vsel %vm1505, %v1490, 0
      %v1513 = vsel %vm1505, %v1491, 0
      %v1516 = vsel %vm1505, %v1492, 0
      %v1519 = vsel %vm1505, %v1493, 0
      %v1522 = vsel %vm1505, %v1494, 0
      %v1525 = vsel %vm1505, %v1495, 0
      %v1528 = vsel %vm1505, %v1496, 0
      %v1531 = vsel %vm1505, %v1497, 0
      %v1534 = vsel %vm1505, %v1498, 0
      %v1537 = vsel %vm1505, %v1499, 0
      %v1540 = vsel %vm1505, %v1500, 0
      %v1543 = vsel %vm1505, %v1501, 0
      %v1546 = vsel %vm1505, %v1502, 0
      %v1549 = vsel %vm1505, %v1503, 0
      %v1552 = vsel %vm1505, %v1504, 0
      %vm1554 = vcmask 1043456
      %v1556 = vsel %vm1554, %v1456, 0
      %1558 = vmatpush.bf16.msra.mxu0 0
      %1559 = vmatpush.bf16.msra.mxu0 0
      %1560 = vmatpush.bf16.msra.mxu0 0
      %1561 = vmatpush.bf16.msra.mxu0 0
      %1562 = vmatpush.bf16.msra.mxu0 0
      %1563 = vmatpush.bf16.msra.mxu0 0
      %1564 = vmatpush.bf16.msra.mxu0 0
      %1565 = vmatpush.bf16.msra.mxu0 %v1556
      %1566 = vmatmul.bf16.gmra.mxu0 %v1507
      %v1567 = vpop.f32.mrf.mxu0
      %v1568 = vadd.f32 0.0, %v1567
      %v1569 = vpop.f32.mrf.mxu0
      %v1570 = vadd.f32 0.0, %v1569
      %1571 = vmatmul.bf16.gmra.mxu0 %v1510
      %v1572 = vpop.f32.mrf.mxu0
      %v1573 = vadd.f32 0.0, %v1572
      %v1574 = vpop.f32.mrf.mxu0
      %v1575 = vadd.f32 0.0, %v1574
      %1576 = vmatmul.bf16.gmra.mxu0 %v1513
      %v1577 = vpop.f32.mrf.mxu0
      %v1578 = vadd.f32 0.0, %v1577
      %v1579 = vpop.f32.mrf.mxu0
      %v1580 = vadd.f32 0.0, %v1579
      %1581 = vmatmul.bf16.gmra.mxu0 %v1516
      %v1582 = vpop.f32.mrf.mxu0
      %v1583 = vadd.f32 0.0, %v1582
      %v1584 = vpop.f32.mrf.mxu0
      %v1585 = vadd.f32 0.0, %v1584
      %1586 = vmatmul.bf16.gmra.mxu0 %v1519
      %v1587 = vpop.f32.mrf.mxu0
      %v1588 = vadd.f32 0.0, %v1587
      %v1589 = vpop.f32.mrf.mxu0
      %v1590 = vadd.f32 0.0, %v1589
      %1591 = vmatmul.bf16.gmra.mxu0 %v1522
      %v1592 = vpop.f32.mrf.mxu0
      %v1593 = vadd.f32 0.0, %v1592
      %v1594 = vpop.f32.mrf.mxu0
      %v1595 = vadd.f32 0.0, %v1594
      %1596 = vmatmul.bf16.gmra.mxu0 %v1525
      %v1597 = vpop.f32.mrf.mxu0
      %v1598 = vadd.f32 0.0, %v1597
      %v1599 = vpop.f32.mrf.mxu0
      %v1600 = vadd.f32 0.0, %v1599
      %1601 = vmatmul.bf16.gmra.mxu0 %v1528
      %v1602 = vpop.f32.mrf.mxu0
      %v1603 = vadd.f32 0.0, %v1602
      %v1604 = vpop.f32.mrf.mxu0
      %v1605 = vadd.f32 0.0, %v1604
      %1606 = vmatmul.bf16.gmra.mxu0 %v1531
      %v1607 = vpop.f32.mrf.mxu0
      %v1608 = vadd.f32 0.0, %v1607
      %v1609 = vpop.f32.mrf.mxu0
      %v1610 = vadd.f32 0.0, %v1609
      %1611 = vmatmul.bf16.gmra.mxu0 %v1534
      %v1612 = vpop.f32.mrf.mxu0
      %v1613 = vadd.f32 0.0, %v1612
      %v1614 = vpop.f32.mrf.mxu0
      %v1615 = vadd.f32 0.0, %v1614
      %1616 = vmatmul.bf16.gmra.mxu0 %v1537
      %v1617 = vpop.f32.mrf.mxu0
      %v1618 = vadd.f32 0.0, %v1617
      %v1619 = vpop.f32.mrf.mxu0
      %v1620 = vadd.f32 0.0, %v1619
      %1621 = vmatmul.bf16.gmra.mxu0 %v1540
      %v1622 = vpop.f32.mrf.mxu0
      %v1623 = vadd.f32 0.0, %v1622
      %v1624 = vpop.f32.mrf.mxu0
      %v1625 = vadd.f32 0.0, %v1624
      %1626 = vmatmul.bf16.gmra.mxu0 %v1543
      %v1627 = vpop.f32.mrf.mxu0
      %v1628 = vadd.f32 0.0, %v1627
      %v1629 = vpop.f32.mrf.mxu0
      %v1630 = vadd.f32 0.0, %v1629
      %1631 = vmatmul.bf16.gmra.mxu0 %v1546
      %v1632 = vpop.f32.mrf.mxu0
      %v1633 = vadd.f32 0.0, %v1632
      %v1634 = vpop.f32.mrf.mxu0
      %v1635 = vadd.f32 0.0, %v1634
      %1636 = vmatmul.bf16.gmra.mxu0 %v1549
      %v1637 = vpop.f32.mrf.mxu0
      %v1638 = vadd.f32 0.0, %v1637
      %v1639 = vpop.f32.mrf.mxu0
      %v1640 = vadd.f32 0.0, %v1639
      %1641 = vmatmul.bf16.gmra.mxu0 %v1552
      %v1642 = vpop.f32.mrf.mxu0
      %v1643 = vadd.f32 0.0, %v1642
      %v1644 = vpop.f32.mrf.mxu0
      %v1645 = vadd.f32 0.0, %v1644
      %1646 = vdwg.mxu0
      %v1679 = vunpack.c.l.b16 %v1020
      %v1680 = vunpack.c.l.b16 %v1021
      %v1681 = vunpack.c.l.b16 %v1022
      %v1682 = vunpack.c.l.b16 %v1023
      %v1683 = vunpack.c.l.b16 %v1024
      %v1684 = vunpack.c.l.b16 %v1025
      %v1685 = vunpack.c.l.b16 %v1026
      %v1686 = vunpack.c.l.b16 %v1027
      %v1687 = vunpack.c.l.b16 %v1028
      %v1688 = vunpack.c.l.b16 %v1029
      %v1689 = vunpack.c.l.b16 %v1030
      %v1690 = vunpack.c.l.b16 %v1031
      %v1691 = vunpack.c.l.b16 %v1032
      %v1692 = vunpack.c.l.b16 %v1033
      %v1693 = vunpack.c.l.b16 %v1034
      %v1694 = vunpack.c.l.b16 %v1035
      %v1695 = vunpack.c.l.b16 %v1036
      %v1696 = vunpack.c.l.b16 %v1037
      %v1697 = vunpack.c.l.b16 %v1038
      %v1698 = vunpack.c.l.b16 %v1039
      %v1699 = vunpack.c.l.b16 %v1040
      %v1700 = vunpack.c.l.b16 %v1041
      %v1701 = vunpack.c.l.b16 %v1042
      %v1702 = vunpack.c.l.b16 %v1043
      %v1703 = vunpack.c.l.b16 %v1044
      %v1704 = vunpack.c.l.b16 %v1045
      %v1705 = vunpack.c.l.b16 %v1046
      %v1706 = vunpack.c.l.b16 %v1047
      %v1707 = vunpack.c.l.b16 %v1048
      %v1708 = vunpack.c.l.b16 %v1049
      %v1709 = vunpack.c.l.b16 %v1050
      %v1710 = vunpack.c.l.b16 %v1051
      %v1711 = vpack.c.b16 %v1680, %v1679
      %v1712 = vpack.c.b16 %v1682, %v1681
      %v1713 = vpack.c.b16 %v1684, %v1683
      %v1714 = vpack.c.b16 %v1686, %v1685
      %v1715 = vpack.c.b16 %v1688, %v1687
      %v1716 = vpack.c.b16 %v1690, %v1689
      %v1717 = vpack.c.b16 %v1692, %v1691
      %v1718 = vpack.c.b16 %v1694, %v1693
      %v1719 = vpack.c.b16 %v1696, %v1695
      %v1720 = vpack.c.b16 %v1698, %v1697
      %v1721 = vpack.c.b16 %v1700, %v1699
      %v1722 = vpack.c.b16 %v1702, %v1701
      %v1723 = vpack.c.b16 %v1704, %v1703
      %v1724 = vpack.c.b16 %v1706, %v1705
      %v1725 = vpack.c.b16 %v1708, %v1707
      %v1726 = vpack.c.b16 %v1710, %v1709
      %v1728 = vsel %vm1505, %v1711, 0
      %v1731 = vsel %vm1505, %v1712, 0
      %v1734 = vsel %vm1505, %v1713, 0
      %v1737 = vsel %vm1505, %v1714, 0
      %v1740 = vsel %vm1505, %v1715, 0
      %v1743 = vsel %vm1505, %v1716, 0
      %v1746 = vsel %vm1505, %v1717, 0
      %v1749 = vsel %vm1505, %v1718, 0
      %v1752 = vsel %vm1505, %v1719, 0
      %v1755 = vsel %vm1505, %v1720, 0
      %v1758 = vsel %vm1505, %v1721, 0
      %v1761 = vsel %vm1505, %v1722, 0
      %v1764 = vsel %vm1505, %v1723, 0
      %v1767 = vsel %vm1505, %v1724, 0
      %v1770 = vsel %vm1505, %v1725, 0
      %v1773 = vsel %vm1505, %v1726, 0
      %v1776 = vsel %vm1554, %v1052, 0
      %1778 = vmatpush.bf16.msra.mxu0 0
      %1779 = vmatpush.bf16.msra.mxu0 0
      %1780 = vmatpush.bf16.msra.mxu0 0
      %1781 = vmatpush.bf16.msra.mxu0 0
      %1782 = vmatpush.bf16.msra.mxu0 0
      %1783 = vmatpush.bf16.msra.mxu0 0
      %1784 = vmatpush.bf16.msra.mxu0 0
      %1785 = vmatpush.bf16.msra.mxu0 %v1776
      %1786 = vmatmul.bf16.gmra.mxu0 %v1728
      %v1787 = vpop.f32.mrf.mxu0
      %v1788 = vadd.f32 %v1568, %v1787
      %v1789 = vpop.f32.mrf.mxu0
      %v1790 = vadd.f32 %v1570, %v1789
      %1791 = vmatmul.bf16.gmra.mxu0 %v1731
      %v1792 = vpop.f32.mrf.mxu0
      %v1793 = vadd.f32 %v1573, %v1792
      %v1794 = vpop.f32.mrf.mxu0
      %v1795 = vadd.f32 %v1575, %v1794
      %1796 = vmatmul.bf16.gmra.mxu0 %v1734
      %v1797 = vpop.f32.mrf.mxu0
      %v1798 = vadd.f32 %v1578, %v1797
      %v1799 = vpop.f32.mrf.mxu0
      %v1800 = vadd.f32 %v1580, %v1799
      %1801 = vmatmul.bf16.gmra.mxu0 %v1737
      %v1802 = vpop.f32.mrf.mxu0
      %v1803 = vadd.f32 %v1583, %v1802
      %v1804 = vpop.f32.mrf.mxu0
      %v1805 = vadd.f32 %v1585, %v1804
      %1806 = vmatmul.bf16.gmra.mxu0 %v1740
      %v1807 = vpop.f32.mrf.mxu0
      %v1808 = vadd.f32 %v1588, %v1807
      %v1809 = vpop.f32.mrf.mxu0
      %v1810 = vadd.f32 %v1590, %v1809
      %1811 = vmatmul.bf16.gmra.mxu0 %v1743
      %v1812 = vpop.f32.mrf.mxu0
      %v1813 = vadd.f32 %v1593, %v1812
      %v1814 = vpop.f32.mrf.mxu0
      %v1815 = vadd.f32 %v1595, %v1814
      %1816 = vmatmul.bf16.gmra.mxu0 %v1746
      %v1817 = vpop.f32.mrf.mxu0
      %v1818 = vadd.f32 %v1598, %v1817
      %v1819 = vpop.f32.mrf.mxu0
      %v1820 = vadd.f32 %v1600, %v1819
      %1821 = vmatmul.bf16.gmra.mxu0 %v1749
      %v1822 = vpop.f32.mrf.mxu0
      %v1823 = vadd.f32 %v1603, %v1822
      %v1824 = vpop.f32.mrf.mxu0
      %v1825 = vadd.f32 %v1605, %v1824
      %1826 = vmatmul.bf16.gmra.mxu0 %v1752
      %v1827 = vpop.f32.mrf.mxu0
      %v1828 = vadd.f32 %v1608, %v1827
      %v1829 = vpop.f32.mrf.mxu0
      %v1830 = vadd.f32 %v1610, %v1829
      %1831 = vmatmul.bf16.gmra.mxu0 %v1755
      %v1832 = vpop.f32.mrf.mxu0
      %v1833 = vadd.f32 %v1613, %v1832
      %v1834 = vpop.f32.mrf.mxu0
      %v1835 = vadd.f32 %v1615, %v1834
      %1836 = vmatmul.bf16.gmra.mxu0 %v1758
      %v1837 = vpop.f32.mrf.mxu0
      %v1838 = vadd.f32 %v1618, %v1837
      %v1839 = vpop.f32.mrf.mxu0
      %v1840 = vadd.f32 %v1620, %v1839
      %1841 = vmatmul.bf16.gmra.mxu0 %v1761
      %v1842 = vpop.f32.mrf.mxu0
      %v1843 = vadd.f32 %v1623, %v1842
      %v1844 = vpop.f32.mrf.mxu0
      %v1845 = vadd.f32 %v1625, %v1844
      %1846 = vmatmul.bf16.gmra.mxu0 %v1764
      %v1847 = vpop.f32.mrf.mxu0
      %v1848 = vadd.f32 %v1628, %v1847
      %v1849 = vpop.f32.mrf.mxu0
      %v1850 = vadd.f32 %v1630, %v1849
      %1851 = vmatmul.bf16.gmra.mxu0 %v1767
      %v1852 = vpop.f32.mrf.mxu0
      %v1853 = vadd.f32 %v1633, %v1852
      %v1854 = vpop.f32.mrf.mxu0
      %v1855 = vadd.f32 %v1635, %v1854
      %1856 = vmatmul.bf16.gmra.mxu0 %v1770
      %v1857 = vpop.f32.mrf.mxu0
      %v1858 = vadd.f32 %v1638, %v1857
      %v1859 = vpop.f32.mrf.mxu0
      %v1860 = vadd.f32 %v1640, %v1859
      %1861 = vmatmul.bf16.gmra.mxu0 %v1773
      %v1862 = vpop.f32.mrf.mxu0
      %v1863 = vadd.f32 %v1643, %v1862
      %v1864 = vpop.f32.mrf.mxu0
      %v1865 = vadd.f32 %v1645, %v1864
      %1866 = vdwg.mxu0
      %v1867 = vld [vmem:[#allocation2] sm:$0xe]
      %v1868 = vld [vmem:[#allocation2 + $0xc] sm:$0xe]
      %v1869 = vld [vmem:[#allocation2 + $0x18] sm:$0xe]
      %v1870 = vld [vmem:[#allocation2 + $0x24] sm:$0xe]
      %v1871 = vld [vmem:[#allocation2 + $0x30] sm:$0xe]
      %v1872 = vld [vmem:[#allocation2 + $0x3c] sm:$0xe]
      %v1873 = vld [vmem:[#allocation2 + $0x48] sm:$0xe]
      %v1874 = vld [vmem:[#allocation2 + $0x54] sm:$0xe]
      %v1875 = vld [vmem:[#allocation2 + $0x60] sm:$0xe]
      %v1876 = vld [vmem:[#allocation2 + $0x6c] sm:$0xe]
      %v1877 = vld [vmem:[#allocation2 + $0x78] sm:$0xe]
      %v1878 = vld [vmem:[#allocation2 + $0x84] sm:$0xe]
      %v1879 = vld [vmem:[#allocation2 + $0x90] sm:$0xe]
      %v1880 = vld [vmem:[#allocation2 + $0x9c] sm:$0xe]
      %v1881 = vld [vmem:[#allocation2 + $0xa8] sm:$0xe]
      %v1882 = vld [vmem:[#allocation2 + $0xb4] sm:$0xe]
      %vm1915 = vcmask 1042432
      %vm1916 = vcmask 1046532
      %vm1917 = vmor %vm1915, %vm1916
      %v1918 = vrot.slane %v1867, 5
      %v1919 = vrot.slane %v1918, 4
      %v1920 = vrot.slane %v1021, 5
      %v1921 = vsel %vm1917, %v1919, %v1920
      %v1922 = vrot.slane %v1920, 4
      %v1923 = vrot.slane %v1053, 5
      %v1924 = vsel %vm1917, %v1922, %v1923
      %v1925 = vrot.slane %v1868, 5
      %v1926 = vrot.slane %v1925, 4
      %v1927 = vrot.slane %v1023, 5
      %v1928 = vsel %vm1917, %v1926, %v1927
      %v1929 = vrot.slane %v1927, 4
      %v1930 = vrot.slane %v1054, 5
      %v1931 = vsel %vm1917, %v1929, %v1930
      %v1932 = vrot.slane %v1869, 5
      %v1933 = vrot.slane %v1932, 4
      %v1934 = vrot.slane %v1025, 5
      %v1935 = vsel %vm1917, %v1933, %v1934
      %v1936 = vrot.slane %v1934, 4
      %v1937 = vrot.slane %v1055, 5
      %v1938 = vsel %vm1917, %v1936, %v1937
      %v1939 = vrot.slane %v1870, 5
      %v1940 = vrot.slane %v1939, 4
      %v1941 = vrot.slane %v1027, 5
      %v1942 = vsel %vm1917, %v1940, %v1941
      %v1943 = vrot.slane %v1941, 4
      %v1944 = vrot.slane %v1056, 5
      %v1945 = vsel %vm1917, %v1943, %v1944
      %v1946 = vrot.slane %v1871, 5
      %v1947 = vrot.slane %v1946, 4
      %v1948 = vrot.slane %v1029, 5
      %v1949 = vsel %vm1917, %v1947, %v1948
      %v1950 = vrot.slane %v1948, 4
      %v1951 = vrot.slane %v1057, 5
      %v1952 = vsel %vm1917, %v1950, %v1951
      %v1953 = vrot.slane %v1872, 5
      %v1954 = vrot.slane %v1953, 4
      %v1955 = vrot.slane %v1031, 5
      %v1956 = vsel %vm1917, %v1954, %v1955
      %v1957 = vrot.slane %v1955, 4
      %v1958 = vrot.slane %v1058, 5
      %v1959 = vsel %vm1917, %v1957, %v1958
      %v1960 = vrot.slane %v1873, 5
      %v1961 = vrot.slane %v1960, 4
      %v1962 = vrot.slane %v1033, 5
      %v1963 = vsel %vm1917, %v1961, %v1962
      %v1964 = vrot.slane %v1962, 4
      %v1965 = vrot.slane %v1059, 5
      %v1966 = vsel %vm1917, %v1964, %v1965
      %v1967 = vrot.slane %v1874, 5
      %v1968 = vrot.slane %v1967, 4
      %v1969 = vrot.slane %v1035, 5
      %v1970 = vsel %vm1917, %v1968, %v1969
      %v1971 = vrot.slane %v1969, 4
      %v1972 = vrot.slane %v1060, 5
      %v1973 = vsel %vm1917, %v1971, %v1972
      %v1974 = vrot.slane %v1875, 5
      %v1975 = vrot.slane %v1974, 4
      %v1976 = vrot.slane %v1037, 5
      %v1977 = vsel %vm1917, %v1975, %v1976
      %v1978 = vrot.slane %v1976, 4
      %v1979 = vrot.slane %v1061, 5
      %v1980 = vsel %vm1917, %v1978, %v1979
      %v1981 = vrot.slane %v1876, 5
      %v1982 = vrot.slane %v1981, 4
      %v1983 = vrot.slane %v1039, 5
      %v1984 = vsel %vm1917, %v1982, %v1983
      %v1985 = vrot.slane %v1983, 4
      %v1986 = vrot.slane %v1062, 5
      %v1987 = vsel %vm1917, %v1985, %v1986
      %v1988 = vrot.slane %v1877, 5
      %v1989 = vrot.slane %v1988, 4
      %v1990 = vrot.slane %v1041, 5
      %v1991 = vsel %vm1917, %v1989, %v1990
      %v1992 = vrot.slane %v1990, 4
      %v1993 = vrot.slane %v1063, 5
      %v1994 = vsel %vm1917, %v1992, %v1993
      %v1995 = vrot.slane %v1878, 5
      %v1996 = vrot.slane %v1995, 4
      %v1997 = vrot.slane %v1043, 5
      %v1998 = vsel %vm1917, %v1996, %v1997
      %v1999 = vrot.slane %v1997, 4
      %v2000 = vrot.slane %v1064, 5
      %v2001 = vsel %vm1917, %v1999, %v2000
      %v2002 = vrot.slane %v1879, 5
      %v2003 = vrot.slane %v2002, 4
      %v2004 = vrot.slane %v1045, 5
      %v2005 = vsel %vm1917, %v2003, %v2004
      %v2006 = vrot.slane %v2004, 4
      %v2007 = vrot.slane %v1065, 5
      %v2008 = vsel %vm1917, %v2006, %v2007
      %v2009 = vrot.slane %v1880, 5
      %v2010 = vrot.slane %v2009, 4
      %v2011 = vrot.slane %v1047, 5
      %v2012 = vsel %vm1917, %v2010, %v2011
      %v2013 = vrot.slane %v2011, 4
      %v2014 = vrot.slane %v1066, 5
      %v2015 = vsel %vm1917, %v2013, %v2014
      %v2016 = vrot.slane %v1881, 5
      %v2017 = vrot.slane %v2016, 4
      %v2018 = vrot.slane %v1049, 5
      %v2019 = vsel %vm1917, %v2017, %v2018
      %v2020 = vrot.slane %v2018, 4
      %v2021 = vrot.slane %v1067, 5
      %v2022 = vsel %vm1917, %v2020, %v2021
      %v2023 = vrot.slane %v1882, 5
      %v2024 = vrot.slane %v2023, 4
      %v2025 = vrot.slane %v1051, 5
      %v2026 = vsel %vm1917, %v2024, %v2025
      %v2027 = vrot.slane %v2025, 4
      %v2028 = vrot.slane %v1068, 5
      %v2029 = vsel %vm1917, %v2027, %v2028
      %v2030 = vld [vmem:[%s303 + $0x8] sm:$0xf]
      %v2031 = vunpack.c.l.b16 %v1921
      %v2032 = vunpack.c.l.b16 %v1924
      %v2033 = vunpack.c.l.b16 %v1928
      %v2034 = vunpack.c.l.b16 %v1931
      %v2035 = vunpack.c.l.b16 %v1935
      %v2036 = vunpack.c.l.b16 %v1938
      %v2037 = vunpack.c.l.b16 %v1942
      %v2038 = vunpack.c.l.b16 %v1945
      %v2039 = vunpack.c.l.b16 %v1949
      %v2040 = vunpack.c.l.b16 %v1952
      %v2041 = vunpack.c.l.b16 %v1956
      %v2042 = vunpack.c.l.b16 %v1959
      %v2043 = vunpack.c.l.b16 %v1963
      %v2044 = vunpack.c.l.b16 %v1966
      %v2045 = vunpack.c.l.b16 %v1970
      %v2046 = vunpack.c.l.b16 %v1973
      %v2047 = vunpack.c.l.b16 %v1977
      %v2048 = vunpack.c.l.b16 %v1980
      %v2049 = vunpack.c.l.b16 %v1984
      %v2050 = vunpack.c.l.b16 %v1987
      %v2051 = vunpack.c.l.b16 %v1991
      %v2052 = vunpack.c.l.b16 %v1994
      %v2053 = vunpack.c.l.b16 %v1998
      %v2054 = vunpack.c.l.b16 %v2001
      %v2055 = vunpack.c.l.b16 %v2005
      %v2056 = vunpack.c.l.b16 %v2008
      %v2057 = vunpack.c.l.b16 %v2012
      %v2058 = vunpack.c.l.b16 %v2015
      %v2059 = vunpack.c.l.b16 %v2019
      %v2060 = vunpack.c.l.b16 %v2022
      %v2061 = vunpack.c.l.b16 %v2026
      %v2062 = vunpack.c.l.b16 %v2029
      %v2063 = vpack.c.b16 %v2032, %v2031
      %v2064 = vpack.c.b16 %v2034, %v2033
      %v2065 = vpack.c.b16 %v2036, %v2035
      %v2066 = vpack.c.b16 %v2038, %v2037
      %v2067 = vpack.c.b16 %v2040, %v2039
      %v2068 = vpack.c.b16 %v2042, %v2041
      %v2069 = vpack.c.b16 %v2044, %v2043
      %v2070 = vpack.c.b16 %v2046, %v2045
      %v2071 = vpack.c.b16 %v2048, %v2047
      %v2072 = vpack.c.b16 %v2050, %v2049
      %v2073 = vpack.c.b16 %v2052, %v2051
      %v2074 = vpack.c.b16 %v2054, %v2053
      %v2075 = vpack.c.b16 %v2056, %v2055
      %v2076 = vpack.c.b16 %v2058, %v2057
      %v2077 = vpack.c.b16 %v2060, %v2059
      %v2078 = vpack.c.b16 %v2062, %v2061
      %v2080 = vsel %vm1505, %v2063, 0
      %v2083 = vsel %vm1505, %v2064, 0
      %v2086 = vsel %vm1505, %v2065, 0
      %v2089 = vsel %vm1505, %v2066, 0
      %v2092 = vsel %vm1505, %v2067, 0
      %v2095 = vsel %vm1505, %v2068, 0
      %v2098 = vsel %vm1505, %v2069, 0
      %v2101 = vsel %vm1505, %v2070, 0
      %v2104 = vsel %vm1505, %v2071, 0
      %v2107 = vsel %vm1505, %v2072, 0
      %v2110 = vsel %vm1505, %v2073, 0
      %v2113 = vsel %vm1505, %v2074, 0
      %v2116 = vsel %vm1505, %v2075, 0
      %v2119 = vsel %vm1505, %v2076, 0
      %v2122 = vsel %vm1505, %v2077, 0
      %v2125 = vsel %vm1505, %v2078, 0
      %v2128 = vsel %vm1554, %v2030, 0
      %2130 = vmatpush.bf16.msra.mxu0 0
      %2131 = vmatpush.bf16.msra.mxu0 0
      %2132 = vmatpush.bf16.msra.mxu0 0
      %2133 = vmatpush.bf16.msra.mxu0 0
      %2134 = vmatpush.bf16.msra.mxu0 0
      %2135 = vmatpush.bf16.msra.mxu0 0
      %2136 = vmatpush.bf16.msra.mxu0 0
      %2137 = vmatpush.bf16.msra.mxu0 %v2128
      %2138 = vmatmul.bf16.gmra.mxu0 %v2080
      %v2139 = vpop.f32.mrf.mxu0
      %v2140 = vadd.f32 0.0, %v2139
      %v2141 = vpop.f32.mrf.mxu0
      %v2142 = vadd.f32 0.0, %v2141
      %2143 = vmatmul.bf16.gmra.mxu0 %v2083
      %v2144 = vpop.f32.mrf.mxu0
      %v2145 = vadd.f32 0.0, %v2144
      %v2146 = vpop.f32.mrf.mxu0
      %v2147 = vadd.f32 0.0, %v2146
      %2148 = vmatmul.bf16.gmra.mxu0 %v2086
      %v2149 = vpop.f32.mrf.mxu0
      %v2150 = vadd.f32 0.0, %v2149
      %v2151 = vpop.f32.mrf.mxu0
      %v2152 = vadd.f32 0.0, %v2151
      %2153 = vmatmul.bf16.gmra.mxu0 %v2089
      %v2154 = vpop.f32.mrf.mxu0
      %v2155 = vadd.f32 0.0, %v2154
      %v2156 = vpop.f32.mrf.mxu0
      %v2157 = vadd.f32 0.0, %v2156
      %2158 = vmatmul.bf16.gmra.mxu0 %v2092
      %v2159 = vpop.f32.mrf.mxu0
      %v2160 = vadd.f32 0.0, %v2159
      %v2161 = vpop.f32.mrf.mxu0
      %v2162 = vadd.f32 0.0, %v2161
      %2163 = vmatmul.bf16.gmra.mxu0 %v2095
      %v2164 = vpop.f32.mrf.mxu0
      %v2165 = vadd.f32 0.0, %v2164
      %v2166 = vpop.f32.mrf.mxu0
      %v2167 = vadd.f32 0.0, %v2166
      %2168 = vmatmul.bf16.gmra.mxu0 %v2098
      %v2169 = vpop.f32.mrf.mxu0
      %v2170 = vadd.f32 0.0, %v2169
      %v2171 = vpop.f32.mrf.mxu0
      %v2172 = vadd.f32 0.0, %v2171
      %2173 = vmatmul.bf16.gmra.mxu0 %v2101
      %v2174 = vpop.f32.mrf.mxu0
      %v2175 = vadd.f32 0.0, %v2174
      %v2176 = vpop.f32.mrf.mxu0
      %v2177 = vadd.f32 0.0, %v2176
      %2178 = vmatmul.bf16.gmra.mxu0 %v2104
      %v2179 = vpop.f32.mrf.mxu0
      %v2180 = vadd.f32 0.0, %v2179
      %v2181 = vpop.f32.mrf.mxu0
      %v2182 = vadd.f32 0.0, %v2181
      %2183 = vmatmul.bf16.gmra.mxu0 %v2107
      %v2184 = vpop.f32.mrf.mxu0
      %v2185 = vadd.f32 0.0, %v2184
      %v2186 = vpop.f32.mrf.mxu0
      %v2187 = vadd.f32 0.0, %v2186
      %2188 = vmatmul.bf16.gmra.mxu0 %v2110
      %v2189 = vpop.f32.mrf.mxu0
      %v2190 = vadd.f32 0.0, %v2189
      %v2191 = vpop.f32.mrf.mxu0
      %v2192 = vadd.f32 0.0, %v2191
      %2193 = vmatmul.bf16.gmra.mxu0 %v2113
      %v2194 = vpop.f32.mrf.mxu0
      %v2195 = vadd.f32 0.0, %v2194
      %v2196 = vpop.f32.mrf.mxu0
      %v2197 = vadd.f32 0.0, %v2196
      %2198 = vmatmul.bf16.gmra.mxu0 %v2116
      %v2199 = vpop.f32.mrf.mxu0
      %v2200 = vadd.f32 0.0, %v2199
      %v2201 = vpop.f32.mrf.mxu0
      %v2202 = vadd.f32 0.0, %v2201
      %2203 = vmatmul.bf16.gmra.mxu0 %v2119
      %v2204 = vpop.f32.mrf.mxu0
      %v2205 = vadd.f32 0.0, %v2204
      %v2206 = vpop.f32.mrf.mxu0
      %v2207 = vadd.f32 0.0, %v2206
      %2208 = vmatmul.bf16.gmra.mxu0 %v2122
      %v2209 = vpop.f32.mrf.mxu0
      %v2210 = vadd.f32 0.0, %v2209
      %v2211 = vpop.f32.mrf.mxu0
      %v2212 = vadd.f32 0.0, %v2211
      %2213 = vmatmul.bf16.gmra.mxu0 %v2125
      %v2214 = vpop.f32.mrf.mxu0
      %v2215 = vadd.f32 0.0, %v2214
      %v2216 = vpop.f32.mrf.mxu0
      %v2217 = vadd.f32 0.0, %v2216
      %2218 = vdwg.mxu0
      %v2219 = vadd.f32 %v1788, %v2140
      %v2220 = vadd.f32 %v1790, %v2142
      %v2221 = vadd.f32 %v1793, %v2145
      %v2222 = vadd.f32 %v1795, %v2147
      %v2223 = vadd.f32 %v1798, %v2150
      %v2224 = vadd.f32 %v1800, %v2152
      %v2225 = vadd.f32 %v1803, %v2155
      %v2226 = vadd.f32 %v1805, %v2157
      %v2227 = vadd.f32 %v1808, %v2160
      %v2228 = vadd.f32 %v1810, %v2162
      %v2229 = vadd.f32 %v1813, %v2165
      %v2230 = vadd.f32 %v1815, %v2167
      %v2231 = vadd.f32 %v1818, %v2170
      %v2232 = vadd.f32 %v1820, %v2172
      %v2233 = vadd.f32 %v1823, %v2175
      %v2234 = vadd.f32 %v1825, %v2177
      %v2235 = vadd.f32 %v1828, %v2180
      %v2236 = vadd.f32 %v1830, %v2182
      %v2237 = vadd.f32 %v1833, %v2185
      %v2238 = vadd.f32 %v1835, %v2187
      %v2239 = vadd.f32 %v1838, %v2190
      %v2240 = vadd.f32 %v1840, %v2192
      %v2241 = vadd.f32 %v1843, %v2195
      %v2242 = vadd.f32 %v1845, %v2197
      %v2243 = vadd.f32 %v1848, %v2200
      %v2244 = vadd.f32 %v1850, %v2202
      %v2245 = vadd.f32 %v1853, %v2205
      %v2246 = vadd.f32 %v1855, %v2207
      %v2247 = vadd.f32 %v1858, %v2210
      %v2248 = vadd.f32 %v1860, %v2212
      %v2249 = vadd.f32 %v1863, %v2215
      %v2250 = vadd.f32 %v1865, %v2217
      %s2251 = scalar_lea.vmem [#allocation2], 12
      %v2252 = vld [vmem:[%s2251] sm:$0xf]
      %v2253 = vld [vmem:[%s2251 + $0x4] sm:$0xf]
      %v2254 = vld [vmem:[%s2251 + $0xc] sm:$0xf]
      %v2255 = vld [vmem:[%s2251 + $0x10] sm:$0xf]
      %v2256 = vld [vmem:[%s2251 + $0x18] sm:$0xf]
      %v2257 = vld [vmem:[%s2251 + $0x1c] sm:$0xf]
      %v2258 = vld [vmem:[%s2251 + $0x24] sm:$0xf]
      %v2259 = vld [vmem:[%s2251 + $0x28] sm:$0xf]
      %v2260 = vld [vmem:[%s2251 + $0x30] sm:$0xf]
      %v2261 = vld [vmem:[%s2251 + $0x34] sm:$0xf]
      %v2262 = vld [vmem:[%s2251 + $0x3c] sm:$0xf]
      %v2263 = vld [vmem:[%s2251 + $0x40] sm:$0xf]
      %v2264 = vld [vmem:[%s2251 + $0x48] sm:$0xf]
      %v2265 = vld [vmem:[%s2251 + $0x4c] sm:$0xf]
      %v2266 = vld [vmem:[%s2251 + $0x54] sm:$0xf]
      %v2267 = vld [vmem:[%s2251 + $0x58] sm:$0xf]
      %v2268 = vld [vmem:[%s2251 + $0x60] sm:$0xf]
      %v2269 = vld [vmem:[%s2251 + $0x64] sm:$0xf]
      %v2270 = vld [vmem:[%s2251 + $0x6c] sm:$0xf]
      %v2271 = vld [vmem:[%s2251 + $0x70] sm:$0xf]
      %v2272 = vld [vmem:[%s2251 + $0x78] sm:$0xf]
      %v2273 = vld [vmem:[%s2251 + $0x7c] sm:$0xf]
      %v2274 = vld [vmem:[%s2251 + $0x84] sm:$0xf]
      %v2275 = vld [vmem:[%s2251 + $0x88] sm:$0xf]
      %v2276 = vld [vmem:[%s2251 + $0x90] sm:$0xf]
      %v2277 = vld [vmem:[%s2251 + $0x94] sm:$0xf]
      %v2278 = vld [vmem:[%s2251 + $0x9c] sm:$0xf]
      %v2279 = vld [vmem:[%s2251 + $0xa0] sm:$0xf]
      %v2280 = vld [vmem:[%s2251 + $0xa8] sm:$0xf]
      %v2281 = vld [vmem:[%s2251 + $0xac] sm:$0xf]
      %v2282 = vld [vmem:[%s2251 + $0xb4] sm:$0xf]
      %v2283 = vld [vmem:[%s2251 + $0xb8] sm:$0xf]
      %v2284 = vld [vmem:[%s303 + $0xc] sm:$0xf]
      %v2317 = vunpack.c.l.b16 %v2252
      %v2318 = vunpack.c.l.b16 %v2253
      %v2319 = vunpack.c.l.b16 %v2254
      %v2320 = vunpack.c.l.b16 %v2255
      %v2321 = vunpack.c.l.b16 %v2256
      %v2322 = vunpack.c.l.b16 %v2257
      %v2323 = vunpack.c.l.b16 %v2258
      %v2324 = vunpack.c.l.b16 %v2259
      %v2325 = vunpack.c.l.b16 %v2260
      %v2326 = vunpack.c.l.b16 %v2261
      %v2327 = vunpack.c.l.b16 %v2262
      %v2328 = vunpack.c.l.b16 %v2263
      %v2329 = vunpack.c.l.b16 %v2264
      %v2330 = vunpack.c.l.b16 %v2265
      %v2331 = vunpack.c.l.b16 %v2266
      %v2332 = vunpack.c.l.b16 %v2267
      %v2333 = vunpack.c.l.b16 %v2268
      %v2334 = vunpack.c.l.b16 %v2269
      %v2335 = vunpack.c.l.b16 %v2270
      %v2336 = vunpack.c.l.b16 %v2271
      %v2337 = vunpack.c.l.b16 %v2272
      %v2338 = vunpack.c.l.b16 %v2273
      %v2339 = vunpack.c.l.b16 %v2274
      %v2340 = vunpack.c.l.b16 %v2275
      %v2341 = vunpack.c.l.b16 %v2276
      %v2342 = vunpack.c.l.b16 %v2277
      %v2343 = vunpack.c.l.b16 %v2278
      %v2344 = vunpack.c.l.b16 %v2279
      %v2345 = vunpack.c.l.b16 %v2280
      %v2346 = vunpack.c.l.b16 %v2281
      %v2347 = vunpack.c.l.b16 %v2282
      %v2348 = vunpack.c.l.b16 %v2283
      %v2349 = vpack.c.b16 %v2318, %v2317
      %v2350 = vpack.c.b16 %v2320, %v2319
      %v2351 = vpack.c.b16 %v2322, %v2321
      %v2352 = vpack.c.b16 %v2324, %v2323
      %v2353 = vpack.c.b16 %v2326, %v2325
      %v2354 = vpack.c.b16 %v2328, %v2327
      %v2355 = vpack.c.b16 %v2330, %v2329
      %v2356 = vpack.c.b16 %v2332, %v2331
      %v2357 = vpack.c.b16 %v2334, %v2333
      %v2358 = vpack.c.b16 %v2336, %v2335
      %v2359 = vpack.c.b16 %v2338, %v2337
      %v2360 = vpack.c.b16 %v2340, %v2339
      %v2361 = vpack.c.b16 %v2342, %v2341
      %v2362 = vpack.c.b16 %v2344, %v2343
      %v2363 = vpack.c.b16 %v2346, %v2345
      %v2364 = vpack.c.b16 %v2348, %v2347
      %v2366 = vsel %vm1505, %v2349, 0
      %v2369 = vsel %vm1505, %v2350, 0
      %v2372 = vsel %vm1505, %v2351, 0
      %v2375 = vsel %vm1505, %v2352, 0
      %v2378 = vsel %vm1505, %v2353, 0
      %v2381 = vsel %vm1505, %v2354, 0
      %v2384 = vsel %vm1505, %v2355, 0
      %v2387 = vsel %vm1505, %v2356, 0
      %v2390 = vsel %vm1505, %v2357, 0
      %v2393 = vsel %vm1505, %v2358, 0
      %v2396 = vsel %vm1505, %v2359, 0
      %v2399 = vsel %vm1505, %v2360, 0
      %v2402 = vsel %vm1505, %v2361, 0
      %v2405 = vsel %vm1505, %v2362, 0
      %v2408 = vsel %vm1505, %v2363, 0
      %v2411 = vsel %vm1505, %v2364, 0
      %v2414 = vsel %vm1554, %v2284, 0
      %2416 = vmatpush.bf16.msra.mxu0 0
      %2417 = vmatpush.bf16.msra.mxu0 0
      %2418 = vmatpush.bf16.msra.mxu0 0
      %2419 = vmatpush.bf16.msra.mxu0 0
      %2420 = vmatpush.bf16.msra.mxu0 0
      %2421 = vmatpush.bf16.msra.mxu0 0
      %2422 = vmatpush.bf16.msra.mxu0 0
      %2423 = vmatpush.bf16.msra.mxu0 %v2414
      %2424 = vmatmul.bf16.gmra.mxu0 %v2366
      %v2425 = vpop.f32.mrf.mxu0
      %v2426 = vadd.f32 0.0, %v2425
      %v2427 = vpop.f32.mrf.mxu0
      %v2428 = vadd.f32 0.0, %v2427
      %2429 = vmatmul.bf16.gmra.mxu0 %v2369
      %v2430 = vpop.f32.mrf.mxu0
      %v2431 = vadd.f32 0.0, %v2430
      %v2432 = vpop.f32.mrf.mxu0
      %v2433 = vadd.f32 0.0, %v2432
      %2434 = vmatmul.bf16.gmra.mxu0 %v2372
      %v2435 = vpop.f32.mrf.mxu0
      %v2436 = vadd.f32 0.0, %v2435
      %v2437 = vpop.f32.mrf.mxu0
      %v2438 = vadd.f32 0.0, %v2437
      %2439 = vmatmul.bf16.gmra.mxu0 %v2375
      %v2440 = vpop.f32.mrf.mxu0
      %v2441 = vadd.f32 0.0, %v2440
      %v2442 = vpop.f32.mrf.mxu0
      %v2443 = vadd.f32 0.0, %v2442
      %2444 = vmatmul.bf16.gmra.mxu0 %v2378
      %v2445 = vpop.f32.mrf.mxu0
      %v2446 = vadd.f32 0.0, %v2445
      %v2447 = vpop.f32.mrf.mxu0
      %v2448 = vadd.f32 0.0, %v2447
      %2449 = vmatmul.bf16.gmra.mxu0 %v2381
      %v2450 = vpop.f32.mrf.mxu0
      %v2451 = vadd.f32 0.0, %v2450
      %v2452 = vpop.f32.mrf.mxu0
      %v2453 = vadd.f32 0.0, %v2452
      %2454 = vmatmul.bf16.gmra.mxu0 %v2384
      %v2455 = vpop.f32.mrf.mxu0
      %v2456 = vadd.f32 0.0, %v2455
      %v2457 = vpop.f32.mrf.mxu0
      %v2458 = vadd.f32 0.0, %v2457
      %2459 = vmatmul.bf16.gmra.mxu0 %v2387
      %v2460 = vpop.f32.mrf.mxu0
      %v2461 = vadd.f32 0.0, %v2460
      %v2462 = vpop.f32.mrf.mxu0
      %v2463 = vadd.f32 0.0, %v2462
      %2464 = vmatmul.bf16.gmra.mxu0 %v2390
      %v2465 = vpop.f32.mrf.mxu0
      %v2466 = vadd.f32 0.0, %v2465
      %v2467 = vpop.f32.mrf.mxu0
      %v2468 = vadd.f32 0.0, %v2467
      %2469 = vmatmul.bf16.gmra.mxu0 %v2393
      %v2470 = vpop.f32.mrf.mxu0
      %v2471 = vadd.f32 0.0, %v2470
      %v2472 = vpop.f32.mrf.mxu0
      %v2473 = vadd.f32 0.0, %v2472
      %2474 = vmatmul.bf16.gmra.mxu0 %v2396
      %v2475 = vpop.f32.mrf.mxu0
      %v2476 = vadd.f32 0.0, %v2475
      %v2477 = vpop.f32.mrf.mxu0
      %v2478 = vadd.f32 0.0, %v2477
      %2479 = vmatmul.bf16.gmra.mxu0 %v2399
      %v2480 = vpop.f32.mrf.mxu0
      %v2481 = vadd.f32 0.0, %v2480
      %v2482 = vpop.f32.mrf.mxu0
      %v2483 = vadd.f32 0.0, %v2482
      %2484 = vmatmul.bf16.gmra.mxu0 %v2402
      %v2485 = vpop.f32.mrf.mxu0
      %v2486 = vadd.f32 0.0, %v2485
      %v2487 = vpop.f32.mrf.mxu0
      %v2488 = vadd.f32 0.0, %v2487
      %2489 = vmatmul.bf16.gmra.mxu0 %v2405
      %v2490 = vpop.f32.mrf.mxu0
      %v2491 = vadd.f32 0.0, %v2490
      %v2492 = vpop.f32.mrf.mxu0
      %v2493 = vadd.f32 0.0, %v2492
      %2494 = vmatmul.bf16.gmra.mxu0 %v2408
      %v2495 = vpop.f32.mrf.mxu0
      %v2496 = vadd.f32 0.0, %v2495
      %v2497 = vpop.f32.mrf.mxu0
      %v2498 = vadd.f32 0.0, %v2497
      %2499 = vmatmul.bf16.gmra.mxu0 %v2411
      %v2500 = vpop.f32.mrf.mxu0
      %v2501 = vadd.f32 0.0, %v2500
      %v2502 = vpop.f32.mrf.mxu0
      %v2503 = vadd.f32 0.0, %v2502
      %2504 = vdwg.mxu0
      %v2505 = vadd.f32 %v2219, %v2426
      %v2506 = vadd.f32 %v2220, %v2428
      %v2507 = vadd.f32 %v2221, %v2431
      %v2508 = vadd.f32 %v2222, %v2433
      %v2509 = vadd.f32 %v2223, %v2436
      %v2510 = vadd.f32 %v2224, %v2438
      %v2511 = vadd.f32 %v2225, %v2441
      %v2512 = vadd.f32 %v2226, %v2443
      %v2513 = vadd.f32 %v2227, %v2446
      %v2514 = vadd.f32 %v2228, %v2448
      %v2515 = vadd.f32 %v2229, %v2451
      %v2516 = vadd.f32 %v2230, %v2453
      %v2517 = vadd.f32 %v2231, %v2456
      %v2518 = vadd.f32 %v2232, %v2458
      %v2519 = vadd.f32 %v2233, %v2461
      %v2520 = vadd.f32 %v2234, %v2463
      %v2521 = vadd.f32 %v2235, %v2466
      %v2522 = vadd.f32 %v2236, %v2468
      %v2523 = vadd.f32 %v2237, %v2471
      %v2524 = vadd.f32 %v2238, %v2473
      %v2525 = vadd.f32 %v2239, %v2476
      %v2526 = vadd.f32 %v2240, %v2478
      %v2527 = vadd.f32 %v2241, %v2481
      %v2528 = vadd.f32 %v2242, %v2483
      %v2529 = vadd.f32 %v2243, %v2486
      %v2530 = vadd.f32 %v2244, %v2488
      %v2531 = vadd.f32 %v2245, %v2491
      %v2532 = vadd.f32 %v2246, %v2493
      %v2533 = vadd.f32 %v2247, %v2496
      %v2534 = vadd.f32 %v2248, %v2498
      %v2535 = vadd.f32 %v2249, %v2501
      %v2536 = vadd.f32 %v2250, %v2503
      %v2537 = vld [vmem:[%s2251] sm:$0xf]
      %v2538 = vld [vmem:[%s2251 + $0x4] sm:$0xf]
      %v2539 = vld [vmem:[%s2251 + $0x8] sm:$0x1]
      %v2540 = vld [vmem:[%s2251 + $0xc] sm:$0xf]
      %v2541 = vld [vmem:[%s2251 + $0x10] sm:$0xf]
      %v2542 = vld [vmem:[%s2251 + $0x14] sm:$0x1]
      %v2543 = vld [vmem:[%s2251 + $0x18] sm:$0xf]
      %v2544 = vld [vmem:[%s2251 + $0x1c] sm:$0xf]
      %v2545 = vld [vmem:[%s2251 + $0x20] sm:$0x1]
      %v2546 = vld [vmem:[%s2251 + $0x24] sm:$0xf]
      %v2547 = vld [vmem:[%s2251 + $0x28] sm:$0xf]
      %v2548 = vld [vmem:[%s2251 + $0x2c] sm:$0x1]
      %v2549 = vld [vmem:[%s2251 + $0x30] sm:$0xf]
      %v2550 = vld [vmem:[%s2251 + $0x34] sm:$0xf]
      %v2551 = vld [vmem:[%s2251 + $0x38] sm:$0x1]
      %v2552 = vld [vmem:[%s2251 + $0x3c] sm:$0xf]
      %v2553 = vld [vmem:[%s2251 + $0x40] sm:$0xf]
      %v2554 = vld [vmem:[%s2251 + $0x44] sm:$0x1]
      %v2555 = vld [vmem:[%s2251 + $0x48] sm:$0xf]
      %v2556 = vld [vmem:[%s2251 + $0x4c] sm:$0xf]
      %v2557 = vld [vmem:[%s2251 + $0x50] sm:$0x1]
      %v2558 = vld [vmem:[%s2251 + $0x54] sm:$0xf]
      %v2559 = vld [vmem:[%s2251 + $0x58] sm:$0xf]
      %v2560 = vld [vmem:[%s2251 + $0x5c] sm:$0x1]
      %v2561 = vld [vmem:[%s2251 + $0x60] sm:$0xf]
      %v2562 = vld [vmem:[%s2251 + $0x64] sm:$0xf]
      %v2563 = vld [vmem:[%s2251 + $0x68] sm:$0x1]
      %v2564 = vld [vmem:[%s2251 + $0x6c] sm:$0xf]
      %v2565 = vld [vmem:[%s2251 + $0x70] sm:$0xf]
      %v2566 = vld [vmem:[%s2251 + $0x74] sm:$0x1]
      %v2567 = vld [vmem:[%s2251 + $0x78] sm:$0xf]
      %v2568 = vld [vmem:[%s2251 + $0x7c] sm:$0xf]
      %v2569 = vld [vmem:[%s2251 + $0x80] sm:$0x1]
      %v2570 = vld [vmem:[%s2251 + $0x84] sm:$0xf]
      %v2571 = vld [vmem:[%s2251 + $0x88] sm:$0xf]
      %v2572 = vld [vmem:[%s2251 + $0x8c] sm:$0x1]
      %v2573 = vld [vmem:[%s2251 + $0x90] sm:$0xf]
      %v2574 = vld [vmem:[%s2251 + $0x94] sm:$0xf]
      %v2575 = vld [vmem:[%s2251 + $0x98] sm:$0x1]
      %v2576 = vld [vmem:[%s2251 + $0x9c] sm:$0xf]
      %v2577 = vld [vmem:[%s2251 + $0xa0] sm:$0xf]
      %v2578 = vld [vmem:[%s2251 + $0xa4] sm:$0x1]
      %v2579 = vld [vmem:[%s2251 + $0xa8] sm:$0xf]
      %v2580 = vld [vmem:[%s2251 + $0xac] sm:$0xf]
      %v2581 = vld [vmem:[%s2251 + $0xb0] sm:$0x1]
      %v2582 = vld [vmem:[%s2251 + $0xb4] sm:$0xf]
      %v2583 = vld [vmem:[%s2251 + $0xb8] sm:$0xf]
      %v2584 = vld [vmem:[%s2251 + $0xbc] sm:$0x1]
      %v2586 = vshrl.u32 %v2537, 16
      %v2588 = vrot.slane %v2586, 4
      %v2589 = vshll.u32 %v2537, 16
      %v2591 = vrot.slane %v2589, 5
      %v2592 = vor.u32 %v2588, %v2591
      %v2593 = vrot.slane %v2592, 4
      %v2595 = vshll.u32 %v2538, 16
      %v2597 = vrot.slane %v2595, 5
      %v2598 = vsel %vm1071, %v2593, %v2597
      %v2599 = vshrl.u32 %v2538, 16
      %v2601 = vrot.slane %v2599, 4
      %v2602 = vor.u32 %v2601, %v2597
      %v2603 = vrot.slane %v2602, 4
      %v2605 = vshll.u32 %v2539, 16
      %v2607 = vrot.slane %v2605, 5
      %v2608 = vsel %vm1071, %v2603, %v2607
      %v2610 = vshrl.u32 %v2540, 16
      %v2612 = vrot.slane %v2610, 4
      %v2613 = vshll.u32 %v2540, 16
      %v2615 = vrot.slane %v2613, 5
      %v2616 = vor.u32 %v2612, %v2615
      %v2617 = vrot.slane %v2616, 4
      %v2619 = vshll.u32 %v2541, 16
      %v2621 = vrot.slane %v2619, 5
      %v2622 = vsel %vm1071, %v2617, %v2621
      %v2623 = vshrl.u32 %v2541, 16
      %v2625 = vrot.slane %v2623, 4
      %v2626 = vor.u32 %v2625, %v2621
      %v2627 = vrot.slane %v2626, 4
      %v2629 = vshll.u32 %v2542, 16
      %v2631 = vrot.slane %v2629, 5
      %v2632 = vsel %vm1071, %v2627, %v2631
      %v2634 = vshrl.u32 %v2543, 16
      %v2636 = vrot.slane %v2634, 4
      %v2637 = vshll.u32 %v2543, 16
      %v2639 = vrot.slane %v2637, 5
      %v2640 = vor.u32 %v2636, %v2639
      %v2641 = vrot.slane %v2640, 4
      %v2643 = vshll.u32 %v2544, 16
      %v2645 = vrot.slane %v2643, 5
      %v2646 = vsel %vm1071, %v2641, %v2645
      %v2647 = vshrl.u32 %v2544, 16
      %v2649 = vrot.slane %v2647, 4
      %v2650 = vor.u32 %v2649, %v2645
      %v2651 = vrot.slane %v2650, 4
      %v2653 = vshll.u32 %v2545, 16
      %v2655 = vrot.slane %v2653, 5
      %v2656 = vsel %vm1071, %v2651, %v2655
      %v2658 = vshrl.u32 %v2546, 16
      %v2660 = vrot.slane %v2658, 4
      %v2661 = vshll.u32 %v2546, 16
      %v2663 = vrot.slane %v2661, 5
      %v2664 = vor.u32 %v2660, %v2663
      %v2665 = vrot.slane %v2664, 4
      %v2667 = vshll.u32 %v2547, 16
      %v2669 = vrot.slane %v2667, 5
      %v2670 = vsel %vm1071, %v2665, %v2669
      %v2671 = vshrl.u32 %v2547, 16
      %v2673 = vrot.slane %v2671, 4
      %v2674 = vor.u32 %v2673, %v2669
      %v2675 = vrot.slane %v2674, 4
      %v2677 = vshll.u32 %v2548, 16
      %v2679 = vrot.slane %v2677, 5
      %v2680 = vsel %vm1071, %v2675, %v2679
      %v2682 = vshrl.u32 %v2549, 16
      %v2684 = vrot.slane %v2682, 4
      %v2685 = vshll.u32 %v2549, 16
      %v2687 = vrot.slane %v2685, 5
      %v2688 = vor.u32 %v2684, %v2687
      %v2689 = vrot.slane %v2688, 4
      %v2691 = vshll.u32 %v2550, 16
      %v2693 = vrot.slane %v2691, 5
      %v2694 = vsel %vm1071, %v2689, %v2693
      %v2695 = vshrl.u32 %v2550, 16
      %v2697 = vrot.slane %v2695, 4
      %v2698 = vor.u32 %v2697, %v2693
      %v2699 = vrot.slane %v2698, 4
      %v2701 = vshll.u32 %v2551, 16
      %v2703 = vrot.slane %v2701, 5
      %v2704 = vsel %vm1071, %v2699, %v2703
      %v2706 = vshrl.u32 %v2552, 16
      %v2708 = vrot.slane %v2706, 4
      %v2709 = vshll.u32 %v2552, 16
      %v2711 = vrot.slane %v2709, 5
      %v2712 = vor.u32 %v2708, %v2711
      %v2713 = vrot.slane %v2712, 4
      %v2715 = vshll.u32 %v2553, 16
      %v2717 = vrot.slane %v2715, 5
      %v2718 = vsel %vm1071, %v2713, %v2717
      %v2719 = vshrl.u32 %v2553, 16
      %v2721 = vrot.slane %v2719, 4
      %v2722 = vor.u32 %v2721, %v2717
      %v2723 = vrot.slane %v2722, 4
      %v2725 = vshll.u32 %v2554, 16
      %v2727 = vrot.slane %v2725, 5
      %v2728 = vsel %vm1071, %v2723, %v2727
      %v2730 = vshrl.u32 %v2555, 16
      %v2732 = vrot.slane %v2730, 4
      %v2733 = vshll.u32 %v2555, 16
      %v2735 = vrot.slane %v2733, 5
      %v2736 = vor.u32 %v2732, %v2735
      %v2737 = vrot.slane %v2736, 4
      %v2739 = vshll.u32 %v2556, 16
      %v2741 = vrot.slane %v2739, 5
      %v2742 = vsel %vm1071, %v2737, %v2741
      %v2743 = vshrl.u32 %v2556, 16
      %v2745 = vrot.slane %v2743, 4
      %v2746 = vor.u32 %v2745, %v2741
      %v2747 = vrot.slane %v2746, 4
      %v2749 = vshll.u32 %v2557, 16
      %v2751 = vrot.slane %v2749, 5
      %v2752 = vsel %vm1071, %v2747, %v2751
      %v2754 = vshrl.u32 %v2558, 16
      %v2756 = vrot.slane %v2754, 4
      %v2757 = vshll.u32 %v2558, 16
      %v2759 = vrot.slane %v2757, 5
      %v2760 = vor.u32 %v2756, %v2759
      %v2761 = vrot.slane %v2760, 4
      %v2763 = vshll.u32 %v2559, 16
      %v2765 = vrot.slane %v2763, 5
      %v2766 = vsel %vm1071, %v2761, %v2765
      %v2767 = vshrl.u32 %v2559, 16
      %v2769 = vrot.slane %v2767, 4
      %v2770 = vor.u32 %v2769, %v2765
      %v2771 = vrot.slane %v2770, 4
      %v2773 = vshll.u32 %v2560, 16
      %v2775 = vrot.slane %v2773, 5
      %v2776 = vsel %vm1071, %v2771, %v2775
      %v2778 = vshrl.u32 %v2561, 16
      %v2780 = vrot.slane %v2778, 4
      %v2781 = vshll.u32 %v2561, 16
      %v2783 = vrot.slane %v2781, 5
      %v2784 = vor.u32 %v2780, %v2783
      %v2785 = vrot.slane %v2784, 4
      %v2787 = vshll.u32 %v2562, 16
      %v2789 = vrot.slane %v2787, 5
      %v2790 = vsel %vm1071, %v2785, %v2789
      %v2791 = vshrl.u32 %v2562, 16
      %v2793 = vrot.slane %v2791, 4
      %v2794 = vor.u32 %v2793, %v2789
      %v2795 = vrot.slane %v2794, 4
      %v2797 = vshll.u32 %v2563, 16
      %v2799 = vrot.slane %v2797, 5
      %v2800 = vsel %vm1071, %v2795, %v2799
      %v2802 = vshrl.u32 %v2564, 16
      %v2804 = vrot.slane %v2802, 4
      %v2805 = vshll.u32 %v2564, 16
      %v2807 = vrot.slane %v2805, 5
      %v2808 = vor.u32 %v2804, %v2807
      %v2809 = vrot.slane %v2808, 4
      %v2811 = vshll.u32 %v2565, 16
      %v2813 = vrot.slane %v2811, 5
      %v2814 = vsel %vm1071, %v2809, %v2813
      %v2815 = vshrl.u32 %v2565, 16
      %v2817 = vrot.slane %v2815, 4
      %v2818 = vor.u32 %v2817, %v2813
      %v2819 = vrot.slane %v2818, 4
      %v2821 = vshll.u32 %v2566, 16
      %v2823 = vrot.slane %v2821, 5
      %v2824 = vsel %vm1071, %v2819, %v2823
      %v2826 = vshrl.u32 %v2567, 16
      %v2828 = vrot.slane %v2826, 4
      %v2829 = vshll.u32 %v2567, 16
      %v2831 = vrot.slane %v2829, 5
      %v2832 = vor.u32 %v2828, %v2831
      %v2833 = vrot.slane %v2832, 4
      %v2835 = vshll.u32 %v2568, 16
      %v2837 = vrot.slane %v2835, 5
      %v2838 = vsel %vm1071, %v2833, %v2837
      %v2839 = vshrl.u32 %v2568, 16
      %v2841 = vrot.slane %v2839, 4
      %v2842 = vor.u32 %v2841, %v2837
      %v2843 = vrot.slane %v2842, 4
      %v2845 = vshll.u32 %v2569, 16
      %v2847 = vrot.slane %v2845, 5
      %v2848 = vsel %vm1071, %v2843, %v2847
      %v2850 = vshrl.u32 %v2570, 16
      %v2852 = vrot.slane %v2850, 4
      %v2853 = vshll.u32 %v2570, 16
      %v2855 = vrot.slane %v2853, 5
      %v2856 = vor.u32 %v2852, %v2855
      %v2857 = vrot.slane %v2856, 4
      %v2859 = vshll.u32 %v2571, 16
      %v2861 = vrot.slane %v2859, 5
      %v2862 = vsel %vm1071, %v2857, %v2861
      %v2863 = vshrl.u32 %v2571, 16
      %v2865 = vrot.slane %v2863, 4
      %v2866 = vor.u32 %v2865, %v2861
      %v2867 = vrot.slane %v2866, 4
      %v2869 = vshll.u32 %v2572, 16
      %v2871 = vrot.slane %v2869, 5
      %v2872 = vsel %vm1071, %v2867, %v2871
      %v2874 = vshrl.u32 %v2573, 16
      %v2876 = vrot.slane %v2874, 4
      %v2877 = vshll.u32 %v2573, 16
      %v2879 = vrot.slane %v2877, 5
      %v2880 = vor.u32 %v2876, %v2879
      %v2881 = vrot.slane %v2880, 4
      %v2883 = vshll.u32 %v2574, 16
      %v2885 = vrot.slane %v2883, 5
      %v2886 = vsel %vm1071, %v2881, %v2885
      %v2887 = vshrl.u32 %v2574, 16
      %v2889 = vrot.slane %v2887, 4
      %v2890 = vor.u32 %v2889, %v2885
      %v2891 = vrot.slane %v2890, 4
      %v2893 = vshll.u32 %v2575, 16
      %v2895 = vrot.slane %v2893, 5
      %v2896 = vsel %vm1071, %v2891, %v2895
      %v2898 = vshrl.u32 %v2576, 16
      %v2900 = vrot.slane %v2898, 4
      %v2901 = vshll.u32 %v2576, 16
      %v2903 = vrot.slane %v2901, 5
      %v2904 = vor.u32 %v2900, %v2903
      %v2905 = vrot.slane %v2904, 4
      %v2907 = vshll.u32 %v2577, 16
      %v2909 = vrot.slane %v2907, 5
      %v2910 = vsel %vm1071, %v2905, %v2909
      %v2911 = vshrl.u32 %v2577, 16
      %v2913 = vrot.slane %v2911, 4
      %v2914 = vor.u32 %v2913, %v2909
      %v2915 = vrot.slane %v2914, 4
      %v2917 = vshll.u32 %v2578, 16
      %v2919 = vrot.slane %v2917, 5
      %v2920 = vsel %vm1071, %v2915, %v2919
      %v2922 = vshrl.u32 %v2579, 16
      %v2924 = vrot.slane %v2922, 4
      %v2925 = vshll.u32 %v2579, 16
      %v2927 = vrot.slane %v2925, 5
      %v2928 = vor.u32 %v2924, %v2927
      %v2929 = vrot.slane %v2928, 4
      %v2931 = vshll.u32 %v2580, 16
      %v2933 = vrot.slane %v2931, 5
      %v2934 = vsel %vm1071, %v2929, %v2933
      %v2935 = vshrl.u32 %v2580, 16
      %v2937 = vrot.slane %v2935, 4
      %v2938 = vor.u32 %v2937, %v2933
      %v2939 = vrot.slane %v2938, 4
      %v2941 = vshll.u32 %v2581, 16
      %v2943 = vrot.slane %v2941, 5
      %v2944 = vsel %vm1071, %v2939, %v2943
      %v2946 = vshrl.u32 %v2582, 16
      %v2948 = vrot.slane %v2946, 4
      %v2949 = vshll.u32 %v2582, 16
      %v2951 = vrot.slane %v2949, 5
      %v2952 = vor.u32 %v2948, %v2951
      %v2953 = vrot.slane %v2952, 4
      %v2955 = vshll.u32 %v2583, 16
      %v2957 = vrot.slane %v2955, 5
      %v2958 = vsel %vm1071, %v2953, %v2957
      %v2959 = vshrl.u32 %v2583, 16
      %v2961 = vrot.slane %v2959, 4
      %v2962 = vor.u32 %v2961, %v2957
      %v2963 = vrot.slane %v2962, 4
      %v2965 = vshll.u32 %v2584, 16
      %v2967 = vrot.slane %v2965, 5
      %v2968 = vsel %vm1071, %v2963, %v2967
      %v2969 = vld [vmem:[%s303 + $0x10] sm:$0xf]
      %v2970 = vunpack.c.l.b16 %v2598
      %v2971 = vunpack.c.l.b16 %v2608
      %v2972 = vunpack.c.l.b16 %v2622
      %v2973 = vunpack.c.l.b16 %v2632
      %v2974 = vunpack.c.l.b16 %v2646
      %v2975 = vunpack.c.l.b16 %v2656
      %v2976 = vunpack.c.l.b16 %v2670
      %v2977 = vunpack.c.l.b16 %v2680
      %v2978 = vunpack.c.l.b16 %v2694
      %v2979 = vunpack.c.l.b16 %v2704
      %v2980 = vunpack.c.l.b16 %v2718
      %v2981 = vunpack.c.l.b16 %v2728
      %v2982 = vunpack.c.l.b16 %v2742
      %v2983 = vunpack.c.l.b16 %v2752
      %v2984 = vunpack.c.l.b16 %v2766
      %v2985 = vunpack.c.l.b16 %v2776
      %v2986 = vunpack.c.l.b16 %v2790
      %v2987 = vunpack.c.l.b16 %v2800
      %v2988 = vunpack.c.l.b16 %v2814
      %v2989 = vunpack.c.l.b16 %v2824
      %v2990 = vunpack.c.l.b16 %v2838
      %v2991 = vunpack.c.l.b16 %v2848
      %v2992 = vunpack.c.l.b16 %v2862
      %v2993 = vunpack.c.l.b16 %v2872
      %v2994 = vunpack.c.l.b16 %v2886
      %v2995 = vunpack.c.l.b16 %v2896
      %v2996 = vunpack.c.l.b16 %v2910
      %v2997 = vunpack.c.l.b16 %v2920
      %v2998 = vunpack.c.l.b16 %v2934
      %v2999 = vunpack.c.l.b16 %v2944
      %v3000 = vunpack.c.l.b16 %v2958
      %v3001 = vunpack.c.l.b16 %v2968
      %v3002 = vpack.c.b16 %v2971, %v2970
      %v3003 = vpack.c.b16 %v2973, %v2972
      %v3004 = vpack.c.b16 %v2975, %v2974
      %v3005 = vpack.c.b16 %v2977, %v2976
      %v3006 = vpack.c.b16 %v2979, %v2978
      %v3007 = vpack.c.b16 %v2981, %v2980
      %v3008 = vpack.c.b16 %v2983, %v2982
      %v3009 = vpack.c.b16 %v2985, %v2984
      %v3010 = vpack.c.b16 %v2987, %v2986
      %v3011 = vpack.c.b16 %v2989, %v2988
      %v3012 = vpack.c.b16 %v2991, %v2990
      %v3013 = vpack.c.b16 %v2993, %v2992
      %v3014 = vpack.c.b16 %v2995, %v2994
      %v3015 = vpack.c.b16 %v2997, %v2996
      %v3016 = vpack.c.b16 %v2999, %v2998
      %v3017 = vpack.c.b16 %v3001, %v3000
      %v3019 = vsel %vm1505, %v3002, 0
      %v3022 = vsel %vm1505, %v3003, 0
      %v3025 = vsel %vm1505, %v3004, 0
      %v3028 = vsel %vm1505, %v3005, 0
      %v3031 = vsel %vm1505, %v3006, 0
      %v3034 = vsel %vm1505, %v3007, 0
      %v3037 = vsel %vm1505, %v3008, 0
      %v3040 = vsel %vm1505, %v3009, 0
      %v3043 = vsel %vm1505, %v3010, 0
      %v3046 = vsel %vm1505, %v3011, 0
      %v3049 = vsel %vm1505, %v3012, 0
      %v3052 = vsel %vm1505, %v3013, 0
      %v3055 = vsel %vm1505, %v3014, 0
      %v3058 = vsel %vm1505, %v3015, 0
      %v3061 = vsel %vm1505, %v3016, 0
      %v3064 = vsel %vm1505, %v3017, 0
      %v3067 = vsel %vm1554, %v2969, 0
      %3069 = vmatpush.bf16.msra.mxu0 0
      %3070 = vmatpush.bf16.msra.mxu0 0
      %3071 = vmatpush.bf16.msra.mxu0 0
      %3072 = vmatpush.bf16.msra.mxu0 0
      %3073 = vmatpush.bf16.msra.mxu0 0
      %3074 = vmatpush.bf16.msra.mxu0 0
      %3075 = vmatpush.bf16.msra.mxu0 0
      %3076 = vmatpush.bf16.msra.mxu0 %v3067
      %3077 = vmatmul.bf16.gmra.mxu0 %v3019
      %v3078 = vpop.f32.mrf.mxu0
      %v3079 = vadd.f32 0.0, %v3078
      %v3080 = vpop.f32.mrf.mxu0
      %v3081 = vadd.f32 0.0, %v3080
      %3082 = vmatmul.bf16.gmra.mxu0 %v3022
      %v3083 = vpop.f32.mrf.mxu0
      %v3084 = vadd.f32 0.0, %v3083
      %v3085 = vpop.f32.mrf.mxu0
      %v3086 = vadd.f32 0.0, %v3085
      %3087 = vmatmul.bf16.gmra.mxu0 %v3025
      %v3088 = vpop.f32.mrf.mxu0
      %v3089 = vadd.f32 0.0, %v3088
      %v3090 = vpop.f32.mrf.mxu0
      %v3091 = vadd.f32 0.0, %v3090
      %3092 = vmatmul.bf16.gmra.mxu0 %v3028
      %v3093 = vpop.f32.mrf.mxu0
      %v3094 = vadd.f32 0.0, %v3093
      %v3095 = vpop.f32.mrf.mxu0
      %v3096 = vadd.f32 0.0, %v3095
      %3097 = vmatmul.bf16.gmra.mxu0 %v3031
      %v3098 = vpop.f32.mrf.mxu0
      %v3099 = vadd.f32 0.0, %v3098
      %v3100 = vpop.f32.mrf.mxu0
      %v3101 = vadd.f32 0.0, %v3100
      %3102 = vmatmul.bf16.gmra.mxu0 %v3034
      %v3103 = vpop.f32.mrf.mxu0
      %v3104 = vadd.f32 0.0, %v3103
      %v3105 = vpop.f32.mrf.mxu0
      %v3106 = vadd.f32 0.0, %v3105
      %3107 = vmatmul.bf16.gmra.mxu0 %v3037
      %v3108 = vpop.f32.mrf.mxu0
      %v3109 = vadd.f32 0.0, %v3108
      %v3110 = vpop.f32.mrf.mxu0
      %v3111 = vadd.f32 0.0, %v3110
      %3112 = vmatmul.bf16.gmra.mxu0 %v3040
      %v3113 = vpop.f32.mrf.mxu0
      %v3114 = vadd.f32 0.0, %v3113
      %v3115 = vpop.f32.mrf.mxu0
      %v3116 = vadd.f32 0.0, %v3115
      %3117 = vmatmul.bf16.gmra.mxu0 %v3043
      %v3118 = vpop.f32.mrf.mxu0
      %v3119 = vadd.f32 0.0, %v3118
      %v3120 = vpop.f32.mrf.mxu0
      %v3121 = vadd.f32 0.0, %v3120
      %3122 = vmatmul.bf16.gmra.mxu0 %v3046
      %v3123 = vpop.f32.mrf.mxu0
      %v3124 = vadd.f32 0.0, %v3123
      %v3125 = vpop.f32.mrf.mxu0
      %v3126 = vadd.f32 0.0, %v3125
      %3127 = vmatmul.bf16.gmra.mxu0 %v3049
      %v3128 = vpop.f32.mrf.mxu0
      %v3129 = vadd.f32 0.0, %v3128
      %v3130 = vpop.f32.mrf.mxu0
      %v3131 = vadd.f32 0.0, %v3130
      %3132 = vmatmul.bf16.gmra.mxu0 %v3052
      %v3133 = vpop.f32.mrf.mxu0
      %v3134 = vadd.f32 0.0, %v3133
      %v3135 = vpop.f32.mrf.mxu0
      %v3136 = vadd.f32 0.0, %v3135
      %3137 = vmatmul.bf16.gmra.mxu0 %v3055
      %v3138 = vpop.f32.mrf.mxu0
      %v3139 = vadd.f32 0.0, %v3138
      %v3140 = vpop.f32.mrf.mxu0
      %v3141 = vadd.f32 0.0, %v3140
      %3142 = vmatmul.bf16.gmra.mxu0 %v3058
      %v3143 = vpop.f32.mrf.mxu0
      %v3144 = vadd.f32 0.0, %v3143
      %v3145 = vpop.f32.mrf.mxu0
      %v3146 = vadd.f32 0.0, %v3145
      %3147 = vmatmul.bf16.gmra.mxu0 %v3061
      %v3148 = vpop.f32.mrf.mxu0
      %v3149 = vadd.f32 0.0, %v3148
      %v3150 = vpop.f32.mrf.mxu0
      %v3151 = vadd.f32 0.0, %v3150
      %3152 = vmatmul.bf16.gmra.mxu0 %v3064
      %v3153 = vpop.f32.mrf.mxu0
      %v3154 = vadd.f32 0.0, %v3153
      %v3155 = vpop.f32.mrf.mxu0
      %v3156 = vadd.f32 0.0, %v3155
      %3157 = vdwg.mxu0
      %v3158 = vadd.f32 %v2505, %v3079
      %v3159 = vadd.f32 %v2506, %v3081
      %v3160 = vadd.f32 %v2507, %v3084
      %v3161 = vadd.f32 %v2508, %v3086
      %v3162 = vadd.f32 %v2509, %v3089
      %v3163 = vadd.f32 %v2510, %v3091
      %v3164 = vadd.f32 %v2511, %v3094
      %v3165 = vadd.f32 %v2512, %v3096
      %v3166 = vadd.f32 %v2513, %v3099
      %v3167 = vadd.f32 %v2514, %v3101
      %v3168 = vadd.f32 %v2515, %v3104
      %v3169 = vadd.f32 %v2516, %v3106
      %v3170 = vadd.f32 %v2517, %v3109
      %v3171 = vadd.f32 %v2518, %v3111
      %v3172 = vadd.f32 %v2519, %v3114
      %v3173 = vadd.f32 %v2520, %v3116
      %v3174 = vadd.f32 %v2521, %v3119
      %v3175 = vadd.f32 %v2522, %v3121
      %v3176 = vadd.f32 %v2523, %v3124
      %v3177 = vadd.f32 %v2524, %v3126
      %v3178 = vadd.f32 %v2525, %v3129
      %v3179 = vadd.f32 %v2526, %v3131
      %v3180 = vadd.f32 %v2527, %v3134
      %v3181 = vadd.f32 %v2528, %v3136
      %v3182 = vadd.f32 %v2529, %v3139
      %v3183 = vadd.f32 %v2530, %v3141
      %v3184 = vadd.f32 %v2531, %v3144
      %v3185 = vadd.f32 %v2532, %v3146
      %v3186 = vadd.f32 %v2533, %v3149
      %v3187 = vadd.f32 %v2534, %v3151
      %v3188 = vadd.f32 %v2535, %v3154
      %v3189 = vadd.f32 %v2536, %v3156
      %v3190 = vld [vmem:[%s2251] sm:$0xe]
      %v3191 = vld [vmem:[%s2251 + $0xc] sm:$0xe]
      %v3192 = vld [vmem:[%s2251 + $0x18] sm:$0xe]
      %v3193 = vld [vmem:[%s2251 + $0x24] sm:$0xe]
      %v3194 = vld [vmem:[%s2251 + $0x30] sm:$0xe]
      %v3195 = vld [vmem:[%s2251 + $0x3c] sm:$0xe]
      %v3196 = vld [vmem:[%s2251 + $0x48] sm:$0xe]
      %v3197 = vld [vmem:[%s2251 + $0x54] sm:$0xe]
      %v3198 = vld [vmem:[%s2251 + $0x60] sm:$0xe]
      %v3199 = vld [vmem:[%s2251 + $0x6c] sm:$0xe]
      %v3200 = vld [vmem:[%s2251 + $0x78] sm:$0xe]
      %v3201 = vld [vmem:[%s2251 + $0x84] sm:$0xe]
      %v3202 = vld [vmem:[%s2251 + $0x90] sm:$0xe]
      %v3203 = vld [vmem:[%s2251 + $0x9c] sm:$0xe]
      %v3204 = vld [vmem:[%s2251 + $0xa8] sm:$0xe]
      %v3205 = vld [vmem:[%s2251 + $0xb4] sm:$0xe]
      %v3254 = vrot.slane %v3190, 5
      %v3255 = vrot.slane %v3254, 4
      %v3256 = vrot.slane %v2538, 5
      %v3257 = vsel %vm1917, %v3255, %v3256
      %v3258 = vrot.slane %v3256, 4
      %v3259 = vrot.slane %v2539, 5
      %v3260 = vsel %vm1917, %v3258, %v3259
      %v3261 = vrot.slane %v3191, 5
      %v3262 = vrot.slane %v3261, 4
      %v3263 = vrot.slane %v2541, 5
      %v3264 = vsel %vm1917, %v3262, %v3263
      %v3265 = vrot.slane %v3263, 4
      %v3266 = vrot.slane %v2542, 5
      %v3267 = vsel %vm1917, %v3265, %v3266
      %v3268 = vrot.slane %v3192, 5
      %v3269 = vrot.slane %v3268, 4
      %v3270 = vrot.slane %v2544, 5
      %v3271 = vsel %vm1917, %v3269, %v3270
      %v3272 = vrot.slane %v3270, 4
      %v3273 = vrot.slane %v2545, 5
      %v3274 = vsel %vm1917, %v3272, %v3273
      %v3275 = vrot.slane %v3193, 5
      %v3276 = vrot.slane %v3275, 4
      %v3277 = vrot.slane %v2547, 5
      %v3278 = vsel %vm1917, %v3276, %v3277
      %v3279 = vrot.slane %v3277, 4
      %v3280 = vrot.slane %v2548, 5
      %v3281 = vsel %vm1917, %v3279, %v3280
      %v3282 = vrot.slane %v3194, 5
      %v3283 = vrot.slane %v3282, 4
      %v3284 = vrot.slane %v2550, 5
      %v3285 = vsel %vm1917, %v3283, %v3284
      %v3286 = vrot.slane %v3284, 4
      %v3287 = vrot.slane %v2551, 5
      %v3288 = vsel %vm1917, %v3286, %v3287
      %v3289 = vrot.slane %v3195, 5
      %v3290 = vrot.slane %v3289, 4
      %v3291 = vrot.slane %v2553, 5
      %v3292 = vsel %vm1917, %v3290, %v3291
      %v3293 = vrot.slane %v3291, 4
      %v3294 = vrot.slane %v2554, 5
      %v3295 = vsel %vm1917, %v3293, %v3294
      %v3296 = vrot.slane %v3196, 5
      %v3297 = vrot.slane %v3296, 4
      %v3298 = vrot.slane %v2556, 5
      %v3299 = vsel %vm1917, %v3297, %v3298
      %v3300 = vrot.slane %v3298, 4
      %v3301 = vrot.slane %v2557, 5
      %v3302 = vsel %vm1917, %v3300, %v3301
      %v3303 = vrot.slane %v3197, 5
      %v3304 = vrot.slane %v3303, 4
      %v3305 = vrot.slane %v2559, 5
      %v3306 = vsel %vm1917, %v3304, %v3305
      %v3307 = vrot.slane %v3305, 4
      %v3308 = vrot.slane %v2560, 5
      %v3309 = vsel %vm1917, %v3307, %v3308
      %v3310 = vrot.slane %v3198, 5
      %v3311 = vrot.slane %v3310, 4
      %v3312 = vrot.slane %v2562, 5
      %v3313 = vsel %vm1917, %v3311, %v3312
      %v3314 = vrot.slane %v3312, 4
      %v3315 = vrot.slane %v2563, 5
      %v3316 = vsel %vm1917, %v3314, %v3315
      %v3317 = vrot.slane %v3199, 5
      %v3318 = vrot.slane %v3317, 4
      %v3319 = vrot.slane %v2565, 5
      %v3320 = vsel %vm1917, %v3318, %v3319
      %v3321 = vrot.slane %v3319, 4
      %v3322 = vrot.slane %v2566, 5
      %v3323 = vsel %vm1917, %v3321, %v3322
      %v3324 = vrot.slane %v3200, 5
      %v3325 = vrot.slane %v3324, 4
      %v3326 = vrot.slane %v2568, 5
      %v3327 = vsel %vm1917, %v3325, %v3326
      %v3328 = vrot.slane %v3326, 4
      %v3329 = vrot.slane %v2569, 5
      %v3330 = vsel %vm1917, %v3328, %v3329
      %v3331 = vrot.slane %v3201, 5
      %v3332 = vrot.slane %v3331, 4
      %v3333 = vrot.slane %v2571, 5
      %v3334 = vsel %vm1917, %v3332, %v3333
      %v3335 = vrot.slane %v3333, 4
      %v3336 = vrot.slane %v2572, 5
      %v3337 = vsel %vm1917, %v3335, %v3336
      %v3338 = vrot.slane %v3202, 5
      %v3339 = vrot.slane %v3338, 4
      %v3340 = vrot.slane %v2574, 5
      %v3341 = vsel %vm1917, %v3339, %v3340
      %v3342 = vrot.slane %v3340, 4
      %v3343 = vrot.slane %v2575, 5
      %v3344 = vsel %vm1917, %v3342, %v3343
      %v3345 = vrot.slane %v3203, 5
      %v3346 = vrot.slane %v3345, 4
      %v3347 = vrot.slane %v2577, 5
      %v3348 = vsel %vm1917, %v3346, %v3347
      %v3349 = vrot.slane %v3347, 4
      %v3350 = vrot.slane %v2578, 5
      %v3351 = vsel %vm1917, %v3349, %v3350
      %v3352 = vrot.slane %v3204, 5
      %v3353 = vrot.slane %v3352, 4
      %v3354 = vrot.slane %v2580, 5
      %v3355 = vsel %vm1917, %v3353, %v3354
      %v3356 = vrot.slane %v3354, 4
      %v3357 = vrot.slane %v2581, 5
      %v3358 = vsel %vm1917, %v3356, %v3357
      %v3359 = vrot.slane %v3205, 5
      %v3360 = vrot.slane %v3359, 4
      %v3361 = vrot.slane %v2583, 5
      %v3362 = vsel %vm1917, %v3360, %v3361
      %v3363 = vrot.slane %v3361, 4
      %v3364 = vrot.slane %v2584, 5
      %v3365 = vsel %vm1917, %v3363, %v3364
      %v3366 = vld [vmem:[%s303 + $0x14] sm:$0xf]
      %v3367 = vunpack.c.l.b16 %v3257
      %v3368 = vunpack.c.l.b16 %v3260
      %v3369 = vunpack.c.l.b16 %v3264
      %v3370 = vunpack.c.l.b16 %v3267
      %v3371 = vunpack.c.l.b16 %v3271
      %v3372 = vunpack.c.l.b16 %v3274
      %v3373 = vunpack.c.l.b16 %v3278
      %v3374 = vunpack.c.l.b16 %v3281
      %v3375 = vunpack.c.l.b16 %v3285
      %v3376 = vunpack.c.l.b16 %v3288
      %v3377 = vunpack.c.l.b16 %v3292
      %v3378 = vunpack.c.l.b16 %v3295
      %v3379 = vunpack.c.l.b16 %v3299
      %v3380 = vunpack.c.l.b16 %v3302
      %v3381 = vunpack.c.l.b16 %v3306
      %v3382 = vunpack.c.l.b16 %v3309
      %v3383 = vunpack.c.l.b16 %v3313
      %v3384 = vunpack.c.l.b16 %v3316
      %v3385 = vunpack.c.l.b16 %v3320
      %v3386 = vunpack.c.l.b16 %v3323
      %v3387 = vunpack.c.l.b16 %v3327
      %v3388 = vunpack.c.l.b16 %v3330
      %v3389 = vunpack.c.l.b16 %v3334
      %v3390 = vunpack.c.l.b16 %v3337
      %v3391 = vunpack.c.l.b16 %v3341
      %v3392 = vunpack.c.l.b16 %v3344
      %v3393 = vunpack.c.l.b16 %v3348
      %v3394 = vunpack.c.l.b16 %v3351
      %v3395 = vunpack.c.l.b16 %v3355
      %v3396 = vunpack.c.l.b16 %v3358
      %v3397 = vunpack.c.l.b16 %v3362
      %v3398 = vunpack.c.l.b16 %v3365
      %v3399 = vpack.c.b16 %v3368, %v3367
      %v3400 = vpack.c.b16 %v3370, %v3369
      %v3401 = vpack.c.b16 %v3372, %v3371
      %v3402 = vpack.c.b16 %v3374, %v3373
      %v3403 = vpack.c.b16 %v3376, %v3375
      %v3404 = vpack.c.b16 %v3378, %v3377
      %v3405 = vpack.c.b16 %v3380, %v3379
      %v3406 = vpack.c.b16 %v3382, %v3381
      %v3407 = vpack.c.b16 %v3384, %v3383
      %v3408 = vpack.c.b16 %v3386, %v3385
      %v3409 = vpack.c.b16 %v3388, %v3387
      %v3410 = vpack.c.b16 %v3390, %v3389
      %v3411 = vpack.c.b16 %v3392, %v3391
      %v3412 = vpack.c.b16 %v3394, %v3393
      %v3413 = vpack.c.b16 %v3396, %v3395
      %v3414 = vpack.c.b16 %v3398, %v3397
      %v3416 = vsel %vm1505, %v3399, 0
      %v3419 = vsel %vm1505, %v3400, 0
      %v3422 = vsel %vm1505, %v3401, 0
      %v3425 = vsel %vm1505, %v3402, 0
      %v3428 = vsel %vm1505, %v3403, 0
      %v3431 = vsel %vm1505, %v3404, 0
      %v3434 = vsel %vm1505, %v3405, 0
      %v3437 = vsel %vm1505, %v3406, 0
      %v3440 = vsel %vm1505, %v3407, 0
      %v3443 = vsel %vm1505, %v3408, 0
      %v3446 = vsel %vm1505, %v3409, 0
      %v3449 = vsel %vm1505, %v3410, 0
      %v3452 = vsel %vm1505, %v3411, 0
      %v3455 = vsel %vm1505, %v3412, 0
      %v3458 = vsel %vm1505, %v3413, 0
      %v3461 = vsel %vm1505, %v3414, 0
      %v3464 = vsel %vm1554, %v3366, 0
      %3466 = vmatpush.bf16.msra.mxu0 0
      %3467 = vmatpush.bf16.msra.mxu0 0
      %3468 = vmatpush.bf16.msra.mxu0 0
      %3469 = vmatpush.bf16.msra.mxu0 0
      %3470 = vmatpush.bf16.msra.mxu0 0
      %3471 = vmatpush.bf16.msra.mxu0 0
      %3472 = vmatpush.bf16.msra.mxu0 0
      %3473 = vmatpush.bf16.msra.mxu0 %v3464
      %3474 = vmatmul.bf16.gmra.mxu0 %v3416
      %v3475 = vpop.f32.mrf.mxu0
      %v3476 = vadd.f32 0.0, %v3475
      %v3477 = vpop.f32.mrf.mxu0
      %v3478 = vadd.f32 0.0, %v3477
      %3479 = vmatmul.bf16.gmra.mxu0 %v3419
      %v3480 = vpop.f32.mrf.mxu0
      %v3481 = vadd.f32 0.0, %v3480
      %v3482 = vpop.f32.mrf.mxu0
      %v3483 = vadd.f32 0.0, %v3482
      %3484 = vmatmul.bf16.gmra.mxu0 %v3422
      %v3485 = vpop.f32.mrf.mxu0
      %v3486 = vadd.f32 0.0, %v3485
      %v3487 = vpop.f32.mrf.mxu0
      %v3488 = vadd.f32 0.0, %v3487
      %3489 = vmatmul.bf16.gmra.mxu0 %v3425
      %v3490 = vpop.f32.mrf.mxu0
      %v3491 = vadd.f32 0.0, %v3490
      %v3492 = vpop.f32.mrf.mxu0
      %v3493 = vadd.f32 0.0, %v3492
      %3494 = vmatmul.bf16.gmra.mxu0 %v3428
      %v3495 = vpop.f32.mrf.mxu0
      %v3496 = vadd.f32 0.0, %v3495
      %v3497 = vpop.f32.mrf.mxu0
      %v3498 = vadd.f32 0.0, %v3497
      %3499 = vmatmul.bf16.gmra.mxu0 %v3431
      %v3500 = vpop.f32.mrf.mxu0
      %v3501 = vadd.f32 0.0, %v3500
      %v3502 = vpop.f32.mrf.mxu0
      %v3503 = vadd.f32 0.0, %v3502
      %3504 = vmatmul.bf16.gmra.mxu0 %v3434
      %v3505 = vpop.f32.mrf.mxu0
      %v3506 = vadd.f32 0.0, %v3505
      %v3507 = vpop.f32.mrf.mxu0
      %v3508 = vadd.f32 0.0, %v3507
      %3509 = vmatmul.bf16.gmra.mxu0 %v3437
      %v3510 = vpop.f32.mrf.mxu0
      %v3511 = vadd.f32 0.0, %v3510
      %v3512 = vpop.f32.mrf.mxu0
      %v3513 = vadd.f32 0.0, %v3512
      %3514 = vmatmul.bf16.gmra.mxu0 %v3440
      %v3515 = vpop.f32.mrf.mxu0
      %v3516 = vadd.f32 0.0, %v3515
      %v3517 = vpop.f32.mrf.mxu0
      %v3518 = vadd.f32 0.0, %v3517
      %3519 = vmatmul.bf16.gmra.mxu0 %v3443
      %v3520 = vpop.f32.mrf.mxu0
      %v3521 = vadd.f32 0.0, %v3520
      %v3522 = vpop.f32.mrf.mxu0
      %v3523 = vadd.f32 0.0, %v3522
      %3524 = vmatmul.bf16.gmra.mxu0 %v3446
      %v3525 = vpop.f32.mrf.mxu0
      %v3526 = vadd.f32 0.0, %v3525
      %v3527 = vpop.f32.mrf.mxu0
      %v3528 = vadd.f32 0.0, %v3527
      %3529 = vmatmul.bf16.gmra.mxu0 %v3449
      %v3530 = vpop.f32.mrf.mxu0
      %v3531 = vadd.f32 0.0, %v3530
      %v3532 = vpop.f32.mrf.mxu0
      %v3533 = vadd.f32 0.0, %v3532
      %3534 = vmatmul.bf16.gmra.mxu0 %v3452
      %v3535 = vpop.f32.mrf.mxu0
      %v3536 = vadd.f32 0.0, %v3535
      %v3537 = vpop.f32.mrf.mxu0
      %v3538 = vadd.f32 0.0, %v3537
      %3539 = vmatmul.bf16.gmra.mxu0 %v3455
      %v3540 = vpop.f32.mrf.mxu0
      %v3541 = vadd.f32 0.0, %v3540
      %v3542 = vpop.f32.mrf.mxu0
      %v3543 = vadd.f32 0.0, %v3542
      %3544 = vmatmul.bf16.gmra.mxu0 %v3458
      %v3545 = vpop.f32.mrf.mxu0
      %v3546 = vadd.f32 0.0, %v3545
      %v3547 = vpop.f32.mrf.mxu0
      %v3548 = vadd.f32 0.0, %v3547
      %3549 = vmatmul.bf16.gmra.mxu0 %v3461
      %v3550 = vpop.f32.mrf.mxu0
      %v3551 = vadd.f32 0.0, %v3550
      %v3552 = vpop.f32.mrf.mxu0
      %v3553 = vadd.f32 0.0, %v3552
      %3554 = vdwg.mxu0
      %v3555 = vadd.f32 %v3158, %v3476
      %v3556 = vadd.f32 %v3159, %v3478
      %v3557 = vadd.f32 %v3160, %v3481
      %v3558 = vadd.f32 %v3161, %v3483
      %v3559 = vadd.f32 %v3162, %v3486
      %v3560 = vadd.f32 %v3163, %v3488
      %v3561 = vadd.f32 %v3164, %v3491
      %v3562 = vadd.f32 %v3165, %v3493
      %v3563 = vadd.f32 %v3166, %v3496
      %v3564 = vadd.f32 %v3167, %v3498
      %v3565 = vadd.f32 %v3168, %v3501
      %v3566 = vadd.f32 %v3169, %v3503
      %v3567 = vadd.f32 %v3170, %v3506
      %v3568 = vadd.f32 %v3171, %v3508
      %v3569 = vadd.f32 %v3172, %v3511
      %v3570 = vadd.f32 %v3173, %v3513
      %v3571 = vadd.f32 %v3174, %v3516
      %v3572 = vadd.f32 %v3175, %v3518
      %v3573 = vadd.f32 %v3176, %v3521
      %v3574 = vadd.f32 %v3177, %v3523
      %v3575 = vadd.f32 %v3178, %v3526
      %v3576 = vadd.f32 %v3179, %v3528
      %v3577 = vadd.f32 %v3180, %v3531
      %v3578 = vadd.f32 %v3181, %v3533
      %v3579 = vadd.f32 %v3182, %v3536
      %v3580 = vadd.f32 %v3183, %v3538
      %v3581 = vadd.f32 %v3184, %v3541
      %v3582 = vadd.f32 %v3185, %v3543
      %v3583 = vadd.f32 %v3186, %v3546
      %v3584 = vadd.f32 %v3187, %v3548
      %v3585 = vadd.f32 %v3188, %v3551
      %v3586 = vadd.f32 %v3189, %v3553
      %s3587 = scalar_lea.vmem [#allocation2], 24
      %v3588 = vld [vmem:[%s3587] sm:$0xf]
      %v3589 = vld [vmem:[%s3587 + $0x4] sm:$0xf]
      %v3590 = vld [vmem:[%s3587 + $0xc] sm:$0xf]
      %v3591 = vld [vmem:[%s3587 + $0x10] sm:$0xf]
      %v3592 = vld [vmem:[%s3587 + $0x18] sm:$0xf]
      %v3593 = vld [vmem:[%s3587 + $0x1c] sm:$0xf]
      %v3594 = vld [vmem:[%s3587 + $0x24] sm:$0xf]
      %v3595 = vld [vmem:[%s3587 + $0x28] sm:$0xf]
      %v3596 = vld [vmem:[%s3587 + $0x30] sm:$0xf]
      %v3597 = vld [vmem:[%s3587 + $0x34] sm:$0xf]
      %v3598 = vld [vmem:[%s3587 + $0x3c] sm:$0xf]
      %v3599 = vld [vmem:[%s3587 + $0x40] sm:$0xf]
      %v3600 = vld [vmem:[%s3587 + $0x48] sm:$0xf]
      %v3601 = vld [vmem:[%s3587 + $0x4c] sm:$0xf]
      %v3602 = vld [vmem:[%s3587 + $0x54] sm:$0xf]
      %v3603 = vld [vmem:[%s3587 + $0x58] sm:$0xf]
      %v3604 = vld [vmem:[%s3587 + $0x60] sm:$0xf]
      %v3605 = vld [vmem:[%s3587 + $0x64] sm:$0xf]
      %v3606 = vld [vmem:[%s3587 + $0x6c] sm:$0xf]
      %v3607 = vld [vmem:[%s3587 + $0x70] sm:$0xf]
      %v3608 = vld [vmem:[%s3587 + $0x78] sm:$0xf]
      %v3609 = vld [vmem:[%s3587 + $0x7c] sm:$0xf]
      %v3610 = vld [vmem:[%s3587 + $0x84] sm:$0xf]
      %v3611 = vld [vmem:[%s3587 + $0x88] sm:$0xf]
      %v3612 = vld [vmem:[%s3587 + $0x90] sm:$0xf]
      %v3613 = vld [vmem:[%s3587 + $0x94] sm:$0xf]
      %v3614 = vld [vmem:[%s3587 + $0x9c] sm:$0xf]
      %v3615 = vld [vmem:[%s3587 + $0xa0] sm:$0xf]
      %v3616 = vld [vmem:[%s3587 + $0xa8] sm:$0xf]
      %v3617 = vld [vmem:[%s3587 + $0xac] sm:$0xf]
      %v3618 = vld [vmem:[%s3587 + $0xb4] sm:$0xf]
      %v3619 = vld [vmem:[%s3587 + $0xb8] sm:$0xf]
      %v3620 = vld [vmem:[%s303 + $0x18] sm:$0xf]
      %v3653 = vunpack.c.l.b16 %v3588
      %v3654 = vunpack.c.l.b16 %v3589
      %v3655 = vunpack.c.l.b16 %v3590
      %v3656 = vunpack.c.l.b16 %v3591
      %v3657 = vunpack.c.l.b16 %v3592
      %v3658 = vunpack.c.l.b16 %v3593
      %v3659 = vunpack.c.l.b16 %v3594
      %v3660 = vunpack.c.l.b16 %v3595
      %v3661 = vunpack.c.l.b16 %v3596
      %v3662 = vunpack.c.l.b16 %v3597
      %v3663 = vunpack.c.l.b16 %v3598
      %v3664 = vunpack.c.l.b16 %v3599
      %v3665 = vunpack.c.l.b16 %v3600
      %v3666 = vunpack.c.l.b16 %v3601
      %v3667 = vunpack.c.l.b16 %v3602
      %v3668 = vunpack.c.l.b16 %v3603
      %v3669 = vunpack.c.l.b16 %v3604
      %v3670 = vunpack.c.l.b16 %v3605
      %v3671 = vunpack.c.l.b16 %v3606
      %v3672 = vunpack.c.l.b16 %v3607
      %v3673 = vunpack.c.l.b16 %v3608
      %v3674 = vunpack.c.l.b16 %v3609
      %v3675 = vunpack.c.l.b16 %v3610
      %v3676 = vunpack.c.l.b16 %v3611
      %v3677 = vunpack.c.l.b16 %v3612
      %v3678 = vunpack.c.l.b16 %v3613
      %v3679 = vunpack.c.l.b16 %v3614
      %v3680 = vunpack.c.l.b16 %v3615
      %v3681 = vunpack.c.l.b16 %v3616
      %v3682 = vunpack.c.l.b16 %v3617
      %v3683 = vunpack.c.l.b16 %v3618
      %v3684 = vunpack.c.l.b16 %v3619
      %v3685 = vpack.c.b16 %v3654, %v3653
      %v3686 = vpack.c.b16 %v3656, %v3655
      %v3687 = vpack.c.b16 %v3658, %v3657
      %v3688 = vpack.c.b16 %v3660, %v3659
      %v3689 = vpack.c.b16 %v3662, %v3661
      %v3690 = vpack.c.b16 %v3664, %v3663
      %v3691 = vpack.c.b16 %v3666, %v3665
      %v3692 = vpack.c.b16 %v3668, %v3667
      %v3693 = vpack.c.b16 %v3670, %v3669
      %v3694 = vpack.c.b16 %v3672, %v3671
      %v3695 = vpack.c.b16 %v3674, %v3673
      %v3696 = vpack.c.b16 %v3676, %v3675
      %v3697 = vpack.c.b16 %v3678, %v3677
      %v3698 = vpack.c.b16 %v3680, %v3679
      %v3699 = vpack.c.b16 %v3682, %v3681
      %v3700 = vpack.c.b16 %v3684, %v3683
      %v3702 = vsel %vm1505, %v3685, 0
      %v3705 = vsel %vm1505, %v3686, 0
      %v3708 = vsel %vm1505, %v3687, 0
      %v3711 = vsel %vm1505, %v3688, 0
      %v3714 = vsel %vm1505, %v3689, 0
      %v3717 = vsel %vm1505, %v3690, 0
      %v3720 = vsel %vm1505, %v3691, 0
      %v3723 = vsel %vm1505, %v3692, 0
      %v3726 = vsel %vm1505, %v3693, 0
      %v3729 = vsel %vm1505, %v3694, 0
      %v3732 = vsel %vm1505, %v3695, 0
      %v3735 = vsel %vm1505, %v3696, 0
      %v3738 = vsel %vm1505, %v3697, 0
      %v3741 = vsel %vm1505, %v3698, 0
      %v3744 = vsel %vm1505, %v3699, 0
      %v3747 = vsel %vm1505, %v3700, 0
      %v3750 = vsel %vm1554, %v3620, 0
      %3752 = vmatpush.bf16.msra.mxu0 0
      %3753 = vmatpush.bf16.msra.mxu0 0
      %3754 = vmatpush.bf16.msra.mxu0 0
      %3755 = vmatpush.bf16.msra.mxu0 0
      %3756 = vmatpush.bf16.msra.mxu0 0
      %3757 = vmatpush.bf16.msra.mxu0 0
      %3758 = vmatpush.bf16.msra.mxu0 0
      %3759 = vmatpush.bf16.msra.mxu0 %v3750
      %3760 = vmatmul.bf16.gmra.mxu0 %v3702
      %v3761 = vpop.f32.mrf.mxu0
      %v3762 = vadd.f32 0.0, %v3761
      %v3763 = vpop.f32.mrf.mxu0
      %v3764 = vadd.f32 0.0, %v3763
      %3765 = vmatmul.bf16.gmra.mxu0 %v3705
      %v3766 = vpop.f32.mrf.mxu0
      %v3767 = vadd.f32 0.0, %v3766
      %v3768 = vpop.f32.mrf.mxu0
      %v3769 = vadd.f32 0.0, %v3768
      %3770 = vmatmul.bf16.gmra.mxu0 %v3708
      %v3771 = vpop.f32.mrf.mxu0
      %v3772 = vadd.f32 0.0, %v3771
      %v3773 = vpop.f32.mrf.mxu0
      %v3774 = vadd.f32 0.0, %v3773
      %3775 = vmatmul.bf16.gmra.mxu0 %v3711
      %v3776 = vpop.f32.mrf.mxu0
      %v3777 = vadd.f32 0.0, %v3776
      %v3778 = vpop.f32.mrf.mxu0
      %v3779 = vadd.f32 0.0, %v3778
      %3780 = vmatmul.bf16.gmra.mxu0 %v3714
      %v3781 = vpop.f32.mrf.mxu0
      %v3782 = vadd.f32 0.0, %v3781
      %v3783 = vpop.f32.mrf.mxu0
      %v3784 = vadd.f32 0.0, %v3783
      %3785 = vmatmul.bf16.gmra.mxu0 %v3717
      %v3786 = vpop.f32.mrf.mxu0
      %v3787 = vadd.f32 0.0, %v3786
      %v3788 = vpop.f32.mrf.mxu0
      %v3789 = vadd.f32 0.0, %v3788
      %3790 = vmatmul.bf16.gmra.mxu0 %v3720
      %v3791 = vpop.f32.mrf.mxu0
      %v3792 = vadd.f32 0.0, %v3791
      %v3793 = vpop.f32.mrf.mxu0
      %v3794 = vadd.f32 0.0, %v3793
      %3795 = vmatmul.bf16.gmra.mxu0 %v3723
      %v3796 = vpop.f32.mrf.mxu0
      %v3797 = vadd.f32 0.0, %v3796
      %v3798 = vpop.f32.mrf.mxu0
      %v3799 = vadd.f32 0.0, %v3798
      %3800 = vmatmul.bf16.gmra.mxu0 %v3726
      %v3801 = vpop.f32.mrf.mxu0
      %v3802 = vadd.f32 0.0, %v3801
      %v3803 = vpop.f32.mrf.mxu0
      %v3804 = vadd.f32 0.0, %v3803
      %3805 = vmatmul.bf16.gmra.mxu0 %v3729
      %v3806 = vpop.f32.mrf.mxu0
      %v3807 = vadd.f32 0.0, %v3806
      %v3808 = vpop.f32.mrf.mxu0
      %v3809 = vadd.f32 0.0, %v3808
      %3810 = vmatmul.bf16.gmra.mxu0 %v3732
      %v3811 = vpop.f32.mrf.mxu0
      %v3812 = vadd.f32 0.0, %v3811
      %v3813 = vpop.f32.mrf.mxu0
      %v3814 = vadd.f32 0.0, %v3813
      %3815 = vmatmul.bf16.gmra.mxu0 %v3735
      %v3816 = vpop.f32.mrf.mxu0
      %v3817 = vadd.f32 0.0, %v3816
      %v3818 = vpop.f32.mrf.mxu0
      %v3819 = vadd.f32 0.0, %v3818
      %3820 = vmatmul.bf16.gmra.mxu0 %v3738
      %v3821 = vpop.f32.mrf.mxu0
      %v3822 = vadd.f32 0.0, %v3821
      %v3823 = vpop.f32.mrf.mxu0
      %v3824 = vadd.f32 0.0, %v3823
      %3825 = vmatmul.bf16.gmra.mxu0 %v3741
      %v3826 = vpop.f32.mrf.mxu0
      %v3827 = vadd.f32 0.0, %v3826
      %v3828 = vpop.f32.mrf.mxu0
      %v3829 = vadd.f32 0.0, %v3828
      %3830 = vmatmul.bf16.gmra.mxu0 %v3744
      %v3831 = vpop.f32.mrf.mxu0
      %v3832 = vadd.f32 0.0, %v3831
      %v3833 = vpop.f32.mrf.mxu0
      %v3834 = vadd.f32 0.0, %v3833
      %3835 = vmatmul.bf16.gmra.mxu0 %v3747
      %v3836 = vpop.f32.mrf.mxu0
      %v3837 = vadd.f32 0.0, %v3836
      %v3838 = vpop.f32.mrf.mxu0
      %v3839 = vadd.f32 0.0, %v3838
      %3840 = vdwg.mxu0
      %v3841 = vadd.f32 %v3555, %v3762
      %v3842 = vadd.f32 %v3556, %v3764
      %v3843 = vadd.f32 %v3557, %v3767
      %v3844 = vadd.f32 %v3558, %v3769
      %v3845 = vadd.f32 %v3559, %v3772
      %v3846 = vadd.f32 %v3560, %v3774
      %v3847 = vadd.f32 %v3561, %v3777
      %v3848 = vadd.f32 %v3562, %v3779
      %v3849 = vadd.f32 %v3563, %v3782
      %v3850 = vadd.f32 %v3564, %v3784
      %v3851 = vadd.f32 %v3565, %v3787
      %v3852 = vadd.f32 %v3566, %v3789
      %v3853 = vadd.f32 %v3567, %v3792
      %v3854 = vadd.f32 %v3568, %v3794
      %v3855 = vadd.f32 %v3569, %v3797
      %v3856 = vadd.f32 %v3570, %v3799
      %v3857 = vadd.f32 %v3571, %v3802
      %v3858 = vadd.f32 %v3572, %v3804
      %v3859 = vadd.f32 %v3573, %v3807
      %v3860 = vadd.f32 %v3574, %v3809
      %v3861 = vadd.f32 %v3575, %v3812
      %v3862 = vadd.f32 %v3576, %v3814
      %v3863 = vadd.f32 %v3577, %v3817
      %v3864 = vadd.f32 %v3578, %v3819
      %v3865 = vadd.f32 %v3579, %v3822
      %v3866 = vadd.f32 %v3580, %v3824
      %v3867 = vadd.f32 %v3581, %v3827
      %v3868 = vadd.f32 %v3582, %v3829
      %v3869 = vadd.f32 %v3583, %v3832
      %v3870 = vadd.f32 %v3584, %v3834
      %v3871 = vadd.f32 %v3585, %v3837
      %v3872 = vadd.f32 %v3586, %v3839
      %v3873 = vld [vmem:[%s3587] sm:$0xf]
      %v3874 = vld [vmem:[%s3587 + $0x4] sm:$0xf]
      %v3875 = vld [vmem:[%s3587 + $0x8] sm:$0x1]
      %v3876 = vld [vmem:[%s3587 + $0xc] sm:$0xf]
      %v3877 = vld [vmem:[%s3587 + $0x10] sm:$0xf]
      %v3878 = vld [vmem:[%s3587 + $0x14] sm:$0x1]
      %v3879 = vld [vmem:[%s3587 + $0x18] sm:$0xf]
      %v3880 = vld [vmem:[%s3587 + $0x1c] sm:$0xf]
      %v3881 = vld [vmem:[%s3587 + $0x20] sm:$0x1]
      %v3882 = vld [vmem:[%s3587 + $0x24] sm:$0xf]
      %v3883 = vld [vmem:[%s3587 + $0x28] sm:$0xf]
      %v3884 = vld [vmem:[%s3587 + $0x2c] sm:$0x1]
      %v3885 = vld [vmem:[%s3587 + $0x30] sm:$0xf]
      %v3886 = vld [vmem:[%s3587 + $0x34] sm:$0xf]
      %v3887 = vld [vmem:[%s3587 + $0x38] sm:$0x1]
      %v3888 = vld [vmem:[%s3587 + $0x3c] sm:$0xf]
      %v3889 = vld [vmem:[%s3587 + $0x40] sm:$0xf]
      %v3890 = vld [vmem:[%s3587 + $0x44] sm:$0x1]
      %v3891 = vld [vmem:[%s3587 + $0x48] sm:$0xf]
      %v3892 = vld [vmem:[%s3587 + $0x4c] sm:$0xf]
      %v3893 = vld [vmem:[%s3587 + $0x50] sm:$0x1]
      %v3894 = vld [vmem:[%s3587 + $0x54] sm:$0xf]
      %v3895 = vld [vmem:[%s3587 + $0x58] sm:$0xf]
      %v3896 = vld [vmem:[%s3587 + $0x5c] sm:$0x1]
      %v3897 = vld [vmem:[%s3587 + $0x60] sm:$0xf]
      %v3898 = vld [vmem:[%s3587 + $0x64] sm:$0xf]
      %v3899 = vld [vmem:[%s3587 + $0x68] sm:$0x1]
      %v3900 = vld [vmem:[%s3587 + $0x6c] sm:$0xf]
      %v3901 = vld [vmem:[%s3587 + $0x70] sm:$0xf]
      %v3902 = vld [vmem:[%s3587 + $0x74] sm:$0x1]
      %v3903 = vld [vmem:[%s3587 + $0x78] sm:$0xf]
      %v3904 = vld [vmem:[%s3587 + $0x7c] sm:$0xf]
      %v3905 = vld [vmem:[%s3587 + $0x80] sm:$0x1]
      %v3906 = vld [vmem:[%s3587 + $0x84] sm:$0xf]
      %v3907 = vld [vmem:[%s3587 + $0x88] sm:$0xf]
      %v3908 = vld [vmem:[%s3587 + $0x8c] sm:$0x1]
      %v3909 = vld [vmem:[%s3587 + $0x90] sm:$0xf]
      %v3910 = vld [vmem:[%s3587 + $0x94] sm:$0xf]
      %v3911 = vld [vmem:[%s3587 + $0x98] sm:$0x1]
      %v3912 = vld [vmem:[%s3587 + $0x9c] sm:$0xf]
      %v3913 = vld [vmem:[%s3587 + $0xa0] sm:$0xf]
      %v3914 = vld [vmem:[%s3587 + $0xa4] sm:$0x1]
      %v3915 = vld [vmem:[%s3587 + $0xa8] sm:$0xf]
      %v3916 = vld [vmem:[%s3587 + $0xac] sm:$0xf]
      %v3917 = vld [vmem:[%s3587 + $0xb0] sm:$0x1]
      %v3918 = vld [vmem:[%s3587 + $0xb4] sm:$0xf]
      %v3919 = vld [vmem:[%s3587 + $0xb8] sm:$0xf]
      %v3920 = vld [vmem:[%s3587 + $0xbc] sm:$0x1]
      %v3922 = vshrl.u32 %v3873, 16
      %v3924 = vrot.slane %v3922, 4
      %v3925 = vshll.u32 %v3873, 16
      %v3927 = vrot.slane %v3925, 5
      %v3928 = vor.u32 %v3924, %v3927
      %v3929 = vrot.slane %v3928, 4
      %v3931 = vshll.u32 %v3874, 16
      %v3933 = vrot.slane %v3931, 5
      %v3934 = vsel %vm1071, %v3929, %v3933
      %v3935 = vshrl.u32 %v3874, 16
      %v3937 = vrot.slane %v3935, 4
      %v3938 = vor.u32 %v3937, %v3933
      %v3939 = vrot.slane %v3938, 4
      %v3941 = vshll.u32 %v3875, 16
      %v3943 = vrot.slane %v3941, 5
      %v3944 = vsel %vm1071, %v3939, %v3943
      %v3946 = vshrl.u32 %v3876, 16
      %v3948 = vrot.slane %v3946, 4
      %v3949 = vshll.u32 %v3876, 16
      %v3951 = vrot.slane %v3949, 5
      %v3952 = vor.u32 %v3948, %v3951
      %v3953 = vrot.slane %v3952, 4
      %v3955 = vshll.u32 %v3877, 16
      %v3957 = vrot.slane %v3955, 5
      %v3958 = vsel %vm1071, %v3953, %v3957
      %v3959 = vshrl.u32 %v3877, 16
      %v3961 = vrot.slane %v3959, 4
      %v3962 = vor.u32 %v3961, %v3957
      %v3963 = vrot.slane %v3962, 4
      %v3965 = vshll.u32 %v3878, 16
      %v3967 = vrot.slane %v3965, 5
      %v3968 = vsel %vm1071, %v3963, %v3967
      %v3970 = vshrl.u32 %v3879, 16
      %v3972 = vrot.slane %v3970, 4
      %v3973 = vshll.u32 %v3879, 16
      %v3975 = vrot.slane %v3973, 5
      %v3976 = vor.u32 %v3972, %v3975
      %v3977 = vrot.slane %v3976, 4
      %v3979 = vshll.u32 %v3880, 16
      %v3981 = vrot.slane %v3979, 5
      %v3982 = vsel %vm1071, %v3977, %v3981
      %v3983 = vshrl.u32 %v3880, 16
      %v3985 = vrot.slane %v3983, 4
      %v3986 = vor.u32 %v3985, %v3981
      %v3987 = vrot.slane %v3986, 4
      %v3989 = vshll.u32 %v3881, 16
      %v3991 = vrot.slane %v3989, 5
      %v3992 = vsel %vm1071, %v3987, %v3991
      %v3994 = vshrl.u32 %v3882, 16
      %v3996 = vrot.slane %v3994, 4
      %v3997 = vshll.u32 %v3882, 16
      %v3999 = vrot.slane %v3997, 5
      %v4000 = vor.u32 %v3996, %v3999
      %v4001 = vrot.slane %v4000, 4
      %v4003 = vshll.u32 %v3883, 16
      %v4005 = vrot.slane %v4003, 5
      %v4006 = vsel %vm1071, %v4001, %v4005
      %v4007 = vshrl.u32 %v3883, 16
      %v4009 = vrot.slane %v4007, 4
      %v4010 = vor.u32 %v4009, %v4005
      %v4011 = vrot.slane %v4010, 4
      %v4013 = vshll.u32 %v3884, 16
      %v4015 = vrot.slane %v4013, 5
      %v4016 = vsel %vm1071, %v4011, %v4015
      %v4018 = vshrl.u32 %v3885, 16
      %v4020 = vrot.slane %v4018, 4
      %v4021 = vshll.u32 %v3885, 16
      %v4023 = vrot.slane %v4021, 5
      %v4024 = vor.u32 %v4020, %v4023
      %v4025 = vrot.slane %v4024, 4
      %v4027 = vshll.u32 %v3886, 16
      %v4029 = vrot.slane %v4027, 5
      %v4030 = vsel %vm1071, %v4025, %v4029
      %v4031 = vshrl.u32 %v3886, 16
      %v4033 = vrot.slane %v4031, 4
      %v4034 = vor.u32 %v4033, %v4029
      %v4035 = vrot.slane %v4034, 4
      %v4037 = vshll.u32 %v3887, 16
      %v4039 = vrot.slane %v4037, 5
      %v4040 = vsel %vm1071, %v4035, %v4039
      %v4042 = vshrl.u32 %v3888, 16
      %v4044 = vrot.slane %v4042, 4
      %v4045 = vshll.u32 %v3888, 16
      %v4047 = vrot.slane %v4045, 5
      %v4048 = vor.u32 %v4044, %v4047
      %v4049 = vrot.slane %v4048, 4
      %v4051 = vshll.u32 %v3889, 16
      %v4053 = vrot.slane %v4051, 5
      %v4054 = vsel %vm1071, %v4049, %v4053
      %v4055 = vshrl.u32 %v3889, 16
      %v4057 = vrot.slane %v4055, 4
      %v4058 = vor.u32 %v4057, %v4053
      %v4059 = vrot.slane %v4058, 4
      %v4061 = vshll.u32 %v3890, 16
      %v4063 = vrot.slane %v4061, 5
      %v4064 = vsel %vm1071, %v4059, %v4063
      %v4066 = vshrl.u32 %v3891, 16
      %v4068 = vrot.slane %v4066, 4
      %v4069 = vshll.u32 %v3891, 16
      %v4071 = vrot.slane %v4069, 5
      %v4072 = vor.u32 %v4068, %v4071
      %v4073 = vrot.slane %v4072, 4
      %v4075 = vshll.u32 %v3892, 16
      %v4077 = vrot.slane %v4075, 5
      %v4078 = vsel %vm1071, %v4073, %v4077
      %v4079 = vshrl.u32 %v3892, 16
      %v4081 = vrot.slane %v4079, 4
      %v4082 = vor.u32 %v4081, %v4077
      %v4083 = vrot.slane %v4082, 4
      %v4085 = vshll.u32 %v3893, 16
      %v4087 = vrot.slane %v4085, 5
      %v4088 = vsel %vm1071, %v4083, %v4087
      %v4090 = vshrl.u32 %v3894, 16
      %v4092 = vrot.slane %v4090, 4
      %v4093 = vshll.u32 %v3894, 16
      %v4095 = vrot.slane %v4093, 5
      %v4096 = vor.u32 %v4092, %v4095
      %v4097 = vrot.slane %v4096, 4
      %v4099 = vshll.u32 %v3895, 16
      %v4101 = vrot.slane %v4099, 5
      %v4102 = vsel %vm1071, %v4097, %v4101
      %v4103 = vshrl.u32 %v3895, 16
      %v4105 = vrot.slane %v4103, 4
      %v4106 = vor.u32 %v4105, %v4101
      %v4107 = vrot.slane %v4106, 4
      %v4109 = vshll.u32 %v3896, 16
      %v4111 = vrot.slane %v4109, 5
      %v4112 = vsel %vm1071, %v4107, %v4111
      %v4114 = vshrl.u32 %v3897, 16
      %v4116 = vrot.slane %v4114, 4
      %v4117 = vshll.u32 %v3897, 16
      %v4119 = vrot.slane %v4117, 5
      %v4120 = vor.u32 %v4116, %v4119
      %v4121 = vrot.slane %v4120, 4
      %v4123 = vshll.u32 %v3898, 16
      %v4125 = vrot.slane %v4123, 5
      %v4126 = vsel %vm1071, %v4121, %v4125
      %v4127 = vshrl.u32 %v3898, 16
      %v4129 = vrot.slane %v4127, 4
      %v4130 = vor.u32 %v4129, %v4125
      %v4131 = vrot.slane %v4130, 4
      %v4133 = vshll.u32 %v3899, 16
      %v4135 = vrot.slane %v4133, 5
      %v4136 = vsel %vm1071, %v4131, %v4135
      %v4138 = vshrl.u32 %v3900, 16
      %v4140 = vrot.slane %v4138, 4
      %v4141 = vshll.u32 %v3900, 16
      %v4143 = vrot.slane %v4141, 5
      %v4144 = vor.u32 %v4140, %v4143
      %v4145 = vrot.slane %v4144, 4
      %v4147 = vshll.u32 %v3901, 16
      %v4149 = vrot.slane %v4147, 5
      %v4150 = vsel %vm1071, %v4145, %v4149
      %v4151 = vshrl.u32 %v3901, 16
      %v4153 = vrot.slane %v4151, 4
      %v4154 = vor.u32 %v4153, %v4149
      %v4155 = vrot.slane %v4154, 4
      %v4157 = vshll.u32 %v3902, 16
      %v4159 = vrot.slane %v4157, 5
      %v4160 = vsel %vm1071, %v4155, %v4159
      %v4162 = vshrl.u32 %v3903, 16
      %v4164 = vrot.slane %v4162, 4
      %v4165 = vshll.u32 %v3903, 16
      %v4167 = vrot.slane %v4165, 5
      %v4168 = vor.u32 %v4164, %v4167
      %v4169 = vrot.slane %v4168, 4
      %v4171 = vshll.u32 %v3904, 16
      %v4173 = vrot.slane %v4171, 5
      %v4174 = vsel %vm1071, %v4169, %v4173
      %v4175 = vshrl.u32 %v3904, 16
      %v4177 = vrot.slane %v4175, 4
      %v4178 = vor.u32 %v4177, %v4173
      %v4179 = vrot.slane %v4178, 4
      %v4181 = vshll.u32 %v3905, 16
      %v4183 = vrot.slane %v4181, 5
      %v4184 = vsel %vm1071, %v4179, %v4183
      %v4186 = vshrl.u32 %v3906, 16
      %v4188 = vrot.slane %v4186, 4
      %v4189 = vshll.u32 %v3906, 16
      %v4191 = vrot.slane %v4189, 5
      %v4192 = vor.u32 %v4188, %v4191
      %v4193 = vrot.slane %v4192, 4
      %v4195 = vshll.u32 %v3907, 16
      %v4197 = vrot.slane %v4195, 5
      %v4198 = vsel %vm1071, %v4193, %v4197
      %v4199 = vshrl.u32 %v3907, 16
      %v4201 = vrot.slane %v4199, 4
      %v4202 = vor.u32 %v4201, %v4197
      %v4203 = vrot.slane %v4202, 4
      %v4205 = vshll.u32 %v3908, 16
      %v4207 = vrot.slane %v4205, 5
      %v4208 = vsel %vm1071, %v4203, %v4207
      %v4210 = vshrl.u32 %v3909, 16
      %v4212 = vrot.slane %v4210, 4
      %v4213 = vshll.u32 %v3909, 16
      %v4215 = vrot.slane %v4213, 5
      %v4216 = vor.u32 %v4212, %v4215
      %v4217 = vrot.slane %v4216, 4
      %v4219 = vshll.u32 %v3910, 16
      %v4221 = vrot.slane %v4219, 5
      %v4222 = vsel %vm1071, %v4217, %v4221
      %v4223 = vshrl.u32 %v3910, 16
      %v4225 = vrot.slane %v4223, 4
      %v4226 = vor.u32 %v4225, %v4221
      %v4227 = vrot.slane %v4226, 4
      %v4229 = vshll.u32 %v3911, 16
      %v4231 = vrot.slane %v4229, 5
      %v4232 = vsel %vm1071, %v4227, %v4231
      %v4234 = vshrl.u32 %v3912, 16
      %v4236 = vrot.slane %v4234, 4
      %v4237 = vshll.u32 %v3912, 16
      %v4239 = vrot.slane %v4237, 5
      %v4240 = vor.u32 %v4236, %v4239
      %v4241 = vrot.slane %v4240, 4
      %v4243 = vshll.u32 %v3913, 16
      %v4245 = vrot.slane %v4243, 5
      %v4246 = vsel %vm1071, %v4241, %v4245
      %v4247 = vshrl.u32 %v3913, 16
      %v4249 = vrot.slane %v4247, 4
      %v4250 = vor.u32 %v4249, %v4245
      %v4251 = vrot.slane %v4250, 4
      %v4253 = vshll.u32 %v3914, 16
      %v4255 = vrot.slane %v4253, 5
      %v4256 = vsel %vm1071, %v4251, %v4255
      %v4258 = vshrl.u32 %v3915, 16
      %v4260 = vrot.slane %v4258, 4
      %v4261 = vshll.u32 %v3915, 16
      %v4263 = vrot.slane %v4261, 5
      %v4264 = vor.u32 %v4260, %v4263
      %v4265 = vrot.slane %v4264, 4
      %v4267 = vshll.u32 %v3916, 16
      %v4269 = vrot.slane %v4267, 5
      %v4270 = vsel %vm1071, %v4265, %v4269
      %v4271 = vshrl.u32 %v3916, 16
      %v4273 = vrot.slane %v4271, 4
      %v4274 = vor.u32 %v4273, %v4269
      %v4275 = vrot.slane %v4274, 4
      %v4277 = vshll.u32 %v3917, 16
      %v4279 = vrot.slane %v4277, 5
      %v4280 = vsel %vm1071, %v4275, %v4279
      %v4282 = vshrl.u32 %v3918, 16
      %v4284 = vrot.slane %v4282, 4
      %v4285 = vshll.u32 %v3918, 16
      %v4287 = vrot.slane %v4285, 5
      %v4288 = vor.u32 %v4284, %v4287
      %v4289 = vrot.slane %v4288, 4
      %v4291 = vshll.u32 %v3919, 16
      %v4293 = vrot.slane %v4291, 5
      %v4294 = vsel %vm1071, %v4289, %v4293
      %v4295 = vshrl.u32 %v3919, 16
      %v4297 = vrot.slane %v4295, 4
      %v4298 = vor.u32 %v4297, %v4293
      %v4299 = vrot.slane %v4298, 4
      %v4301 = vshll.u32 %v3920, 16
      %v4303 = vrot.slane %v4301, 5
      %v4304 = vsel %vm1071, %v4299, %v4303
      %v4305 = vld [vmem:[%s303 + $0x1c] sm:$0xf]
      %v4306 = vunpack.c.l.b16 %v3934
      %v4307 = vunpack.c.l.b16 %v3944
      %v4308 = vunpack.c.l.b16 %v3958
      %v4309 = vunpack.c.l.b16 %v3968
      %v4310 = vunpack.c.l.b16 %v3982
      %v4311 = vunpack.c.l.b16 %v3992
      %v4312 = vunpack.c.l.b16 %v4006
      %v4313 = vunpack.c.l.b16 %v4016
      %v4314 = vunpack.c.l.b16 %v4030
      %v4315 = vunpack.c.l.b16 %v4040
      %v4316 = vunpack.c.l.b16 %v4054
      %v4317 = vunpack.c.l.b16 %v4064
      %v4318 = vunpack.c.l.b16 %v4078
      %v4319 = vunpack.c.l.b16 %v4088
      %v4320 = vunpack.c.l.b16 %v4102
      %v4321 = vunpack.c.l.b16 %v4112
      %v4322 = vunpack.c.l.b16 %v4126
      %v4323 = vunpack.c.l.b16 %v4136
      %v4324 = vunpack.c.l.b16 %v4150
      %v4325 = vunpack.c.l.b16 %v4160
      %v4326 = vunpack.c.l.b16 %v4174
      %v4327 = vunpack.c.l.b16 %v4184
      %v4328 = vunpack.c.l.b16 %v4198
      %v4329 = vunpack.c.l.b16 %v4208
      %v4330 = vunpack.c.l.b16 %v4222
      %v4331 = vunpack.c.l.b16 %v4232
      %v4332 = vunpack.c.l.b16 %v4246
      %v4333 = vunpack.c.l.b16 %v4256
      %v4334 = vunpack.c.l.b16 %v4270
      %v4335 = vunpack.c.l.b16 %v4280
      %v4336 = vunpack.c.l.b16 %v4294
      %v4337 = vunpack.c.l.b16 %v4304
      %v4338 = vpack.c.b16 %v4307, %v4306
      %v4339 = vpack.c.b16 %v4309, %v4308
      %v4340 = vpack.c.b16 %v4311, %v4310
      %v4341 = vpack.c.b16 %v4313, %v4312
      %v4342 = vpack.c.b16 %v4315, %v4314
      %v4343 = vpack.c.b16 %v4317, %v4316
      %v4344 = vpack.c.b16 %v4319, %v4318
      %v4345 = vpack.c.b16 %v4321, %v4320
      %v4346 = vpack.c.b16 %v4323, %v4322
      %v4347 = vpack.c.b16 %v4325, %v4324
      %v4348 = vpack.c.b16 %v4327, %v4326
      %v4349 = vpack.c.b16 %v4329, %v4328
      %v4350 = vpack.c.b16 %v4331, %v4330
      %v4351 = vpack.c.b16 %v4333, %v4332
      %v4352 = vpack.c.b16 %v4335, %v4334
      %v4353 = vpack.c.b16 %v4337, %v4336
      %v4355 = vsel %vm1505, %v4338, 0
      %v4358 = vsel %vm1505, %v4339, 0
      %v4361 = vsel %vm1505, %v4340, 0
      %v4364 = vsel %vm1505, %v4341, 0
      %v4367 = vsel %vm1505, %v4342, 0
      %v4370 = vsel %vm1505, %v4343, 0
      %v4373 = vsel %vm1505, %v4344, 0
      %v4376 = vsel %vm1505, %v4345, 0
      %v4379 = vsel %vm1505, %v4346, 0
      %v4382 = vsel %vm1505, %v4347, 0
      %v4385 = vsel %vm1505, %v4348, 0
      %v4388 = vsel %vm1505, %v4349, 0
      %v4391 = vsel %vm1505, %v4350, 0
      %v4394 = vsel %vm1505, %v4351, 0
      %v4397 = vsel %vm1505, %v4352, 0
      %v4400 = vsel %vm1505, %v4353, 0
      %v4403 = vsel %vm1554, %v4305, 0
      %4405 = vmatpush.bf16.msra.mxu0 0
      %4406 = vmatpush.bf16.msra.mxu0 0
      %4407 = vmatpush.bf16.msra.mxu0 0
      %4408 = vmatpush.bf16.msra.mxu0 0
      %4409 = vmatpush.bf16.msra.mxu0 0
      %4410 = vmatpush.bf16.msra.mxu0 0
      %4411 = vmatpush.bf16.msra.mxu0 0
      %4412 = vmatpush.bf16.msra.mxu0 %v4403
      %4413 = vmatmul.bf16.gmra.mxu0 %v4355
      %v4414 = vpop.f32.mrf.mxu0
      %v4415 = vadd.f32 0.0, %v4414
      %v4416 = vpop.f32.mrf.mxu0
      %v4417 = vadd.f32 0.0, %v4416
      %4418 = vmatmul.bf16.gmra.mxu0 %v4358
      %v4419 = vpop.f32.mrf.mxu0
      %v4420 = vadd.f32 0.0, %v4419
      %v4421 = vpop.f32.mrf.mxu0
      %v4422 = vadd.f32 0.0, %v4421
      %4423 = vmatmul.bf16.gmra.mxu0 %v4361
      %v4424 = vpop.f32.mrf.mxu0
      %v4425 = vadd.f32 0.0, %v4424
      %v4426 = vpop.f32.mrf.mxu0
      %v4427 = vadd.f32 0.0, %v4426
      %4428 = vmatmul.bf16.gmra.mxu0 %v4364
      %v4429 = vpop.f32.mrf.mxu0
      %v4430 = vadd.f32 0.0, %v4429
      %v4431 = vpop.f32.mrf.mxu0
      %v4432 = vadd.f32 0.0, %v4431
      %4433 = vmatmul.bf16.gmra.mxu0 %v4367
      %v4434 = vpop.f32.mrf.mxu0
      %v4435 = vadd.f32 0.0, %v4434
      %v4436 = vpop.f32.mrf.mxu0
      %v4437 = vadd.f32 0.0, %v4436
      %4438 = vmatmul.bf16.gmra.mxu0 %v4370
      %v4439 = vpop.f32.mrf.mxu0
      %v4440 = vadd.f32 0.0, %v4439
      %v4441 = vpop.f32.mrf.mxu0
      %v4442 = vadd.f32 0.0, %v4441
      %4443 = vmatmul.bf16.gmra.mxu0 %v4373
      %v4444 = vpop.f32.mrf.mxu0
      %v4445 = vadd.f32 0.0, %v4444
      %v4446 = vpop.f32.mrf.mxu0
      %v4447 = vadd.f32 0.0, %v4446
      %4448 = vmatmul.bf16.gmra.mxu0 %v4376
      %v4449 = vpop.f32.mrf.mxu0
      %v4450 = vadd.f32 0.0, %v4449
      %v4451 = vpop.f32.mrf.mxu0
      %v4452 = vadd.f32 0.0, %v4451
      %4453 = vmatmul.bf16.gmra.mxu0 %v4379
      %v4454 = vpop.f32.mrf.mxu0
      %v4455 = vadd.f32 0.0, %v4454
      %v4456 = vpop.f32.mrf.mxu0
      %v4457 = vadd.f32 0.0, %v4456
      %4458 = vmatmul.bf16.gmra.mxu0 %v4382
      %v4459 = vpop.f32.mrf.mxu0
      %v4460 = vadd.f32 0.0, %v4459
      %v4461 = vpop.f32.mrf.mxu0
      %v4462 = vadd.f32 0.0, %v4461
      %4463 = vmatmul.bf16.gmra.mxu0 %v4385
      %v4464 = vpop.f32.mrf.mxu0
      %v4465 = vadd.f32 0.0, %v4464
      %v4466 = vpop.f32.mrf.mxu0
      %v4467 = vadd.f32 0.0, %v4466
      %4468 = vmatmul.bf16.gmra.mxu0 %v4388
      %v4469 = vpop.f32.mrf.mxu0
      %v4470 = vadd.f32 0.0, %v4469
      %v4471 = vpop.f32.mrf.mxu0
      %v4472 = vadd.f32 0.0, %v4471
      %4473 = vmatmul.bf16.gmra.mxu0 %v4391
      %v4474 = vpop.f32.mrf.mxu0
      %v4475 = vadd.f32 0.0, %v4474
      %v4476 = vpop.f32.mrf.mxu0
      %v4477 = vadd.f32 0.0, %v4476
      %4478 = vmatmul.bf16.gmra.mxu0 %v4394
      %v4479 = vpop.f32.mrf.mxu0
      %v4480 = vadd.f32 0.0, %v4479
      %v4481 = vpop.f32.mrf.mxu0
      %v4482 = vadd.f32 0.0, %v4481
      %4483 = vmatmul.bf16.gmra.mxu0 %v4397
      %v4484 = vpop.f32.mrf.mxu0
      %v4485 = vadd.f32 0.0, %v4484
      %v4486 = vpop.f32.mrf.mxu0
      %v4487 = vadd.f32 0.0, %v4486
      %4488 = vmatmul.bf16.gmra.mxu0 %v4400
      %v4489 = vpop.f32.mrf.mxu0
      %v4490 = vadd.f32 0.0, %v4489
      %v4491 = vpop.f32.mrf.mxu0
      %v4492 = vadd.f32 0.0, %v4491
      %4493 = vdwg.mxu0
      %v4494 = vadd.f32 %v3841, %v4415
      %v4495 = vadd.f32 %v3842, %v4417
      %v4496 = vadd.f32 %v3843, %v4420
      %v4497 = vadd.f32 %v3844, %v4422
      %v4498 = vadd.f32 %v3845, %v4425
      %v4499 = vadd.f32 %v3846, %v4427
      %v4500 = vadd.f32 %v3847, %v4430
      %v4501 = vadd.f32 %v3848, %v4432
      %v4502 = vadd.f32 %v3849, %v4435
      %v4503 = vadd.f32 %v3850, %v4437
      %v4504 = vadd.f32 %v3851, %v4440
      %v4505 = vadd.f32 %v3852, %v4442
      %v4506 = vadd.f32 %v3853, %v4445
      %v4507 = vadd.f32 %v3854, %v4447
      %v4508 = vadd.f32 %v3855, %v4450
      %v4509 = vadd.f32 %v3856, %v4452
      %v4510 = vadd.f32 %v3857, %v4455
      %v4511 = vadd.f32 %v3858, %v4457
      %v4512 = vadd.f32 %v3859, %v4460
      %v4513 = vadd.f32 %v3860, %v4462
      %v4514 = vadd.f32 %v3861, %v4465
      %v4515 = vadd.f32 %v3862, %v4467
      %v4516 = vadd.f32 %v3863, %v4470
      %v4517 = vadd.f32 %v3864, %v4472
      %v4518 = vadd.f32 %v3865, %v4475
      %v4519 = vadd.f32 %v3866, %v4477
      %v4520 = vadd.f32 %v3867, %v4480
      %v4521 = vadd.f32 %v3868, %v4482
      %v4522 = vadd.f32 %v3869, %v4485
      %v4523 = vadd.f32 %v3870, %v4487
      %v4524 = vadd.f32 %v3871, %v4490
      %v4525 = vadd.f32 %v3872, %v4492
      %v4526 = vld [vmem:[%s3587] sm:$0xe]
      %v4527 = vld [vmem:[%s3587 + $0xc] sm:$0xe]
      %v4528 = vld [vmem:[%s3587 + $0x18] sm:$0xe]
      %v4529 = vld [vmem:[%s3587 + $0x24] sm:$0xe]
      %v4530 = vld [vmem:[%s3587 + $0x30] sm:$0xe]
      %v4531 = vld [vmem:[%s3587 + $0x3c] sm:$0xe]
      %v4532 = vld [vmem:[%s3587 + $0x48] sm:$0xe]
      %v4533 = vld [vmem:[%s3587 + $0x54] sm:$0xe]
      %v4534 = vld [vmem:[%s3587 + $0x60] sm:$0xe]
      %v4535 = vld [vmem:[%s3587 + $0x6c] sm:$0xe]
      %v4536 = vld [vmem:[%s3587 + $0x78] sm:$0xe]
      %v4537 = vld [vmem:[%s3587 + $0x84] sm:$0xe]
      %v4538 = vld [vmem:[%s3587 + $0x90] sm:$0xe]
      %v4539 = vld [vmem:[%s3587 + $0x9c] sm:$0xe]
      %v4540 = vld [vmem:[%s3587 + $0xa8] sm:$0xe]
      %v4541 = vld [vmem:[%s3587 + $0xb4] sm:$0xe]
      %v4590 = vrot.slane %v4526, 5
      %v4591 = vrot.slane %v4590, 4
      %v4592 = vrot.slane %v3874, 5
      %v4593 = vsel %vm1917, %v4591, %v4592
      %v4594 = vrot.slane %v4592, 4
      %v4595 = vrot.slane %v3875, 5
      %v4596 = vsel %vm1917, %v4594, %v4595
      %v4597 = vrot.slane %v4527, 5
      %v4598 = vrot.slane %v4597, 4
      %v4599 = vrot.slane %v3877, 5
      %v4600 = vsel %vm1917, %v4598, %v4599
      %v4601 = vrot.slane %v4599, 4
      %v4602 = vrot.slane %v3878, 5
      %v4603 = vsel %vm1917, %v4601, %v4602
      %v4604 = vrot.slane %v4528, 5
      %v4605 = vrot.slane %v4604, 4
      %v4606 = vrot.slane %v3880, 5
      %v4607 = vsel %vm1917, %v4605, %v4606
      %v4608 = vrot.slane %v4606, 4
      %v4609 = vrot.slane %v3881, 5
      %v4610 = vsel %vm1917, %v4608, %v4609
      %v4611 = vrot.slane %v4529, 5
      %v4612 = vrot.slane %v4611, 4
      %v4613 = vrot.slane %v3883, 5
      %v4614 = vsel %vm1917, %v4612, %v4613
      %v4615 = vrot.slane %v4613, 4
      %v4616 = vrot.slane %v3884, 5
      %v4617 = vsel %vm1917, %v4615, %v4616
      %v4618 = vrot.slane %v4530, 5
      %v4619 = vrot.slane %v4618, 4
      %v4620 = vrot.slane %v3886, 5
      %v4621 = vsel %vm1917, %v4619, %v4620
      %v4622 = vrot.slane %v4620, 4
      %v4623 = vrot.slane %v3887, 5
      %v4624 = vsel %vm1917, %v4622, %v4623
      %v4625 = vrot.slane %v4531, 5
      %v4626 = vrot.slane %v4625, 4
      %v4627 = vrot.slane %v3889, 5
      %v4628 = vsel %vm1917, %v4626, %v4627
      %v4629 = vrot.slane %v4627, 4
      %v4630 = vrot.slane %v3890, 5
      %v4631 = vsel %vm1917, %v4629, %v4630
      %v4632 = vrot.slane %v4532, 5
      %v4633 = vrot.slane %v4632, 4
      %v4634 = vrot.slane %v3892, 5
      %v4635 = vsel %vm1917, %v4633, %v4634
      %v4636 = vrot.slane %v4634, 4
      %v4637 = vrot.slane %v3893, 5
      %v4638 = vsel %vm1917, %v4636, %v4637
      %v4639 = vrot.slane %v4533, 5
      %v4640 = vrot.slane %v4639, 4
      %v4641 = vrot.slane %v3895, 5
      %v4642 = vsel %vm1917, %v4640, %v4641
      %v4643 = vrot.slane %v4641, 4
      %v4644 = vrot.slane %v3896, 5
      %v4645 = vsel %vm1917, %v4643, %v4644
      %v4646 = vrot.slane %v4534, 5
      %v4647 = vrot.slane %v4646, 4
      %v4648 = vrot.slane %v3898, 5
      %v4649 = vsel %vm1917, %v4647, %v4648
      %v4650 = vrot.slane %v4648, 4
      %v4651 = vrot.slane %v3899, 5
      %v4652 = vsel %vm1917, %v4650, %v4651
      %v4653 = vrot.slane %v4535, 5
      %v4654 = vrot.slane %v4653, 4
      %v4655 = vrot.slane %v3901, 5
      %v4656 = vsel %vm1917, %v4654, %v4655
      %v4657 = vrot.slane %v4655, 4
      %v4658 = vrot.slane %v3902, 5
      %v4659 = vsel %vm1917, %v4657, %v4658
      %v4660 = vrot.slane %v4536, 5
      %v4661 = vrot.slane %v4660, 4
      %v4662 = vrot.slane %v3904, 5
      %v4663 = vsel %vm1917, %v4661, %v4662
      %v4664 = vrot.slane %v4662, 4
      %v4665 = vrot.slane %v3905, 5
      %v4666 = vsel %vm1917, %v4664, %v4665
      %v4667 = vrot.slane %v4537, 5
      %v4668 = vrot.slane %v4667, 4
      %v4669 = vrot.slane %v3907, 5
      %v4670 = vsel %vm1917, %v4668, %v4669
      %v4671 = vrot.slane %v4669, 4
      %v4672 = vrot.slane %v3908, 5
      %v4673 = vsel %vm1917, %v4671, %v4672
      %v4674 = vrot.slane %v4538, 5
      %v4675 = vrot.slane %v4674, 4
      %v4676 = vrot.slane %v3910, 5
      %v4677 = vsel %vm1917, %v4675, %v4676
      %v4678 = vrot.slane %v4676, 4
      %v4679 = vrot.slane %v3911, 5
      %v4680 = vsel %vm1917, %v4678, %v4679
      %v4681 = vrot.slane %v4539, 5
      %v4682 = vrot.slane %v4681, 4
      %v4683 = vrot.slane %v3913, 5
      %v4684 = vsel %vm1917, %v4682, %v4683
      %v4685 = vrot.slane %v4683, 4
      %v4686 = vrot.slane %v3914, 5
      %v4687 = vsel %vm1917, %v4685, %v4686
      %v4688 = vrot.slane %v4540, 5
      %v4689 = vrot.slane %v4688, 4
      %v4690 = vrot.slane %v3916, 5
      %v4691 = vsel %vm1917, %v4689, %v4690
      %v4692 = vrot.slane %v4690, 4
      %v4693 = vrot.slane %v3917, 5
      %v4694 = vsel %vm1917, %v4692, %v4693
      %v4695 = vrot.slane %v4541, 5
      %v4696 = vrot.slane %v4695, 4
      %v4697 = vrot.slane %v3919, 5
      %v4698 = vsel %vm1917, %v4696, %v4697
      %v4699 = vrot.slane %v4697, 4
      %v4700 = vrot.slane %v3920, 5
      %v4701 = vsel %vm1917, %v4699, %v4700
      %v4702 = vld [vmem:[%s303 + $0x20] sm:$0xf]
      %v4703 = vunpack.c.l.b16 %v4593
      %v4704 = vunpack.c.l.b16 %v4596
      %v4705 = vunpack.c.l.b16 %v4600
      %v4706 = vunpack.c.l.b16 %v4603
      %v4707 = vunpack.c.l.b16 %v4607
      %v4708 = vunpack.c.l.b16 %v4610
      %v4709 = vunpack.c.l.b16 %v4614
      %v4710 = vunpack.c.l.b16 %v4617
      %v4711 = vunpack.c.l.b16 %v4621
      %v4712 = vunpack.c.l.b16 %v4624
      %v4713 = vunpack.c.l.b16 %v4628
      %v4714 = vunpack.c.l.b16 %v4631
      %v4715 = vunpack.c.l.b16 %v4635
      %v4716 = vunpack.c.l.b16 %v4638
      %v4717 = vunpack.c.l.b16 %v4642
      %v4718 = vunpack.c.l.b16 %v4645
      %v4719 = vunpack.c.l.b16 %v4649
      %v4720 = vunpack.c.l.b16 %v4652
      %v4721 = vunpack.c.l.b16 %v4656
      %v4722 = vunpack.c.l.b16 %v4659
      %v4723 = vunpack.c.l.b16 %v4663
      %v4724 = vunpack.c.l.b16 %v4666
      %v4725 = vunpack.c.l.b16 %v4670
      %v4726 = vunpack.c.l.b16 %v4673
      %v4727 = vunpack.c.l.b16 %v4677
      %v4728 = vunpack.c.l.b16 %v4680
      %v4729 = vunpack.c.l.b16 %v4684
      %v4730 = vunpack.c.l.b16 %v4687
      %v4731 = vunpack.c.l.b16 %v4691
      %v4732 = vunpack.c.l.b16 %v4694
      %v4733 = vunpack.c.l.b16 %v4698
      %v4734 = vunpack.c.l.b16 %v4701
      %v4735 = vpack.c.b16 %v4704, %v4703
      %v4736 = vpack.c.b16 %v4706, %v4705
      %v4737 = vpack.c.b16 %v4708, %v4707
      %v4738 = vpack.c.b16 %v4710, %v4709
      %v4739 = vpack.c.b16 %v4712, %v4711
      %v4740 = vpack.c.b16 %v4714, %v4713
      %v4741 = vpack.c.b16 %v4716, %v4715
      %v4742 = vpack.c.b16 %v4718, %v4717
      %v4743 = vpack.c.b16 %v4720, %v4719
      %v4744 = vpack.c.b16 %v4722, %v4721
      %v4745 = vpack.c.b16 %v4724, %v4723
      %v4746 = vpack.c.b16 %v4726, %v4725
      %v4747 = vpack.c.b16 %v4728, %v4727
      %v4748 = vpack.c.b16 %v4730, %v4729
      %v4749 = vpack.c.b16 %v4732, %v4731
      %v4750 = vpack.c.b16 %v4734, %v4733
      %v4752 = vsel %vm1505, %v4735, 0
      %v4755 = vsel %vm1505, %v4736, 0
      %v4758 = vsel %vm1505, %v4737, 0
      %v4761 = vsel %vm1505, %v4738, 0
      %v4764 = vsel %vm1505, %v4739, 0
      %v4767 = vsel %vm1505, %v4740, 0
      %v4770 = vsel %vm1505, %v4741, 0
      %v4773 = vsel %vm1505, %v4742, 0
      %v4776 = vsel %vm1505, %v4743, 0
      %v4779 = vsel %vm1505, %v4744, 0
      %v4782 = vsel %vm1505, %v4745, 0
      %v4785 = vsel %vm1505, %v4746, 0
      %v4788 = vsel %vm1505, %v4747, 0
      %v4791 = vsel %vm1505, %v4748, 0
      %v4794 = vsel %vm1505, %v4749, 0
      %v4797 = vsel %vm1505, %v4750, 0
      %v4800 = vsel %vm1554, %v4702, 0
      %4802 = vmatpush.bf16.msra.mxu0 0
      %4803 = vmatpush.bf16.msra.mxu0 0
      %4804 = vmatpush.bf16.msra.mxu0 0
      %4805 = vmatpush.bf16.msra.mxu0 0
      %4806 = vmatpush.bf16.msra.mxu0 0
      %4807 = vmatpush.bf16.msra.mxu0 0
      %4808 = vmatpush.bf16.msra.mxu0 0
      %4809 = vmatpush.bf16.msra.mxu0 %v4800
      %4810 = vmatmul.bf16.gmra.mxu0 %v4752
      %v4811 = vpop.f32.mrf.mxu0
      %v4812 = vadd.f32 0.0, %v4811
      %v4813 = vpop.f32.mrf.mxu0
      %v4814 = vadd.f32 0.0, %v4813
      %4815 = vmatmul.bf16.gmra.mxu0 %v4755
      %v4816 = vpop.f32.mrf.mxu0
      %v4817 = vadd.f32 0.0, %v4816
      %v4818 = vpop.f32.mrf.mxu0
      %v4819 = vadd.f32 0.0, %v4818
      %4820 = vmatmul.bf16.gmra.mxu0 %v4758
      %v4821 = vpop.f32.mrf.mxu0
      %v4822 = vadd.f32 0.0, %v4821
      %v4823 = vpop.f32.mrf.mxu0
      %v4824 = vadd.f32 0.0, %v4823
      %4825 = vmatmul.bf16.gmra.mxu0 %v4761
      %v4826 = vpop.f32.mrf.mxu0
      %v4827 = vadd.f32 0.0, %v4826
      %v4828 = vpop.f32.mrf.mxu0
      %v4829 = vadd.f32 0.0, %v4828
      %4830 = vmatmul.bf16.gmra.mxu0 %v4764
      %v4831 = vpop.f32.mrf.mxu0
      %v4832 = vadd.f32 0.0, %v4831
      %v4833 = vpop.f32.mrf.mxu0
      %v4834 = vadd.f32 0.0, %v4833
      %4835 = vmatmul.bf16.gmra.mxu0 %v4767
      %v4836 = vpop.f32.mrf.mxu0
      %v4837 = vadd.f32 0.0, %v4836
      %v4838 = vpop.f32.mrf.mxu0
      %v4839 = vadd.f32 0.0, %v4838
      %4840 = vmatmul.bf16.gmra.mxu0 %v4770
      %v4841 = vpop.f32.mrf.mxu0
      %v4842 = vadd.f32 0.0, %v4841
      %v4843 = vpop.f32.mrf.mxu0
      %v4844 = vadd.f32 0.0, %v4843
      %4845 = vmatmul.bf16.gmra.mxu0 %v4773
      %v4846 = vpop.f32.mrf.mxu0
      %v4847 = vadd.f32 0.0, %v4846
      %v4848 = vpop.f32.mrf.mxu0
      %v4849 = vadd.f32 0.0, %v4848
      %4850 = vmatmul.bf16.gmra.mxu0 %v4776
      %v4851 = vpop.f32.mrf.mxu0
      %v4852 = vadd.f32 0.0, %v4851
      %v4853 = vpop.f32.mrf.mxu0
      %v4854 = vadd.f32 0.0, %v4853
      %4855 = vmatmul.bf16.gmra.mxu0 %v4779
      %v4856 = vpop.f32.mrf.mxu0
      %v4857 = vadd.f32 0.0, %v4856
      %v4858 = vpop.f32.mrf.mxu0
      %v4859 = vadd.f32 0.0, %v4858
      %4860 = vmatmul.bf16.gmra.mxu0 %v4782
      %v4861 = vpop.f32.mrf.mxu0
      %v4862 = vadd.f32 0.0, %v4861
      %v4863 = vpop.f32.mrf.mxu0
      %v4864 = vadd.f32 0.0, %v4863
      %4865 = vmatmul.bf16.gmra.mxu0 %v4785
      %v4866 = vpop.f32.mrf.mxu0
      %v4867 = vadd.f32 0.0, %v4866
      %v4868 = vpop.f32.mrf.mxu0
      %v4869 = vadd.f32 0.0, %v4868
      %4870 = vmatmul.bf16.gmra.mxu0 %v4788
      %v4871 = vpop.f32.mrf.mxu0
      %v4872 = vadd.f32 0.0, %v4871
      %v4873 = vpop.f32.mrf.mxu0
      %v4874 = vadd.f32 0.0, %v4873
      %4875 = vmatmul.bf16.gmra.mxu0 %v4791
      %v4876 = vpop.f32.mrf.mxu0
      %v4877 = vadd.f32 0.0, %v4876
      %v4878 = vpop.f32.mrf.mxu0
      %v4879 = vadd.f32 0.0, %v4878
      %4880 = vmatmul.bf16.gmra.mxu0 %v4794
      %v4881 = vpop.f32.mrf.mxu0
      %v4882 = vadd.f32 0.0, %v4881
      %v4883 = vpop.f32.mrf.mxu0
      %v4884 = vadd.f32 0.0, %v4883
      %4885 = vmatmul.bf16.gmra.mxu0 %v4797
      %v4886 = vpop.f32.mrf.mxu0
      %v4887 = vadd.f32 0.0, %v4886
      %v4888 = vpop.f32.mrf.mxu0
      %v4889 = vadd.f32 0.0, %v4888
      %4890 = vdwg.mxu0
      %v4891 = vadd.f32 %v4494, %v4812
      %v4892 = vadd.f32 %v4495, %v4814
      %v4893 = vadd.f32 %v4496, %v4817
      %v4894 = vadd.f32 %v4497, %v4819
      %v4895 = vadd.f32 %v4498, %v4822
      %v4896 = vadd.f32 %v4499, %v4824
      %v4897 = vadd.f32 %v4500, %v4827
      %v4898 = vadd.f32 %v4501, %v4829
      %v4899 = vadd.f32 %v4502, %v4832
      %v4900 = vadd.f32 %v4503, %v4834
      %v4901 = vadd.f32 %v4504, %v4837
      %v4902 = vadd.f32 %v4505, %v4839
      %v4903 = vadd.f32 %v4506, %v4842
      %v4904 = vadd.f32 %v4507, %v4844
      %v4905 = vadd.f32 %v4508, %v4847
      %v4906 = vadd.f32 %v4509, %v4849
      %v4907 = vadd.f32 %v4510, %v4852
      %v4908 = vadd.f32 %v4511, %v4854
      %v4909 = vadd.f32 %v4512, %v4857
      %v4910 = vadd.f32 %v4513, %v4859
      %v4911 = vadd.f32 %v4514, %v4862
      %v4912 = vadd.f32 %v4515, %v4864
      %v4913 = vadd.f32 %v4516, %v4867
      %v4914 = vadd.f32 %v4517, %v4869
      %v4915 = vadd.f32 %v4518, %v4872
      %v4916 = vadd.f32 %v4519, %v4874
      %v4917 = vadd.f32 %v4520, %v4877
      %v4918 = vadd.f32 %v4521, %v4879
      %v4919 = vadd.f32 %v4522, %v4882
      %v4920 = vadd.f32 %v4523, %v4884
      %v4921 = vadd.f32 %v4524, %v4887
      %v4922 = vadd.f32 %v4525, %v4889
      %v4923 = vsel %vm1505, %v4891, 0.0
      %v4924 = vsel %vm1505, %v4892, 0.0
      %v4925 = vadd.f32 %v4923, %v4924
      %v4926 = vsel %vm1505, %v4893, 0.0
      %v4927 = vadd.f32 %v4925, %v4926
      %v4928 = vsel %vm1505, %v4894, 0.0
      %v4929 = vadd.f32 %v4927, %v4928
      %v4930 = vsel %vm1505, %v4895, 0.0
      %v4931 = vadd.f32 %v4929, %v4930
      %v4932 = vsel %vm1505, %v4896, 0.0
      %v4933 = vadd.f32 %v4931, %v4932
      %v4934 = vsel %vm1505, %v4897, 0.0
      %v4935 = vadd.f32 %v4933, %v4934
      %v4936 = vsel %vm1505, %v4898, 0.0
      %v4937 = vadd.f32 %v4935, %v4936
      %v4938 = vsel %vm1505, %v4899, 0.0
      %v4939 = vadd.f32 %v4937, %v4938
      %v4940 = vsel %vm1505, %v4900, 0.0
      %v4941 = vadd.f32 %v4939, %v4940
      %v4942 = vsel %vm1505, %v4901, 0.0
      %v4943 = vadd.f32 %v4941, %v4942
      %v4944 = vsel %vm1505, %v4902, 0.0
      %v4945 = vadd.f32 %v4943, %v4944
      %v4946 = vsel %vm1505, %v4903, 0.0
      %v4947 = vadd.f32 %v4945, %v4946
      %v4948 = vsel %vm1505, %v4904, 0.0
      %v4949 = vadd.f32 %v4947, %v4948
      %v4950 = vsel %vm1505, %v4905, 0.0
      %v4951 = vadd.f32 %v4949, %v4950
      %v4952 = vsel %vm1505, %v4906, 0.0
      %v4953 = vadd.f32 %v4951, %v4952
      %v4954 = vsel %vm1505, %v4907, 0.0
      %v4955 = vadd.f32 %v4953, %v4954
      %v4956 = vsel %vm1505, %v4908, 0.0
      %v4957 = vadd.f32 %v4955, %v4956
      %v4958 = vsel %vm1505, %v4909, 0.0
      %v4959 = vadd.f32 %v4957, %v4958
      %v4960 = vsel %vm1505, %v4910, 0.0
      %v4961 = vadd.f32 %v4959, %v4960
      %v4962 = vsel %vm1505, %v4911, 0.0
      %v4963 = vadd.f32 %v4961, %v4962
      %v4964 = vsel %vm1505, %v4912, 0.0
      %v4965 = vadd.f32 %v4963, %v4964
      %v4966 = vsel %vm1505, %v4913, 0.0
      %v4967 = vadd.f32 %v4965, %v4966
      %v4968 = vsel %vm1505, %v4914, 0.0
      %v4969 = vadd.f32 %v4967, %v4968
      %v4970 = vsel %vm1505, %v4915, 0.0
      %v4971 = vadd.f32 %v4969, %v4970
      %v4972 = vsel %vm1505, %v4916, 0.0
      %v4973 = vadd.f32 %v4971, %v4972
      %v4974 = vsel %vm1505, %v4917, 0.0
      %v4975 = vadd.f32 %v4973, %v4974
      %v4976 = vsel %vm1505, %v4918, 0.0
      %v4977 = vadd.f32 %v4975, %v4976
      %v4978 = vsel %vm1505, %v4919, 0.0
      %v4979 = vadd.f32 %v4977, %v4978
      %v4980 = vsel %vm1505, %v4920, 0.0
      %v4981 = vadd.f32 %v4979, %v4980
      %v4982 = vsel %vm1505, %v4921, 0.0
      %v4983 = vadd.f32 %v4981, %v4982
      %v4984 = vsel %vm1505, %v4922, 0.0
      %v4985 = vadd.f32 %v4983, %v4984
      %v4986 = vrot.slane %v4985, 4
      %v4987 = vadd.f32 %v4985, %v4986
      %v4988 = vrot.slane %v4987, 2
      %v4989 = vadd.f32 %v4987, %v4988
      %v4990 = vrot.slane %v4989, 1
      %v4991 = vadd.f32 %v4989, %v4990
      %v4992 = vmul.f32 %v4891, %v4891
      %v4993 = vmul.f32 %v4892, %v4892
      %v4994 = vmul.f32 %v4893, %v4893
      %v4995 = vmul.f32 %v4894, %v4894
      %v4996 = vmul.f32 %v4895, %v4895
      %v4997 = vmul.f32 %v4896, %v4896
      %v4998 = vmul.f32 %v4897, %v4897
      %v4999 = vmul.f32 %v4898, %v4898
      %v5000 = vmul.f32 %v4899, %v4899
      %v5001 = vmul.f32 %v4900, %v4900
      %v5002 = vmul.f32 %v4901, %v4901
      %v5003 = vmul.f32 %v4902, %v4902
      %v5004 = vmul.f32 %v4903, %v4903
      %v5005 = vmul.f32 %v4904, %v4904
      %v5006 = vmul.f32 %v4905, %v4905
      %v5007 = vmul.f32 %v4906, %v4906
      %v5008 = vmul.f32 %v4907, %v4907
      %v5009 = vmul.f32 %v4908, %v4908
      %v5010 = vmul.f32 %v4909, %v4909
      %v5011 = vmul.f32 %v4910, %v4910
      %v5012 = vmul.f32 %v4911, %v4911
      %v5013 = vmul.f32 %v4912, %v4912
      %v5014 = vmul.f32 %v4913, %v4913
      %v5015 = vmul.f32 %v4914, %v4914
      %v5016 = vmul.f32 %v4915, %v4915
      %v5017 = vmul.f32 %v4916, %v4916
      %v5018 = vmul.f32 %v4917, %v4917
      %v5019 = vmul.f32 %v4918, %v4918
      %v5020 = vmul.f32 %v4919, %v4919
      %v5021 = vmul.f32 %v4920, %v4920
      %v5022 = vmul.f32 %v4921, %v4921
      %v5023 = vmul.f32 %v4922, %v4922
      %v5024 = vsel %vm1505, %v4992, 0.0
      %v5025 = vsel %vm1505, %v4993, 0.0
      %v5026 = vadd.f32 %v5024, %v5025
      %v5027 = vsel %vm1505, %v4994, 0.0
      %v5028 = vadd.f32 %v5026, %v5027
      %v5029 = vsel %vm1505, %v4995, 0.0
      %v5030 = vadd.f32 %v5028, %v5029
      %v5031 = vsel %vm1505, %v4996, 0.0
      %v5032 = vadd.f32 %v5030, %v5031
      %v5033 = vsel %vm1505, %v4997, 0.0
      %v5034 = vadd.f32 %v5032, %v5033
      %v5035 = vsel %vm1505, %v4998, 0.0
      %v5036 = vadd.f32 %v5034, %v5035
      %v5037 = vsel %vm1505, %v4999, 0.0
      %v5038 = vadd.f32 %v5036, %v5037
      %v5039 = vsel %vm1505, %v5000, 0.0
      %v5040 = vadd.f32 %v5038, %v5039
      %v5041 = vsel %vm1505, %v5001, 0.0
      %v5042 = vadd.f32 %v5040, %v5041
      %v5043 = vsel %vm1505, %v5002, 0.0
      %v5044 = vadd.f32 %v5042, %v5043
      %v5045 = vsel %vm1505, %v5003, 0.0
      %v5046 = vadd.f32 %v5044, %v5045
      %v5047 = vsel %vm1505, %v5004, 0.0
      %v5048 = vadd.f32 %v5046, %v5047
      %v5049 = vsel %vm1505, %v5005, 0.0
      %v5050 = vadd.f32 %v5048, %v5049
      %v5051 = vsel %vm1505, %v5006, 0.0
      %v5052 = vadd.f32 %v5050, %v5051
      %v5053 = vsel %vm1505, %v5007, 0.0
      %v5054 = vadd.f32 %v5052, %v5053
      %v5055 = vsel %vm1505, %v5008, 0.0
      %v5056 = vadd.f32 %v5054, %v5055
      %v5057 = vsel %vm1505, %v5009, 0.0
      %v5058 = vadd.f32 %v5056, %v5057
      %v5059 = vsel %vm1505, %v5010, 0.0
      %v5060 = vadd.f32 %v5058, %v5059
      %v5061 = vsel %vm1505, %v5011, 0.0
      %v5062 = vadd.f32 %v5060, %v5061
      %v5063 = vsel %vm1505, %v5012, 0.0
      %v5064 = vadd.f32 %v5062, %v5063
      %v5065 = vsel %vm1505, %v5013, 0.0
      %v5066 = vadd.f32 %v5064, %v5065
      %v5067 = vsel %vm1505, %v5014, 0.0
      %v5068 = vadd.f32 %v5066, %v5067
      %v5069 = vsel %vm1505, %v5015, 0.0
      %v5070 = vadd.f32 %v5068, %v5069
      %v5071 = vsel %vm1505, %v5016, 0.0
      %v5072 = vadd.f32 %v5070, %v5071
      %v5073 = vsel %vm1505, %v5017, 0.0
      %v5074 = vadd.f32 %v5072, %v5073
      %v5075 = vsel %vm1505, %v5018, 0.0
      %v5076 = vadd.f32 %v5074, %v5075
      %v5077 = vsel %vm1505, %v5019, 0.0
      %v5078 = vadd.f32 %v5076, %v5077
      %v5079 = vsel %vm1505, %v5020, 0.0
      %v5080 = vadd.f32 %v5078, %v5079
      %v5081 = vsel %vm1505, %v5021, 0.0
      %v5082 = vadd.f32 %v5080, %v5081
      %v5083 = vsel %vm1505, %v5022, 0.0
      %v5084 = vadd.f32 %v5082, %v5083
      %v5085 = vsel %vm1505, %v5023, 0.0
      %v5086 = vadd.f32 %v5084, %v5085
      %v5087 = vrot.slane %v5086, 4
      %v5088 = vadd.f32 %v5086, %v5087
      %v5089 = vrot.slane %v5088, 2
      %v5090 = vadd.f32 %v5088, %v5089
      %v5091 = vrot.slane %v5090, 1
      %v5092 = vadd.f32 %v5090, %v5091
      %vm5093 = vcmask 1040384
      %v5094 = vsel %vm5093, %v4991, %v5092
      %vm5095 = vcmask 58368
      %5096 = vst.msk [vmem:[%s321] sm:$0x3] %vm5095, %v5094
      %v5097 = vld [vmem:[%s306] sm:$0x1]
      %v5099 = vperm.slane %v5097, 0
      %v5101 = vadd.f32 %v4891, %v5099
      %v5102 = vadd.f32 %v4892, %v5099
      %v5103 = vadd.f32 %v4893, %v5099
      %v5104 = vadd.f32 %v4894, %v5099
      %v5105 = vadd.f32 %v4895, %v5099
      %v5106 = vadd.f32 %v4896, %v5099
      %v5107 = vadd.f32 %v4897, %v5099
      %v5108 = vadd.f32 %v4898, %v5099
      %v5109 = vadd.f32 %v4899, %v5099
      %v5110 = vadd.f32 %v4900, %v5099
      %v5111 = vadd.f32 %v4901, %v5099
      %v5112 = vadd.f32 %v4902, %v5099
      %v5113 = vadd.f32 %v4903, %v5099
      %v5114 = vadd.f32 %v4904, %v5099
      %v5115 = vadd.f32 %v4905, %v5099
      %v5116 = vadd.f32 %v4906, %v5099
      %v5117 = vadd.f32 %v4907, %v5099
      %v5118 = vadd.f32 %v4908, %v5099
      %v5119 = vadd.f32 %v4909, %v5099
      %v5120 = vadd.f32 %v4910, %v5099
      %v5121 = vadd.f32 %v4911, %v5099
      %v5122 = vadd.f32 %v4912, %v5099
      %v5123 = vadd.f32 %v4913, %v5099
      %v5124 = vadd.f32 %v4914, %v5099
      %v5125 = vadd.f32 %v4915, %v5099
      %v5126 = vadd.f32 %v4916, %v5099
      %v5127 = vadd.f32 %v4917, %v5099
      %v5128 = vadd.f32 %v4918, %v5099
      %v5129 = vadd.f32 %v4919, %v5099
      %v5130 = vadd.f32 %v4920, %v5099
      %v5131 = vadd.f32 %v4921, %v5099
      %v5132 = vadd.f32 %v4922, %v5099
      %v5133 = vpack.c.bf16 %v5101, %v5101
      %v5134 = vpack.c.bf16 %v5102, %v5102
      %v5135 = vpack.c.bf16 %v5103, %v5103
      %v5136 = vpack.c.bf16 %v5104, %v5104
      %v5137 = vpack.c.bf16 %v5105, %v5105
      %v5138 = vpack.c.bf16 %v5106, %v5106
      %v5139 = vpack.c.bf16 %v5107, %v5107
      %v5140 = vpack.c.bf16 %v5108, %v5108
      %v5141 = vpack.c.bf16 %v5109, %v5109
      %v5142 = vpack.c.bf16 %v5110, %v5110
      %v5143 = vpack.c.bf16 %v5111, %v5111
      %v5144 = vpack.c.bf16 %v5112, %v5112
      %v5145 = vpack.c.bf16 %v5113, %v5113
      %v5146 = vpack.c.bf16 %v5114, %v5114
      %v5147 = vpack.c.bf16 %v5115, %v5115
      %v5148 = vpack.c.bf16 %v5116, %v5116
      %v5149 = vpack.c.bf16 %v5117, %v5117
      %v5150 = vpack.c.bf16 %v5118, %v5118
      %v5151 = vpack.c.bf16 %v5119, %v5119
      %v5152 = vpack.c.bf16 %v5120, %v5120
      %v5153 = vpack.c.bf16 %v5121, %v5121
      %v5154 = vpack.c.bf16 %v5122, %v5122
      %v5155 = vpack.c.bf16 %v5123, %v5123
      %v5156 = vpack.c.bf16 %v5124, %v5124
      %v5157 = vpack.c.bf16 %v5125, %v5125
      %v5158 = vpack.c.bf16 %v5126, %v5126
      %v5159 = vpack.c.bf16 %v5127, %v5127
      %v5160 = vpack.c.bf16 %v5128, %v5128
      %v5161 = vpack.c.bf16 %v5129, %v5129
      %v5162 = vpack.c.bf16 %v5130, %v5130
      %v5163 = vpack.c.bf16 %v5131, %v5131
      %v5164 = vpack.c.bf16 %v5132, %v5132
      %vm5165 = vcmask 60416
      %5166 = vst.msk [vmem:[%s314] sm:$0xf] %vm5165, %v5133
      %5167 = vst.msk [vmem:[%s314 + $0x4] sm:$0xf] %vm5165, %v5134
      %5168 = vst.msk [vmem:[%s314 + $0x8] sm:$0xf] %vm5165, %v5135
      %5169 = vst.msk [vmem:[%s314 + $0xc] sm:$0xf] %vm5165, %v5136
      %5170 = vst.msk [vmem:[%s314 + $0x10] sm:$0xf] %vm5165, %v5137
      %5171 = vst.msk [vmem:[%s314 + $0x14] sm:$0xf] %vm5165, %v5138
      %5172 = vst.msk [vmem:[%s314 + $0x18] sm:$0xf] %vm5165, %v5139
      %5173 = vst.msk [vmem:[%s314 + $0x1c] sm:$0xf] %vm5165, %v5140
      %5174 = vst.msk [vmem:[%s314 + $0x20] sm:$0xf] %vm5165, %v5141
      %5175 = vst.msk [vmem:[%s314 + $0x24] sm:$0xf] %vm5165, %v5142
      %5176 = vst.msk [vmem:[%s314 + $0x28] sm:$0xf] %vm5165, %v5143
      %5177 = vst.msk [vmem:[%s314 + $0x2c] sm:$0xf] %vm5165, %v5144
      %5178 = vst.msk [vmem:[%s314 + $0x30] sm:$0xf] %vm5165, %v5145
      %5179 = vst.msk [vmem:[%s314 + $0x34] sm:$0xf] %vm5165, %v5146
      %5180 = vst.msk [vmem:[%s314 + $0x38] sm:$0xf] %vm5165, %v5147
      %5181 = vst.msk [vmem:[%s314 + $0x3c] sm:$0xf] %vm5165, %v5148
      %5182 = vst.msk [vmem:[%s314 + $0x40] sm:$0xf] %vm5165, %v5149
      %5183 = vst.msk [vmem:[%s314 + $0x44] sm:$0xf] %vm5165, %v5150
      %5184 = vst.msk [vmem:[%s314 + $0x48] sm:$0xf] %vm5165, %v5151
      %5185 = vst.msk [vmem:[%s314 + $0x4c] sm:$0xf] %vm5165, %v5152
      %5186 = vst.msk [vmem:[%s314 + $0x50] sm:$0xf] %vm5165, %v5153
      %5187 = vst.msk [vmem:[%s314 + $0x54] sm:$0xf] %vm5165, %v5154
      %5188 = vst.msk [vmem:[%s314 + $0x58] sm:$0xf] %vm5165, %v5155
      %5189 = vst.msk [vmem:[%s314 + $0x5c] sm:$0xf] %vm5165, %v5156
      %5190 = vst.msk [vmem:[%s314 + $0x60] sm:$0xf] %vm5165, %v5157
      %5191 = vst.msk [vmem:[%s314 + $0x64] sm:$0xf] %vm5165, %v5158
      %5192 = vst.msk [vmem:[%s314 + $0x68] sm:$0xf] %vm5165, %v5159
      %5193 = vst.msk [vmem:[%s314 + $0x6c] sm:$0xf] %vm5165, %v5160
      %5194 = vst.msk [vmem:[%s314 + $0x70] sm:$0xf] %vm5165, %v5161
      %5195 = vst.msk [vmem:[%s314 + $0x74] sm:$0xf] %vm5165, %v5162
      %5196 = vst.msk [vmem:[%s314 + $0x78] sm:$0xf] %vm5165, %v5163
      %5197 = vst.msk [vmem:[%s314 + $0x7c] sm:$0xf] %vm5165, %v5164
      %p5198 = scmp.lt.s32.totalorder %s22, 1
      %s5199 = scalar_select %p5198, %s22, 1
      %p5200 = scmp.lt.s32.totalorder %s23, 0
      %s5201 = scalar_select %p5200, %s23, 0
      %s5202 = smul.addr %s5199, 32
      %s5203 = sadd.s32 %s5201, %s5202
      %s5204 = smul.addr %s5203, 4
      %s5205 = scalar_lea.vmem %s5, %s5204
      %p5206 = scmp.lt.s32.totalorder %s22, 1
      %s5207 = scalar_select %p5206, %s22, 1
      %p5208 = scmp.lt.s32.totalorder %s23, 0
      %s5209 = scalar_select %p5208, %s23, 0
      %s5210 = sadd.s32 %s5209, %s5207
      %s5211 = smul.addr %s5210, 2
      %s5212 = scalar_lea.vmem %s6, %s5211
      // Predicated region
      $region45: #{up_forward.4} parent=39 // pred_check
        %p5213 = pneg %p170
      $region46: #{up_forward.4} parent=39 // pred_check_branch
        %5215 = sbr.rel (%p5213) target = $region48
      $region47: #{up_forward.4} parent=39 // pred_region
        _
      $region48: #{up_forward.4} parent=39 // pred_fallthru
        _
      // Predicated region
      $region49: #{up_forward.4} parent=39 // pred_check
        %p5216 = pneg %p198
      $region50: #{up_forward.4} parent=39 // pred_check_branch
        %5218 = sbr.rel (%p5216) target = $region52
      $region51: #{up_forward.4} parent=39 // pred_region
        _
      $region52: #{up_forward.4} parent=39 // pred_fallthru
        _
    $region40: #{up_forward.4} parent=5 // pred_fallthru
      _
    %p5219 = scmp.le.s32.totalorder 2, %s13
    // Predicated region
    $region53: #{up_forward.4} parent=5 // pred_check
      %p5220 = pneg %p5219
    $region54: #{up_forward.4} parent=5 // pred_check_branch
      %5222 = sbr.rel (%p5220) target = $region56
    $region55: #{up_forward.4} parent=5 // pred_region
      %s5223 = ssub.s32 %s13, 2
      // Predicated region
      $region57: #{up_forward.4} parent=55 // pred_check
        %p5224 = pneg %p176
      $region58: #{up_forward.4} parent=55 // pred_check_branch
        %5226 = sbr.rel (%p5224) target = $region60
      $region59: #{up_forward.4} parent=55 // pred_region
        %p5227 = scmp.lt.s32.totalorder %s24, 1
        %s5228 = scalar_select %p5227, %s24, 1
        %p5229 = scmp.lt.s32.totalorder %s25, 0
        %s5230 = scalar_select %p5229, %s25, 0
        %s5231 = smul.addr %s5228, 32
        %s5232 = sadd.s32 %s5230, %s5231
        %s5233 = smul.addr %s5232, 4
        %s5234 = scalar_lea.vmem %s5, %s5233
      $region60: #{up_forward.4} parent=55 // pred_fallthru
        _
      // Predicated region
      $region61: #{up_forward.4} parent=55 // pred_check
        %p5235 = pneg %p204
      $region62: #{up_forward.4} parent=55 // pred_check_branch
        %5237 = sbr.rel (%p5235) target = $region64
      $region63: #{up_forward.4} parent=55 // pred_region
        %p5238 = scmp.lt.s32.totalorder %s24, 1
        %s5239 = scalar_select %p5238, %s24, 1
        %p5240 = scmp.lt.s32.totalorder %s25, 0
        %s5241 = scalar_select %p5240, %s25, 0
        %s5242 = sadd.s32 %s5241, %s5239
        %s5243 = smul.addr %s5242, 2
        %s5244 = scalar_lea.vmem %s6, %s5243
      $region64: #{up_forward.4} parent=55 // pred_fallthru
        _
    $region56: #{up_forward.4} parent=5 // pred_fallthru
      _
  $region6: #{up_forward.4} parent=0 // loop_footer
    %s17 = sadd.s32 1, %s13
  $region7: #{up_forward.4} parent=0 // loop_footer_branch
    %12 = sbr.rel target = $region3
  $region8: #{up_forward.4} parent=0 // loop_exit
    _

// kernel: up_forward.3
$region0: #{up_forward.3}
  #allocation0 [shape = 'u32[]', space=smem, size = 0x4, offset = 0x4, fixed_abs, tag = 'smem constant byte address 0x4 - core index']
  #allocation1 [shape = 'u32[72,128]{1,0:T(1,128)}', space=vmem, size = 0x9000, scoped, tag = 'internal scratch']
  #allocation2 [shape = 'bf16[18,18,8]{2,1,0:T(8,128)(2,1)}', space=vmem, size = 0x1b000, scoped, tag = 'scratch operand']
  %s0 = inlined_call_operand.vmem [shape: bf16[2,16,16,4], index: 0, kind: input, shape index: {}]
  %s1 = inlined_call_operand.vmem [shape: bf16[2,16,16,4], index: 1, kind: input, shape index: {}]
  %s2 = inlined_call_operand.vmem [shape: bf16[72,8], index: 2, kind: input, shape index: {}]
  %s3 = inlined_call_operand.vmem [shape: f32[1,8], index: 3, kind: input, shape index: {}]
  %s4 = inlined_call_operand.vmem [shape: bf16[2,16,16,8], index: 4, kind: output, shape index: {0}]
  %s5 = inlined_call_operand.vmem [shape: f32[2,2,8], index: 5, kind: output, shape index: {1}]
  %6 = xla_tuple %s4, %s5
  %s7 = sld [smem:[#allocation0]]
  $region61: #{up_forward.3} parent=0
    _
  %s9 = ssub.s32 1, %s7
  %s10 = scalar_select 0, %s9, %s7
  loop: start=0, step=1, limit=4
  $region2: #{up_forward.3} parent=0 // loop_pre_header
    _
  $region3: #{up_forward.3} parent=0 // loop_header
    %s12 = sphi 0, %s16
    %p13 = scmp.ge.s32.totalorder %s12, 4
    %s19 = sphi 0, %s31
    %s20 = sphi 0, %s27
    %s21 = sphi 0, %s19
    %s22 = sphi 0, %s20
    %s23 = sphi 0, %s21
    %s24 = sphi 0, %s22
    %s34 = sphi 0, %s36
    %s37 = sphi 0, %s34
    %s38 = sphi 0, %s37
    %s54 = sphi 0, %s38
    %s60 = sphi 0, %s62
    %s63 = sphi 0, %s60
    %s64 = sphi 0, %s63
    %s80 = sphi 0, %s64
    %s86 = sphi 0, %s88
    %s89 = sphi 0, %s86
    %s90 = sphi 0, %s89
    %s106 = sphi 0, %s90
    %s112 = sphi 0, %s114
    %s115 = sphi 0, %s112
    %s116 = sphi 0, %s115
    %s132 = sphi 0, %s116
    %s140 = sphi 0, %s142
    %s143 = sphi 0, %s140
    %s144 = sphi 0, %s143
    %s160 = sphi 0, %s144
    %s168 = sphi 0, %s170
    %s171 = sphi 0, %s168
    %s172 = sphi 0, %s171
    %s188 = sphi 0, %s172
  $region4: #{up_forward.3} parent=0 // loop_header_branch
    %15 = sbr.rel (%p13) target = $region8
  $region5: #{up_forward.3} parent=0 // loop_body
    %s17 = ssub.s32 %s12, 1
    %s18 = ssub.s32 %s12, 2
    %s25 = sadd.s32 1, %s20
    %p26 = scmp.ge.s32.totalorder %s25, 1
    %s27 = scalar_select %p26, 0, %s25
    %s28 = sadd.s32 1, %s19
    %s29 = scalar_select %p26, %s28, %s19
    %p30 = scmp.ge.s32.totalorder %s29, 2
    %s31 = scalar_select %p30, 0, %s29
    %s32 = ssub.s32 %s19, %s31
    %p33 = scmp.eq.s32.totalorder %s32, 0
    %s35 = sadd.s32 %s34, 1
    %s36 = scalar_select %p33, %s34, %s35
    %p39 = pneg %p33
    %p40 = scmp.eq.s32.totalorder %s12, 1
    %p41 = por %p39, %p40
    %p42 = scmp.ne.s32.totalorder %s34, %s37
    %p43 = scmp.eq.s32.totalorder %s12, 0
    %p44 = por %p42, %p43
    %p45 = scmp.ne.s32.totalorder %s34, %s37
    %p46 = scmp.eq.s32.totalorder %s17, 1
    %p47 = por %p45, %p46
    %p48 = scmp.ne.s32.totalorder %s37, %s38
    %p49 = scmp.eq.s32.totalorder %s17, 0
    %p50 = por %p48, %p49
    %p51 = scmp.ne.s32.totalorder %s37, %s38
    %p52 = scmp.eq.s32.totalorder %s18, 1
    %p53 = por %p51, %p52
    %p55 = scmp.ne.s32.totalorder %s38, %s54
    %p56 = scmp.eq.s32.totalorder %s18, 0
    %p57 = por %p55, %p56
    %s58 = ssub.s32 %s19, %s31
    %p59 = scmp.eq.s32.totalorder %s58, 0
    %s61 = sadd.s32 %s60, 1
    %s62 = scalar_select %p59, %s60, %s61
    %p65 = pneg %p59
    %p66 = scmp.eq.s32.totalorder %s12, 1
    %p67 = por %p65, %p66
    %p68 = scmp.ne.s32.totalorder %s60, %s63
    %p69 = scmp.eq.s32.totalorder %s12, 0
    %p70 = por %p68, %p69
    %p71 = scmp.ne.s32.totalorder %s60, %s63
    %p72 = scmp.eq.s32.totalorder %s17, 1
    %p73 = por %p71, %p72
    %p74 = scmp.ne.s32.totalorder %s63, %s64
    %p75 = scmp.eq.s32.totalorder %s17, 0
    %p76 = por %p74, %p75
    %p77 = scmp.ne.s32.totalorder %s63, %s64
    %p78 = scmp.eq.s32.totalorder %s18, 1
    %p79 = por %p77, %p78
    %p81 = scmp.ne.s32.totalorder %s64, %s80
    %p82 = scmp.eq.s32.totalorder %s18, 0
    %p83 = por %p81, %p82
    %s84 = ssub.s32 %s20, %s27
    %p85 = scmp.eq.s32.totalorder %s84, 0
    %s87 = sadd.s32 %s86, 1
    %s88 = scalar_select %p85, %s86, %s87
    %p91 = pneg %p85
    %p92 = scmp.eq.s32.totalorder %s12, 1
    %p93 = por %p91, %p92
    %p94 = scmp.ne.s32.totalorder %s86, %s89
    %p95 = scmp.eq.s32.totalorder %s12, 0
    %p96 = por %p94, %p95
    %p97 = scmp.ne.s32.totalorder %s86, %s89
    %p98 = scmp.eq.s32.totalorder %s17, 1
    %p99 = por %p97, %p98
    %p100 = scmp.ne.s32.totalorder %s89, %s90
    %p101 = scmp.eq.s32.totalorder %s17, 0
    %p102 = por %p100, %p101
    %p103 = scmp.ne.s32.totalorder %s89, %s90
    %p104 = scmp.eq.s32.totalorder %s18, 1
    %p105 = por %p103, %p104
    %p107 = scmp.ne.s32.totalorder %s90, %s106
    %p108 = scmp.eq.s32.totalorder %s18, 0
    %p109 = por %p107, %p108
    %s110 = ssub.s32 %s20, %s27
    %p111 = scmp.eq.s32.totalorder %s110, 0
    %s113 = sadd.s32 %s112, 1
    %s114 = scalar_select %p111, %s112, %s113
    %p117 = pneg %p111
    %p118 = scmp.eq.s32.totalorder %s12, 1
    %p119 = por %p117, %p118
    %p120 = scmp.ne.s32.totalorder %s112, %s115
    %p121 = scmp.eq.s32.totalorder %s12, 0
    %p122 = por %p120, %p121
    %p123 = scmp.ne.s32.totalorder %s112, %s115
    %p124 = scmp.eq.s32.totalorder %s17, 1
    %p125 = por %p123, %p124
    %p126 = scmp.ne.s32.totalorder %s115, %s116
    %p127 = scmp.eq.s32.totalorder %s17, 0
    %p128 = por %p126, %p127
    %p129 = scmp.ne.s32.totalorder %s115, %s116
    %p130 = scmp.eq.s32.totalorder %s18, 1
    %p131 = por %p129, %p130
    %p133 = scmp.ne.s32.totalorder %s116, %s132
    %p134 = scmp.eq.s32.totalorder %s18, 0
    %p135 = por %p133, %p134
    %s136 = ssub.s32 %s19, %s31
    %s137 = ssub.s32 %s20, %s27
    %s138 = sor.u32 %s136, %s137
    %p139 = scmp.eq.s32.totalorder %s138, 0
    %s141 = sadd.s32 %s140, 1
    %s142 = scalar_select %p139, %s140, %s141
    %p145 = pneg %p139
    %p146 = scmp.eq.s32.totalorder %s12, 1
    %p147 = por %p145, %p146
    %p148 = scmp.ne.s32.totalorder %s140, %s143
    %p149 = scmp.eq.s32.totalorder %s12, 0
    %p150 = por %p148, %p149
    %p151 = scmp.ne.s32.totalorder %s140, %s143
    %p152 = scmp.eq.s32.totalorder %s17, 1
    %p153 = por %p151, %p152
    %p154 = scmp.ne.s32.totalorder %s143, %s144
    %p155 = scmp.eq.s32.totalorder %s17, 0
    %p156 = por %p154, %p155
    %p157 = scmp.ne.s32.totalorder %s143, %s144
    %p158 = scmp.eq.s32.totalorder %s18, 1
    %p159 = por %p157, %p158
    %p161 = scmp.ne.s32.totalorder %s144, %s160
    %p162 = scmp.eq.s32.totalorder %s18, 0
    %p163 = por %p161, %p162
    %s164 = ssub.s32 %s19, %s31
    %s165 = ssub.s32 %s20, %s27
    %s166 = sor.u32 %s164, %s165
    %p167 = scmp.eq.s32.totalorder %s166, 0
    %s169 = sadd.s32 %s168, 1
    %s170 = scalar_select %p167, %s168, %s169
    %p173 = pneg %p167
    %p174 = scmp.eq.s32.totalorder %s12, 1
    %p175 = por %p173, %p174
    %p176 = scmp.ne.s32.totalorder %s168, %s171
    %p177 = scmp.eq.s32.totalorder %s12, 0
    %p178 = por %p176, %p177
    %p179 = scmp.ne.s32.totalorder %s168, %s171
    %p180 = scmp.eq.s32.totalorder %s17, 1
    %p181 = por %p179, %p180
    %p182 = scmp.ne.s32.totalorder %s171, %s172
    %p183 = scmp.eq.s32.totalorder %s17, 0
    %p184 = por %p182, %p183
    %p185 = scmp.ne.s32.totalorder %s171, %s172
    %p186 = scmp.eq.s32.totalorder %s18, 1
    %p187 = por %p185, %p186
    %p189 = scmp.ne.s32.totalorder %s172, %s188
    %p190 = scmp.eq.s32.totalorder %s18, 0
    %p191 = por %p189, %p190
    %p192 = scmp.le.s32.totalorder 1, %s12
    %p193 = scmp.lt.s32.totalorder %s12, 3
    %p194 = pnand %p192, %p193
    %p195 = pneg %p194
    // Predicated region
    $region9: #{up_forward.3} parent=5 // pred_check
      _
    $region10: #{up_forward.3} parent=5 // pred_check_branch
      %197 = sbr.rel (%p194) target = $region12
    $region11: #{up_forward.3} parent=5 // pred_region
      %s198 = ssub.s32 %s12, 1
      // Predicated region
      $region13: #{up_forward.3} parent=11 // pred_check
        %p199 = pneg %p102
      $region14: #{up_forward.3} parent=11 // pred_check_branch
        %201 = sbr.rel (%p199) target = $region16
      $region15: #{up_forward.3} parent=11 // pred_region
        %p202 = scmp.lt.s32.totalorder %s22, 0
        %s203 = scalar_select %p202, %s22, 0
        %s204 = smul.addr %s203, 4
        %s205 = scalar_lea.vmem %s2, %s204
      $region16: #{up_forward.3} parent=11 // pred_fallthru
        _
      // Predicated region
      $region17: #{up_forward.3} parent=11 // pred_check
        %p206 = pneg %p128
      $region18: #{up_forward.3} parent=11 // pred_check_branch
        %208 = sbr.rel (%p206) target = $region20
      $region19: #{up_forward.3} parent=11 // pred_region
        %p209 = scmp.lt.s32.totalorder %s22, 0
        %s210 = scalar_select %p209, %s22, 0
        %s211 = scalar_lea.vmem %s3, %s210
      $region20: #{up_forward.3} parent=11 // pred_fallthru
        _
    $region12: #{up_forward.3} parent=5 // pred_fallthru
      _
    %p212 = scmp.lt.s32.totalorder %s12, 2
    // Predicated region
    $region21: #{up_forward.3} parent=5 // pred_check
      %p213 = pneg %p212
    $region22: #{up_forward.3} parent=5 // pred_check_branch
      %215 = sbr.rel (%p213) target = $region24
    $region23: #{up_forward.3} parent=5 // pred_region
      // Predicated region
      $region25: #{up_forward.3} parent=23 // pred_check
        %p216 = pneg %p44
      $region26: #{up_forward.3} parent=23 // pred_check_branch
        %218 = sbr.rel (%p216) target = $region28
      $region27: #{up_forward.3} parent=23 // pred_region
        %p219 = scmp.lt.s32.totalorder %s19, 1
        %s220 = scalar_select %p219, %s19, 1
        %s221 = smul.addr %s220, 32
        %s222 = smul.addr %s221, 4
        %s223 = scalar_lea.vmem %s0, %s222
      $region28: #{up_forward.3} parent=23 // pred_fallthru
        _
      // Predicated region
      $region29: #{up_forward.3} parent=23 // pred_check
        %p224 = pneg %p70
      $region30: #{up_forward.3} parent=23 // pred_check_branch
        %226 = sbr.rel (%p224) target = $region32
      $region31: #{up_forward.3} parent=23 // pred_region
        %p227 = scmp.lt.s32.totalorder %s19, 1
        %s228 = scalar_select %p227, %s19, 1
        %s229 = smul.addr %s228, 32
        %s230 = smul.addr %s229, 4
        %s231 = scalar_lea.vmem %s1, %s230
      $region32: #{up_forward.3} parent=23 // pred_fallthru
        _
    $region24: #{up_forward.3} parent=5 // pred_fallthru
      _
    %p232 = scmp.le.s32.totalorder 1, %s12
    %p233 = scmp.lt.s32.totalorder %s12, 3
    %p234 = pnand %p232, %p233
    %p235 = pneg %p234
    // Predicated region
    $region33: #{up_forward.3} parent=5 // pred_check
      _
    $region34: #{up_forward.3} parent=5 // pred_check_branch
      %237 = sbr.rel (%p234) target = $region36
    $region35: #{up_forward.3} parent=5 // pred_region
      %s238 = ssub.s32 %s12, 1
      %p239 = scmp.lt.s32.totalorder %s21, 1
      %s240 = scalar_select %p239, %s21, 1
      %s241 = smul.addr %s240, 32
      %s242 = smul.addr %s241, 4
      %s243 = scalar_lea.vmem %s0, %s242
      %p244 = pneg %p50
      %p245 = pneg %p47
      %p246 = scmp.lt.s32.totalorder %s21, 1
      %s247 = scalar_select %p246, %s21, 1
      %s248 = smul.addr %s247, 32
      %s249 = smul.addr %s248, 4
      %s250 = scalar_lea.vmem %s1, %s249
      %p251 = pneg %p76
      %p252 = pneg %p73
      %p253 = scmp.lt.s32.totalorder %s22, 0
      %s254 = scalar_select %p253, %s22, 0
      %s255 = smul.addr %s254, 4
      %s256 = scalar_lea.vmem %s2, %s255
      %p257 = pneg %p102
      %p258 = pneg %p99
      %p259 = scmp.lt.s32.totalorder %s22, 0
      %s260 = scalar_select %p259, %s22, 0
      %s261 = scalar_lea.vmem %s3, %s260
      %p262 = pneg %p128
      %p263 = pneg %p125
      %p264 = pneg %p156
      %p265 = pneg %p153
      %p266 = scmp.lt.s32.totalorder %s21, 1
      %s267 = scalar_select %p266, %s21, 1
      %p268 = scmp.lt.s32.totalorder %s22, 0
      %s269 = scalar_select %p268, %s22, 0
      %s270 = smul.addr %s267, 32
      %s271 = sadd.s32 %s269, %s270
      %s272 = smul.addr %s271, 4
      %s273 = scalar_lea.vmem %s4, %s272
      %p274 = pneg %p184
      %p275 = pneg %p181
      %p276 = scmp.lt.s32.totalorder %s21, 1
      %s277 = scalar_select %p276, %s21, 1
      %p278 = scmp.lt.s32.totalorder %s22, 0
      %s279 = scalar_select %p278, %s22, 0
      %s280 = sadd.s32 %s279, %s277
      %s281 = smul.addr %s280, 2
      %s282 = scalar_lea.vmem %s5, %s281
      %p283 = scmp.lt.s32.totalorder %s21, 1
      %s284 = scalar_select %p283, %s21, 1
      %s285 = smul.addr %s284, 32
      %s286 = smul.addr %s285, 4
      %s287 = scalar_lea.vmem %s0, %s286
      %p288 = scmp.lt.s32.totalorder %s21, 1
      %s289 = scalar_select %p288, %s21, 1
      %s290 = smul.addr %s289, 32
      %s291 = smul.addr %s290, 4
      %s292 = scalar_lea.vmem %s1, %s291
      %p293 = scmp.lt.s32.totalorder %s22, 0
      %s294 = scalar_select %p293, %s22, 0
      %s295 = smul.addr %s294, 4
      %s296 = scalar_lea.vmem %s2, %s295
      %p297 = scmp.lt.s32.totalorder %s22, 0
      %s298 = scalar_select %p297, %s22, 0
      %s299 = scalar_lea.vmem %s3, %s298
      %p300 = scmp.lt.s32.totalorder %s21, 1
      %s301 = scalar_select %p300, %s21, 1
      %p302 = scmp.lt.s32.totalorder %s22, 0
      %s303 = scalar_select %p302, %s22, 0
      %s304 = smul.addr %s301, 32
      %s305 = sadd.s32 %s303, %s304
      %s306 = smul.addr %s305, 4
      %s307 = scalar_lea.vmem %s4, %s306
      %p308 = scmp.lt.s32.totalorder %s21, 1
      %s309 = scalar_select %p308, %s21, 1
      %p310 = scmp.lt.s32.totalorder %s22, 0
      %s311 = scalar_select %p310, %s22, 0
      %s312 = sadd.s32 %s311, %s309
      %s313 = smul.addr %s312, 2
      %s314 = scalar_lea.vmem %s5, %s313
      %p316 = scmp.eq.s32.totalorder %s22, 0
      // Predicated region
      $region37: #{up_forward.3} parent=35 // pred_check
        %p317 = pneg %p316
      $region38: #{up_forward.3} parent=35 // pred_check_branch
        %319 = sbr.rel (%p317) target = $region40
      $region39: #{up_forward.3} parent=35 // pred_region
        %vm320 = vcmask 60416
        %321 = vst.msk [vmem:[#allocation2] sm:$0xf] %vm320, 0
        %322 = vst.msk [vmem:[#allocation2 + $0x4] sm:$0xf] %vm320, 0
        %vm323 = vcmask 57344
        %324 = vst.msk [vmem:[#allocation2 + $0x8] sm:$0x1] %vm323, 0
        %s325 = scalar_lea.vmem [#allocation2], 204
        %326 = vst.msk [vmem:[%s325] sm:$0xf] %vm320, 0
        %327 = vst.msk [vmem:[%s325 + $0x4] sm:$0xf] %vm320, 0
        %328 = vst.msk [vmem:[%s325 + $0x8] sm:$0x1] %vm323, 0
        %v329 = vld [vmem:[%s287] sm:$0xf]
        %v330 = vld [vmem:[%s287 + $0x4] sm:$0xf]
        %v331 = vld [vmem:[%s287 + $0x8] sm:$0xf]
        %v332 = vld [vmem:[%s287 + $0xc] sm:$0xf]
        %v333 = vld [vmem:[%s287 + $0x10] sm:$0xf]
        %v334 = vld [vmem:[%s287 + $0x14] sm:$0xf]
        %v335 = vld [vmem:[%s287 + $0x18] sm:$0xf]
        %v336 = vld [vmem:[%s287 + $0x1c] sm:$0xf]
        %v337 = vld [vmem:[%s287 + $0x20] sm:$0xf]
        %v338 = vld [vmem:[%s287 + $0x24] sm:$0xf]
        %v339 = vld [vmem:[%s287 + $0x28] sm:$0xf]
        %v340 = vld [vmem:[%s287 + $0x2c] sm:$0xf]
        %v341 = vld [vmem:[%s287 + $0x30] sm:$0xf]
        %v342 = vld [vmem:[%s287 + $0x34] sm:$0xf]
        %v343 = vld [vmem:[%s287 + $0x38] sm:$0xf]
        %v344 = vld [vmem:[%s287 + $0x3c] sm:$0xf]
        %v345 = vld [vmem:[%s287 + $0x40] sm:$0xf]
        %v346 = vld [vmem:[%s287 + $0x44] sm:$0xf]
        %v347 = vld [vmem:[%s287 + $0x48] sm:$0xf]
        %v348 = vld [vmem:[%s287 + $0x4c] sm:$0xf]
        %v349 = vld [vmem:[%s287 + $0x50] sm:$0xf]
        %v350 = vld [vmem:[%s287 + $0x54] sm:$0xf]
        %v351 = vld [vmem:[%s287 + $0x58] sm:$0xf]
        %v352 = vld [vmem:[%s287 + $0x5c] sm:$0xf]
        %v353 = vld [vmem:[%s287 + $0x60] sm:$0xf]
        %v354 = vld [vmem:[%s287 + $0x64] sm:$0xf]
        %v355 = vld [vmem:[%s287 + $0x68] sm:$0xf]
        %v356 = vld [vmem:[%s287 + $0x6c] sm:$0xf]
        %v357 = vld [vmem:[%s287 + $0x70] sm:$0xf]
        %v358 = vld [vmem:[%s287 + $0x74] sm:$0xf]
        %v359 = vld [vmem:[%s287 + $0x78] sm:$0xf]
        %v360 = vld [vmem:[%s287 + $0x7c] sm:$0xf]
        %v361 = vld [vmem:[%s292] sm:$0xf]
        %v362 = vld [vmem:[%s292 + $0x4] sm:$0xf]
        %v363 = vld [vmem:[%s292 + $0x8] sm:$0xf]
        %v364 = vld [vmem:[%s292 + $0xc] sm:$0xf]
        %v365 = vld [vmem:[%s292 + $0x10] sm:$0xf]
        %v366 = vld [vmem:[%s292 + $0x14] sm:$0xf]
        %v367 = vld [vmem:[%s292 + $0x18] sm:$0xf]
        %v368 = vld [vmem:[%s292 + $0x1c] sm:$0xf]
        %v369 = vld [vmem:[%s292 + $0x20] sm:$0xf]
        %v370 = vld [vmem:[%s292 + $0x24] sm:$0xf]
        %v371 = vld [vmem:[%s292 + $0x28] sm:$0xf]
        %v372 = vld [vmem:[%s292 + $0x2c] sm:$0xf]
        %v373 = vld [vmem:[%s292 + $0x30] sm:$0xf]
        %v374 = vld [vmem:[%s292 + $0x34] sm:$0xf]
        %v375 = vld [vmem:[%s292 + $0x38] sm:$0xf]
        %v376 = vld [vmem:[%s292 + $0x3c] sm:$0xf]
        %v377 = vld [vmem:[%s292 + $0x40] sm:$0xf]
        %v378 = vld [vmem:[%s292 + $0x44] sm:$0xf]
        %v379 = vld [vmem:[%s292 + $0x48] sm:$0xf]
        %v380 = vld [vmem:[%s292 + $0x4c] sm:$0xf]
        %v381 = vld [vmem:[%s292 + $0x50] sm:$0xf]
        %v382 = vld [vmem:[%s292 + $0x54] sm:$0xf]
        %v383 = vld [vmem:[%s292 + $0x58] sm:$0xf]
        %v384 = vld [vmem:[%s292 + $0x5c] sm:$0xf]
        %v385 = vld [vmem:[%s292 + $0x60] sm:$0xf]
        %v386 = vld [vmem:[%s292 + $0x64] sm:$0xf]
        %v387 = vld [vmem:[%s292 + $0x68] sm:$0xf]
        %v388 = vld [vmem:[%s292 + $0x6c] sm:$0xf]
        %v389 = vld [vmem:[%s292 + $0x70] sm:$0xf]
        %v390 = vld [vmem:[%s292 + $0x74] sm:$0xf]
        %v391 = vld [vmem:[%s292 + $0x78] sm:$0xf]
        %v392 = vld [vmem:[%s292 + $0x7c] sm:$0xf]
        %v425 = vunpack.c.l.b16 %v329
        %v426 = vunpack.c.l.b16 %v330
        %v427 = vunpack.c.l.b16 %v331
        %v428 = vunpack.c.l.b16 %v332
        %v429 = vunpack.c.l.b16 %v333
        %v430 = vunpack.c.l.b16 %v334
        %v431 = vunpack.c.l.b16 %v335
        %v432 = vunpack.c.l.b16 %v336
        %v433 = vunpack.c.l.b16 %v337
        %v434 = vunpack.c.l.b16 %v338
        %v435 = vunpack.c.l.b16 %v339
        %v436 = vunpack.c.l.b16 %v340
        %v437 = vunpack.c.l.b16 %v341
        %v438 = vunpack.c.l.b16 %v342
        %v439 = vunpack.c.l.b16 %v343
        %v440 = vunpack.c.l.b16 %v344
        %v441 = vunpack.c.l.b16 %v345
        %v442 = vunpack.c.l.b16 %v346
        %v443 = vunpack.c.l.b16 %v347
        %v444 = vunpack.c.l.b16 %v348
        %v445 = vunpack.c.l.b16 %v349
        %v446 = vunpack.c.l.b16 %v350
        %v447 = vunpack.c.l.b16 %v351
        %v448 = vunpack.c.l.b16 %v352
        %v449 = vunpack.c.l.b16 %v353
        %v450 = vunpack.c.l.b16 %v354
        %v451 = vunpack.c.l.b16 %v355
        %v452 = vunpack.c.l.b16 %v356
        %v453 = vunpack.c.l.b16 %v357
        %v454 = vunpack.c.l.b16 %v358
        %v455 = vunpack.c.l.b16 %v359
        %v456 = vunpack.c.l.b16 %v360
        %v457 = vpack.c.b16 %v426, %v425
        %v458 = vpack.c.b16 %v428, %v427
        %v459 = vpack.c.b16 %v430, %v429
        %v460 = vpack.c.b16 %v432, %v431
        %v461 = vpack.c.b16 %v434, %v433
        %v462 = vpack.c.b16 %v436, %v435
        %v463 = vpack.c.b16 %v438, %v437
        %v464 = vpack.c.b16 %v440, %v439
        %v465 = vpack.c.b16 %v442, %v441
        %v466 = vpack.c.b16 %v444, %v443
        %v467 = vpack.c.b16 %v446, %v445
        %v468 = vpack.c.b16 %v448, %v447
        %v469 = vpack.c.b16 %v450, %v449
        %v470 = vpack.c.b16 %v452, %v451
        %v471 = vpack.c.b16 %v454, %v453
        %v472 = vpack.c.b16 %v456, %v455
        %v505 = vunpack.c.l.b16 %v361
        %v506 = vunpack.c.l.b16 %v362
        %v507 = vunpack.c.l.b16 %v363
        %v508 = vunpack.c.l.b16 %v364
        %v509 = vunpack.c.l.b16 %v365
        %v510 = vunpack.c.l.b16 %v366
        %v511 = vunpack.c.l.b16 %v367
        %v512 = vunpack.c.l.b16 %v368
        %v513 = vunpack.c.l.b16 %v369
        %v514 = vunpack.c.l.b16 %v370
        %v515 = vunpack.c.l.b16 %v371
        %v516 = vunpack.c.l.b16 %v372
        %v517 = vunpack.c.l.b16 %v373
        %v518 = vunpack.c.l.b16 %v374
        %v519 = vunpack.c.l.b16 %v375
        %v520 = vunpack.c.l.b16 %v376
        %v521 = vunpack.c.l.b16 %v377
        %v522 = vunpack.c.l.b16 %v378
        %v523 = vunpack.c.l.b16 %v379
        %v524 = vunpack.c.l.b16 %v380
        %v525 = vunpack.c.l.b16 %v381
        %v526 = vunpack.c.l.b16 %v382
        %v527 = vunpack.c.l.b16 %v383
        %v528 = vunpack.c.l.b16 %v384
        %v529 = vunpack.c.l.b16 %v385
        %v530 = vunpack.c.l.b16 %v386
        %v531 = vunpack.c.l.b16 %v387
        %v532 = vunpack.c.l.b16 %v388
        %v533 = vunpack.c.l.b16 %v389
        %v534 = vunpack.c.l.b16 %v390
        %v535 = vunpack.c.l.b16 %v391
        %v536 = vunpack.c.l.b16 %v392
        %v537 = vpack.c.b16 %v506, %v505
        %v538 = vpack.c.b16 %v508, %v507
        %v539 = vpack.c.b16 %v510, %v509
        %v540 = vpack.c.b16 %v512, %v511
        %v541 = vpack.c.b16 %v514, %v513
        %v542 = vpack.c.b16 %v516, %v515
        %v543 = vpack.c.b16 %v518, %v517
        %v544 = vpack.c.b16 %v520, %v519
        %v545 = vpack.c.b16 %v522, %v521
        %v546 = vpack.c.b16 %v524, %v523
        %v547 = vpack.c.b16 %v526, %v525
        %v548 = vpack.c.b16 %v528, %v527
        %v549 = vpack.c.b16 %v530, %v529
        %v550 = vpack.c.b16 %v532, %v531
        %v551 = vpack.c.b16 %v534, %v533
        %v552 = vpack.c.b16 %v536, %v535
        %553 = vrot.lane.b32.xlu0 %v537, 4
        %v554 = vpop.permute.xlu0 %553
        %555 = vrot.lane.b32.xlu0 %v538, 4
        %v556 = vpop.permute.xlu0 %555
        %557 = vrot.lane.b32.xlu0 %v539, 4
        %v558 = vpop.permute.xlu0 %557
        %559 = vrot.lane.b32.xlu0 %v540, 4
        %v560 = vpop.permute.xlu0 %559
        %561 = vrot.lane.b32.xlu0 %v541, 4
        %v562 = vpop.permute.xlu0 %561
        %563 = vrot.lane.b32.xlu0 %v542, 4
        %v564 = vpop.permute.xlu0 %563
        %565 = vrot.lane.b32.xlu0 %v543, 4
        %v566 = vpop.permute.xlu0 %565
        %567 = vrot.lane.b32.xlu0 %v544, 4
        %v568 = vpop.permute.xlu0 %567
        %569 = vrot.lane.b32.xlu0 %v545, 4
        %v570 = vpop.permute.xlu0 %569
        %571 = vrot.lane.b32.xlu0 %v546, 4
        %v572 = vpop.permute.xlu0 %571
        %573 = vrot.lane.b32.xlu0 %v547, 4
        %v574 = vpop.permute.xlu0 %573
        %575 = vrot.lane.b32.xlu0 %v548, 4
        %v576 = vpop.permute.xlu0 %575
        %577 = vrot.lane.b32.xlu0 %v549, 4
        %v578 = vpop.permute.xlu0 %577
        %579 = vrot.lane.b32.xlu0 %v550, 4
        %v580 = vpop.permute.xlu0 %579
        %581 = vrot.lane.b32.xlu0 %v551, 4
        %v582 = vpop.permute.xlu0 %581
        %583 = vrot.lane.b32.xlu0 %v552, 4
        %v584 = vpop.permute.xlu0 %583
        %vm585 = vcmask 31744
        %v588 = vsel %vm585, %v457, %v554
        %v591 = vsel %vm585, %v458, %v556
        %v594 = vsel %vm585, %v459, %v558
        %v597 = vsel %vm585, %v460, %v560
        %v600 = vsel %vm585, %v461, %v562
        %v603 = vsel %vm585, %v462, %v564
        %v606 = vsel %vm585, %v463, %v566
        %v609 = vsel %vm585, %v464, %v568
        %v612 = vsel %vm585, %v465, %v570
        %v615 = vsel %vm585, %v466, %v572
        %v618 = vsel %vm585, %v467, %v574
        %v621 = vsel %vm585, %v468, %v576
        %v624 = vsel %vm585, %v469, %v578
        %v627 = vsel %vm585, %v470, %v580
        %v630 = vsel %vm585, %v471, %v582
        %v633 = vsel %vm585, %v472, %v584
        %v634 = vshrl.u32 %v588, 16
        %v636 = vrot.slane %v634, 7
        %v637 = vshll.u32 %v588, 16
        %v639 = vor.u32 %v636, %v637
        %v640 = vshrl.u32 %v591, 16
        %v642 = vrot.slane %v640, 7
        %v643 = vshll.u32 %v591, 16
        %v645 = vor.u32 %v642, %v643
        %v646 = vshrl.u32 %v594, 16
        %v648 = vrot.slane %v646, 7
        %v649 = vshll.u32 %v594, 16
        %v651 = vor.u32 %v648, %v649
        %v652 = vshrl.u32 %v597, 16
        %v654 = vrot.slane %v652, 7
        %v655 = vshll.u32 %v597, 16
        %v657 = vor.u32 %v654, %v655
        %v658 = vshrl.u32 %v600, 16
        %v660 = vrot.slane %v658, 7
        %v661 = vshll.u32 %v600, 16
        %v663 = vor.u32 %v660, %v661
        %v664 = vshrl.u32 %v603, 16
        %v666 = vrot.slane %v664, 7
        %v667 = vshll.u32 %v603, 16
        %v669 = vor.u32 %v666, %v667
        %v670 = vshrl.u32 %v606, 16
        %v672 = vrot.slane %v670, 7
        %v673 = vshll.u32 %v606, 16
        %v675 = vor.u32 %v672, %v673
        %v676 = vshrl.u32 %v609, 16
        %v678 = vrot.slane %v676, 7
        %v679 = vshll.u32 %v609, 16
        %v681 = vor.u32 %v678, %v679
        %v682 = vshrl.u32 %v612, 16
        %v684 = vrot.slane %v682, 7
        %v685 = vshll.u32 %v612, 16
        %v687 = vor.u32 %v684, %v685
        %v688 = vshrl.u32 %v615, 16
        %v690 = vrot.slane %v688, 7
        %v691 = vshll.u32 %v615, 16
        %v693 = vor.u32 %v690, %v691
        %v694 = vshrl.u32 %v618, 16
        %v696 = vrot.slane %v694, 7
        %v697 = vshll.u32 %v618, 16
        %v699 = vor.u32 %v696, %v697
        %v700 = vshrl.u32 %v621, 16
        %v702 = vrot.slane %v700, 7
        %v703 = vshll.u32 %v621, 16
        %v705 = vor.u32 %v702, %v703
        %v706 = vshrl.u32 %v624, 16
        %v708 = vrot.slane %v706, 7
        %v709 = vshll.u32 %v624, 16
        %v711 = vor.u32 %v708, %v709
        %v712 = vshrl.u32 %v627, 16
        %v714 = vrot.slane %v712, 7
        %v715 = vshll.u32 %v627, 16
        %v717 = vor.u32 %v714, %v715
        %v718 = vshrl.u32 %v630, 16
        %v720 = vrot.slane %v718, 7
        %v721 = vshll.u32 %v630, 16
        %v723 = vor.u32 %v720, %v721
        %v724 = vshrl.u32 %v633, 16
        %v726 = vrot.slane %v724, 7
        %v727 = vshll.u32 %v633, 16
        %v729 = vor.u32 %v726, %v727
        %vm762 = vcmask 1040384
        %vm763 = vsmask.f32 256
        %vm764 = vmand %vm762, %vm763
        %v765 = vsel %vm764, 0, %v639
        %v766 = vsel %vm764, 0, %v645
        %v767 = vsel %vm764, 0, %v651
        %v768 = vsel %vm764, 0, %v657
        %v769 = vsel %vm764, 0, %v663
        %v770 = vsel %vm764, 0, %v669
        %v771 = vsel %vm764, 0, %v675
        %v772 = vsel %vm764, 0, %v681
        %v773 = vsel %vm764, 0, %v687
        %v774 = vsel %vm764, 0, %v693
        %v775 = vsel %vm764, 0, %v699
        %v776 = vsel %vm764, 0, %v705
        %v777 = vsel %vm764, 0, %v711
        %v778 = vsel %vm764, 0, %v717
        %v779 = vsel %vm764, 0, %v723
        %v780 = vsel %vm764, 0, %v729
        %v781 = vsel %vm764, %v636, 0
        %v782 = vsel %vm764, %v642, 0
        %v783 = vsel %vm764, %v648, 0
        %v784 = vsel %vm764, %v654, 0
        %v785 = vsel %vm764, %v660, 0
        %v786 = vsel %vm764, %v666, 0
        %v787 = vsel %vm764, %v672, 0
        %v788 = vsel %vm764, %v678, 0
        %v789 = vsel %vm764, %v684, 0
        %v790 = vsel %vm764, %v690, 0
        %v791 = vsel %vm764, %v696, 0
        %v792 = vsel %vm764, %v702, 0
        %v793 = vsel %vm764, %v708, 0
        %v794 = vsel %vm764, %v714, 0
        %v795 = vsel %vm764, %v720, 0
        %v796 = vsel %vm764, %v726, 0
        %v829 = vunpack.c.l.b16 %v765
        %v830 = vunpack.c.h.b16 %v765
        %v831 = vunpack.c.l.b16 %v781
        %v832 = vunpack.c.l.b16 %v766
        %v833 = vunpack.c.h.b16 %v766
        %v834 = vunpack.c.l.b16 %v782
        %v835 = vunpack.c.l.b16 %v767
        %v836 = vunpack.c.h.b16 %v767
        %v837 = vunpack.c.l.b16 %v783
        %v838 = vunpack.c.l.b16 %v768
        %v839 = vunpack.c.h.b16 %v768
        %v840 = vunpack.c.l.b16 %v784
        %v841 = vunpack.c.l.b16 %v769
        %v842 = vunpack.c.h.b16 %v769
        %v843 = vunpack.c.l.b16 %v785
        %v844 = vunpack.c.l.b16 %v770
        %v845 = vunpack.c.h.b16 %v770
        %v846 = vunpack.c.l.b16 %v786
        %v847 = vunpack.c.l.b16 %v771
        %v848 = vunpack.c.h.b16 %v771
        %v849 = vunpack.c.l.b16 %v787
        %v850 = vunpack.c.l.b16 %v772
        %v851 = vunpack.c.h.b16 %v772
        %v852 = vunpack.c.l.b16 %v788
        %v853 = vunpack.c.l.b16 %v773
        %v854 = vunpack.c.h.b16 %v773
        %v855 = vunpack.c.l.b16 %v789
        %v856 = vunpack.c.l.b16 %v774
        %v857 = vunpack.c.h.b16 %v774
        %v858 = vunpack.c.l.b16 %v790
        %v859 = vunpack.c.l.b16 %v775
        %v860 = vunpack.c.h.b16 %v775
        %v861 = vunpack.c.l.b16 %v791
        %v862 = vunpack.c.l.b16 %v776
        %v863 = vunpack.c.h.b16 %v776
        %v864 = vunpack.c.l.b16 %v792
        %v865 = vunpack.c.l.b16 %v777
        %v866 = vunpack.c.h.b16 %v777
        %v867 = vunpack.c.l.b16 %v793
        %v868 = vunpack.c.l.b16 %v778
        %v869 = vunpack.c.h.b16 %v778
        %v870 = vunpack.c.l.b16 %v794
        %v871 = vunpack.c.l.b16 %v779
        %v872 = vunpack.c.h.b16 %v779
        %v873 = vunpack.c.l.b16 %v795
        %v874 = vunpack.c.l.b16 %v780
        %v875 = vunpack.c.h.b16 %v780
        %v876 = vunpack.c.l.b16 %v796
        %v877 = vpack.c.b16 %v829, %v829
        %v878 = vpack.c.b16 %v830, %v830
        %v879 = vpack.c.b16 %v831, %v831
        %v880 = vpack.c.b16 %v832, %v832
        %v881 = vpack.c.b16 %v833, %v833
        %v882 = vpack.c.b16 %v834, %v834
        %v883 = vpack.c.b16 %v835, %v835
        %v884 = vpack.c.b16 %v836, %v836
        %v885 = vpack.c.b16 %v837, %v837
        %v886 = vpack.c.b16 %v838, %v838
        %v887 = vpack.c.b16 %v839, %v839
        %v888 = vpack.c.b16 %v840, %v840
        %v889 = vpack.c.b16 %v841, %v841
        %v890 = vpack.c.b16 %v842, %v842
        %v891 = vpack.c.b16 %v843, %v843
        %v892 = vpack.c.b16 %v844, %v844
        %v893 = vpack.c.b16 %v845, %v845
        %v894 = vpack.c.b16 %v846, %v846
        %v895 = vpack.c.b16 %v847, %v847
        %v896 = vpack.c.b16 %v848, %v848
        %v897 = vpack.c.b16 %v849, %v849
        %v898 = vpack.c.b16 %v850, %v850
        %v899 = vpack.c.b16 %v851, %v851
        %v900 = vpack.c.b16 %v852, %v852
        %v901 = vpack.c.b16 %v853, %v853
        %v902 = vpack.c.b16 %v854, %v854
        %v903 = vpack.c.b16 %v855, %v855
        %v904 = vpack.c.b16 %v856, %v856
        %v905 = vpack.c.b16 %v857, %v857
        %v906 = vpack.c.b16 %v858, %v858
        %v907 = vpack.c.b16 %v859, %v859
        %v908 = vpack.c.b16 %v860, %v860
        %v909 = vpack.c.b16 %v861, %v861
        %v910 = vpack.c.b16 %v862, %v862
        %v911 = vpack.c.b16 %v863, %v863
        %v912 = vpack.c.b16 %v864, %v864
        %v913 = vpack.c.b16 %v865, %v865
        %v914 = vpack.c.b16 %v866, %v866
        %v915 = vpack.c.b16 %v867, %v867
        %v916 = vpack.c.b16 %v868, %v868
        %v917 = vpack.c.b16 %v869, %v869
        %v918 = vpack.c.b16 %v870, %v870
        %v919 = vpack.c.b16 %v871, %v871
        %v920 = vpack.c.b16 %v872, %v872
        %v921 = vpack.c.b16 %v873, %v873
        %v922 = vpack.c.b16 %v874, %v874
        %v923 = vpack.c.b16 %v875, %v875
        %v924 = vpack.c.b16 %v876, %v876
        %s973 = scalar_lea.vmem [#allocation2], 12
        %974 = vst.msk [vmem:[%s973] sm:$0xf] %vm320, %v877
        %975 = vst.msk [vmem:[%s973 + $0x4] sm:$0xf] %vm320, %v878
        %976 = vst.msk [vmem:[%s973 + $0x8] sm:$0x1] %vm323, %v879
        %977 = vst.msk [vmem:[%s973 + $0xc] sm:$0xf] %vm320, %v880
        %978 = vst.msk [vmem:[%s973 + $0x10] sm:$0xf] %vm320, %v881
        %979 = vst.msk [vmem:[%s973 + $0x14] sm:$0x1] %vm323, %v882
        %980 = vst.msk [vmem:[%s973 + $0x18] sm:$0xf] %vm320, %v883
        %981 = vst.msk [vmem:[%s973 + $0x1c] sm:$0xf] %vm320, %v884
        %982 = vst.msk [vmem:[%s973 + $0x20] sm:$0x1] %vm323, %v885
        %983 = vst.msk [vmem:[%s973 + $0x24] sm:$0xf] %vm320, %v886
        %984 = vst.msk [vmem:[%s973 + $0x28] sm:$0xf] %vm320, %v887
        %985 = vst.msk [vmem:[%s973 + $0x2c] sm:$0x1] %vm323, %v888
        %986 = vst.msk [vmem:[%s973 + $0x30] sm:$0xf] %vm320, %v889
        %987 = vst.msk [vmem:[%s973 + $0x34] sm:$0xf] %vm320, %v890
        %988 = vst.msk [vmem:[%s973 + $0x38] sm:$0x1] %vm323, %v891
        %989 = vst.msk [vmem:[%s973 + $0x3c] sm:$0xf] %vm320, %v892
        %990 = vst.msk [vmem:[%s973 + $0x40] sm:$0xf] %vm320, %v893
        %991 = vst.msk [vmem:[%s973 + $0x44] sm:$0x1] %vm323, %v894
        %992 = vst.msk [vmem:[%s973 + $0x48] sm:$0xf] %vm320, %v895
        %993 = vst.msk [vmem:[%s973 + $0x4c] sm:$0xf] %vm320, %v896
        %994 = vst.msk [vmem:[%s973 + $0x50] sm:$0x1] %vm323, %v897
        %995 = vst.msk [vmem:[%s973 + $0x54] sm:$0xf] %vm320, %v898
        %996 = vst.msk [vmem:[%s973 + $0x58] sm:$0xf] %vm320, %v899
        %997 = vst.msk [vmem:[%s973 + $0x5c] sm:$0x1] %vm323, %v900
        %998 = vst.msk [vmem:[%s973 + $0x60] sm:$0xf] %vm320, %v901
        %999 = vst.msk [vmem:[%s973 + $0x64] sm:$0xf] %vm320, %v902
        %1000 = vst.msk [vmem:[%s973 + $0x68] sm:$0x1] %vm323, %v903
        %1001 = vst.msk [vmem:[%s973 + $0x6c] sm:$0xf] %vm320, %v904
        %1002 = vst.msk [vmem:[%s973 + $0x70] sm:$0xf] %vm320, %v905
        %1003 = vst.msk [vmem:[%s973 + $0x74] sm:$0x1] %vm323, %v906
        %1004 = vst.msk [vmem:[%s973 + $0x78] sm:$0xf] %vm320, %v907
        %1005 = vst.msk [vmem:[%s973 + $0x7c] sm:$0xf] %vm320, %v908
        %1006 = vst.msk [vmem:[%s973 + $0x80] sm:$0x1] %vm323, %v909
        %1007 = vst.msk [vmem:[%s973 + $0x84] sm:$0xf] %vm320, %v910
        %1008 = vst.msk [vmem:[%s973 + $0x88] sm:$0xf] %vm320, %v911
        %1009 = vst.msk [vmem:[%s973 + $0x8c] sm:$0x1] %vm323, %v912
        %1010 = vst.msk [vmem:[%s973 + $0x90] sm:$0xf] %vm320, %v913
        %1011 = vst.msk [vmem:[%s973 + $0x94] sm:$0xf] %vm320, %v914
        %1012 = vst.msk [vmem:[%s973 + $0x98] sm:$0x1] %vm323, %v915
        %1013 = vst.msk [vmem:[%s973 + $0x9c] sm:$0xf] %vm320, %v916
        %1014 = vst.msk [vmem:[%s973 + $0xa0] sm:$0xf] %vm320, %v917
        %1015 = vst.msk [vmem:[%s973 + $0xa4] sm:$0x1] %vm323, %v918
        %1016 = vst.msk [vmem:[%s973 + $0xa8] sm:$0xf] %vm320, %v919
        %1017 = vst.msk [vmem:[%s973 + $0xac] sm:$0xf] %vm320, %v920
        %1018 = vst.msk [vmem:[%s973 + $0xb0] sm:$0x1] %vm323, %v921
        %1019 = vst.msk [vmem:[%s973 + $0xb4] sm:$0xf] %vm320, %v922
        %1020 = vst.msk [vmem:[%s973 + $0xb8] sm:$0xf] %vm320, %v923
        %1021 = vst.msk [vmem:[%s973 + $0xbc] sm:$0x1] %vm323, %v924
      $region40: #{up_forward.3} parent=35 // pred_fallthru
        _
      %v1022 = vld [vmem:[#allocation2] sm:$0xf]
      %v1023 = vld [vmem:[#allocation2 + $0x4] sm:$0xf]
      %v1024 = vld [vmem:[#allocation2 + $0xc] sm:$0xf]
      %v1025 = vld [vmem:[#allocation2 + $0x10] sm:$0xf]
      %v1026 = vld [vmem:[#allocation2 + $0x18] sm:$0xf]
      %v1027 = vld [vmem:[#allocation2 + $0x1c] sm:$0xf]
      %v1028 = vld [vmem:[#allocation2 + $0x24] sm:$0xf]
      %v1029 = vld [vmem:[#allocation2 + $0x28] sm:$0xf]
      %v1030 = vld [vmem:[#allocation2 + $0x30] sm:$0xf]
      %v1031 = vld [vmem:[#allocation2 + $0x34] sm:$0xf]
      %v1032 = vld [vmem:[#allocation2 + $0x3c] sm:$0xf]
      %v1033 = vld [vmem:[#allocation2 + $0x40] sm:$0xf]
      %v1034 = vld [vmem:[#allocation2 + $0x48] sm:$0xf]
      %v1035 = vld [vmem:[#allocation2 + $0x4c] sm:$0xf]
      %v1036 = vld [vmem:[#allocation2 + $0x54] sm:$0xf]
      %v1037 = vld [vmem:[#allocation2 + $0x58] sm:$0xf]
      %v1038 = vld [vmem:[#allocation2 + $0x60] sm:$0xf]
      %v1039 = vld [vmem:[#allocation2 + $0x64] sm:$0xf]
      %v1040 = vld [vmem:[#allocation2 + $0x6c] sm:$0xf]
      %v1041 = vld [vmem:[#allocation2 + $0x70] sm:$0xf]
      %v1042 = vld [vmem:[#allocation2 + $0x78] sm:$0xf]
      %v1043 = vld [vmem:[#allocation2 + $0x7c] sm:$0xf]
      %v1044 = vld [vmem:[#allocation2 + $0x84] sm:$0xf]
      %v1045 = vld [vmem:[#allocation2 + $0x88] sm:$0xf]
      %v1046 = vld [vmem:[#allocation2 + $0x90] sm:$0xf]
      %v1047 = vld [vmem:[#allocation2 + $0x94] sm:$0xf]
      %v1048 = vld [vmem:[#allocation2 + $0x9c] sm:$0xf]
      %v1049 = vld [vmem:[#allocation2 + $0xa0] sm:$0xf]
      %v1050 = vld [vmem:[#allocation2 + $0xa8] sm:$0xf]
      %v1051 = vld [vmem:[#allocation2 + $0xac] sm:$0xf]
      %v1052 = vld [vmem:[#allocation2 + $0xb4] sm:$0xf]
      %v1053 = vld [vmem:[#allocation2 + $0xb8] sm:$0xf]
      %v1054 = vld [vmem:[%s296] sm:$0xf]
      %v1055 = vld [vmem:[#allocation2 + $0x8] sm:$0x1]
      %v1056 = vld [vmem:[#allocation2 + $0x14] sm:$0x1]
      %v1057 = vld [vmem:[#allocation2 + $0x20] sm:$0x1]
      %v1058 = vld [vmem:[#allocation2 + $0x2c] sm:$0x1]
      %v1059 = vld [vmem:[#allocation2 + $0x38] sm:$0x1]
      %v1060 = vld [vmem:[#allocation2 + $0x44] sm:$0x1]
      %v1061 = vld [vmem:[#allocation2 + $0x50] sm:$0x1]
      %v1062 = vld [vmem:[#allocation2 + $0x5c] sm:$0x1]
      %v1063 = vld [vmem:[#allocation2 + $0x68] sm:$0x1]
      %v1064 = vld [vmem:[#allocation2 + $0x74] sm:$0x1]
      %v1065 = vld [vmem:[#allocation2 + $0x80] sm:$0x1]
      %v1066 = vld [vmem:[#allocation2 + $0x8c] sm:$0x1]
      %v1067 = vld [vmem:[#allocation2 + $0x98] sm:$0x1]
      %v1068 = vld [vmem:[#allocation2 + $0xa4] sm:$0x1]
      %v1069 = vld [vmem:[#allocation2 + $0xb0] sm:$0x1]
      %v1070 = vld [vmem:[#allocation2 + $0xbc] sm:$0x1]
      %vm1071 = vsmask.f32 3328
      %vm1072 = vsmask.f32 7440
      %vm1073 = vmor %vm1071, %vm1072
      %v1075 = vshrl.u32 %v1022, 16
      %v1077 = vrot.slane %v1075, 4
      %v1078 = vshll.u32 %v1022, 16
      %v1080 = vrot.slane %v1078, 5
      %v1081 = vor.u32 %v1077, %v1080
      %v1082 = vrot.slane %v1081, 4
      %v1084 = vshll.u32 %v1023, 16
      %v1086 = vrot.slane %v1084, 5
      %v1087 = vsel %vm1073, %v1082, %v1086
      %v1088 = vshrl.u32 %v1023, 16
      %v1090 = vrot.slane %v1088, 4
      %v1091 = vor.u32 %v1090, %v1086
      %v1092 = vrot.slane %v1091, 4
      %v1094 = vshll.u32 %v1055, 16
      %v1096 = vrot.slane %v1094, 5
      %v1097 = vsel %vm1073, %v1092, %v1096
      %v1099 = vshrl.u32 %v1024, 16
      %v1101 = vrot.slane %v1099, 4
      %v1102 = vshll.u32 %v1024, 16
      %v1104 = vrot.slane %v1102, 5
      %v1105 = vor.u32 %v1101, %v1104
      %v1106 = vrot.slane %v1105, 4
      %v1108 = vshll.u32 %v1025, 16
      %v1110 = vrot.slane %v1108, 5
      %v1111 = vsel %vm1073, %v1106, %v1110
      %v1112 = vshrl.u32 %v1025, 16
      %v1114 = vrot.slane %v1112, 4
      %v1115 = vor.u32 %v1114, %v1110
      %v1116 = vrot.slane %v1115, 4
      %v1118 = vshll.u32 %v1056, 16
      %v1120 = vrot.slane %v1118, 5
      %v1121 = vsel %vm1073, %v1116, %v1120
      %v1123 = vshrl.u32 %v1026, 16
      %v1125 = vrot.slane %v1123, 4
      %v1126 = vshll.u32 %v1026, 16
      %v1128 = vrot.slane %v1126, 5
      %v1129 = vor.u32 %v1125, %v1128
      %v1130 = vrot.slane %v1129, 4
      %v1132 = vshll.u32 %v1027, 16
      %v1134 = vrot.slane %v1132, 5
      %v1135 = vsel %vm1073, %v1130, %v1134
      %v1136 = vshrl.u32 %v1027, 16
      %v1138 = vrot.slane %v1136, 4
      %v1139 = vor.u32 %v1138, %v1134
      %v1140 = vrot.slane %v1139, 4
      %v1142 = vshll.u32 %v1057, 16
      %v1144 = vrot.slane %v1142, 5
      %v1145 = vsel %vm1073, %v1140, %v1144
      %v1147 = vshrl.u32 %v1028, 16
      %v1149 = vrot.slane %v1147, 4
      %v1150 = vshll.u32 %v1028, 16
      %v1152 = vrot.slane %v1150, 5
      %v1153 = vor.u32 %v1149, %v1152
      %v1154 = vrot.slane %v1153, 4
      %v1156 = vshll.u32 %v1029, 16
      %v1158 = vrot.slane %v1156, 5
      %v1159 = vsel %vm1073, %v1154, %v1158
      %v1160 = vshrl.u32 %v1029, 16
      %v1162 = vrot.slane %v1160, 4
      %v1163 = vor.u32 %v1162, %v1158
      %v1164 = vrot.slane %v1163, 4
      %v1166 = vshll.u32 %v1058, 16
      %v1168 = vrot.slane %v1166, 5
      %v1169 = vsel %vm1073, %v1164, %v1168
      %v1171 = vshrl.u32 %v1030, 16
      %v1173 = vrot.slane %v1171, 4
      %v1174 = vshll.u32 %v1030, 16
      %v1176 = vrot.slane %v1174, 5
      %v1177 = vor.u32 %v1173, %v1176
      %v1178 = vrot.slane %v1177, 4
      %v1180 = vshll.u32 %v1031, 16
      %v1182 = vrot.slane %v1180, 5
      %v1183 = vsel %vm1073, %v1178, %v1182
      %v1184 = vshrl.u32 %v1031, 16
      %v1186 = vrot.slane %v1184, 4
      %v1187 = vor.u32 %v1186, %v1182
      %v1188 = vrot.slane %v1187, 4
      %v1190 = vshll.u32 %v1059, 16
      %v1192 = vrot.slane %v1190, 5
      %v1193 = vsel %vm1073, %v1188, %v1192
      %v1195 = vshrl.u32 %v1032, 16
      %v1197 = vrot.slane %v1195, 4
      %v1198 = vshll.u32 %v1032, 16
      %v1200 = vrot.slane %v1198, 5
      %v1201 = vor.u32 %v1197, %v1200
      %v1202 = vrot.slane %v1201, 4
      %v1204 = vshll.u32 %v1033, 16
      %v1206 = vrot.slane %v1204, 5
      %v1207 = vsel %vm1073, %v1202, %v1206
      %v1208 = vshrl.u32 %v1033, 16
      %v1210 = vrot.slane %v1208, 4
      %v1211 = vor.u32 %v1210, %v1206
      %v1212 = vrot.slane %v1211, 4
      %v1214 = vshll.u32 %v1060, 16
      %v1216 = vrot.slane %v1214, 5
      %v1217 = vsel %vm1073, %v1212, %v1216
      %v1219 = vshrl.u32 %v1034, 16
      %v1221 = vrot.slane %v1219, 4
      %v1222 = vshll.u32 %v1034, 16
      %v1224 = vrot.slane %v1222, 5
      %v1225 = vor.u32 %v1221, %v1224
      %v1226 = vrot.slane %v1225, 4
      %v1228 = vshll.u32 %v1035, 16
      %v1230 = vrot.slane %v1228, 5
      %v1231 = vsel %vm1073, %v1226, %v1230
      %v1232 = vshrl.u32 %v1035, 16
      %v1234 = vrot.slane %v1232, 4
      %v1235 = vor.u32 %v1234, %v1230
      %v1236 = vrot.slane %v1235, 4
      %v1238 = vshll.u32 %v1061, 16
      %v1240 = vrot.slane %v1238, 5
      %v1241 = vsel %vm1073, %v1236, %v1240
      %v1243 = vshrl.u32 %v1036, 16
      %v1245 = vrot.slane %v1243, 4
      %v1246 = vshll.u32 %v1036, 16
      %v1248 = vrot.slane %v1246, 5
      %v1249 = vor.u32 %v1245, %v1248
      %v1250 = vrot.slane %v1249, 4
      %v1252 = vshll.u32 %v1037, 16
      %v1254 = vrot.slane %v1252, 5
      %v1255 = vsel %vm1073, %v1250, %v1254
      %v1256 = vshrl.u32 %v1037, 16
      %v1258 = vrot.slane %v1256, 4
      %v1259 = vor.u32 %v1258, %v1254
      %v1260 = vrot.slane %v1259, 4
      %v1262 = vshll.u32 %v1062, 16
      %v1264 = vrot.slane %v1262, 5
      %v1265 = vsel %vm1073, %v1260, %v1264
      %v1267 = vshrl.u32 %v1038, 16
      %v1269 = vrot.slane %v1267, 4
      %v1270 = vshll.u32 %v1038, 16
      %v1272 = vrot.slane %v1270, 5
      %v1273 = vor.u32 %v1269, %v1272
      %v1274 = vrot.slane %v1273, 4
      %v1276 = vshll.u32 %v1039, 16
      %v1278 = vrot.slane %v1276, 5
      %v1279 = vsel %vm1073, %v1274, %v1278
      %v1280 = vshrl.u32 %v1039, 16
      %v1282 = vrot.slane %v1280, 4
      %v1283 = vor.u32 %v1282, %v1278
      %v1284 = vrot.slane %v1283, 4
      %v1286 = vshll.u32 %v1063, 16
      %v1288 = vrot.slane %v1286, 5
      %v1289 = vsel %vm1073, %v1284, %v1288
      %v1291 = vshrl.u32 %v1040, 16
      %v1293 = vrot.slane %v1291, 4
      %v1294 = vshll.u32 %v1040, 16
      %v1296 = vrot.slane %v1294, 5
      %v1297 = vor.u32 %v1293, %v1296
      %v1298 = vrot.slane %v1297, 4
      %v1300 = vshll.u32 %v1041, 16
      %v1302 = vrot.slane %v1300, 5
      %v1303 = vsel %vm1073, %v1298, %v1302
      %v1304 = vshrl.u32 %v1041, 16
      %v1306 = vrot.slane %v1304, 4
      %v1307 = vor.u32 %v1306, %v1302
      %v1308 = vrot.slane %v1307, 4
      %v1310 = vshll.u32 %v1064, 16
      %v1312 = vrot.slane %v1310, 5
      %v1313 = vsel %vm1073, %v1308, %v1312
      %v1315 = vshrl.u32 %v1042, 16
      %v1317 = vrot.slane %v1315, 4
      %v1318 = vshll.u32 %v1042, 16
      %v1320 = vrot.slane %v1318, 5
      %v1321 = vor.u32 %v1317, %v1320
      %v1322 = vrot.slane %v1321, 4
      %v1324 = vshll.u32 %v1043, 16
      %v1326 = vrot.slane %v1324, 5
      %v1327 = vsel %vm1073, %v1322, %v1326
      %v1328 = vshrl.u32 %v1043, 16
      %v1330 = vrot.slane %v1328, 4
      %v1331 = vor.u32 %v1330, %v1326
      %v1332 = vrot.slane %v1331, 4
      %v1334 = vshll.u32 %v1065, 16
      %v1336 = vrot.slane %v1334, 5
      %v1337 = vsel %vm1073, %v1332, %v1336
      %v1339 = vshrl.u32 %v1044, 16
      %v1341 = vrot.slane %v1339, 4
      %v1342 = vshll.u32 %v1044, 16
      %v1344 = vrot.slane %v1342, 5
      %v1345 = vor.u32 %v1341, %v1344
      %v1346 = vrot.slane %v1345, 4
      %v1348 = vshll.u32 %v1045, 16
      %v1350 = vrot.slane %v1348, 5
      %v1351 = vsel %vm1073, %v1346, %v1350
      %v1352 = vshrl.u32 %v1045, 16
      %v1354 = vrot.slane %v1352, 4
      %v1355 = vor.u32 %v1354, %v1350
      %v1356 = vrot.slane %v1355, 4
      %v1358 = vshll.u32 %v1066, 16
      %v1360 = vrot.slane %v1358, 5
      %v1361 = vsel %vm1073, %v1356, %v1360
      %v1363 = vshrl.u32 %v1046, 16
      %v1365 = vrot.slane %v1363, 4
      %v1366 = vshll.u32 %v1046, 16
      %v1368 = vrot.slane %v1366, 5
      %v1369 = vor.u32 %v1365, %v1368
      %v1370 = vrot.slane %v1369, 4
      %v1372 = vshll.u32 %v1047, 16
      %v1374 = vrot.slane %v1372, 5
      %v1375 = vsel %vm1073, %v1370, %v1374
      %v1376 = vshrl.u32 %v1047, 16
      %v1378 = vrot.slane %v1376, 4
      %v1379 = vor.u32 %v1378, %v1374
      %v1380 = vrot.slane %v1379, 4
      %v1382 = vshll.u32 %v1067, 16
      %v1384 = vrot.slane %v1382, 5
      %v1385 = vsel %vm1073, %v1380, %v1384
      %v1387 = vshrl.u32 %v1048, 16
      %v1389 = vrot.slane %v1387, 4
      %v1390 = vshll.u32 %v1048, 16
      %v1392 = vrot.slane %v1390, 5
      %v1393 = vor.u32 %v1389, %v1392
      %v1394 = vrot.slane %v1393, 4
      %v1396 = vshll.u32 %v1049, 16
      %v1398 = vrot.slane %v1396, 5
      %v1399 = vsel %vm1073, %v1394, %v1398
      %v1400 = vshrl.u32 %v1049, 16
      %v1402 = vrot.slane %v1400, 4
      %v1403 = vor.u32 %v1402, %v1398
      %v1404 = vrot.slane %v1403, 4
      %v1406 = vshll.u32 %v1068, 16
      %v1408 = vrot.slane %v1406, 5
      %v1409 = vsel %vm1073, %v1404, %v1408
      %v1411 = vshrl.u32 %v1050, 16
      %v1413 = vrot.slane %v1411, 4
      %v1414 = vshll.u32 %v1050, 16
      %v1416 = vrot.slane %v1414, 5
      %v1417 = vor.u32 %v1413, %v1416
      %v1418 = vrot.slane %v1417, 4
      %v1420 = vshll.u32 %v1051, 16
      %v1422 = vrot.slane %v1420, 5
      %v1423 = vsel %vm1073, %v1418, %v1422
      %v1424 = vshrl.u32 %v1051, 16
      %v1426 = vrot.slane %v1424, 4
      %v1427 = vor.u32 %v1426, %v1422
      %v1428 = vrot.slane %v1427, 4
      %v1430 = vshll.u32 %v1069, 16
      %v1432 = vrot.slane %v1430, 5
      %v1433 = vsel %vm1073, %v1428, %v1432
      %v1435 = vshrl.u32 %v1052, 16
      %v1437 = vrot.slane %v1435, 4
      %v1438 = vshll.u32 %v1052, 16
      %v1440 = vrot.slane %v1438, 5
      %v1441 = vor.u32 %v1437, %v1440
      %v1442 = vrot.slane %v1441, 4
      %v1444 = vshll.u32 %v1053, 16
      %v1446 = vrot.slane %v1444, 5
      %v1447 = vsel %vm1073, %v1442, %v1446
      %v1448 = vshrl.u32 %v1053, 16
      %v1450 = vrot.slane %v1448, 4
      %v1451 = vor.u32 %v1450, %v1446
      %v1452 = vrot.slane %v1451, 4
      %v1454 = vshll.u32 %v1070, 16
      %v1456 = vrot.slane %v1454, 5
      %v1457 = vsel %vm1073, %v1452, %v1456
      %v1458 = vld [vmem:[%s296 + $0x4] sm:$0xf]
      %v1459 = vunpack.c.l.b16 %v1087
      %v1460 = vunpack.c.l.b16 %v1097
      %v1461 = vunpack.c.l.b16 %v1111
      %v1462 = vunpack.c.l.b16 %v1121
      %v1463 = vunpack.c.l.b16 %v1135
      %v1464 = vunpack.c.l.b16 %v1145
      %v1465 = vunpack.c.l.b16 %v1159
      %v1466 = vunpack.c.l.b16 %v1169
      %v1467 = vunpack.c.l.b16 %v1183
      %v1468 = vunpack.c.l.b16 %v1193
      %v1469 = vunpack.c.l.b16 %v1207
      %v1470 = vunpack.c.l.b16 %v1217
      %v1471 = vunpack.c.l.b16 %v1231
      %v1472 = vunpack.c.l.b16 %v1241
      %v1473 = vunpack.c.l.b16 %v1255
      %v1474 = vunpack.c.l.b16 %v1265
      %v1475 = vunpack.c.l.b16 %v1279
      %v1476 = vunpack.c.l.b16 %v1289
      %v1477 = vunpack.c.l.b16 %v1303
      %v1478 = vunpack.c.l.b16 %v1313
      %v1479 = vunpack.c.l.b16 %v1327
      %v1480 = vunpack.c.l.b16 %v1337
      %v1481 = vunpack.c.l.b16 %v1351
      %v1482 = vunpack.c.l.b16 %v1361
      %v1483 = vunpack.c.l.b16 %v1375
      %v1484 = vunpack.c.l.b16 %v1385
      %v1485 = vunpack.c.l.b16 %v1399
      %v1486 = vunpack.c.l.b16 %v1409
      %v1487 = vunpack.c.l.b16 %v1423
      %v1488 = vunpack.c.l.b16 %v1433
      %v1489 = vunpack.c.l.b16 %v1447
      %v1490 = vunpack.c.l.b16 %v1457
      %v1491 = vpack.c.b16 %v1460, %v1459
      %v1492 = vpack.c.b16 %v1462, %v1461
      %v1493 = vpack.c.b16 %v1464, %v1463
      %v1494 = vpack.c.b16 %v1466, %v1465
      %v1495 = vpack.c.b16 %v1468, %v1467
      %v1496 = vpack.c.b16 %v1470, %v1469
      %v1497 = vpack.c.b16 %v1472, %v1471
      %v1498 = vpack.c.b16 %v1474, %v1473
      %v1499 = vpack.c.b16 %v1476, %v1475
      %v1500 = vpack.c.b16 %v1478, %v1477
      %v1501 = vpack.c.b16 %v1480, %v1479
      %v1502 = vpack.c.b16 %v1482, %v1481
      %v1503 = vpack.c.b16 %v1484, %v1483
      %v1504 = vpack.c.b16 %v1486, %v1485
      %v1505 = vpack.c.b16 %v1488, %v1487
      %v1506 = vpack.c.b16 %v1490, %v1489
      %vm1507 = vcmask 64512
      %v1509 = vsel %vm1507, %v1491, 0
      %v1512 = vsel %vm1507, %v1492, 0
      %v1515 = vsel %vm1507, %v1493, 0
      %v1518 = vsel %vm1507, %v1494, 0
      %v1521 = vsel %vm1507, %v1495, 0
      %v1524 = vsel %vm1507, %v1496, 0
      %v1527 = vsel %vm1507, %v1497, 0
      %v1530 = vsel %vm1507, %v1498, 0
      %v1533 = vsel %vm1507, %v1499, 0
      %v1536 = vsel %vm1507, %v1500, 0
      %v1539 = vsel %vm1507, %v1501, 0
      %v1542 = vsel %vm1507, %v1502, 0
      %v1545 = vsel %vm1507, %v1503, 0
      %v1548 = vsel %vm1507, %v1504, 0
      %v1551 = vsel %vm1507, %v1505, 0
      %v1554 = vsel %vm1507, %v1506, 0
      %vm1556 = vcmask 1043456
      %v1558 = vsel %vm1556, %v1458, 0
      %1560 = vmatpush.bf16.msra.mxu0 0
      %1561 = vmatpush.bf16.msra.mxu0 0
      %1562 = vmatpush.bf16.msra.mxu0 0
      %1563 = vmatpush.bf16.msra.mxu0 0
      %1564 = vmatpush.bf16.msra.mxu0 0
      %1565 = vmatpush.bf16.msra.mxu0 0
      %1566 = vmatpush.bf16.msra.mxu0 0
      %1567 = vmatpush.bf16.msra.mxu0 %v1558
      %1568 = vmatmul.bf16.gmra.mxu0 %v1509
      %v1569 = vpop.f32.mrf.mxu0
      %v1570 = vadd.f32 0.0, %v1569
      %v1571 = vpop.f32.mrf.mxu0
      %v1572 = vadd.f32 0.0, %v1571
      %1573 = vmatmul.bf16.gmra.mxu0 %v1512
      %v1574 = vpop.f32.mrf.mxu0
      %v1575 = vadd.f32 0.0, %v1574
      %v1576 = vpop.f32.mrf.mxu0
      %v1577 = vadd.f32 0.0, %v1576
      %1578 = vmatmul.bf16.gmra.mxu0 %v1515
      %v1579 = vpop.f32.mrf.mxu0
      %v1580 = vadd.f32 0.0, %v1579
      %v1581 = vpop.f32.mrf.mxu0
      %v1582 = vadd.f32 0.0, %v1581
      %1583 = vmatmul.bf16.gmra.mxu0 %v1518
      %v1584 = vpop.f32.mrf.mxu0
      %v1585 = vadd.f32 0.0, %v1584
      %v1586 = vpop.f32.mrf.mxu0
      %v1587 = vadd.f32 0.0, %v1586
      %1588 = vmatmul.bf16.gmra.mxu0 %v1521
      %v1589 = vpop.f32.mrf.mxu0
      %v1590 = vadd.f32 0.0, %v1589
      %v1591 = vpop.f32.mrf.mxu0
      %v1592 = vadd.f32 0.0, %v1591
      %1593 = vmatmul.bf16.gmra.mxu0 %v1524
      %v1594 = vpop.f32.mrf.mxu0
      %v1595 = vadd.f32 0.0, %v1594
      %v1596 = vpop.f32.mrf.mxu0
      %v1597 = vadd.f32 0.0, %v1596
      %1598 = vmatmul.bf16.gmra.mxu0 %v1527
      %v1599 = vpop.f32.mrf.mxu0
      %v1600 = vadd.f32 0.0, %v1599
      %v1601 = vpop.f32.mrf.mxu0
      %v1602 = vadd.f32 0.0, %v1601
      %1603 = vmatmul.bf16.gmra.mxu0 %v1530
      %v1604 = vpop.f32.mrf.mxu0
      %v1605 = vadd.f32 0.0, %v1604
      %v1606 = vpop.f32.mrf.mxu0
      %v1607 = vadd.f32 0.0, %v1606
      %1608 = vmatmul.bf16.gmra.mxu0 %v1533
      %v1609 = vpop.f32.mrf.mxu0
      %v1610 = vadd.f32 0.0, %v1609
      %v1611 = vpop.f32.mrf.mxu0
      %v1612 = vadd.f32 0.0, %v1611
      %1613 = vmatmul.bf16.gmra.mxu0 %v1536
      %v1614 = vpop.f32.mrf.mxu0
      %v1615 = vadd.f32 0.0, %v1614
      %v1616 = vpop.f32.mrf.mxu0
      %v1617 = vadd.f32 0.0, %v1616
      %1618 = vmatmul.bf16.gmra.mxu0 %v1539
      %v1619 = vpop.f32.mrf.mxu0
      %v1620 = vadd.f32 0.0, %v1619
      %v1621 = vpop.f32.mrf.mxu0
      %v1622 = vadd.f32 0.0, %v1621
      %1623 = vmatmul.bf16.gmra.mxu0 %v1542
      %v1624 = vpop.f32.mrf.mxu0
      %v1625 = vadd.f32 0.0, %v1624
      %v1626 = vpop.f32.mrf.mxu0
      %v1627 = vadd.f32 0.0, %v1626
      %1628 = vmatmul.bf16.gmra.mxu0 %v1545
      %v1629 = vpop.f32.mrf.mxu0
      %v1630 = vadd.f32 0.0, %v1629
      %v1631 = vpop.f32.mrf.mxu0
      %v1632 = vadd.f32 0.0, %v1631
      %1633 = vmatmul.bf16.gmra.mxu0 %v1548
      %v1634 = vpop.f32.mrf.mxu0
      %v1635 = vadd.f32 0.0, %v1634
      %v1636 = vpop.f32.mrf.mxu0
      %v1637 = vadd.f32 0.0, %v1636
      %1638 = vmatmul.bf16.gmra.mxu0 %v1551
      %v1639 = vpop.f32.mrf.mxu0
      %v1640 = vadd.f32 0.0, %v1639
      %v1641 = vpop.f32.mrf.mxu0
      %v1642 = vadd.f32 0.0, %v1641
      %1643 = vmatmul.bf16.gmra.mxu0 %v1554
      %v1644 = vpop.f32.mrf.mxu0
      %v1645 = vadd.f32 0.0, %v1644
      %v1646 = vpop.f32.mrf.mxu0
      %v1647 = vadd.f32 0.0, %v1646
      %1648 = vdwg.mxu0
      %v1681 = vunpack.c.l.b16 %v1022
      %v1682 = vunpack.c.l.b16 %v1023
      %v1683 = vunpack.c.l.b16 %v1024
      %v1684 = vunpack.c.l.b16 %v1025
      %v1685 = vunpack.c.l.b16 %v1026
      %v1686 = vunpack.c.l.b16 %v1027
      %v1687 = vunpack.c.l.b16 %v1028
      %v1688 = vunpack.c.l.b16 %v1029
      %v1689 = vunpack.c.l.b16 %v1030
      %v1690 = vunpack.c.l.b16 %v1031
      %v1691 = vunpack.c.l.b16 %v1032
      %v1692 = vunpack.c.l.b16 %v1033
      %v1693 = vunpack.c.l.b16 %v1034
      %v1694 = vunpack.c.l.b16 %v1035
      %v1695 = vunpack.c.l.b16 %v1036
      %v1696 = vunpack.c.l.b16 %v1037
      %v1697 = vunpack.c.l.b16 %v1038
      %v1698 = vunpack.c.l.b16 %v1039
      %v1699 = vunpack.c.l.b16 %v1040
      %v1700 = vunpack.c.l.b16 %v1041
      %v1701 = vunpack.c.l.b16 %v1042
      %v1702 = vunpack.c.l.b16 %v1043
      %v1703 = vunpack.c.l.b16 %v1044
      %v1704 = vunpack.c.l.b16 %v1045
      %v1705 = vunpack.c.l.b16 %v1046
      %v1706 = vunpack.c.l.b16 %v1047
      %v1707 = vunpack.c.l.b16 %v1048
      %v1708 = vunpack.c.l.b16 %v1049
      %v1709 = vunpack.c.l.b16 %v1050
      %v1710 = vunpack.c.l.b16 %v1051
      %v1711 = vunpack.c.l.b16 %v1052
      %v1712 = vunpack.c.l.b16 %v1053
      %v1713 = vpack.c.b16 %v1682, %v1681
      %v1714 = vpack.c.b16 %v1684, %v1683
      %v1715 = vpack.c.b16 %v1686, %v1685
      %v1716 = vpack.c.b16 %v1688, %v1687
      %v1717 = vpack.c.b16 %v1690, %v1689
      %v1718 = vpack.c.b16 %v1692, %v1691
      %v1719 = vpack.c.b16 %v1694, %v1693
      %v1720 = vpack.c.b16 %v1696, %v1695
      %v1721 = vpack.c.b16 %v1698, %v1697
      %v1722 = vpack.c.b16 %v1700, %v1699
      %v1723 = vpack.c.b16 %v1702, %v1701
      %v1724 = vpack.c.b16 %v1704, %v1703
      %v1725 = vpack.c.b16 %v1706, %v1705
      %v1726 = vpack.c.b16 %v1708, %v1707
      %v1727 = vpack.c.b16 %v1710, %v1709
      %v1728 = vpack.c.b16 %v1712, %v1711
      %v1730 = vsel %vm1507, %v1713, 0
      %v1733 = vsel %vm1507, %v1714, 0
      %v1736 = vsel %vm1507, %v1715, 0
      %v1739 = vsel %vm1507, %v1716, 0
      %v1742 = vsel %vm1507, %v1717, 0
      %v1745 = vsel %vm1507, %v1718, 0
      %v1748 = vsel %vm1507, %v1719, 0
      %v1751 = vsel %vm1507, %v1720, 0
      %v1754 = vsel %vm1507, %v1721, 0
      %v1757 = vsel %vm1507, %v1722, 0
      %v1760 = vsel %vm1507, %v1723, 0
      %v1763 = vsel %vm1507, %v1724, 0
      %v1766 = vsel %vm1507, %v1725, 0
      %v1769 = vsel %vm1507, %v1726, 0
      %v1772 = vsel %vm1507, %v1727, 0
      %v1775 = vsel %vm1507, %v1728, 0
      %v1778 = vsel %vm1556, %v1054, 0
      %1780 = vmatpush.bf16.msra.mxu0 0
      %1781 = vmatpush.bf16.msra.mxu0 0
      %1782 = vmatpush.bf16.msra.mxu0 0
      %1783 = vmatpush.bf16.msra.mxu0 0
      %1784 = vmatpush.bf16.msra.mxu0 0
      %1785 = vmatpush.bf16.msra.mxu0 0
      %1786 = vmatpush.bf16.msra.mxu0 0
      %1787 = vmatpush.bf16.msra.mxu0 %v1778
      %1788 = vmatmul.bf16.gmra.mxu0 %v1730
      %v1789 = vpop.f32.mrf.mxu0
      %v1790 = vadd.f32 %v1570, %v1789
      %v1791 = vpop.f32.mrf.mxu0
      %v1792 = vadd.f32 %v1572, %v1791
      %1793 = vmatmul.bf16.gmra.mxu0 %v1733
      %v1794 = vpop.f32.mrf.mxu0
      %v1795 = vadd.f32 %v1575, %v1794
      %v1796 = vpop.f32.mrf.mxu0
      %v1797 = vadd.f32 %v1577, %v1796
      %1798 = vmatmul.bf16.gmra.mxu0 %v1736
      %v1799 = vpop.f32.mrf.mxu0
      %v1800 = vadd.f32 %v1580, %v1799
      %v1801 = vpop.f32.mrf.mxu0
      %v1802 = vadd.f32 %v1582, %v1801
      %1803 = vmatmul.bf16.gmra.mxu0 %v1739
      %v1804 = vpop.f32.mrf.mxu0
      %v1805 = vadd.f32 %v1585, %v1804
      %v1806 = vpop.f32.mrf.mxu0
      %v1807 = vadd.f32 %v1587, %v1806
      %1808 = vmatmul.bf16.gmra.mxu0 %v1742
      %v1809 = vpop.f32.mrf.mxu0
      %v1810 = vadd.f32 %v1590, %v1809
      %v1811 = vpop.f32.mrf.mxu0
      %v1812 = vadd.f32 %v1592, %v1811
      %1813 = vmatmul.bf16.gmra.mxu0 %v1745
      %v1814 = vpop.f32.mrf.mxu0
      %v1815 = vadd.f32 %v1595, %v1814
      %v1816 = vpop.f32.mrf.mxu0
      %v1817 = vadd.f32 %v1597, %v1816
      %1818 = vmatmul.bf16.gmra.mxu0 %v1748
      %v1819 = vpop.f32.mrf.mxu0
      %v1820 = vadd.f32 %v1600, %v1819
      %v1821 = vpop.f32.mrf.mxu0
      %v1822 = vadd.f32 %v1602, %v1821
      %1823 = vmatmul.bf16.gmra.mxu0 %v1751
      %v1824 = vpop.f32.mrf.mxu0
      %v1825 = vadd.f32 %v1605, %v1824
      %v1826 = vpop.f32.mrf.mxu0
      %v1827 = vadd.f32 %v1607, %v1826
      %1828 = vmatmul.bf16.gmra.mxu0 %v1754
      %v1829 = vpop.f32.mrf.mxu0
      %v1830 = vadd.f32 %v1610, %v1829
      %v1831 = vpop.f32.mrf.mxu0
      %v1832 = vadd.f32 %v1612, %v1831
      %1833 = vmatmul.bf16.gmra.mxu0 %v1757
      %v1834 = vpop.f32.mrf.mxu0
      %v1835 = vadd.f32 %v1615, %v1834
      %v1836 = vpop.f32.mrf.mxu0
      %v1837 = vadd.f32 %v1617, %v1836
      %1838 = vmatmul.bf16.gmra.mxu0 %v1760
      %v1839 = vpop.f32.mrf.mxu0
      %v1840 = vadd.f32 %v1620, %v1839
      %v1841 = vpop.f32.mrf.mxu0
      %v1842 = vadd.f32 %v1622, %v1841
      %1843 = vmatmul.bf16.gmra.mxu0 %v1763
      %v1844 = vpop.f32.mrf.mxu0
      %v1845 = vadd.f32 %v1625, %v1844
      %v1846 = vpop.f32.mrf.mxu0
      %v1847 = vadd.f32 %v1627, %v1846
      %1848 = vmatmul.bf16.gmra.mxu0 %v1766
      %v1849 = vpop.f32.mrf.mxu0
      %v1850 = vadd.f32 %v1630, %v1849
      %v1851 = vpop.f32.mrf.mxu0
      %v1852 = vadd.f32 %v1632, %v1851
      %1853 = vmatmul.bf16.gmra.mxu0 %v1769
      %v1854 = vpop.f32.mrf.mxu0
      %v1855 = vadd.f32 %v1635, %v1854
      %v1856 = vpop.f32.mrf.mxu0
      %v1857 = vadd.f32 %v1637, %v1856
      %1858 = vmatmul.bf16.gmra.mxu0 %v1772
      %v1859 = vpop.f32.mrf.mxu0
      %v1860 = vadd.f32 %v1640, %v1859
      %v1861 = vpop.f32.mrf.mxu0
      %v1862 = vadd.f32 %v1642, %v1861
      %1863 = vmatmul.bf16.gmra.mxu0 %v1775
      %v1864 = vpop.f32.mrf.mxu0
      %v1865 = vadd.f32 %v1645, %v1864
      %v1866 = vpop.f32.mrf.mxu0
      %v1867 = vadd.f32 %v1647, %v1866
      %1868 = vdwg.mxu0
      %v1869 = vld [vmem:[#allocation2] sm:$0xe]
      %v1870 = vld [vmem:[#allocation2 + $0xc] sm:$0xe]
      %v1871 = vld [vmem:[#allocation2 + $0x18] sm:$0xe]
      %v1872 = vld [vmem:[#allocation2 + $0x24] sm:$0xe]
      %v1873 = vld [vmem:[#allocation2 + $0x30] sm:$0xe]
      %v1874 = vld [vmem:[#allocation2 + $0x3c] sm:$0xe]
      %v1875 = vld [vmem:[#allocation2 + $0x48] sm:$0xe]
      %v1876 = vld [vmem:[#allocation2 + $0x54] sm:$0xe]
      %v1877 = vld [vmem:[#allocation2 + $0x60] sm:$0xe]
      %v1878 = vld [vmem:[#allocation2 + $0x6c] sm:$0xe]
      %v1879 = vld [vmem:[#allocation2 + $0x78] sm:$0xe]
      %v1880 = vld [vmem:[#allocation2 + $0x84] sm:$0xe]
      %v1881 = vld [vmem:[#allocation2 + $0x90] sm:$0xe]
      %v1882 = vld [vmem:[#allocation2 + $0x9c] sm:$0xe]
      %v1883 = vld [vmem:[#allocation2 + $0xa8] sm:$0xe]
      %v1884 = vld [vmem:[#allocation2 + $0xb4] sm:$0xe]
      %vm1917 = vcmask 1042432
      %vm1918 = vcmask 1046532
      %vm1919 = vmor %vm1917, %vm1918
      %v1920 = vrot.slane %v1869, 5
      %v1921 = vrot.slane %v1920, 4
      %v1922 = vrot.slane %v1023, 5
      %v1923 = vsel %vm1919, %v1921, %v1922
      %v1924 = vrot.slane %v1922, 4
      %v1925 = vrot.slane %v1055, 5
      %v1926 = vsel %vm1919, %v1924, %v1925
      %v1927 = vrot.slane %v1870, 5
      %v1928 = vrot.slane %v1927, 4
      %v1929 = vrot.slane %v1025, 5
      %v1930 = vsel %vm1919, %v1928, %v1929
      %v1931 = vrot.slane %v1929, 4
      %v1932 = vrot.slane %v1056, 5
      %v1933 = vsel %vm1919, %v1931, %v1932
      %v1934 = vrot.slane %v1871, 5
      %v1935 = vrot.slane %v1934, 4
      %v1936 = vrot.slane %v1027, 5
      %v1937 = vsel %vm1919, %v1935, %v1936
      %v1938 = vrot.slane %v1936, 4
      %v1939 = vrot.slane %v1057, 5
      %v1940 = vsel %vm1919, %v1938, %v1939
      %v1941 = vrot.slane %v1872, 5
      %v1942 = vrot.slane %v1941, 4
      %v1943 = vrot.slane %v1029, 5
      %v1944 = vsel %vm1919, %v1942, %v1943
      %v1945 = vrot.slane %v1943, 4
      %v1946 = vrot.slane %v1058, 5
      %v1947 = vsel %vm1919, %v1945, %v1946
      %v1948 = vrot.slane %v1873, 5
      %v1949 = vrot.slane %v1948, 4
      %v1950 = vrot.slane %v1031, 5
      %v1951 = vsel %vm1919, %v1949, %v1950
      %v1952 = vrot.slane %v1950, 4
      %v1953 = vrot.slane %v1059, 5
      %v1954 = vsel %vm1919, %v1952, %v1953
      %v1955 = vrot.slane %v1874, 5
      %v1956 = vrot.slane %v1955, 4
      %v1957 = vrot.slane %v1033, 5
      %v1958 = vsel %vm1919, %v1956, %v1957
      %v1959 = vrot.slane %v1957, 4
      %v1960 = vrot.slane %v1060, 5
      %v1961 = vsel %vm1919, %v1959, %v1960
      %v1962 = vrot.slane %v1875, 5
      %v1963 = vrot.slane %v1962, 4
      %v1964 = vrot.slane %v1035, 5
      %v1965 = vsel %vm1919, %v1963, %v1964
      %v1966 = vrot.slane %v1964, 4
      %v1967 = vrot.slane %v1061, 5
      %v1968 = vsel %vm1919, %v1966, %v1967
      %v1969 = vrot.slane %v1876, 5
      %v1970 = vrot.slane %v1969, 4
      %v1971 = vrot.slane %v1037, 5
      %v1972 = vsel %vm1919, %v1970, %v1971
      %v1973 = vrot.slane %v1971, 4
      %v1974 = vrot.slane %v1062, 5
      %v1975 = vsel %vm1919, %v1973, %v1974
      %v1976 = vrot.slane %v1877, 5
      %v1977 = vrot.slane %v1976, 4
      %v1978 = vrot.slane %v1039, 5
      %v1979 = vsel %vm1919, %v1977, %v1978
      %v1980 = vrot.slane %v1978, 4
      %v1981 = vrot.slane %v1063, 5
      %v1982 = vsel %vm1919, %v1980, %v1981
      %v1983 = vrot.slane %v1878, 5
      %v1984 = vrot.slane %v1983, 4
      %v1985 = vrot.slane %v1041, 5
      %v1986 = vsel %vm1919, %v1984, %v1985
      %v1987 = vrot.slane %v1985, 4
      %v1988 = vrot.slane %v1064, 5
      %v1989 = vsel %vm1919, %v1987, %v1988
      %v1990 = vrot.slane %v1879, 5
      %v1991 = vrot.slane %v1990, 4
      %v1992 = vrot.slane %v1043, 5
      %v1993 = vsel %vm1919, %v1991, %v1992
      %v1994 = vrot.slane %v1992, 4
      %v1995 = vrot.slane %v1065, 5
      %v1996 = vsel %vm1919, %v1994, %v1995
      %v1997 = vrot.slane %v1880, 5
      %v1998 = vrot.slane %v1997, 4
      %v1999 = vrot.slane %v1045, 5
      %v2000 = vsel %vm1919, %v1998, %v1999
      %v2001 = vrot.slane %v1999, 4
      %v2002 = vrot.slane %v1066, 5
      %v2003 = vsel %vm1919, %v2001, %v2002
      %v2004 = vrot.slane %v1881, 5
      %v2005 = vrot.slane %v2004, 4
      %v2006 = vrot.slane %v1047, 5
      %v2007 = vsel %vm1919, %v2005, %v2006
      %v2008 = vrot.slane %v2006, 4
      %v2009 = vrot.slane %v1067, 5
      %v2010 = vsel %vm1919, %v2008, %v2009
      %v2011 = vrot.slane %v1882, 5
      %v2012 = vrot.slane %v2011, 4
      %v2013 = vrot.slane %v1049, 5
      %v2014 = vsel %vm1919, %v2012, %v2013
      %v2015 = vrot.slane %v2013, 4
      %v2016 = vrot.slane %v1068, 5
      %v2017 = vsel %vm1919, %v2015, %v2016
      %v2018 = vrot.slane %v1883, 5
      %v2019 = vrot.slane %v2018, 4
      %v2020 = vrot.slane %v1051, 5
      %v2021 = vsel %vm1919, %v2019, %v2020
      %v2022 = vrot.slane %v2020, 4
      %v2023 = vrot.slane %v1069, 5
      %v2024 = vsel %vm1919, %v2022, %v2023
      %v2025 = vrot.slane %v1884, 5
      %v2026 = vrot.slane %v2025, 4
      %v2027 = vrot.slane %v1053, 5
      %v2028 = vsel %vm1919, %v2026, %v2027
      %v2029 = vrot.slane %v2027, 4
      %v2030 = vrot.slane %v1070, 5
      %v2031 = vsel %vm1919, %v2029, %v2030
      %v2032 = vld [vmem:[%s296 + $0x8] sm:$0xf]
      %v2033 = vunpack.c.l.b16 %v1923
      %v2034 = vunpack.c.l.b16 %v1926
      %v2035 = vunpack.c.l.b16 %v1930
      %v2036 = vunpack.c.l.b16 %v1933
      %v2037 = vunpack.c.l.b16 %v1937
      %v2038 = vunpack.c.l.b16 %v1940
      %v2039 = vunpack.c.l.b16 %v1944
      %v2040 = vunpack.c.l.b16 %v1947
      %v2041 = vunpack.c.l.b16 %v1951
      %v2042 = vunpack.c.l.b16 %v1954
      %v2043 = vunpack.c.l.b16 %v1958
      %v2044 = vunpack.c.l.b16 %v1961
      %v2045 = vunpack.c.l.b16 %v1965
      %v2046 = vunpack.c.l.b16 %v1968
      %v2047 = vunpack.c.l.b16 %v1972
      %v2048 = vunpack.c.l.b16 %v1975
      %v2049 = vunpack.c.l.b16 %v1979
      %v2050 = vunpack.c.l.b16 %v1982
      %v2051 = vunpack.c.l.b16 %v1986
      %v2052 = vunpack.c.l.b16 %v1989
      %v2053 = vunpack.c.l.b16 %v1993
      %v2054 = vunpack.c.l.b16 %v1996
      %v2055 = vunpack.c.l.b16 %v2000
      %v2056 = vunpack.c.l.b16 %v2003
      %v2057 = vunpack.c.l.b16 %v2007
      %v2058 = vunpack.c.l.b16 %v2010
      %v2059 = vunpack.c.l.b16 %v2014
      %v2060 = vunpack.c.l.b16 %v2017
      %v2061 = vunpack.c.l.b16 %v2021
      %v2062 = vunpack.c.l.b16 %v2024
      %v2063 = vunpack.c.l.b16 %v2028
      %v2064 = vunpack.c.l.b16 %v2031
      %v2065 = vpack.c.b16 %v2034, %v2033
      %v2066 = vpack.c.b16 %v2036, %v2035
      %v2067 = vpack.c.b16 %v2038, %v2037
      %v2068 = vpack.c.b16 %v2040, %v2039
      %v2069 = vpack.c.b16 %v2042, %v2041
      %v2070 = vpack.c.b16 %v2044, %v2043
      %v2071 = vpack.c.b16 %v2046, %v2045
      %v2072 = vpack.c.b16 %v2048, %v2047
      %v2073 = vpack.c.b16 %v2050, %v2049
      %v2074 = vpack.c.b16 %v2052, %v2051
      %v2075 = vpack.c.b16 %v2054, %v2053
      %v2076 = vpack.c.b16 %v2056, %v2055
      %v2077 = vpack.c.b16 %v2058, %v2057
      %v2078 = vpack.c.b16 %v2060, %v2059
      %v2079 = vpack.c.b16 %v2062, %v2061
      %v2080 = vpack.c.b16 %v2064, %v2063
      %v2082 = vsel %vm1507, %v2065, 0
      %v2085 = vsel %vm1507, %v2066, 0
      %v2088 = vsel %vm1507, %v2067, 0
      %v2091 = vsel %vm1507, %v2068, 0
      %v2094 = vsel %vm1507, %v2069, 0
      %v2097 = vsel %vm1507, %v2070, 0
      %v2100 = vsel %vm1507, %v2071, 0
      %v2103 = vsel %vm1507, %v2072, 0
      %v2106 = vsel %vm1507, %v2073, 0
      %v2109 = vsel %vm1507, %v2074, 0
      %v2112 = vsel %vm1507, %v2075, 0
      %v2115 = vsel %vm1507, %v2076, 0
      %v2118 = vsel %vm1507, %v2077, 0
      %v2121 = vsel %vm1507, %v2078, 0
      %v2124 = vsel %vm1507, %v2079, 0
      %v2127 = vsel %vm1507, %v2080, 0
      %v2130 = vsel %vm1556, %v2032, 0
      %2132 = vmatpush.bf16.msra.mxu0 0
      %2133 = vmatpush.bf16.msra.mxu0 0
      %2134 = vmatpush.bf16.msra.mxu0 0
      %2135 = vmatpush.bf16.msra.mxu0 0
      %2136 = vmatpush.bf16.msra.mxu0 0
      %2137 = vmatpush.bf16.msra.mxu0 0
      %2138 = vmatpush.bf16.msra.mxu0 0
      %2139 = vmatpush.bf16.msra.mxu0 %v2130
      %2140 = vmatmul.bf16.gmra.mxu0 %v2082
      %v2141 = vpop.f32.mrf.mxu0
      %v2142 = vadd.f32 0.0, %v2141
      %v2143 = vpop.f32.mrf.mxu0
      %v2144 = vadd.f32 0.0, %v2143
      %2145 = vmatmul.bf16.gmra.mxu0 %v2085
      %v2146 = vpop.f32.mrf.mxu0
      %v2147 = vadd.f32 0.0, %v2146
      %v2148 = vpop.f32.mrf.mxu0
      %v2149 = vadd.f32 0.0, %v2148
      %2150 = vmatmul.bf16.gmra.mxu0 %v2088
      %v2151 = vpop.f32.mrf.mxu0
      %v2152 = vadd.f32 0.0, %v2151
      %v2153 = vpop.f32.mrf.mxu0
      %v2154 = vadd.f32 0.0, %v2153
      %2155 = vmatmul.bf16.gmra.mxu0 %v2091
      %v2156 = vpop.f32.mrf.mxu0
      %v2157 = vadd.f32 0.0, %v2156
      %v2158 = vpop.f32.mrf.mxu0
      %v2159 = vadd.f32 0.0, %v2158
      %2160 = vmatmul.bf16.gmra.mxu0 %v2094
      %v2161 = vpop.f32.mrf.mxu0
      %v2162 = vadd.f32 0.0, %v2161
      %v2163 = vpop.f32.mrf.mxu0
      %v2164 = vadd.f32 0.0, %v2163
      %2165 = vmatmul.bf16.gmra.mxu0 %v2097
      %v2166 = vpop.f32.mrf.mxu0
      %v2167 = vadd.f32 0.0, %v2166
      %v2168 = vpop.f32.mrf.mxu0
      %v2169 = vadd.f32 0.0, %v2168
      %2170 = vmatmul.bf16.gmra.mxu0 %v2100
      %v2171 = vpop.f32.mrf.mxu0
      %v2172 = vadd.f32 0.0, %v2171
      %v2173 = vpop.f32.mrf.mxu0
      %v2174 = vadd.f32 0.0, %v2173
      %2175 = vmatmul.bf16.gmra.mxu0 %v2103
      %v2176 = vpop.f32.mrf.mxu0
      %v2177 = vadd.f32 0.0, %v2176
      %v2178 = vpop.f32.mrf.mxu0
      %v2179 = vadd.f32 0.0, %v2178
      %2180 = vmatmul.bf16.gmra.mxu0 %v2106
      %v2181 = vpop.f32.mrf.mxu0
      %v2182 = vadd.f32 0.0, %v2181
      %v2183 = vpop.f32.mrf.mxu0
      %v2184 = vadd.f32 0.0, %v2183
      %2185 = vmatmul.bf16.gmra.mxu0 %v2109
      %v2186 = vpop.f32.mrf.mxu0
      %v2187 = vadd.f32 0.0, %v2186
      %v2188 = vpop.f32.mrf.mxu0
      %v2189 = vadd.f32 0.0, %v2188
      %2190 = vmatmul.bf16.gmra.mxu0 %v2112
      %v2191 = vpop.f32.mrf.mxu0
      %v2192 = vadd.f32 0.0, %v2191
      %v2193 = vpop.f32.mrf.mxu0
      %v2194 = vadd.f32 0.0, %v2193
      %2195 = vmatmul.bf16.gmra.mxu0 %v2115
      %v2196 = vpop.f32.mrf.mxu0
      %v2197 = vadd.f32 0.0, %v2196
      %v2198 = vpop.f32.mrf.mxu0
      %v2199 = vadd.f32 0.0, %v2198
      %2200 = vmatmul.bf16.gmra.mxu0 %v2118
      %v2201 = vpop.f32.mrf.mxu0
      %v2202 = vadd.f32 0.0, %v2201
      %v2203 = vpop.f32.mrf.mxu0
      %v2204 = vadd.f32 0.0, %v2203
      %2205 = vmatmul.bf16.gmra.mxu0 %v2121
      %v2206 = vpop.f32.mrf.mxu0
      %v2207 = vadd.f32 0.0, %v2206
      %v2208 = vpop.f32.mrf.mxu0
      %v2209 = vadd.f32 0.0, %v2208
      %2210 = vmatmul.bf16.gmra.mxu0 %v2124
      %v2211 = vpop.f32.mrf.mxu0
      %v2212 = vadd.f32 0.0, %v2211
      %v2213 = vpop.f32.mrf.mxu0
      %v2214 = vadd.f32 0.0, %v2213
      %2215 = vmatmul.bf16.gmra.mxu0 %v2127
      %v2216 = vpop.f32.mrf.mxu0
      %v2217 = vadd.f32 0.0, %v2216
      %v2218 = vpop.f32.mrf.mxu0
      %v2219 = vadd.f32 0.0, %v2218
      %2220 = vdwg.mxu0
      %v2221 = vadd.f32 %v1790, %v2142
      %v2222 = vadd.f32 %v1792, %v2144
      %v2223 = vadd.f32 %v1795, %v2147
      %v2224 = vadd.f32 %v1797, %v2149
      %v2225 = vadd.f32 %v1800, %v2152
      %v2226 = vadd.f32 %v1802, %v2154
      %v2227 = vadd.f32 %v1805, %v2157
      %v2228 = vadd.f32 %v1807, %v2159
      %v2229 = vadd.f32 %v1810, %v2162
      %v2230 = vadd.f32 %v1812, %v2164
      %v2231 = vadd.f32 %v1815, %v2167
      %v2232 = vadd.f32 %v1817, %v2169
      %v2233 = vadd.f32 %v1820, %v2172
      %v2234 = vadd.f32 %v1822, %v2174
      %v2235 = vadd.f32 %v1825, %v2177
      %v2236 = vadd.f32 %v1827, %v2179
      %v2237 = vadd.f32 %v1830, %v2182
      %v2238 = vadd.f32 %v1832, %v2184
      %v2239 = vadd.f32 %v1835, %v2187
      %v2240 = vadd.f32 %v1837, %v2189
      %v2241 = vadd.f32 %v1840, %v2192
      %v2242 = vadd.f32 %v1842, %v2194
      %v2243 = vadd.f32 %v1845, %v2197
      %v2244 = vadd.f32 %v1847, %v2199
      %v2245 = vadd.f32 %v1850, %v2202
      %v2246 = vadd.f32 %v1852, %v2204
      %v2247 = vadd.f32 %v1855, %v2207
      %v2248 = vadd.f32 %v1857, %v2209
      %v2249 = vadd.f32 %v1860, %v2212
      %v2250 = vadd.f32 %v1862, %v2214
      %v2251 = vadd.f32 %v1865, %v2217
      %v2252 = vadd.f32 %v1867, %v2219
      %s2253 = scalar_lea.vmem [#allocation2], 12
      %v2254 = vld [vmem:[%s2253] sm:$0xf]
      %v2255 = vld [vmem:[%s2253 + $0x4] sm:$0xf]
      %v2256 = vld [vmem:[%s2253 + $0xc] sm:$0xf]
      %v2257 = vld [vmem:[%s2253 + $0x10] sm:$0xf]
      %v2258 = vld [vmem:[%s2253 + $0x18] sm:$0xf]
      %v2259 = vld [vmem:[%s2253 + $0x1c] sm:$0xf]
      %v2260 = vld [vmem:[%s2253 + $0x24] sm:$0xf]
      %v2261 = vld [vmem:[%s2253 + $0x28] sm:$0xf]
      %v2262 = vld [vmem:[%s2253 + $0x30] sm:$0xf]
      %v2263 = vld [vmem:[%s2253 + $0x34] sm:$0xf]
      %v2264 = vld [vmem:[%s2253 + $0x3c] sm:$0xf]
      %v2265 = vld [vmem:[%s2253 + $0x40] sm:$0xf]
      %v2266 = vld [vmem:[%s2253 + $0x48] sm:$0xf]
      %v2267 = vld [vmem:[%s2253 + $0x4c] sm:$0xf]
      %v2268 = vld [vmem:[%s2253 + $0x54] sm:$0xf]
      %v2269 = vld [vmem:[%s2253 + $0x58] sm:$0xf]
      %v2270 = vld [vmem:[%s2253 + $0x60] sm:$0xf]
      %v2271 = vld [vmem:[%s2253 + $0x64] sm:$0xf]
      %v2272 = vld [vmem:[%s2253 + $0x6c] sm:$0xf]
      %v2273 = vld [vmem:[%s2253 + $0x70] sm:$0xf]
      %v2274 = vld [vmem:[%s2253 + $0x78] sm:$0xf]
      %v2275 = vld [vmem:[%s2253 + $0x7c] sm:$0xf]
      %v2276 = vld [vmem:[%s2253 + $0x84] sm:$0xf]
      %v2277 = vld [vmem:[%s2253 + $0x88] sm:$0xf]
      %v2278 = vld [vmem:[%s2253 + $0x90] sm:$0xf]
      %v2279 = vld [vmem:[%s2253 + $0x94] sm:$0xf]
      %v2280 = vld [vmem:[%s2253 + $0x9c] sm:$0xf]
      %v2281 = vld [vmem:[%s2253 + $0xa0] sm:$0xf]
      %v2282 = vld [vmem:[%s2253 + $0xa8] sm:$0xf]
      %v2283 = vld [vmem:[%s2253 + $0xac] sm:$0xf]
      %v2284 = vld [vmem:[%s2253 + $0xb4] sm:$0xf]
      %v2285 = vld [vmem:[%s2253 + $0xb8] sm:$0xf]
      %v2286 = vld [vmem:[%s296 + $0xc] sm:$0xf]
      %v2319 = vunpack.c.l.b16 %v2254
      %v2320 = vunpack.c.l.b16 %v2255
      %v2321 = vunpack.c.l.b16 %v2256
      %v2322 = vunpack.c.l.b16 %v2257
      %v2323 = vunpack.c.l.b16 %v2258
      %v2324 = vunpack.c.l.b16 %v2259
      %v2325 = vunpack.c.l.b16 %v2260
      %v2326 = vunpack.c.l.b16 %v2261
      %v2327 = vunpack.c.l.b16 %v2262
      %v2328 = vunpack.c.l.b16 %v2263
      %v2329 = vunpack.c.l.b16 %v2264
      %v2330 = vunpack.c.l.b16 %v2265
      %v2331 = vunpack.c.l.b16 %v2266
      %v2332 = vunpack.c.l.b16 %v2267
      %v2333 = vunpack.c.l.b16 %v2268
      %v2334 = vunpack.c.l.b16 %v2269
      %v2335 = vunpack.c.l.b16 %v2270
      %v2336 = vunpack.c.l.b16 %v2271
      %v2337 = vunpack.c.l.b16 %v2272
      %v2338 = vunpack.c.l.b16 %v2273
      %v2339 = vunpack.c.l.b16 %v2274
      %v2340 = vunpack.c.l.b16 %v2275
      %v2341 = vunpack.c.l.b16 %v2276
      %v2342 = vunpack.c.l.b16 %v2277
      %v2343 = vunpack.c.l.b16 %v2278
      %v2344 = vunpack.c.l.b16 %v2279
      %v2345 = vunpack.c.l.b16 %v2280
      %v2346 = vunpack.c.l.b16 %v2281
      %v2347 = vunpack.c.l.b16 %v2282
      %v2348 = vunpack.c.l.b16 %v2283
      %v2349 = vunpack.c.l.b16 %v2284
      %v2350 = vunpack.c.l.b16 %v2285
      %v2351 = vpack.c.b16 %v2320, %v2319
      %v2352 = vpack.c.b16 %v2322, %v2321
      %v2353 = vpack.c.b16 %v2324, %v2323
      %v2354 = vpack.c.b16 %v2326, %v2325
      %v2355 = vpack.c.b16 %v2328, %v2327
      %v2356 = vpack.c.b16 %v2330, %v2329
      %v2357 = vpack.c.b16 %v2332, %v2331
      %v2358 = vpack.c.b16 %v2334, %v2333
      %v2359 = vpack.c.b16 %v2336, %v2335
      %v2360 = vpack.c.b16 %v2338, %v2337
      %v2361 = vpack.c.b16 %v2340, %v2339
      %v2362 = vpack.c.b16 %v2342, %v2341
      %v2363 = vpack.c.b16 %v2344, %v2343
      %v2364 = vpack.c.b16 %v2346, %v2345
      %v2365 = vpack.c.b16 %v2348, %v2347
      %v2366 = vpack.c.b16 %v2350, %v2349
      %v2368 = vsel %vm1507, %v2351, 0
      %v2371 = vsel %vm1507, %v2352, 0
      %v2374 = vsel %vm1507, %v2353, 0
      %v2377 = vsel %vm1507, %v2354, 0
      %v2380 = vsel %vm1507, %v2355, 0
      %v2383 = vsel %vm1507, %v2356, 0
      %v2386 = vsel %vm1507, %v2357, 0
      %v2389 = vsel %vm1507, %v2358, 0
      %v2392 = vsel %vm1507, %v2359, 0
      %v2395 = vsel %vm1507, %v2360, 0
      %v2398 = vsel %vm1507, %v2361, 0
      %v2401 = vsel %vm1507, %v2362, 0
      %v2404 = vsel %vm1507, %v2363, 0
      %v2407 = vsel %vm1507, %v2364, 0
      %v2410 = vsel %vm1507, %v2365, 0
      %v2413 = vsel %vm1507, %v2366, 0
      %v2416 = vsel %vm1556, %v2286, 0
      %2418 = vmatpush.bf16.msra.mxu0 0
      %2419 = vmatpush.bf16.msra.mxu0 0
      %2420 = vmatpush.bf16.msra.mxu0 0
      %2421 = vmatpush.bf16.msra.mxu0 0
      %2422 = vmatpush.bf16.msra.mxu0 0
      %2423 = vmatpush.bf16.msra.mxu0 0
      %2424 = vmatpush.bf16.msra.mxu0 0
      %2425 = vmatpush.bf16.msra.mxu0 %v2416
      %2426 = vmatmul.bf16.gmra.mxu0 %v2368
      %v2427 = vpop.f32.mrf.mxu0
      %v2428 = vadd.f32 0.0, %v2427
      %v2429 = vpop.f32.mrf.mxu0
      %v2430 = vadd.f32 0.0, %v2429
      %2431 = vmatmul.bf16.gmra.mxu0 %v2371
      %v2432 = vpop.f32.mrf.mxu0
      %v2433 = vadd.f32 0.0, %v2432
      %v2434 = vpop.f32.mrf.mxu0
      %v2435 = vadd.f32 0.0, %v2434
      %2436 = vmatmul.bf16.gmra.mxu0 %v2374
      %v2437 = vpop.f32.mrf.mxu0
      %v2438 = vadd.f32 0.0, %v2437
      %v2439 = vpop.f32.mrf.mxu0
      %v2440 = vadd.f32 0.0, %v2439
      %2441 = vmatmul.bf16.gmra.mxu0 %v2377
      %v2442 = vpop.f32.mrf.mxu0
      %v2443 = vadd.f32 0.0, %v2442
      %v2444 = vpop.f32.mrf.mxu0
      %v2445 = vadd.f32 0.0, %v2444
      %2446 = vmatmul.bf16.gmra.mxu0 %v2380
      %v2447 = vpop.f32.mrf.mxu0
      %v2448 = vadd.f32 0.0, %v2447
      %v2449 = vpop.f32.mrf.mxu0
      %v2450 = vadd.f32 0.0, %v2449
      %2451 = vmatmul.bf16.gmra.mxu0 %v2383
      %v2452 = vpop.f32.mrf.mxu0
      %v2453 = vadd.f32 0.0, %v2452
      %v2454 = vpop.f32.mrf.mxu0
      %v2455 = vadd.f32 0.0, %v2454
      %2456 = vmatmul.bf16.gmra.mxu0 %v2386
      %v2457 = vpop.f32.mrf.mxu0
      %v2458 = vadd.f32 0.0, %v2457
      %v2459 = vpop.f32.mrf.mxu0
      %v2460 = vadd.f32 0.0, %v2459
      %2461 = vmatmul.bf16.gmra.mxu0 %v2389
      %v2462 = vpop.f32.mrf.mxu0
      %v2463 = vadd.f32 0.0, %v2462
      %v2464 = vpop.f32.mrf.mxu0
      %v2465 = vadd.f32 0.0, %v2464
      %2466 = vmatmul.bf16.gmra.mxu0 %v2392
      %v2467 = vpop.f32.mrf.mxu0
      %v2468 = vadd.f32 0.0, %v2467
      %v2469 = vpop.f32.mrf.mxu0
      %v2470 = vadd.f32 0.0, %v2469
      %2471 = vmatmul.bf16.gmra.mxu0 %v2395
      %v2472 = vpop.f32.mrf.mxu0
      %v2473 = vadd.f32 0.0, %v2472
      %v2474 = vpop.f32.mrf.mxu0
      %v2475 = vadd.f32 0.0, %v2474
      %2476 = vmatmul.bf16.gmra.mxu0 %v2398
      %v2477 = vpop.f32.mrf.mxu0
      %v2478 = vadd.f32 0.0, %v2477
      %v2479 = vpop.f32.mrf.mxu0
      %v2480 = vadd.f32 0.0, %v2479
      %2481 = vmatmul.bf16.gmra.mxu0 %v2401
      %v2482 = vpop.f32.mrf.mxu0
      %v2483 = vadd.f32 0.0, %v2482
      %v2484 = vpop.f32.mrf.mxu0
      %v2485 = vadd.f32 0.0, %v2484
      %2486 = vmatmul.bf16.gmra.mxu0 %v2404
      %v2487 = vpop.f32.mrf.mxu0
      %v2488 = vadd.f32 0.0, %v2487
      %v2489 = vpop.f32.mrf.mxu0
      %v2490 = vadd.f32 0.0, %v2489
      %2491 = vmatmul.bf16.gmra.mxu0 %v2407
      %v2492 = vpop.f32.mrf.mxu0
      %v2493 = vadd.f32 0.0, %v2492
      %v2494 = vpop.f32.mrf.mxu0
      %v2495 = vadd.f32 0.0, %v2494
      %2496 = vmatmul.bf16.gmra.mxu0 %v2410
      %v2497 = vpop.f32.mrf.mxu0
      %v2498 = vadd.f32 0.0, %v2497
      %v2499 = vpop.f32.mrf.mxu0
      %v2500 = vadd.f32 0.0, %v2499
      %2501 = vmatmul.bf16.gmra.mxu0 %v2413
      %v2502 = vpop.f32.mrf.mxu0
      %v2503 = vadd.f32 0.0, %v2502
      %v2504 = vpop.f32.mrf.mxu0
      %v2505 = vadd.f32 0.0, %v2504
      %2506 = vdwg.mxu0
      %v2507 = vadd.f32 %v2221, %v2428
      %v2508 = vadd.f32 %v2222, %v2430
      %v2509 = vadd.f32 %v2223, %v2433
      %v2510 = vadd.f32 %v2224, %v2435
      %v2511 = vadd.f32 %v2225, %v2438
      %v2512 = vadd.f32 %v2226, %v2440
      %v2513 = vadd.f32 %v2227, %v2443
      %v2514 = vadd.f32 %v2228, %v2445
      %v2515 = vadd.f32 %v2229, %v2448
      %v2516 = vadd.f32 %v2230, %v2450
      %v2517 = vadd.f32 %v2231, %v2453
      %v2518 = vadd.f32 %v2232, %v2455
      %v2519 = vadd.f32 %v2233, %v2458
      %v2520 = vadd.f32 %v2234, %v2460
      %v2521 = vadd.f32 %v2235, %v2463
      %v2522 = vadd.f32 %v2236, %v2465
      %v2523 = vadd.f32 %v2237, %v2468
      %v2524 = vadd.f32 %v2238, %v2470
      %v2525 = vadd.f32 %v2239, %v2473
      %v2526 = vadd.f32 %v2240, %v2475
      %v2527 = vadd.f32 %v2241, %v2478
      %v2528 = vadd.f32 %v2242, %v2480
      %v2529 = vadd.f32 %v2243, %v2483
      %v2530 = vadd.f32 %v2244, %v2485
      %v2531 = vadd.f32 %v2245, %v2488
      %v2532 = vadd.f32 %v2246, %v2490
      %v2533 = vadd.f32 %v2247, %v2493
      %v2534 = vadd.f32 %v2248, %v2495
      %v2535 = vadd.f32 %v2249, %v2498
      %v2536 = vadd.f32 %v2250, %v2500
      %v2537 = vadd.f32 %v2251, %v2503
      %v2538 = vadd.f32 %v2252, %v2505
      %v2539 = vld [vmem:[%s2253] sm:$0xf]
      %v2540 = vld [vmem:[%s2253 + $0x4] sm:$0xf]
      %v2541 = vld [vmem:[%s2253 + $0x8] sm:$0x1]
      %v2542 = vld [vmem:[%s2253 + $0xc] sm:$0xf]
      %v2543 = vld [vmem:[%s2253 + $0x10] sm:$0xf]
      %v2544 = vld [vmem:[%s2253 + $0x14] sm:$0x1]
      %v2545 = vld [vmem:[%s2253 + $0x18] sm:$0xf]
      %v2546 = vld [vmem:[%s2253 + $0x1c] sm:$0xf]
      %v2547 = vld [vmem:[%s2253 + $0x20] sm:$0x1]
      %v2548 = vld [vmem:[%s2253 + $0x24] sm:$0xf]
      %v2549 = vld [vmem:[%s2253 + $0x28] sm:$0xf]
      %v2550 = vld [vmem:[%s2253 + $0x2c] sm:$0x1]
      %v2551 = vld [vmem:[%s2253 + $0x30] sm:$0xf]
      %v2552 = vld [vmem:[%s2253 + $0x34] sm:$0xf]
      %v2553 = vld [vmem:[%s2253 + $0x38] sm:$0x1]
      %v2554 = vld [vmem:[%s2253 + $0x3c] sm:$0xf]
      %v2555 = vld [vmem:[%s2253 + $0x40] sm:$0xf]
      %v2556 = vld [vmem:[%s2253 + $0x44] sm:$0x1]
      %v2557 = vld [vmem:[%s2253 + $0x48] sm:$0xf]
      %v2558 = vld [vmem:[%s2253 + $0x4c] sm:$0xf]
      %v2559 = vld [vmem:[%s2253 + $0x50] sm:$0x1]
      %v2560 = vld [vmem:[%s2253 + $0x54] sm:$0xf]
      %v2561 = vld [vmem:[%s2253 + $0x58] sm:$0xf]
      %v2562 = vld [vmem:[%s2253 + $0x5c] sm:$0x1]
      %v2563 = vld [vmem:[%s2253 + $0x60] sm:$0xf]
      %v2564 = vld [vmem:[%s2253 + $0x64] sm:$0xf]
      %v2565 = vld [vmem:[%s2253 + $0x68] sm:$0x1]
      %v2566 = vld [vmem:[%s2253 + $0x6c] sm:$0xf]
      %v2567 = vld [vmem:[%s2253 + $0x70] sm:$0xf]
      %v2568 = vld [vmem:[%s2253 + $0x74] sm:$0x1]
      %v2569 = vld [vmem:[%s2253 + $0x78] sm:$0xf]
      %v2570 = vld [vmem:[%s2253 + $0x7c] sm:$0xf]
      %v2571 = vld [vmem:[%s2253 + $0x80] sm:$0x1]
      %v2572 = vld [vmem:[%s2253 + $0x84] sm:$0xf]
      %v2573 = vld [vmem:[%s2253 + $0x88] sm:$0xf]
      %v2574 = vld [vmem:[%s2253 + $0x8c] sm:$0x1]
      %v2575 = vld [vmem:[%s2253 + $0x90] sm:$0xf]
      %v2576 = vld [vmem:[%s2253 + $0x94] sm:$0xf]
      %v2577 = vld [vmem:[%s2253 + $0x98] sm:$0x1]
      %v2578 = vld [vmem:[%s2253 + $0x9c] sm:$0xf]
      %v2579 = vld [vmem:[%s2253 + $0xa0] sm:$0xf]
      %v2580 = vld [vmem:[%s2253 + $0xa4] sm:$0x1]
      %v2581 = vld [vmem:[%s2253 + $0xa8] sm:$0xf]
      %v2582 = vld [vmem:[%s2253 + $0xac] sm:$0xf]
      %v2583 = vld [vmem:[%s2253 + $0xb0] sm:$0x1]
      %v2584 = vld [vmem:[%s2253 + $0xb4] sm:$0xf]
      %v2585 = vld [vmem:[%s2253 + $0xb8] sm:$0xf]
      %v2586 = vld [vmem:[%s2253 + $0xbc] sm:$0x1]
      %v2588 = vshrl.u32 %v2539, 16
      %v2590 = vrot.slane %v2588, 4
      %v2591 = vshll.u32 %v2539, 16
      %v2593 = vrot.slane %v2591, 5
      %v2594 = vor.u32 %v2590, %v2593
      %v2595 = vrot.slane %v2594, 4
      %v2597 = vshll.u32 %v2540, 16
      %v2599 = vrot.slane %v2597, 5
      %v2600 = vsel %vm1073, %v2595, %v2599
      %v2601 = vshrl.u32 %v2540, 16
      %v2603 = vrot.slane %v2601, 4
      %v2604 = vor.u32 %v2603, %v2599
      %v2605 = vrot.slane %v2604, 4
      %v2607 = vshll.u32 %v2541, 16
      %v2609 = vrot.slane %v2607, 5
      %v2610 = vsel %vm1073, %v2605, %v2609
      %v2612 = vshrl.u32 %v2542, 16
      %v2614 = vrot.slane %v2612, 4
      %v2615 = vshll.u32 %v2542, 16
      %v2617 = vrot.slane %v2615, 5
      %v2618 = vor.u32 %v2614, %v2617
      %v2619 = vrot.slane %v2618, 4
      %v2621 = vshll.u32 %v2543, 16
      %v2623 = vrot.slane %v2621, 5
      %v2624 = vsel %vm1073, %v2619, %v2623
      %v2625 = vshrl.u32 %v2543, 16
      %v2627 = vrot.slane %v2625, 4
      %v2628 = vor.u32 %v2627, %v2623
      %v2629 = vrot.slane %v2628, 4
      %v2631 = vshll.u32 %v2544, 16
      %v2633 = vrot.slane %v2631, 5
      %v2634 = vsel %vm1073, %v2629, %v2633
      %v2636 = vshrl.u32 %v2545, 16
      %v2638 = vrot.slane %v2636, 4
      %v2639 = vshll.u32 %v2545, 16
      %v2641 = vrot.slane %v2639, 5
      %v2642 = vor.u32 %v2638, %v2641
      %v2643 = vrot.slane %v2642, 4
      %v2645 = vshll.u32 %v2546, 16
      %v2647 = vrot.slane %v2645, 5
      %v2648 = vsel %vm1073, %v2643, %v2647
      %v2649 = vshrl.u32 %v2546, 16
      %v2651 = vrot.slane %v2649, 4
      %v2652 = vor.u32 %v2651, %v2647
      %v2653 = vrot.slane %v2652, 4
      %v2655 = vshll.u32 %v2547, 16
      %v2657 = vrot.slane %v2655, 5
      %v2658 = vsel %vm1073, %v2653, %v2657
      %v2660 = vshrl.u32 %v2548, 16
      %v2662 = vrot.slane %v2660, 4
      %v2663 = vshll.u32 %v2548, 16
      %v2665 = vrot.slane %v2663, 5
      %v2666 = vor.u32 %v2662, %v2665
      %v2667 = vrot.slane %v2666, 4
      %v2669 = vshll.u32 %v2549, 16
      %v2671 = vrot.slane %v2669, 5
      %v2672 = vsel %vm1073, %v2667, %v2671
      %v2673 = vshrl.u32 %v2549, 16
      %v2675 = vrot.slane %v2673, 4
      %v2676 = vor.u32 %v2675, %v2671
      %v2677 = vrot.slane %v2676, 4
      %v2679 = vshll.u32 %v2550, 16
      %v2681 = vrot.slane %v2679, 5
      %v2682 = vsel %vm1073, %v2677, %v2681
      %v2684 = vshrl.u32 %v2551, 16
      %v2686 = vrot.slane %v2684, 4
      %v2687 = vshll.u32 %v2551, 16
      %v2689 = vrot.slane %v2687, 5
      %v2690 = vor.u32 %v2686, %v2689
      %v2691 = vrot.slane %v2690, 4
      %v2693 = vshll.u32 %v2552, 16
      %v2695 = vrot.slane %v2693, 5
      %v2696 = vsel %vm1073, %v2691, %v2695
      %v2697 = vshrl.u32 %v2552, 16
      %v2699 = vrot.slane %v2697, 4
      %v2700 = vor.u32 %v2699, %v2695
      %v2701 = vrot.slane %v2700, 4
      %v2703 = vshll.u32 %v2553, 16
      %v2705 = vrot.slane %v2703, 5
      %v2706 = vsel %vm1073, %v2701, %v2705
      %v2708 = vshrl.u32 %v2554, 16
      %v2710 = vrot.slane %v2708, 4
      %v2711 = vshll.u32 %v2554, 16
      %v2713 = vrot.slane %v2711, 5
      %v2714 = vor.u32 %v2710, %v2713
      %v2715 = vrot.slane %v2714, 4
      %v2717 = vshll.u32 %v2555, 16
      %v2719 = vrot.slane %v2717, 5
      %v2720 = vsel %vm1073, %v2715, %v2719
      %v2721 = vshrl.u32 %v2555, 16
      %v2723 = vrot.slane %v2721, 4
      %v2724 = vor.u32 %v2723, %v2719
      %v2725 = vrot.slane %v2724, 4
      %v2727 = vshll.u32 %v2556, 16
      %v2729 = vrot.slane %v2727, 5
      %v2730 = vsel %vm1073, %v2725, %v2729
      %v2732 = vshrl.u32 %v2557, 16
      %v2734 = vrot.slane %v2732, 4
      %v2735 = vshll.u32 %v2557, 16
      %v2737 = vrot.slane %v2735, 5
      %v2738 = vor.u32 %v2734, %v2737
      %v2739 = vrot.slane %v2738, 4
      %v2741 = vshll.u32 %v2558, 16
      %v2743 = vrot.slane %v2741, 5
      %v2744 = vsel %vm1073, %v2739, %v2743
      %v2745 = vshrl.u32 %v2558, 16
      %v2747 = vrot.slane %v2745, 4
      %v2748 = vor.u32 %v2747, %v2743
      %v2749 = vrot.slane %v2748, 4
      %v2751 = vshll.u32 %v2559, 16
      %v2753 = vrot.slane %v2751, 5
      %v2754 = vsel %vm1073, %v2749, %v2753
      %v2756 = vshrl.u32 %v2560, 16
      %v2758 = vrot.slane %v2756, 4
      %v2759 = vshll.u32 %v2560, 16
      %v2761 = vrot.slane %v2759, 5
      %v2762 = vor.u32 %v2758, %v2761
      %v2763 = vrot.slane %v2762, 4
      %v2765 = vshll.u32 %v2561, 16
      %v2767 = vrot.slane %v2765, 5
      %v2768 = vsel %vm1073, %v2763, %v2767
      %v2769 = vshrl.u32 %v2561, 16
      %v2771 = vrot.slane %v2769, 4
      %v2772 = vor.u32 %v2771, %v2767
      %v2773 = vrot.slane %v2772, 4
      %v2775 = vshll.u32 %v2562, 16
      %v2777 = vrot.slane %v2775, 5
      %v2778 = vsel %vm1073, %v2773, %v2777
      %v2780 = vshrl.u32 %v2563, 16
      %v2782 = vrot.slane %v2780, 4
      %v2783 = vshll.u32 %v2563, 16
      %v2785 = vrot.slane %v2783, 5
      %v2786 = vor.u32 %v2782, %v2785
      %v2787 = vrot.slane %v2786, 4
      %v2789 = vshll.u32 %v2564, 16
      %v2791 = vrot.slane %v2789, 5
      %v2792 = vsel %vm1073, %v2787, %v2791
      %v2793 = vshrl.u32 %v2564, 16
      %v2795 = vrot.slane %v2793, 4
      %v2796 = vor.u32 %v2795, %v2791
      %v2797 = vrot.slane %v2796, 4
      %v2799 = vshll.u32 %v2565, 16
      %v2801 = vrot.slane %v2799, 5
      %v2802 = vsel %vm1073, %v2797, %v2801
      %v2804 = vshrl.u32 %v2566, 16
      %v2806 = vrot.slane %v2804, 4
      %v2807 = vshll.u32 %v2566, 16
      %v2809 = vrot.slane %v2807, 5
      %v2810 = vor.u32 %v2806, %v2809
      %v2811 = vrot.slane %v2810, 4
      %v2813 = vshll.u32 %v2567, 16
      %v2815 = vrot.slane %v2813, 5
      %v2816 = vsel %vm1073, %v2811, %v2815
      %v2817 = vshrl.u32 %v2567, 16
      %v2819 = vrot.slane %v2817, 4
      %v2820 = vor.u32 %v2819, %v2815
      %v2821 = vrot.slane %v2820, 4
      %v2823 = vshll.u32 %v2568, 16
      %v2825 = vrot.slane %v2823, 5
      %v2826 = vsel %vm1073, %v2821, %v2825
      %v2828 = vshrl.u32 %v2569, 16
      %v2830 = vrot.slane %v2828, 4
      %v2831 = vshll.u32 %v2569, 16
      %v2833 = vrot.slane %v2831, 5
      %v2834 = vor.u32 %v2830, %v2833
      %v2835 = vrot.slane %v2834, 4
      %v2837 = vshll.u32 %v2570, 16
      %v2839 = vrot.slane %v2837, 5
      %v2840 = vsel %vm1073, %v2835, %v2839
      %v2841 = vshrl.u32 %v2570, 16
      %v2843 = vrot.slane %v2841, 4
      %v2844 = vor.u32 %v2843, %v2839
      %v2845 = vrot.slane %v2844, 4
      %v2847 = vshll.u32 %v2571, 16
      %v2849 = vrot.slane %v2847, 5
      %v2850 = vsel %vm1073, %v2845, %v2849
      %v2852 = vshrl.u32 %v2572, 16
      %v2854 = vrot.slane %v2852, 4
      %v2855 = vshll.u32 %v2572, 16
      %v2857 = vrot.slane %v2855, 5
      %v2858 = vor.u32 %v2854, %v2857
      %v2859 = vrot.slane %v2858, 4
      %v2861 = vshll.u32 %v2573, 16
      %v2863 = vrot.slane %v2861, 5
      %v2864 = vsel %vm1073, %v2859, %v2863
      %v2865 = vshrl.u32 %v2573, 16
      %v2867 = vrot.slane %v2865, 4
      %v2868 = vor.u32 %v2867, %v2863
      %v2869 = vrot.slane %v2868, 4
      %v2871 = vshll.u32 %v2574, 16
      %v2873 = vrot.slane %v2871, 5
      %v2874 = vsel %vm1073, %v2869, %v2873
      %v2876 = vshrl.u32 %v2575, 16
      %v2878 = vrot.slane %v2876, 4
      %v2879 = vshll.u32 %v2575, 16
      %v2881 = vrot.slane %v2879, 5
      %v2882 = vor.u32 %v2878, %v2881
      %v2883 = vrot.slane %v2882, 4
      %v2885 = vshll.u32 %v2576, 16
      %v2887 = vrot.slane %v2885, 5
      %v2888 = vsel %vm1073, %v2883, %v2887
      %v2889 = vshrl.u32 %v2576, 16
      %v2891 = vrot.slane %v2889, 4
      %v2892 = vor.u32 %v2891, %v2887
      %v2893 = vrot.slane %v2892, 4
      %v2895 = vshll.u32 %v2577, 16
      %v2897 = vrot.slane %v2895, 5
      %v2898 = vsel %vm1073, %v2893, %v2897
      %v2900 = vshrl.u32 %v2578, 16
      %v2902 = vrot.slane %v2900, 4
      %v2903 = vshll.u32 %v2578, 16
      %v2905 = vrot.slane %v2903, 5
      %v2906 = vor.u32 %v2902, %v2905
      %v2907 = vrot.slane %v2906, 4
      %v2909 = vshll.u32 %v2579, 16
      %v2911 = vrot.slane %v2909, 5
      %v2912 = vsel %vm1073, %v2907, %v2911
      %v2913 = vshrl.u32 %v2579, 16
      %v2915 = vrot.slane %v2913, 4
      %v2916 = vor.u32 %v2915, %v2911
      %v2917 = vrot.slane %v2916, 4
      %v2919 = vshll.u32 %v2580, 16
      %v2921 = vrot.slane %v2919, 5
      %v2922 = vsel %vm1073, %v2917, %v2921
      %v2924 = vshrl.u32 %v2581, 16
      %v2926 = vrot.slane %v2924, 4
      %v2927 = vshll.u32 %v2581, 16
      %v2929 = vrot.slane %v2927, 5
      %v2930 = vor.u32 %v2926, %v2929
      %v2931 = vrot.slane %v2930, 4
      %v2933 = vshll.u32 %v2582, 16
      %v2935 = vrot.slane %v2933, 5
      %v2936 = vsel %vm1073, %v2931, %v2935
      %v2937 = vshrl.u32 %v2582, 16
      %v2939 = vrot.slane %v2937, 4
      %v2940 = vor.u32 %v2939, %v2935
      %v2941 = vrot.slane %v2940, 4
      %v2943 = vshll.u32 %v2583, 16
      %v2945 = vrot.slane %v2943, 5
      %v2946 = vsel %vm1073, %v2941, %v2945
      %v2948 = vshrl.u32 %v2584, 16
      %v2950 = vrot.slane %v2948, 4
      %v2951 = vshll.u32 %v2584, 16
      %v2953 = vrot.slane %v2951, 5
      %v2954 = vor.u32 %v2950, %v2953
      %v2955 = vrot.slane %v2954, 4
      %v2957 = vshll.u32 %v2585, 16
      %v2959 = vrot.slane %v2957, 5
      %v2960 = vsel %vm1073, %v2955, %v2959
      %v2961 = vshrl.u32 %v2585, 16
      %v2963 = vrot.slane %v2961, 4
      %v2964 = vor.u32 %v2963, %v2959
      %v2965 = vrot.slane %v2964, 4
      %v2967 = vshll.u32 %v2586, 16
      %v2969 = vrot.slane %v2967, 5
      %v2970 = vsel %vm1073, %v2965, %v2969
      %v2971 = vld [vmem:[%s296 + $0x10] sm:$0xf]
      %v2972 = vunpack.c.l.b16 %v2600
      %v2973 = vunpack.c.l.b16 %v2610
      %v2974 = vunpack.c.l.b16 %v2624
      %v2975 = vunpack.c.l.b16 %v2634
      %v2976 = vunpack.c.l.b16 %v2648
      %v2977 = vunpack.c.l.b16 %v2658
      %v2978 = vunpack.c.l.b16 %v2672
      %v2979 = vunpack.c.l.b16 %v2682
      %v2980 = vunpack.c.l.b16 %v2696
      %v2981 = vunpack.c.l.b16 %v2706
      %v2982 = vunpack.c.l.b16 %v2720
      %v2983 = vunpack.c.l.b16 %v2730
      %v2984 = vunpack.c.l.b16 %v2744
      %v2985 = vunpack.c.l.b16 %v2754
      %v2986 = vunpack.c.l.b16 %v2768
      %v2987 = vunpack.c.l.b16 %v2778
      %v2988 = vunpack.c.l.b16 %v2792
      %v2989 = vunpack.c.l.b16 %v2802
      %v2990 = vunpack.c.l.b16 %v2816
      %v2991 = vunpack.c.l.b16 %v2826
      %v2992 = vunpack.c.l.b16 %v2840
      %v2993 = vunpack.c.l.b16 %v2850
      %v2994 = vunpack.c.l.b16 %v2864
      %v2995 = vunpack.c.l.b16 %v2874
      %v2996 = vunpack.c.l.b16 %v2888
      %v2997 = vunpack.c.l.b16 %v2898
      %v2998 = vunpack.c.l.b16 %v2912
      %v2999 = vunpack.c.l.b16 %v2922
      %v3000 = vunpack.c.l.b16 %v2936
      %v3001 = vunpack.c.l.b16 %v2946
      %v3002 = vunpack.c.l.b16 %v2960
      %v3003 = vunpack.c.l.b16 %v2970
      %v3004 = vpack.c.b16 %v2973, %v2972
      %v3005 = vpack.c.b16 %v2975, %v2974
      %v3006 = vpack.c.b16 %v2977, %v2976
      %v3007 = vpack.c.b16 %v2979, %v2978
      %v3008 = vpack.c.b16 %v2981, %v2980
      %v3009 = vpack.c.b16 %v2983, %v2982
      %v3010 = vpack.c.b16 %v2985, %v2984
      %v3011 = vpack.c.b16 %v2987, %v2986
      %v3012 = vpack.c.b16 %v2989, %v2988
      %v3013 = vpack.c.b16 %v2991, %v2990
      %v3014 = vpack.c.b16 %v2993, %v2992
      %v3015 = vpack.c.b16 %v2995, %v2994
      %v3016 = vpack.c.b16 %v2997, %v2996
      %v3017 = vpack.c.b16 %v2999, %v2998
      %v3018 = vpack.c.b16 %v3001, %v3000
      %v3019 = vpack.c.b16 %v3003, %v3002
      %v3021 = vsel %vm1507, %v3004, 0
      %v3024 = vsel %vm1507, %v3005, 0
      %v3027 = vsel %vm1507, %v3006, 0
      %v3030 = vsel %vm1507, %v3007, 0
      %v3033 = vsel %vm1507, %v3008, 0
      %v3036 = vsel %vm1507, %v3009, 0
      %v3039 = vsel %vm1507, %v3010, 0
      %v3042 = vsel %vm1507, %v3011, 0
      %v3045 = vsel %vm1507, %v3012, 0
      %v3048 = vsel %vm1507, %v3013, 0
      %v3051 = vsel %vm1507, %v3014, 0
      %v3054 = vsel %vm1507, %v3015, 0
      %v3057 = vsel %vm1507, %v3016, 0
      %v3060 = vsel %vm1507, %v3017, 0
      %v3063 = vsel %vm1507, %v3018, 0
      %v3066 = vsel %vm1507, %v3019, 0
      %v3069 = vsel %vm1556, %v2971, 0
      %3071 = vmatpush.bf16.msra.mxu0 0
      %3072 = vmatpush.bf16.msra.mxu0 0
      %3073 = vmatpush.bf16.msra.mxu0 0
      %3074 = vmatpush.bf16.msra.mxu0 0
      %3075 = vmatpush.bf16.msra.mxu0 0
      %3076 = vmatpush.bf16.msra.mxu0 0
      %3077 = vmatpush.bf16.msra.mxu0 0
      %3078 = vmatpush.bf16.msra.mxu0 %v3069
      %3079 = vmatmul.bf16.gmra.mxu0 %v3021
      %v3080 = vpop.f32.mrf.mxu0
      %v3081 = vadd.f32 0.0, %v3080
      %v3082 = vpop.f32.mrf.mxu0
      %v3083 = vadd.f32 0.0, %v3082
      %3084 = vmatmul.bf16.gmra.mxu0 %v3024
      %v3085 = vpop.f32.mrf.mxu0
      %v3086 = vadd.f32 0.0, %v3085
      %v3087 = vpop.f32.mrf.mxu0
      %v3088 = vadd.f32 0.0, %v3087
      %3089 = vmatmul.bf16.gmra.mxu0 %v3027
      %v3090 = vpop.f32.mrf.mxu0
      %v3091 = vadd.f32 0.0, %v3090
      %v3092 = vpop.f32.mrf.mxu0
      %v3093 = vadd.f32 0.0, %v3092
      %3094 = vmatmul.bf16.gmra.mxu0 %v3030
      %v3095 = vpop.f32.mrf.mxu0
      %v3096 = vadd.f32 0.0, %v3095
      %v3097 = vpop.f32.mrf.mxu0
      %v3098 = vadd.f32 0.0, %v3097
      %3099 = vmatmul.bf16.gmra.mxu0 %v3033
      %v3100 = vpop.f32.mrf.mxu0
      %v3101 = vadd.f32 0.0, %v3100
      %v3102 = vpop.f32.mrf.mxu0
      %v3103 = vadd.f32 0.0, %v3102
      %3104 = vmatmul.bf16.gmra.mxu0 %v3036
      %v3105 = vpop.f32.mrf.mxu0
      %v3106 = vadd.f32 0.0, %v3105
      %v3107 = vpop.f32.mrf.mxu0
      %v3108 = vadd.f32 0.0, %v3107
      %3109 = vmatmul.bf16.gmra.mxu0 %v3039
      %v3110 = vpop.f32.mrf.mxu0
      %v3111 = vadd.f32 0.0, %v3110
      %v3112 = vpop.f32.mrf.mxu0
      %v3113 = vadd.f32 0.0, %v3112
      %3114 = vmatmul.bf16.gmra.mxu0 %v3042
      %v3115 = vpop.f32.mrf.mxu0
      %v3116 = vadd.f32 0.0, %v3115
      %v3117 = vpop.f32.mrf.mxu0
      %v3118 = vadd.f32 0.0, %v3117
      %3119 = vmatmul.bf16.gmra.mxu0 %v3045
      %v3120 = vpop.f32.mrf.mxu0
      %v3121 = vadd.f32 0.0, %v3120
      %v3122 = vpop.f32.mrf.mxu0
      %v3123 = vadd.f32 0.0, %v3122
      %3124 = vmatmul.bf16.gmra.mxu0 %v3048
      %v3125 = vpop.f32.mrf.mxu0
      %v3126 = vadd.f32 0.0, %v3125
      %v3127 = vpop.f32.mrf.mxu0
      %v3128 = vadd.f32 0.0, %v3127
      %3129 = vmatmul.bf16.gmra.mxu0 %v3051
      %v3130 = vpop.f32.mrf.mxu0
      %v3131 = vadd.f32 0.0, %v3130
      %v3132 = vpop.f32.mrf.mxu0
      %v3133 = vadd.f32 0.0, %v3132
      %3134 = vmatmul.bf16.gmra.mxu0 %v3054
      %v3135 = vpop.f32.mrf.mxu0
      %v3136 = vadd.f32 0.0, %v3135
      %v3137 = vpop.f32.mrf.mxu0
      %v3138 = vadd.f32 0.0, %v3137
      %3139 = vmatmul.bf16.gmra.mxu0 %v3057
      %v3140 = vpop.f32.mrf.mxu0
      %v3141 = vadd.f32 0.0, %v3140
      %v3142 = vpop.f32.mrf.mxu0
      %v3143 = vadd.f32 0.0, %v3142
      %3144 = vmatmul.bf16.gmra.mxu0 %v3060
      %v3145 = vpop.f32.mrf.mxu0
      %v3146 = vadd.f32 0.0, %v3145
      %v3147 = vpop.f32.mrf.mxu0
      %v3148 = vadd.f32 0.0, %v3147
      %3149 = vmatmul.bf16.gmra.mxu0 %v3063
      %v3150 = vpop.f32.mrf.mxu0
      %v3151 = vadd.f32 0.0, %v3150
      %v3152 = vpop.f32.mrf.mxu0
      %v3153 = vadd.f32 0.0, %v3152
      %3154 = vmatmul.bf16.gmra.mxu0 %v3066
      %v3155 = vpop.f32.mrf.mxu0
      %v3156 = vadd.f32 0.0, %v3155
      %v3157 = vpop.f32.mrf.mxu0
      %v3158 = vadd.f32 0.0, %v3157
      %3159 = vdwg.mxu0
      %v3160 = vadd.f32 %v2507, %v3081
      %v3161 = vadd.f32 %v2508, %v3083
      %v3162 = vadd.f32 %v2509, %v3086
      %v3163 = vadd.f32 %v2510, %v3088
      %v3164 = vadd.f32 %v2511, %v3091
      %v3165 = vadd.f32 %v2512, %v3093
      %v3166 = vadd.f32 %v2513, %v3096
      %v3167 = vadd.f32 %v2514, %v3098
      %v3168 = vadd.f32 %v2515, %v3101
      %v3169 = vadd.f32 %v2516, %v3103
      %v3170 = vadd.f32 %v2517, %v3106
      %v3171 = vadd.f32 %v2518, %v3108
      %v3172 = vadd.f32 %v2519, %v3111
      %v3173 = vadd.f32 %v2520, %v3113
      %v3174 = vadd.f32 %v2521, %v3116
      %v3175 = vadd.f32 %v2522, %v3118
      %v3176 = vadd.f32 %v2523, %v3121
      %v3177 = vadd.f32 %v2524, %v3123
      %v3178 = vadd.f32 %v2525, %v3126
      %v3179 = vadd.f32 %v2526, %v3128
      %v3180 = vadd.f32 %v2527, %v3131
      %v3181 = vadd.f32 %v2528, %v3133
      %v3182 = vadd.f32 %v2529, %v3136
      %v3183 = vadd.f32 %v2530, %v3138
      %v3184 = vadd.f32 %v2531, %v3141
      %v3185 = vadd.f32 %v2532, %v3143
      %v3186 = vadd.f32 %v2533, %v3146
      %v3187 = vadd.f32 %v2534, %v3148
      %v3188 = vadd.f32 %v2535, %v3151
      %v3189 = vadd.f32 %v2536, %v3153
      %v3190 = vadd.f32 %v2537, %v3156
      %v3191 = vadd.f32 %v2538, %v3158
      %v3192 = vld [vmem:[%s2253] sm:$0xe]
      %v3193 = vld [vmem:[%s2253 + $0xc] sm:$0xe]
      %v3194 = vld [vmem:[%s2253 + $0x18] sm:$0xe]
      %v3195 = vld [vmem:[%s2253 + $0x24] sm:$0xe]
      %v3196 = vld [vmem:[%s2253 + $0x30] sm:$0xe]
      %v3197 = vld [vmem:[%s2253 + $0x3c] sm:$0xe]
      %v3198 = vld [vmem:[%s2253 + $0x48] sm:$0xe]
      %v3199 = vld [vmem:[%s2253 + $0x54] sm:$0xe]
      %v3200 = vld [vmem:[%s2253 + $0x60] sm:$0xe]
      %v3201 = vld [vmem:[%s2253 + $0x6c] sm:$0xe]
      %v3202 = vld [vmem:[%s2253 + $0x78] sm:$0xe]
      %v3203 = vld [vmem:[%s2253 + $0x84] sm:$0xe]
      %v3204 = vld [vmem:[%s2253 + $0x90] sm:$0xe]
      %v3205 = vld [vmem:[%s2253 + $0x9c] sm:$0xe]
      %v3206 = vld [vmem:[%s2253 + $0xa8] sm:$0xe]
      %v3207 = vld [vmem:[%s2253 + $0xb4] sm:$0xe]
      %v3256 = vrot.slane %v3192, 5
      %v3257 = vrot.slane %v3256, 4
      %v3258 = vrot.slane %v2540, 5
      %v3259 = vsel %vm1919, %v3257, %v3258
      %v3260 = vrot.slane %v3258, 4
      %v3261 = vrot.slane %v2541, 5
      %v3262 = vsel %vm1919, %v3260, %v3261
      %v3263 = vrot.slane %v3193, 5
      %v3264 = vrot.slane %v3263, 4
      %v3265 = vrot.slane %v2543, 5
      %v3266 = vsel %vm1919, %v3264, %v3265
      %v3267 = vrot.slane %v3265, 4
      %v3268 = vrot.slane %v2544, 5
      %v3269 = vsel %vm1919, %v3267, %v3268
      %v3270 = vrot.slane %v3194, 5
      %v3271 = vrot.slane %v3270, 4
      %v3272 = vrot.slane %v2546, 5
      %v3273 = vsel %vm1919, %v3271, %v3272
      %v3274 = vrot.slane %v3272, 4
      %v3275 = vrot.slane %v2547, 5
      %v3276 = vsel %vm1919, %v3274, %v3275
      %v3277 = vrot.slane %v3195, 5
      %v3278 = vrot.slane %v3277, 4
      %v3279 = vrot.slane %v2549, 5
      %v3280 = vsel %vm1919, %v3278, %v3279
      %v3281 = vrot.slane %v3279, 4
      %v3282 = vrot.slane %v2550, 5
      %v3283 = vsel %vm1919, %v3281, %v3282
      %v3284 = vrot.slane %v3196, 5
      %v3285 = vrot.slane %v3284, 4
      %v3286 = vrot.slane %v2552, 5
      %v3287 = vsel %vm1919, %v3285, %v3286
      %v3288 = vrot.slane %v3286, 4
      %v3289 = vrot.slane %v2553, 5
      %v3290 = vsel %vm1919, %v3288, %v3289
      %v3291 = vrot.slane %v3197, 5
      %v3292 = vrot.slane %v3291, 4
      %v3293 = vrot.slane %v2555, 5
      %v3294 = vsel %vm1919, %v3292, %v3293
      %v3295 = vrot.slane %v3293, 4
      %v3296 = vrot.slane %v2556, 5
      %v3297 = vsel %vm1919, %v3295, %v3296
      %v3298 = vrot.slane %v3198, 5
      %v3299 = vrot.slane %v3298, 4
      %v3300 = vrot.slane %v2558, 5
      %v3301 = vsel %vm1919, %v3299, %v3300
      %v3302 = vrot.slane %v3300, 4
      %v3303 = vrot.slane %v2559, 5
      %v3304 = vsel %vm1919, %v3302, %v3303
      %v3305 = vrot.slane %v3199, 5
      %v3306 = vrot.slane %v3305, 4
      %v3307 = vrot.slane %v2561, 5
      %v3308 = vsel %vm1919, %v3306, %v3307
      %v3309 = vrot.slane %v3307, 4
      %v3310 = vrot.slane %v2562, 5
      %v3311 = vsel %vm1919, %v3309, %v3310
      %v3312 = vrot.slane %v3200, 5
      %v3313 = vrot.slane %v3312, 4
      %v3314 = vrot.slane %v2564, 5
      %v3315 = vsel %vm1919, %v3313, %v3314
      %v3316 = vrot.slane %v3314, 4
      %v3317 = vrot.slane %v2565, 5
      %v3318 = vsel %vm1919, %v3316, %v3317
      %v3319 = vrot.slane %v3201, 5
      %v3320 = vrot.slane %v3319, 4
      %v3321 = vrot.slane %v2567, 5
      %v3322 = vsel %vm1919, %v3320, %v3321
      %v3323 = vrot.slane %v3321, 4
      %v3324 = vrot.slane %v2568, 5
      %v3325 = vsel %vm1919, %v3323, %v3324
      %v3326 = vrot.slane %v3202, 5
      %v3327 = vrot.slane %v3326, 4
      %v3328 = vrot.slane %v2570, 5
      %v3329 = vsel %vm1919, %v3327, %v3328
      %v3330 = vrot.slane %v3328, 4
      %v3331 = vrot.slane %v2571, 5
      %v3332 = vsel %vm1919, %v3330, %v3331
      %v3333 = vrot.slane %v3203, 5
      %v3334 = vrot.slane %v3333, 4
      %v3335 = vrot.slane %v2573, 5
      %v3336 = vsel %vm1919, %v3334, %v3335
      %v3337 = vrot.slane %v3335, 4
      %v3338 = vrot.slane %v2574, 5
      %v3339 = vsel %vm1919, %v3337, %v3338
      %v3340 = vrot.slane %v3204, 5
      %v3341 = vrot.slane %v3340, 4
      %v3342 = vrot.slane %v2576, 5
      %v3343 = vsel %vm1919, %v3341, %v3342
      %v3344 = vrot.slane %v3342, 4
      %v3345 = vrot.slane %v2577, 5
      %v3346 = vsel %vm1919, %v3344, %v3345
      %v3347 = vrot.slane %v3205, 5
      %v3348 = vrot.slane %v3347, 4
      %v3349 = vrot.slane %v2579, 5
      %v3350 = vsel %vm1919, %v3348, %v3349
      %v3351 = vrot.slane %v3349, 4
      %v3352 = vrot.slane %v2580, 5
      %v3353 = vsel %vm1919, %v3351, %v3352
      %v3354 = vrot.slane %v3206, 5
      %v3355 = vrot.slane %v3354, 4
      %v3356 = vrot.slane %v2582, 5
      %v3357 = vsel %vm1919, %v3355, %v3356
      %v3358 = vrot.slane %v3356, 4
      %v3359 = vrot.slane %v2583, 5
      %v3360 = vsel %vm1919, %v3358, %v3359
      %v3361 = vrot.slane %v3207, 5
      %v3362 = vrot.slane %v3361, 4
      %v3363 = vrot.slane %v2585, 5
      %v3364 = vsel %vm1919, %v3362, %v3363
      %v3365 = vrot.slane %v3363, 4
      %v3366 = vrot.slane %v2586, 5
      %v3367 = vsel %vm1919, %v3365, %v3366
      %v3368 = vld [vmem:[%s296 + $0x14] sm:$0xf]
      %v3369 = vunpack.c.l.b16 %v3259
      %v3370 = vunpack.c.l.b16 %v3262
      %v3371 = vunpack.c.l.b16 %v3266
      %v3372 = vunpack.c.l.b16 %v3269
      %v3373 = vunpack.c.l.b16 %v3273
      %v3374 = vunpack.c.l.b16 %v3276
      %v3375 = vunpack.c.l.b16 %v3280
      %v3376 = vunpack.c.l.b16 %v3283
      %v3377 = vunpack.c.l.b16 %v3287
      %v3378 = vunpack.c.l.b16 %v3290
      %v3379 = vunpack.c.l.b16 %v3294
      %v3380 = vunpack.c.l.b16 %v3297
      %v3381 = vunpack.c.l.b16 %v3301
      %v3382 = vunpack.c.l.b16 %v3304
      %v3383 = vunpack.c.l.b16 %v3308
      %v3384 = vunpack.c.l.b16 %v3311
      %v3385 = vunpack.c.l.b16 %v3315
      %v3386 = vunpack.c.l.b16 %v3318
      %v3387 = vunpack.c.l.b16 %v3322
      %v3388 = vunpack.c.l.b16 %v3325
      %v3389 = vunpack.c.l.b16 %v3329
      %v3390 = vunpack.c.l.b16 %v3332
      %v3391 = vunpack.c.l.b16 %v3336
      %v3392 = vunpack.c.l.b16 %v3339
      %v3393 = vunpack.c.l.b16 %v3343
      %v3394 = vunpack.c.l.b16 %v3346
      %v3395 = vunpack.c.l.b16 %v3350
      %v3396 = vunpack.c.l.b16 %v3353
      %v3397 = vunpack.c.l.b16 %v3357
      %v3398 = vunpack.c.l.b16 %v3360
      %v3399 = vunpack.c.l.b16 %v3364
      %v3400 = vunpack.c.l.b16 %v3367
      %v3401 = vpack.c.b16 %v3370, %v3369
      %v3402 = vpack.c.b16 %v3372, %v3371
      %v3403 = vpack.c.b16 %v3374, %v3373
      %v3404 = vpack.c.b16 %v3376, %v3375
      %v3405 = vpack.c.b16 %v3378, %v3377
      %v3406 = vpack.c.b16 %v3380, %v3379
      %v3407 = vpack.c.b16 %v3382, %v3381
      %v3408 = vpack.c.b16 %v3384, %v3383
      %v3409 = vpack.c.b16 %v3386, %v3385
      %v3410 = vpack.c.b16 %v3388, %v3387
      %v3411 = vpack.c.b16 %v3390, %v3389
      %v3412 = vpack.c.b16 %v3392, %v3391
      %v3413 = vpack.c.b16 %v3394, %v3393
      %v3414 = vpack.c.b16 %v3396, %v3395
      %v3415 = vpack.c.b16 %v3398, %v3397
      %v3416 = vpack.c.b16 %v3400, %v3399
      %v3418 = vsel %vm1507, %v3401, 0
      %v3421 = vsel %vm1507, %v3402, 0
      %v3424 = vsel %vm1507, %v3403, 0
      %v3427 = vsel %vm1507, %v3404, 0
      %v3430 = vsel %vm1507, %v3405, 0
      %v3433 = vsel %vm1507, %v3406, 0
      %v3436 = vsel %vm1507, %v3407, 0
      %v3439 = vsel %vm1507, %v3408, 0
      %v3442 = vsel %vm1507, %v3409, 0
      %v3445 = vsel %vm1507, %v3410, 0
      %v3448 = vsel %vm1507, %v3411, 0
      %v3451 = vsel %vm1507, %v3412, 0
      %v3454 = vsel %vm1507, %v3413, 0
      %v3457 = vsel %vm1507, %v3414, 0
      %v3460 = vsel %vm1507, %v3415, 0
      %v3463 = vsel %vm1507, %v3416, 0
      %v3466 = vsel %vm1556, %v3368, 0
      %3468 = vmatpush.bf16.msra.mxu0 0
      %3469 = vmatpush.bf16.msra.mxu0 0
      %3470 = vmatpush.bf16.msra.mxu0 0
      %3471 = vmatpush.bf16.msra.mxu0 0
      %3472 = vmatpush.bf16.msra.mxu0 0
      %3473 = vmatpush.bf16.msra.mxu0 0
      %3474 = vmatpush.bf16.msra.mxu0 0
      %3475 = vmatpush.bf16.msra.mxu0 %v3466
      %3476 = vmatmul.bf16.gmra.mxu0 %v3418
      %v3477 = vpop.f32.mrf.mxu0
      %v3478 = vadd.f32 0.0, %v3477
      %v3479 = vpop.f32.mrf.mxu0
      %v3480 = vadd.f32 0.0, %v3479
      %3481 = vmatmul.bf16.gmra.mxu0 %v3421
      %v3482 = vpop.f32.mrf.mxu0
      %v3483 = vadd.f32 0.0, %v3482
      %v3484 = vpop.f32.mrf.mxu0
      %v3485 = vadd.f32 0.0, %v3484
      %3486 = vmatmul.bf16.gmra.mxu0 %v3424
      %v3487 = vpop.f32.mrf.mxu0
      %v3488 = vadd.f32 0.0, %v3487
      %v3489 = vpop.f32.mrf.mxu0
      %v3490 = vadd.f32 0.0, %v3489
      %3491 = vmatmul.bf16.gmra.mxu0 %v3427
      %v3492 = vpop.f32.mrf.mxu0
      %v3493 = vadd.f32 0.0, %v3492
      %v3494 = vpop.f32.mrf.mxu0
      %v3495 = vadd.f32 0.0, %v3494
      %3496 = vmatmul.bf16.gmra.mxu0 %v3430
      %v3497 = vpop.f32.mrf.mxu0
      %v3498 = vadd.f32 0.0, %v3497
      %v3499 = vpop.f32.mrf.mxu0
      %v3500 = vadd.f32 0.0, %v3499
      %3501 = vmatmul.bf16.gmra.mxu0 %v3433
      %v3502 = vpop.f32.mrf.mxu0
      %v3503 = vadd.f32 0.0, %v3502
      %v3504 = vpop.f32.mrf.mxu0
      %v3505 = vadd.f32 0.0, %v3504
      %3506 = vmatmul.bf16.gmra.mxu0 %v3436
      %v3507 = vpop.f32.mrf.mxu0
      %v3508 = vadd.f32 0.0, %v3507
      %v3509 = vpop.f32.mrf.mxu0
      %v3510 = vadd.f32 0.0, %v3509
      %3511 = vmatmul.bf16.gmra.mxu0 %v3439
      %v3512 = vpop.f32.mrf.mxu0
      %v3513 = vadd.f32 0.0, %v3512
      %v3514 = vpop.f32.mrf.mxu0
      %v3515 = vadd.f32 0.0, %v3514
      %3516 = vmatmul.bf16.gmra.mxu0 %v3442
      %v3517 = vpop.f32.mrf.mxu0
      %v3518 = vadd.f32 0.0, %v3517
      %v3519 = vpop.f32.mrf.mxu0
      %v3520 = vadd.f32 0.0, %v3519
      %3521 = vmatmul.bf16.gmra.mxu0 %v3445
      %v3522 = vpop.f32.mrf.mxu0
      %v3523 = vadd.f32 0.0, %v3522
      %v3524 = vpop.f32.mrf.mxu0
      %v3525 = vadd.f32 0.0, %v3524
      %3526 = vmatmul.bf16.gmra.mxu0 %v3448
      %v3527 = vpop.f32.mrf.mxu0
      %v3528 = vadd.f32 0.0, %v3527
      %v3529 = vpop.f32.mrf.mxu0
      %v3530 = vadd.f32 0.0, %v3529
      %3531 = vmatmul.bf16.gmra.mxu0 %v3451
      %v3532 = vpop.f32.mrf.mxu0
      %v3533 = vadd.f32 0.0, %v3532
      %v3534 = vpop.f32.mrf.mxu0
      %v3535 = vadd.f32 0.0, %v3534
      %3536 = vmatmul.bf16.gmra.mxu0 %v3454
      %v3537 = vpop.f32.mrf.mxu0
      %v3538 = vadd.f32 0.0, %v3537
      %v3539 = vpop.f32.mrf.mxu0
      %v3540 = vadd.f32 0.0, %v3539
      %3541 = vmatmul.bf16.gmra.mxu0 %v3457
      %v3542 = vpop.f32.mrf.mxu0
      %v3543 = vadd.f32 0.0, %v3542
      %v3544 = vpop.f32.mrf.mxu0
      %v3545 = vadd.f32 0.0, %v3544
      %3546 = vmatmul.bf16.gmra.mxu0 %v3460
      %v3547 = vpop.f32.mrf.mxu0
      %v3548 = vadd.f32 0.0, %v3547
      %v3549 = vpop.f32.mrf.mxu0
      %v3550 = vadd.f32 0.0, %v3549
      %3551 = vmatmul.bf16.gmra.mxu0 %v3463
      %v3552 = vpop.f32.mrf.mxu0
      %v3553 = vadd.f32 0.0, %v3552
      %v3554 = vpop.f32.mrf.mxu0
      %v3555 = vadd.f32 0.0, %v3554
      %3556 = vdwg.mxu0
      %v3557 = vadd.f32 %v3160, %v3478
      %v3558 = vadd.f32 %v3161, %v3480
      %v3559 = vadd.f32 %v3162, %v3483
      %v3560 = vadd.f32 %v3163, %v3485
      %v3561 = vadd.f32 %v3164, %v3488
      %v3562 = vadd.f32 %v3165, %v3490
      %v3563 = vadd.f32 %v3166, %v3493
      %v3564 = vadd.f32 %v3167, %v3495
      %v3565 = vadd.f32 %v3168, %v3498
      %v3566 = vadd.f32 %v3169, %v3500
      %v3567 = vadd.f32 %v3170, %v3503
      %v3568 = vadd.f32 %v3171, %v3505
      %v3569 = vadd.f32 %v3172, %v3508
      %v3570 = vadd.f32 %v3173, %v3510
      %v3571 = vadd.f32 %v3174, %v3513
      %v3572 = vadd.f32 %v3175, %v3515
      %v3573 = vadd.f32 %v3176, %v3518
      %v3574 = vadd.f32 %v3177, %v3520
      %v3575 = vadd.f32 %v3178, %v3523
      %v3576 = vadd.f32 %v3179, %v3525
      %v3577 = vadd.f32 %v3180, %v3528
      %v3578 = vadd.f32 %v3181, %v3530
      %v3579 = vadd.f32 %v3182, %v3533
      %v3580 = vadd.f32 %v3183, %v3535
      %v3581 = vadd.f32 %v3184, %v3538
      %v3582 = vadd.f32 %v3185, %v3540
      %v3583 = vadd.f32 %v3186, %v3543
      %v3584 = vadd.f32 %v3187, %v3545
      %v3585 = vadd.f32 %v3188, %v3548
      %v3586 = vadd.f32 %v3189, %v3550
      %v3587 = vadd.f32 %v3190, %v3553
      %v3588 = vadd.f32 %v3191, %v3555
      %s3589 = scalar_lea.vmem [#allocation2], 24
      %v3590 = vld [vmem:[%s3589] sm:$0xf]
      %v3591 = vld [vmem:[%s3589 + $0x4] sm:$0xf]
      %v3592 = vld [vmem:[%s3589 + $0xc] sm:$0xf]
      %v3593 = vld [vmem:[%s3589 + $0x10] sm:$0xf]
      %v3594 = vld [vmem:[%s3589 + $0x18] sm:$0xf]
      %v3595 = vld [vmem:[%s3589 + $0x1c] sm:$0xf]
      %v3596 = vld [vmem:[%s3589 + $0x24] sm:$0xf]
      %v3597 = vld [vmem:[%s3589 + $0x28] sm:$0xf]
      %v3598 = vld [vmem:[%s3589 + $0x30] sm:$0xf]
      %v3599 = vld [vmem:[%s3589 + $0x34] sm:$0xf]
      %v3600 = vld [vmem:[%s3589 + $0x3c] sm:$0xf]
      %v3601 = vld [vmem:[%s3589 + $0x40] sm:$0xf]
      %v3602 = vld [vmem:[%s3589 + $0x48] sm:$0xf]
      %v3603 = vld [vmem:[%s3589 + $0x4c] sm:$0xf]
      %v3604 = vld [vmem:[%s3589 + $0x54] sm:$0xf]
      %v3605 = vld [vmem:[%s3589 + $0x58] sm:$0xf]
      %v3606 = vld [vmem:[%s3589 + $0x60] sm:$0xf]
      %v3607 = vld [vmem:[%s3589 + $0x64] sm:$0xf]
      %v3608 = vld [vmem:[%s3589 + $0x6c] sm:$0xf]
      %v3609 = vld [vmem:[%s3589 + $0x70] sm:$0xf]
      %v3610 = vld [vmem:[%s3589 + $0x78] sm:$0xf]
      %v3611 = vld [vmem:[%s3589 + $0x7c] sm:$0xf]
      %v3612 = vld [vmem:[%s3589 + $0x84] sm:$0xf]
      %v3613 = vld [vmem:[%s3589 + $0x88] sm:$0xf]
      %v3614 = vld [vmem:[%s3589 + $0x90] sm:$0xf]
      %v3615 = vld [vmem:[%s3589 + $0x94] sm:$0xf]
      %v3616 = vld [vmem:[%s3589 + $0x9c] sm:$0xf]
      %v3617 = vld [vmem:[%s3589 + $0xa0] sm:$0xf]
      %v3618 = vld [vmem:[%s3589 + $0xa8] sm:$0xf]
      %v3619 = vld [vmem:[%s3589 + $0xac] sm:$0xf]
      %v3620 = vld [vmem:[%s3589 + $0xb4] sm:$0xf]
      %v3621 = vld [vmem:[%s3589 + $0xb8] sm:$0xf]
      %v3622 = vld [vmem:[%s296 + $0x18] sm:$0xf]
      %v3655 = vunpack.c.l.b16 %v3590
      %v3656 = vunpack.c.l.b16 %v3591
      %v3657 = vunpack.c.l.b16 %v3592
      %v3658 = vunpack.c.l.b16 %v3593
      %v3659 = vunpack.c.l.b16 %v3594
      %v3660 = vunpack.c.l.b16 %v3595
      %v3661 = vunpack.c.l.b16 %v3596
      %v3662 = vunpack.c.l.b16 %v3597
      %v3663 = vunpack.c.l.b16 %v3598
      %v3664 = vunpack.c.l.b16 %v3599
      %v3665 = vunpack.c.l.b16 %v3600
      %v3666 = vunpack.c.l.b16 %v3601
      %v3667 = vunpack.c.l.b16 %v3602
      %v3668 = vunpack.c.l.b16 %v3603
      %v3669 = vunpack.c.l.b16 %v3604
      %v3670 = vunpack.c.l.b16 %v3605
      %v3671 = vunpack.c.l.b16 %v3606
      %v3672 = vunpack.c.l.b16 %v3607
      %v3673 = vunpack.c.l.b16 %v3608
      %v3674 = vunpack.c.l.b16 %v3609
      %v3675 = vunpack.c.l.b16 %v3610
      %v3676 = vunpack.c.l.b16 %v3611
      %v3677 = vunpack.c.l.b16 %v3612
      %v3678 = vunpack.c.l.b16 %v3613
      %v3679 = vunpack.c.l.b16 %v3614
      %v3680 = vunpack.c.l.b16 %v3615
      %v3681 = vunpack.c.l.b16 %v3616
      %v3682 = vunpack.c.l.b16 %v3617
      %v3683 = vunpack.c.l.b16 %v3618
      %v3684 = vunpack.c.l.b16 %v3619
      %v3685 = vunpack.c.l.b16 %v3620
      %v3686 = vunpack.c.l.b16 %v3621
      %v3687 = vpack.c.b16 %v3656, %v3655
      %v3688 = vpack.c.b16 %v3658, %v3657
      %v3689 = vpack.c.b16 %v3660, %v3659
      %v3690 = vpack.c.b16 %v3662, %v3661
      %v3691 = vpack.c.b16 %v3664, %v3663
      %v3692 = vpack.c.b16 %v3666, %v3665
      %v3693 = vpack.c.b16 %v3668, %v3667
      %v3694 = vpack.c.b16 %v3670, %v3669
      %v3695 = vpack.c.b16 %v3672, %v3671
      %v3696 = vpack.c.b16 %v3674, %v3673
      %v3697 = vpack.c.b16 %v3676, %v3675
      %v3698 = vpack.c.b16 %v3678, %v3677
      %v3699 = vpack.c.b16 %v3680, %v3679
      %v3700 = vpack.c.b16 %v3682, %v3681
      %v3701 = vpack.c.b16 %v3684, %v3683
      %v3702 = vpack.c.b16 %v3686, %v3685
      %v3704 = vsel %vm1507, %v3687, 0
      %v3707 = vsel %vm1507, %v3688, 0
      %v3710 = vsel %vm1507, %v3689, 0
      %v3713 = vsel %vm1507, %v3690, 0
      %v3716 = vsel %vm1507, %v3691, 0
      %v3719 = vsel %vm1507, %v3692, 0
      %v3722 = vsel %vm1507, %v3693, 0
      %v3725 = vsel %vm1507, %v3694, 0
      %v3728 = vsel %vm1507, %v3695, 0
      %v3731 = vsel %vm1507, %v3696, 0
      %v3734 = vsel %vm1507, %v3697, 0
      %v3737 = vsel %vm1507, %v3698, 0
      %v3740 = vsel %vm1507, %v3699, 0
      %v3743 = vsel %vm1507, %v3700, 0
      %v3746 = vsel %vm1507, %v3701, 0
      %v3749 = vsel %vm1507, %v3702, 0
      %v3752 = vsel %vm1556, %v3622, 0
      %3754 = vmatpush.bf16.msra.mxu0 0
      %3755 = vmatpush.bf16.msra.mxu0 0
      %3756 = vmatpush.bf16.msra.mxu0 0
      %3757 = vmatpush.bf16.msra.mxu0 0
      %3758 = vmatpush.bf16.msra.mxu0 0
      %3759 = vmatpush.bf16.msra.mxu0 0
      %3760 = vmatpush.bf16.msra.mxu0 0
      %3761 = vmatpush.bf16.msra.mxu0 %v3752
      %3762 = vmatmul.bf16.gmra.mxu0 %v3704
      %v3763 = vpop.f32.mrf.mxu0
      %v3764 = vadd.f32 0.0, %v3763
      %v3765 = vpop.f32.mrf.mxu0
      %v3766 = vadd.f32 0.0, %v3765
      %3767 = vmatmul.bf16.gmra.mxu0 %v3707
      %v3768 = vpop.f32.mrf.mxu0
      %v3769 = vadd.f32 0.0, %v3768
      %v3770 = vpop.f32.mrf.mxu0
      %v3771 = vadd.f32 0.0, %v3770
      %3772 = vmatmul.bf16.gmra.mxu0 %v3710
      %v3773 = vpop.f32.mrf.mxu0
      %v3774 = vadd.f32 0.0, %v3773
      %v3775 = vpop.f32.mrf.mxu0
      %v3776 = vadd.f32 0.0, %v3775
      %3777 = vmatmul.bf16.gmra.mxu0 %v3713
      %v3778 = vpop.f32.mrf.mxu0
      %v3779 = vadd.f32 0.0, %v3778
      %v3780 = vpop.f32.mrf.mxu0
      %v3781 = vadd.f32 0.0, %v3780
      %3782 = vmatmul.bf16.gmra.mxu0 %v3716
      %v3783 = vpop.f32.mrf.mxu0
      %v3784 = vadd.f32 0.0, %v3783
      %v3785 = vpop.f32.mrf.mxu0
      %v3786 = vadd.f32 0.0, %v3785
      %3787 = vmatmul.bf16.gmra.mxu0 %v3719
      %v3788 = vpop.f32.mrf.mxu0
      %v3789 = vadd.f32 0.0, %v3788
      %v3790 = vpop.f32.mrf.mxu0
      %v3791 = vadd.f32 0.0, %v3790
      %3792 = vmatmul.bf16.gmra.mxu0 %v3722
      %v3793 = vpop.f32.mrf.mxu0
      %v3794 = vadd.f32 0.0, %v3793
      %v3795 = vpop.f32.mrf.mxu0
      %v3796 = vadd.f32 0.0, %v3795
      %3797 = vmatmul.bf16.gmra.mxu0 %v3725
      %v3798 = vpop.f32.mrf.mxu0
      %v3799 = vadd.f32 0.0, %v3798
      %v3800 = vpop.f32.mrf.mxu0
      %v3801 = vadd.f32 0.0, %v3800
      %3802 = vmatmul.bf16.gmra.mxu0 %v3728
      %v3803 = vpop.f32.mrf.mxu0
      %v3804 = vadd.f32 0.0, %v3803
      %v3805 = vpop.f32.mrf.mxu0
      %v3806 = vadd.f32 0.0, %v3805
      %3807 = vmatmul.bf16.gmra.mxu0 %v3731
      %v3808 = vpop.f32.mrf.mxu0
      %v3809 = vadd.f32 0.0, %v3808
      %v3810 = vpop.f32.mrf.mxu0
      %v3811 = vadd.f32 0.0, %v3810
      %3812 = vmatmul.bf16.gmra.mxu0 %v3734
      %v3813 = vpop.f32.mrf.mxu0
      %v3814 = vadd.f32 0.0, %v3813
      %v3815 = vpop.f32.mrf.mxu0
      %v3816 = vadd.f32 0.0, %v3815
      %3817 = vmatmul.bf16.gmra.mxu0 %v3737
      %v3818 = vpop.f32.mrf.mxu0
      %v3819 = vadd.f32 0.0, %v3818
      %v3820 = vpop.f32.mrf.mxu0
      %v3821 = vadd.f32 0.0, %v3820
      %3822 = vmatmul.bf16.gmra.mxu0 %v3740
      %v3823 = vpop.f32.mrf.mxu0
      %v3824 = vadd.f32 0.0, %v3823
      %v3825 = vpop.f32.mrf.mxu0
      %v3826 = vadd.f32 0.0, %v3825
      %3827 = vmatmul.bf16.gmra.mxu0 %v3743
      %v3828 = vpop.f32.mrf.mxu0
      %v3829 = vadd.f32 0.0, %v3828
      %v3830 = vpop.f32.mrf.mxu0
      %v3831 = vadd.f32 0.0, %v3830
      %3832 = vmatmul.bf16.gmra.mxu0 %v3746
      %v3833 = vpop.f32.mrf.mxu0
      %v3834 = vadd.f32 0.0, %v3833
      %v3835 = vpop.f32.mrf.mxu0
      %v3836 = vadd.f32 0.0, %v3835
      %3837 = vmatmul.bf16.gmra.mxu0 %v3749
      %v3838 = vpop.f32.mrf.mxu0
      %v3839 = vadd.f32 0.0, %v3838
      %v3840 = vpop.f32.mrf.mxu0
      %v3841 = vadd.f32 0.0, %v3840
      %3842 = vdwg.mxu0
      %v3843 = vadd.f32 %v3557, %v3764
      %v3844 = vadd.f32 %v3558, %v3766
      %v3845 = vadd.f32 %v3559, %v3769
      %v3846 = vadd.f32 %v3560, %v3771
      %v3847 = vadd.f32 %v3561, %v3774
      %v3848 = vadd.f32 %v3562, %v3776
      %v3849 = vadd.f32 %v3563, %v3779
      %v3850 = vadd.f32 %v3564, %v3781
      %v3851 = vadd.f32 %v3565, %v3784
      %v3852 = vadd.f32 %v3566, %v3786
      %v3853 = vadd.f32 %v3567, %v3789
      %v3854 = vadd.f32 %v3568, %v3791
      %v3855 = vadd.f32 %v3569, %v3794
      %v3856 = vadd.f32 %v3570, %v3796
      %v3857 = vadd.f32 %v3571, %v3799
      %v3858 = vadd.f32 %v3572, %v3801
      %v3859 = vadd.f32 %v3573, %v3804
      %v3860 = vadd.f32 %v3574, %v3806
      %v3861 = vadd.f32 %v3575, %v3809
      %v3862 = vadd.f32 %v3576, %v3811
      %v3863 = vadd.f32 %v3577, %v3814
      %v3864 = vadd.f32 %v3578, %v3816
      %v3865 = vadd.f32 %v3579, %v3819
      %v3866 = vadd.f32 %v3580, %v3821
      %v3867 = vadd.f32 %v3581, %v3824
      %v3868 = vadd.f32 %v3582, %v3826
      %v3869 = vadd.f32 %v3583, %v3829
      %v3870 = vadd.f32 %v3584, %v3831
      %v3871 = vadd.f32 %v3585, %v3834
      %v3872 = vadd.f32 %v3586, %v3836
      %v3873 = vadd.f32 %v3587, %v3839
      %v3874 = vadd.f32 %v3588, %v3841
      %v3875 = vld [vmem:[%s3589] sm:$0xf]
      %v3876 = vld [vmem:[%s3589 + $0x4] sm:$0xf]
      %v3877 = vld [vmem:[%s3589 + $0x8] sm:$0x1]
      %v3878 = vld [vmem:[%s3589 + $0xc] sm:$0xf]
      %v3879 = vld [vmem:[%s3589 + $0x10] sm:$0xf]
      %v3880 = vld [vmem:[%s3589 + $0x14] sm:$0x1]
      %v3881 = vld [vmem:[%s3589 + $0x18] sm:$0xf]
      %v3882 = vld [vmem:[%s3589 + $0x1c] sm:$0xf]
      %v3883 = vld [vmem:[%s3589 + $0x20] sm:$0x1]
      %v3884 = vld [vmem:[%s3589 + $0x24] sm:$0xf]
      %v3885 = vld [vmem:[%s3589 + $0x28] sm:$0xf]
      %v3886 = vld [vmem:[%s3589 + $0x2c] sm:$0x1]
      %v3887 = vld [vmem:[%s3589 + $0x30] sm:$0xf]
      %v3888 = vld [vmem:[%s3589 + $0x34] sm:$0xf]
      %v3889 = vld [vmem:[%s3589 + $0x38] sm:$0x1]
      %v3890 = vld [vmem:[%s3589 + $0x3c] sm:$0xf]
      %v3891 = vld [vmem:[%s3589 + $0x40] sm:$0xf]
      %v3892 = vld [vmem:[%s3589 + $0x44] sm:$0x1]
      %v3893 = vld [vmem:[%s3589 + $0x48] sm:$0xf]
      %v3894 = vld [vmem:[%s3589 + $0x4c] sm:$0xf]
      %v3895 = vld [vmem:[%s3589 + $0x50] sm:$0x1]
      %v3896 = vld [vmem:[%s3589 + $0x54] sm:$0xf]
      %v3897 = vld [vmem:[%s3589 + $0x58] sm:$0xf]
      %v3898 = vld [vmem:[%s3589 + $0x5c] sm:$0x1]
      %v3899 = vld [vmem:[%s3589 + $0x60] sm:$0xf]
      %v3900 = vld [vmem:[%s3589 + $0x64] sm:$0xf]
      %v3901 = vld [vmem:[%s3589 + $0x68] sm:$0x1]
      %v3902 = vld [vmem:[%s3589 + $0x6c] sm:$0xf]
      %v3903 = vld [vmem:[%s3589 + $0x70] sm:$0xf]
      %v3904 = vld [vmem:[%s3589 + $0x74] sm:$0x1]
      %v3905 = vld [vmem:[%s3589 + $0x78] sm:$0xf]
      %v3906 = vld [vmem:[%s3589 + $0x7c] sm:$0xf]
      %v3907 = vld [vmem:[%s3589 + $0x80] sm:$0x1]
      %v3908 = vld [vmem:[%s3589 + $0x84] sm:$0xf]
      %v3909 = vld [vmem:[%s3589 + $0x88] sm:$0xf]
      %v3910 = vld [vmem:[%s3589 + $0x8c] sm:$0x1]
      %v3911 = vld [vmem:[%s3589 + $0x90] sm:$0xf]
      %v3912 = vld [vmem:[%s3589 + $0x94] sm:$0xf]
      %v3913 = vld [vmem:[%s3589 + $0x98] sm:$0x1]
      %v3914 = vld [vmem:[%s3589 + $0x9c] sm:$0xf]
      %v3915 = vld [vmem:[%s3589 + $0xa0] sm:$0xf]
      %v3916 = vld [vmem:[%s3589 + $0xa4] sm:$0x1]
      %v3917 = vld [vmem:[%s3589 + $0xa8] sm:$0xf]
      %v3918 = vld [vmem:[%s3589 + $0xac] sm:$0xf]
      %v3919 = vld [vmem:[%s3589 + $0xb0] sm:$0x1]
      %v3920 = vld [vmem:[%s3589 + $0xb4] sm:$0xf]
      %v3921 = vld [vmem:[%s3589 + $0xb8] sm:$0xf]
      %v3922 = vld [vmem:[%s3589 + $0xbc] sm:$0x1]
      %v3924 = vshrl.u32 %v3875, 16
      %v3926 = vrot.slane %v3924, 4
      %v3927 = vshll.u32 %v3875, 16
      %v3929 = vrot.slane %v3927, 5
      %v3930 = vor.u32 %v3926, %v3929
      %v3931 = vrot.slane %v3930, 4
      %v3933 = vshll.u32 %v3876, 16
      %v3935 = vrot.slane %v3933, 5
      %v3936 = vsel %vm1073, %v3931, %v3935
      %v3937 = vshrl.u32 %v3876, 16
      %v3939 = vrot.slane %v3937, 4
      %v3940 = vor.u32 %v3939, %v3935
      %v3941 = vrot.slane %v3940, 4
      %v3943 = vshll.u32 %v3877, 16
      %v3945 = vrot.slane %v3943, 5
      %v3946 = vsel %vm1073, %v3941, %v3945
      %v3948 = vshrl.u32 %v3878, 16
      %v3950 = vrot.slane %v3948, 4
      %v3951 = vshll.u32 %v3878, 16
      %v3953 = vrot.slane %v3951, 5
      %v3954 = vor.u32 %v3950, %v3953
      %v3955 = vrot.slane %v3954, 4
      %v3957 = vshll.u32 %v3879, 16
      %v3959 = vrot.slane %v3957, 5
      %v3960 = vsel %vm1073, %v3955, %v3959
      %v3961 = vshrl.u32 %v3879, 16
      %v3963 = vrot.slane %v3961, 4
      %v3964 = vor.u32 %v3963, %v3959
      %v3965 = vrot.slane %v3964, 4
      %v3967 = vshll.u32 %v3880, 16
      %v3969 = vrot.slane %v3967, 5
      %v3970 = vsel %vm1073, %v3965, %v3969
      %v3972 = vshrl.u32 %v3881, 16
      %v3974 = vrot.slane %v3972, 4
      %v3975 = vshll.u32 %v3881, 16
      %v3977 = vrot.slane %v3975, 5
      %v3978 = vor.u32 %v3974, %v3977
      %v3979 = vrot.slane %v3978, 4
      %v3981 = vshll.u32 %v3882, 16
      %v3983 = vrot.slane %v3981, 5
      %v3984 = vsel %vm1073, %v3979, %v3983
      %v3985 = vshrl.u32 %v3882, 16
      %v3987 = vrot.slane %v3985, 4
      %v3988 = vor.u32 %v3987, %v3983
      %v3989 = vrot.slane %v3988, 4
      %v3991 = vshll.u32 %v3883, 16
      %v3993 = vrot.slane %v3991, 5
      %v3994 = vsel %vm1073, %v3989, %v3993
      %v3996 = vshrl.u32 %v3884, 16
      %v3998 = vrot.slane %v3996, 4
      %v3999 = vshll.u32 %v3884, 16
      %v4001 = vrot.slane %v3999, 5
      %v4002 = vor.u32 %v3998, %v4001
      %v4003 = vrot.slane %v4002, 4
      %v4005 = vshll.u32 %v3885, 16
      %v4007 = vrot.slane %v4005, 5
      %v4008 = vsel %vm1073, %v4003, %v4007
      %v4009 = vshrl.u32 %v3885, 16
      %v4011 = vrot.slane %v4009, 4
      %v4012 = vor.u32 %v4011, %v4007
      %v4013 = vrot.slane %v4012, 4
      %v4015 = vshll.u32 %v3886, 16
      %v4017 = vrot.slane %v4015, 5
      %v4018 = vsel %vm1073, %v4013, %v4017
      %v4020 = vshrl.u32 %v3887, 16
      %v4022 = vrot.slane %v4020, 4
      %v4023 = vshll.u32 %v3887, 16
      %v4025 = vrot.slane %v4023, 5
      %v4026 = vor.u32 %v4022, %v4025
      %v4027 = vrot.slane %v4026, 4
      %v4029 = vshll.u32 %v3888, 16
      %v4031 = vrot.slane %v4029, 5
      %v4032 = vsel %vm1073, %v4027, %v4031
      %v4033 = vshrl.u32 %v3888, 16
      %v4035 = vrot.slane %v4033, 4
      %v4036 = vor.u32 %v4035, %v4031
      %v4037 = vrot.slane %v4036, 4
      %v4039 = vshll.u32 %v3889, 16
      %v4041 = vrot.slane %v4039, 5
      %v4042 = vsel %vm1073, %v4037, %v4041
      %v4044 = vshrl.u32 %v3890, 16
      %v4046 = vrot.slane %v4044, 4
      %v4047 = vshll.u32 %v3890, 16
      %v4049 = vrot.slane %v4047, 5
      %v4050 = vor.u32 %v4046, %v4049
      %v4051 = vrot.slane %v4050, 4
      %v4053 = vshll.u32 %v3891, 16
      %v4055 = vrot.slane %v4053, 5
      %v4056 = vsel %vm1073, %v4051, %v4055
      %v4057 = vshrl.u32 %v3891, 16
      %v4059 = vrot.slane %v4057, 4
      %v4060 = vor.u32 %v4059, %v4055
      %v4061 = vrot.slane %v4060, 4
      %v4063 = vshll.u32 %v3892, 16
      %v4065 = vrot.slane %v4063, 5
      %v4066 = vsel %vm1073, %v4061, %v4065
      %v4068 = vshrl.u32 %v3893, 16
      %v4070 = vrot.slane %v4068, 4
      %v4071 = vshll.u32 %v3893, 16
      %v4073 = vrot.slane %v4071, 5
      %v4074 = vor.u32 %v4070, %v4073
      %v4075 = vrot.slane %v4074, 4
      %v4077 = vshll.u32 %v3894, 16
      %v4079 = vrot.slane %v4077, 5
      %v4080 = vsel %vm1073, %v4075, %v4079
      %v4081 = vshrl.u32 %v3894, 16
      %v4083 = vrot.slane %v4081, 4
      %v4084 = vor.u32 %v4083, %v4079
      %v4085 = vrot.slane %v4084, 4
      %v4087 = vshll.u32 %v3895, 16
      %v4089 = vrot.slane %v4087, 5
      %v4090 = vsel %vm1073, %v4085, %v4089
      %v4092 = vshrl.u32 %v3896, 16
      %v4094 = vrot.slane %v4092, 4
      %v4095 = vshll.u32 %v3896, 16
      %v4097 = vrot.slane %v4095, 5
      %v4098 = vor.u32 %v4094, %v4097
      %v4099 = vrot.slane %v4098, 4
      %v4101 = vshll.u32 %v3897, 16
      %v4103 = vrot.slane %v4101, 5
      %v4104 = vsel %vm1073, %v4099, %v4103
      %v4105 = vshrl.u32 %v3897, 16
      %v4107 = vrot.slane %v4105, 4
      %v4108 = vor.u32 %v4107, %v4103
      %v4109 = vrot.slane %v4108, 4
      %v4111 = vshll.u32 %v3898, 16
      %v4113 = vrot.slane %v4111, 5
      %v4114 = vsel %vm1073, %v4109, %v4113
      %v4116 = vshrl.u32 %v3899, 16
      %v4118 = vrot.slane %v4116, 4
      %v4119 = vshll.u32 %v3899, 16
      %v4121 = vrot.slane %v4119, 5
      %v4122 = vor.u32 %v4118, %v4121
      %v4123 = vrot.slane %v4122, 4
      %v4125 = vshll.u32 %v3900, 16
      %v4127 = vrot.slane %v4125, 5
      %v4128 = vsel %vm1073, %v4123, %v4127
      %v4129 = vshrl.u32 %v3900, 16
      %v4131 = vrot.slane %v4129, 4
      %v4132 = vor.u32 %v4131, %v4127
      %v4133 = vrot.slane %v4132, 4
      %v4135 = vshll.u32 %v3901, 16
      %v4137 = vrot.slane %v4135, 5
      %v4138 = vsel %vm1073, %v4133, %v4137
      %v4140 = vshrl.u32 %v3902, 16
      %v4142 = vrot.slane %v4140, 4
      %v4143 = vshll.u32 %v3902, 16
      %v4145 = vrot.slane %v4143, 5
      %v4146 = vor.u32 %v4142, %v4145
      %v4147 = vrot.slane %v4146, 4
      %v4149 = vshll.u32 %v3903, 16
      %v4151 = vrot.slane %v4149, 5
      %v4152 = vsel %vm1073, %v4147, %v4151
      %v4153 = vshrl.u32 %v3903, 16
      %v4155 = vrot.slane %v4153, 4
      %v4156 = vor.u32 %v4155, %v4151
      %v4157 = vrot.slane %v4156, 4
      %v4159 = vshll.u32 %v3904, 16
      %v4161 = vrot.slane %v4159, 5
      %v4162 = vsel %vm1073, %v4157, %v4161
      %v4164 = vshrl.u32 %v3905, 16
      %v4166 = vrot.slane %v4164, 4
      %v4167 = vshll.u32 %v3905, 16
      %v4169 = vrot.slane %v4167, 5
      %v4170 = vor.u32 %v4166, %v4169
      %v4171 = vrot.slane %v4170, 4
      %v4173 = vshll.u32 %v3906, 16
      %v4175 = vrot.slane %v4173, 5
      %v4176 = vsel %vm1073, %v4171, %v4175
      %v4177 = vshrl.u32 %v3906, 16
      %v4179 = vrot.slane %v4177, 4
      %v4180 = vor.u32 %v4179, %v4175
      %v4181 = vrot.slane %v4180, 4
      %v4183 = vshll.u32 %v3907, 16
      %v4185 = vrot.slane %v4183, 5
      %v4186 = vsel %vm1073, %v4181, %v4185
      %v4188 = vshrl.u32 %v3908, 16
      %v4190 = vrot.slane %v4188, 4
      %v4191 = vshll.u32 %v3908, 16
      %v4193 = vrot.slane %v4191, 5
      %v4194 = vor.u32 %v4190, %v4193
      %v4195 = vrot.slane %v4194, 4
      %v4197 = vshll.u32 %v3909, 16
      %v4199 = vrot.slane %v4197, 5
      %v4200 = vsel %vm1073, %v4195, %v4199
      %v4201 = vshrl.u32 %v3909, 16
      %v4203 = vrot.slane %v4201, 4
      %v4204 = vor.u32 %v4203, %v4199
      %v4205 = vrot.slane %v4204, 4
      %v4207 = vshll.u32 %v3910, 16
      %v4209 = vrot.slane %v4207, 5
      %v4210 = vsel %vm1073, %v4205, %v4209
      %v4212 = vshrl.u32 %v3911, 16
      %v4214 = vrot.slane %v4212, 4
      %v4215 = vshll.u32 %v3911, 16
      %v4217 = vrot.slane %v4215, 5
      %v4218 = vor.u32 %v4214, %v4217
      %v4219 = vrot.slane %v4218, 4
      %v4221 = vshll.u32 %v3912, 16
      %v4223 = vrot.slane %v4221, 5
      %v4224 = vsel %vm1073, %v4219, %v4223
      %v4225 = vshrl.u32 %v3912, 16
      %v4227 = vrot.slane %v4225, 4
      %v4228 = vor.u32 %v4227, %v4223
      %v4229 = vrot.slane %v4228, 4
      %v4231 = vshll.u32 %v3913, 16
      %v4233 = vrot.slane %v4231, 5
      %v4234 = vsel %vm1073, %v4229, %v4233
      %v4236 = vshrl.u32 %v3914, 16
      %v4238 = vrot.slane %v4236, 4
      %v4239 = vshll.u32 %v3914, 16
      %v4241 = vrot.slane %v4239, 5
      %v4242 = vor.u32 %v4238, %v4241
      %v4243 = vrot.slane %v4242, 4
      %v4245 = vshll.u32 %v3915, 16
      %v4247 = vrot.slane %v4245, 5
      %v4248 = vsel %vm1073, %v4243, %v4247
      %v4249 = vshrl.u32 %v3915, 16
      %v4251 = vrot.slane %v4249, 4
      %v4252 = vor.u32 %v4251, %v4247
      %v4253 = vrot.slane %v4252, 4
      %v4255 = vshll.u32 %v3916, 16
      %v4257 = vrot.slane %v4255, 5
      %v4258 = vsel %vm1073, %v4253, %v4257
      %v4260 = vshrl.u32 %v3917, 16
      %v4262 = vrot.slane %v4260, 4
      %v4263 = vshll.u32 %v3917, 16
      %v4265 = vrot.slane %v4263, 5
      %v4266 = vor.u32 %v4262, %v4265
      %v4267 = vrot.slane %v4266, 4
      %v4269 = vshll.u32 %v3918, 16
      %v4271 = vrot.slane %v4269, 5
      %v4272 = vsel %vm1073, %v4267, %v4271
      %v4273 = vshrl.u32 %v3918, 16
      %v4275 = vrot.slane %v4273, 4
      %v4276 = vor.u32 %v4275, %v4271
      %v4277 = vrot.slane %v4276, 4
      %v4279 = vshll.u32 %v3919, 16
      %v4281 = vrot.slane %v4279, 5
      %v4282 = vsel %vm1073, %v4277, %v4281
      %v4284 = vshrl.u32 %v3920, 16
      %v4286 = vrot.slane %v4284, 4
      %v4287 = vshll.u32 %v3920, 16
      %v4289 = vrot.slane %v4287, 5
      %v4290 = vor.u32 %v4286, %v4289
      %v4291 = vrot.slane %v4290, 4
      %v4293 = vshll.u32 %v3921, 16
      %v4295 = vrot.slane %v4293, 5
      %v4296 = vsel %vm1073, %v4291, %v4295
      %v4297 = vshrl.u32 %v3921, 16
      %v4299 = vrot.slane %v4297, 4
      %v4300 = vor.u32 %v4299, %v4295
      %v4301 = vrot.slane %v4300, 4
      %v4303 = vshll.u32 %v3922, 16
      %v4305 = vrot.slane %v4303, 5
      %v4306 = vsel %vm1073, %v4301, %v4305
      %v4307 = vld [vmem:[%s296 + $0x1c] sm:$0xf]
      %v4308 = vunpack.c.l.b16 %v3936
      %v4309 = vunpack.c.l.b16 %v3946
      %v4310 = vunpack.c.l.b16 %v3960
      %v4311 = vunpack.c.l.b16 %v3970
      %v4312 = vunpack.c.l.b16 %v3984
      %v4313 = vunpack.c.l.b16 %v3994
      %v4314 = vunpack.c.l.b16 %v4008
      %v4315 = vunpack.c.l.b16 %v4018
      %v4316 = vunpack.c.l.b16 %v4032
      %v4317 = vunpack.c.l.b16 %v4042
      %v4318 = vunpack.c.l.b16 %v4056
      %v4319 = vunpack.c.l.b16 %v4066
      %v4320 = vunpack.c.l.b16 %v4080
      %v4321 = vunpack.c.l.b16 %v4090
      %v4322 = vunpack.c.l.b16 %v4104
      %v4323 = vunpack.c.l.b16 %v4114
      %v4324 = vunpack.c.l.b16 %v4128
      %v4325 = vunpack.c.l.b16 %v4138
      %v4326 = vunpack.c.l.b16 %v4152
      %v4327 = vunpack.c.l.b16 %v4162
      %v4328 = vunpack.c.l.b16 %v4176
      %v4329 = vunpack.c.l.b16 %v4186
      %v4330 = vunpack.c.l.b16 %v4200
      %v4331 = vunpack.c.l.b16 %v4210
      %v4332 = vunpack.c.l.b16 %v4224
      %v4333 = vunpack.c.l.b16 %v4234
      %v4334 = vunpack.c.l.b16 %v4248
      %v4335 = vunpack.c.l.b16 %v4258
      %v4336 = vunpack.c.l.b16 %v4272
      %v4337 = vunpack.c.l.b16 %v4282
      %v4338 = vunpack.c.l.b16 %v4296
      %v4339 = vunpack.c.l.b16 %v4306
      %v4340 = vpack.c.b16 %v4309, %v4308
      %v4341 = vpack.c.b16 %v4311, %v4310
      %v4342 = vpack.c.b16 %v4313, %v4312
      %v4343 = vpack.c.b16 %v4315, %v4314
      %v4344 = vpack.c.b16 %v4317, %v4316
      %v4345 = vpack.c.b16 %v4319, %v4318
      %v4346 = vpack.c.b16 %v4321, %v4320
      %v4347 = vpack.c.b16 %v4323, %v4322
      %v4348 = vpack.c.b16 %v4325, %v4324
      %v4349 = vpack.c.b16 %v4327, %v4326
      %v4350 = vpack.c.b16 %v4329, %v4328
      %v4351 = vpack.c.b16 %v4331, %v4330
      %v4352 = vpack.c.b16 %v4333, %v4332
      %v4353 = vpack.c.b16 %v4335, %v4334
      %v4354 = vpack.c.b16 %v4337, %v4336
      %v4355 = vpack.c.b16 %v4339, %v4338
      %v4357 = vsel %vm1507, %v4340, 0
      %v4360 = vsel %vm1507, %v4341, 0
      %v4363 = vsel %vm1507, %v4342, 0
      %v4366 = vsel %vm1507, %v4343, 0
      %v4369 = vsel %vm1507, %v4344, 0
      %v4372 = vsel %vm1507, %v4345, 0
      %v4375 = vsel %vm1507, %v4346, 0
      %v4378 = vsel %vm1507, %v4347, 0
      %v4381 = vsel %vm1507, %v4348, 0
      %v4384 = vsel %vm1507, %v4349, 0
      %v4387 = vsel %vm1507, %v4350, 0
      %v4390 = vsel %vm1507, %v4351, 0
      %v4393 = vsel %vm1507, %v4352, 0
      %v4396 = vsel %vm1507, %v4353, 0
      %v4399 = vsel %vm1507, %v4354, 0
      %v4402 = vsel %vm1507, %v4355, 0
      %v4405 = vsel %vm1556, %v4307, 0
      %4407 = vmatpush.bf16.msra.mxu0 0
      %4408 = vmatpush.bf16.msra.mxu0 0
      %4409 = vmatpush.bf16.msra.mxu0 0
      %4410 = vmatpush.bf16.msra.mxu0 0
      %4411 = vmatpush.bf16.msra.mxu0 0
      %4412 = vmatpush.bf16.msra.mxu0 0
      %4413 = vmatpush.bf16.msra.mxu0 0
      %4414 = vmatpush.bf16.msra.mxu0 %v4405
      %4415 = vmatmul.bf16.gmra.mxu0 %v4357
      %v4416 = vpop.f32.mrf.mxu0
      %v4417 = vadd.f32 0.0, %v4416
      %v4418 = vpop.f32.mrf.mxu0
      %v4419 = vadd.f32 0.0, %v4418
      %4420 = vmatmul.bf16.gmra.mxu0 %v4360
      %v4421 = vpop.f32.mrf.mxu0
      %v4422 = vadd.f32 0.0, %v4421
      %v4423 = vpop.f32.mrf.mxu0
      %v4424 = vadd.f32 0.0, %v4423
      %4425 = vmatmul.bf16.gmra.mxu0 %v4363
      %v4426 = vpop.f32.mrf.mxu0
      %v4427 = vadd.f32 0.0, %v4426
      %v4428 = vpop.f32.mrf.mxu0
      %v4429 = vadd.f32 0.0, %v4428
      %4430 = vmatmul.bf16.gmra.mxu0 %v4366
      %v4431 = vpop.f32.mrf.mxu0
      %v4432 = vadd.f32 0.0, %v4431
      %v4433 = vpop.f32.mrf.mxu0
      %v4434 = vadd.f32 0.0, %v4433
      %4435 = vmatmul.bf16.gmra.mxu0 %v4369
      %v4436 = vpop.f32.mrf.mxu0
      %v4437 = vadd.f32 0.0, %v4436
      %v4438 = vpop.f32.mrf.mxu0
      %v4439 = vadd.f32 0.0, %v4438
      %4440 = vmatmul.bf16.gmra.mxu0 %v4372
      %v4441 = vpop.f32.mrf.mxu0
      %v4442 = vadd.f32 0.0, %v4441
      %v4443 = vpop.f32.mrf.mxu0
      %v4444 = vadd.f32 0.0, %v4443
      %4445 = vmatmul.bf16.gmra.mxu0 %v4375
      %v4446 = vpop.f32.mrf.mxu0
      %v4447 = vadd.f32 0.0, %v4446
      %v4448 = vpop.f32.mrf.mxu0
      %v4449 = vadd.f32 0.0, %v4448
      %4450 = vmatmul.bf16.gmra.mxu0 %v4378
      %v4451 = vpop.f32.mrf.mxu0
      %v4452 = vadd.f32 0.0, %v4451
      %v4453 = vpop.f32.mrf.mxu0
      %v4454 = vadd.f32 0.0, %v4453
      %4455 = vmatmul.bf16.gmra.mxu0 %v4381
      %v4456 = vpop.f32.mrf.mxu0
      %v4457 = vadd.f32 0.0, %v4456
      %v4458 = vpop.f32.mrf.mxu0
      %v4459 = vadd.f32 0.0, %v4458
      %4460 = vmatmul.bf16.gmra.mxu0 %v4384
      %v4461 = vpop.f32.mrf.mxu0
      %v4462 = vadd.f32 0.0, %v4461
      %v4463 = vpop.f32.mrf.mxu0
      %v4464 = vadd.f32 0.0, %v4463
      %4465 = vmatmul.bf16.gmra.mxu0 %v4387
      %v4466 = vpop.f32.mrf.mxu0
      %v4467 = vadd.f32 0.0, %v4466
      %v4468 = vpop.f32.mrf.mxu0
      %v4469 = vadd.f32 0.0, %v4468
      %4470 = vmatmul.bf16.gmra.mxu0 %v4390
      %v4471 = vpop.f32.mrf.mxu0
      %v4472 = vadd.f32 0.0, %v4471
      %v4473 = vpop.f32.mrf.mxu0
      %v4474 = vadd.f32 0.0, %v4473
      %4475 = vmatmul.bf16.gmra.mxu0 %v4393
      %v4476 = vpop.f32.mrf.mxu0
      %v4477 = vadd.f32 0.0, %v4476
      %v4478 = vpop.f32.mrf.mxu0
      %v4479 = vadd.f32 0.0, %v4478
      %4480 = vmatmul.bf16.gmra.mxu0 %v4396
      %v4481 = vpop.f32.mrf.mxu0
      %v4482 = vadd.f32 0.0, %v4481
      %v4483 = vpop.f32.mrf.mxu0
      %v4484 = vadd.f32 0.0, %v4483
      %4485 = vmatmul.bf16.gmra.mxu0 %v4399
      %v4486 = vpop.f32.mrf.mxu0
      %v4487 = vadd.f32 0.0, %v4486
      %v4488 = vpop.f32.mrf.mxu0
      %v4489 = vadd.f32 0.0, %v4488
      %4490 = vmatmul.bf16.gmra.mxu0 %v4402
      %v4491 = vpop.f32.mrf.mxu0
      %v4492 = vadd.f32 0.0, %v4491
      %v4493 = vpop.f32.mrf.mxu0
      %v4494 = vadd.f32 0.0, %v4493
      %4495 = vdwg.mxu0
      %v4496 = vadd.f32 %v3843, %v4417
      %v4497 = vadd.f32 %v3844, %v4419
      %v4498 = vadd.f32 %v3845, %v4422
      %v4499 = vadd.f32 %v3846, %v4424
      %v4500 = vadd.f32 %v3847, %v4427
      %v4501 = vadd.f32 %v3848, %v4429
      %v4502 = vadd.f32 %v3849, %v4432
      %v4503 = vadd.f32 %v3850, %v4434
      %v4504 = vadd.f32 %v3851, %v4437
      %v4505 = vadd.f32 %v3852, %v4439
      %v4506 = vadd.f32 %v3853, %v4442
      %v4507 = vadd.f32 %v3854, %v4444
      %v4508 = vadd.f32 %v3855, %v4447
      %v4509 = vadd.f32 %v3856, %v4449
      %v4510 = vadd.f32 %v3857, %v4452
      %v4511 = vadd.f32 %v3858, %v4454
      %v4512 = vadd.f32 %v3859, %v4457
      %v4513 = vadd.f32 %v3860, %v4459
      %v4514 = vadd.f32 %v3861, %v4462
      %v4515 = vadd.f32 %v3862, %v4464
      %v4516 = vadd.f32 %v3863, %v4467
      %v4517 = vadd.f32 %v3864, %v4469
      %v4518 = vadd.f32 %v3865, %v4472
      %v4519 = vadd.f32 %v3866, %v4474
      %v4520 = vadd.f32 %v3867, %v4477
      %v4521 = vadd.f32 %v3868, %v4479
      %v4522 = vadd.f32 %v3869, %v4482
      %v4523 = vadd.f32 %v3870, %v4484
      %v4524 = vadd.f32 %v3871, %v4487
      %v4525 = vadd.f32 %v3872, %v4489
      %v4526 = vadd.f32 %v3873, %v4492
      %v4527 = vadd.f32 %v3874, %v4494
      %v4528 = vld [vmem:[%s3589] sm:$0xe]
      %v4529 = vld [vmem:[%s3589 + $0xc] sm:$0xe]
      %v4530 = vld [vmem:[%s3589 + $0x18] sm:$0xe]
      %v4531 = vld [vmem:[%s3589 + $0x24] sm:$0xe]
      %v4532 = vld [vmem:[%s3589 + $0x30] sm:$0xe]
      %v4533 = vld [vmem:[%s3589 + $0x3c] sm:$0xe]
      %v4534 = vld [vmem:[%s3589 + $0x48] sm:$0xe]
      %v4535 = vld [vmem:[%s3589 + $0x54] sm:$0xe]
      %v4536 = vld [vmem:[%s3589 + $0x60] sm:$0xe]
      %v4537 = vld [vmem:[%s3589 + $0x6c] sm:$0xe]
      %v4538 = vld [vmem:[%s3589 + $0x78] sm:$0xe]
      %v4539 = vld [vmem:[%s3589 + $0x84] sm:$0xe]
      %v4540 = vld [vmem:[%s3589 + $0x90] sm:$0xe]
      %v4541 = vld [vmem:[%s3589 + $0x9c] sm:$0xe]
      %v4542 = vld [vmem:[%s3589 + $0xa8] sm:$0xe]
      %v4543 = vld [vmem:[%s3589 + $0xb4] sm:$0xe]
      %v4592 = vrot.slane %v4528, 5
      %v4593 = vrot.slane %v4592, 4
      %v4594 = vrot.slane %v3876, 5
      %v4595 = vsel %vm1919, %v4593, %v4594
      %v4596 = vrot.slane %v4594, 4
      %v4597 = vrot.slane %v3877, 5
      %v4598 = vsel %vm1919, %v4596, %v4597
      %v4599 = vrot.slane %v4529, 5
      %v4600 = vrot.slane %v4599, 4
      %v4601 = vrot.slane %v3879, 5
      %v4602 = vsel %vm1919, %v4600, %v4601
      %v4603 = vrot.slane %v4601, 4
      %v4604 = vrot.slane %v3880, 5
      %v4605 = vsel %vm1919, %v4603, %v4604
      %v4606 = vrot.slane %v4530, 5
      %v4607 = vrot.slane %v4606, 4
      %v4608 = vrot.slane %v3882, 5
      %v4609 = vsel %vm1919, %v4607, %v4608
      %v4610 = vrot.slane %v4608, 4
      %v4611 = vrot.slane %v3883, 5
      %v4612 = vsel %vm1919, %v4610, %v4611
      %v4613 = vrot.slane %v4531, 5
      %v4614 = vrot.slane %v4613, 4
      %v4615 = vrot.slane %v3885, 5
      %v4616 = vsel %vm1919, %v4614, %v4615
      %v4617 = vrot.slane %v4615, 4
      %v4618 = vrot.slane %v3886, 5
      %v4619 = vsel %vm1919, %v4617, %v4618
      %v4620 = vrot.slane %v4532, 5
      %v4621 = vrot.slane %v4620, 4
      %v4622 = vrot.slane %v3888, 5
      %v4623 = vsel %vm1919, %v4621, %v4622
      %v4624 = vrot.slane %v4622, 4
      %v4625 = vrot.slane %v3889, 5
      %v4626 = vsel %vm1919, %v4624, %v4625
      %v4627 = vrot.slane %v4533, 5
      %v4628 = vrot.slane %v4627, 4
      %v4629 = vrot.slane %v3891, 5
      %v4630 = vsel %vm1919, %v4628, %v4629
      %v4631 = vrot.slane %v4629, 4
      %v4632 = vrot.slane %v3892, 5
      %v4633 = vsel %vm1919, %v4631, %v4632
      %v4634 = vrot.slane %v4534, 5
      %v4635 = vrot.slane %v4634, 4
      %v4636 = vrot.slane %v3894, 5
      %v4637 = vsel %vm1919, %v4635, %v4636
      %v4638 = vrot.slane %v4636, 4
      %v4639 = vrot.slane %v3895, 5
      %v4640 = vsel %vm1919, %v4638, %v4639
      %v4641 = vrot.slane %v4535, 5
      %v4642 = vrot.slane %v4641, 4
      %v4643 = vrot.slane %v3897, 5
      %v4644 = vsel %vm1919, %v4642, %v4643
      %v4645 = vrot.slane %v4643, 4
      %v4646 = vrot.slane %v3898, 5
      %v4647 = vsel %vm1919, %v4645, %v4646
      %v4648 = vrot.slane %v4536, 5
      %v4649 = vrot.slane %v4648, 4
      %v4650 = vrot.slane %v3900, 5
      %v4651 = vsel %vm1919, %v4649, %v4650
      %v4652 = vrot.slane %v4650, 4
      %v4653 = vrot.slane %v3901, 5
      %v4654 = vsel %vm1919, %v4652, %v4653
      %v4655 = vrot.slane %v4537, 5
      %v4656 = vrot.slane %v4655, 4
      %v4657 = vrot.slane %v3903, 5
      %v4658 = vsel %vm1919, %v4656, %v4657
      %v4659 = vrot.slane %v4657, 4
      %v4660 = vrot.slane %v3904, 5
      %v4661 = vsel %vm1919, %v4659, %v4660
      %v4662 = vrot.slane %v4538, 5
      %v4663 = vrot.slane %v4662, 4
      %v4664 = vrot.slane %v3906, 5
      %v4665 = vsel %vm1919, %v4663, %v4664
      %v4666 = vrot.slane %v4664, 4
      %v4667 = vrot.slane %v3907, 5
      %v4668 = vsel %vm1919, %v4666, %v4667
      %v4669 = vrot.slane %v4539, 5
      %v4670 = vrot.slane %v4669, 4
      %v4671 = vrot.slane %v3909, 5
      %v4672 = vsel %vm1919, %v4670, %v4671
      %v4673 = vrot.slane %v4671, 4
      %v4674 = vrot.slane %v3910, 5
      %v4675 = vsel %vm1919, %v4673, %v4674
      %v4676 = vrot.slane %v4540, 5
      %v4677 = vrot.slane %v4676, 4
      %v4678 = vrot.slane %v3912, 5
      %v4679 = vsel %vm1919, %v4677, %v4678
      %v4680 = vrot.slane %v4678, 4
      %v4681 = vrot.slane %v3913, 5
      %v4682 = vsel %vm1919, %v4680, %v4681
      %v4683 = vrot.slane %v4541, 5
      %v4684 = vrot.slane %v4683, 4
      %v4685 = vrot.slane %v3915, 5
      %v4686 = vsel %vm1919, %v4684, %v4685
      %v4687 = vrot.slane %v4685, 4
      %v4688 = vrot.slane %v3916, 5
      %v4689 = vsel %vm1919, %v4687, %v4688
      %v4690 = vrot.slane %v4542, 5
      %v4691 = vrot.slane %v4690, 4
      %v4692 = vrot.slane %v3918, 5
      %v4693 = vsel %vm1919, %v4691, %v4692
      %v4694 = vrot.slane %v4692, 4
      %v4695 = vrot.slane %v3919, 5
      %v4696 = vsel %vm1919, %v4694, %v4695
      %v4697 = vrot.slane %v4543, 5
      %v4698 = vrot.slane %v4697, 4
      %v4699 = vrot.slane %v3921, 5
      %v4700 = vsel %vm1919, %v4698, %v4699
      %v4701 = vrot.slane %v4699, 4
      %v4702 = vrot.slane %v3922, 5
      %v4703 = vsel %vm1919, %v4701, %v4702
      %v4704 = vld [vmem:[%s296 + $0x20] sm:$0xf]
      %v4705 = vunpack.c.l.b16 %v4595
      %v4706 = vunpack.c.l.b16 %v4598
      %v4707 = vunpack.c.l.b16 %v4602
      %v4708 = vunpack.c.l.b16 %v4605
      %v4709 = vunpack.c.l.b16 %v4609
      %v4710 = vunpack.c.l.b16 %v4612
      %v4711 = vunpack.c.l.b16 %v4616
      %v4712 = vunpack.c.l.b16 %v4619
      %v4713 = vunpack.c.l.b16 %v4623
      %v4714 = vunpack.c.l.b16 %v4626
      %v4715 = vunpack.c.l.b16 %v4630
      %v4716 = vunpack.c.l.b16 %v4633
      %v4717 = vunpack.c.l.b16 %v4637
      %v4718 = vunpack.c.l.b16 %v4640
      %v4719 = vunpack.c.l.b16 %v4644
      %v4720 = vunpack.c.l.b16 %v4647
      %v4721 = vunpack.c.l.b16 %v4651
      %v4722 = vunpack.c.l.b16 %v4654
      %v4723 = vunpack.c.l.b16 %v4658
      %v4724 = vunpack.c.l.b16 %v4661
      %v4725 = vunpack.c.l.b16 %v4665
      %v4726 = vunpack.c.l.b16 %v4668
      %v4727 = vunpack.c.l.b16 %v4672
      %v4728 = vunpack.c.l.b16 %v4675
      %v4729 = vunpack.c.l.b16 %v4679
      %v4730 = vunpack.c.l.b16 %v4682
      %v4731 = vunpack.c.l.b16 %v4686
      %v4732 = vunpack.c.l.b16 %v4689
      %v4733 = vunpack.c.l.b16 %v4693
      %v4734 = vunpack.c.l.b16 %v4696
      %v4735 = vunpack.c.l.b16 %v4700
      %v4736 = vunpack.c.l.b16 %v4703
      %v4737 = vpack.c.b16 %v4706, %v4705
      %v4738 = vpack.c.b16 %v4708, %v4707
      %v4739 = vpack.c.b16 %v4710, %v4709
      %v4740 = vpack.c.b16 %v4712, %v4711
      %v4741 = vpack.c.b16 %v4714, %v4713
      %v4742 = vpack.c.b16 %v4716, %v4715
      %v4743 = vpack.c.b16 %v4718, %v4717
      %v4744 = vpack.c.b16 %v4720, %v4719
      %v4745 = vpack.c.b16 %v4722, %v4721
      %v4746 = vpack.c.b16 %v4724, %v4723
      %v4747 = vpack.c.b16 %v4726, %v4725
      %v4748 = vpack.c.b16 %v4728, %v4727
      %v4749 = vpack.c.b16 %v4730, %v4729
      %v4750 = vpack.c.b16 %v4732, %v4731
      %v4751 = vpack.c.b16 %v4734, %v4733
      %v4752 = vpack.c.b16 %v4736, %v4735
      %v4754 = vsel %vm1507, %v4737, 0
      %v4757 = vsel %vm1507, %v4738, 0
      %v4760 = vsel %vm1507, %v4739, 0
      %v4763 = vsel %vm1507, %v4740, 0
      %v4766 = vsel %vm1507, %v4741, 0
      %v4769 = vsel %vm1507, %v4742, 0
      %v4772 = vsel %vm1507, %v4743, 0
      %v4775 = vsel %vm1507, %v4744, 0
      %v4778 = vsel %vm1507, %v4745, 0
      %v4781 = vsel %vm1507, %v4746, 0
      %v4784 = vsel %vm1507, %v4747, 0
      %v4787 = vsel %vm1507, %v4748, 0
      %v4790 = vsel %vm1507, %v4749, 0
      %v4793 = vsel %vm1507, %v4750, 0
      %v4796 = vsel %vm1507, %v4751, 0
      %v4799 = vsel %vm1507, %v4752, 0
      %v4802 = vsel %vm1556, %v4704, 0
      %4804 = vmatpush.bf16.msra.mxu0 0
      %4805 = vmatpush.bf16.msra.mxu0 0
      %4806 = vmatpush.bf16.msra.mxu0 0
      %4807 = vmatpush.bf16.msra.mxu0 0
      %4808 = vmatpush.bf16.msra.mxu0 0
      %4809 = vmatpush.bf16.msra.mxu0 0
      %4810 = vmatpush.bf16.msra.mxu0 0
      %4811 = vmatpush.bf16.msra.mxu0 %v4802
      %4812 = vmatmul.bf16.gmra.mxu0 %v4754
      %v4813 = vpop.f32.mrf.mxu0
      %v4814 = vadd.f32 0.0, %v4813
      %v4815 = vpop.f32.mrf.mxu0
      %v4816 = vadd.f32 0.0, %v4815
      %4817 = vmatmul.bf16.gmra.mxu0 %v4757
      %v4818 = vpop.f32.mrf.mxu0
      %v4819 = vadd.f32 0.0, %v4818
      %v4820 = vpop.f32.mrf.mxu0
      %v4821 = vadd.f32 0.0, %v4820
      %4822 = vmatmul.bf16.gmra.mxu0 %v4760
      %v4823 = vpop.f32.mrf.mxu0
      %v4824 = vadd.f32 0.0, %v4823
      %v4825 = vpop.f32.mrf.mxu0
      %v4826 = vadd.f32 0.0, %v4825
      %4827 = vmatmul.bf16.gmra.mxu0 %v4763
      %v4828 = vpop.f32.mrf.mxu0
      %v4829 = vadd.f32 0.0, %v4828
      %v4830 = vpop.f32.mrf.mxu0
      %v4831 = vadd.f32 0.0, %v4830
      %4832 = vmatmul.bf16.gmra.mxu0 %v4766
      %v4833 = vpop.f32.mrf.mxu0
      %v4834 = vadd.f32 0.0, %v4833
      %v4835 = vpop.f32.mrf.mxu0
      %v4836 = vadd.f32 0.0, %v4835
      %4837 = vmatmul.bf16.gmra.mxu0 %v4769
      %v4838 = vpop.f32.mrf.mxu0
      %v4839 = vadd.f32 0.0, %v4838
      %v4840 = vpop.f32.mrf.mxu0
      %v4841 = vadd.f32 0.0, %v4840
      %4842 = vmatmul.bf16.gmra.mxu0 %v4772
      %v4843 = vpop.f32.mrf.mxu0
      %v4844 = vadd.f32 0.0, %v4843
      %v4845 = vpop.f32.mrf.mxu0
      %v4846 = vadd.f32 0.0, %v4845
      %4847 = vmatmul.bf16.gmra.mxu0 %v4775
      %v4848 = vpop.f32.mrf.mxu0
      %v4849 = vadd.f32 0.0, %v4848
      %v4850 = vpop.f32.mrf.mxu0
      %v4851 = vadd.f32 0.0, %v4850
      %4852 = vmatmul.bf16.gmra.mxu0 %v4778
      %v4853 = vpop.f32.mrf.mxu0
      %v4854 = vadd.f32 0.0, %v4853
      %v4855 = vpop.f32.mrf.mxu0
      %v4856 = vadd.f32 0.0, %v4855
      %4857 = vmatmul.bf16.gmra.mxu0 %v4781
      %v4858 = vpop.f32.mrf.mxu0
      %v4859 = vadd.f32 0.0, %v4858
      %v4860 = vpop.f32.mrf.mxu0
      %v4861 = vadd.f32 0.0, %v4860
      %4862 = vmatmul.bf16.gmra.mxu0 %v4784
      %v4863 = vpop.f32.mrf.mxu0
      %v4864 = vadd.f32 0.0, %v4863
      %v4865 = vpop.f32.mrf.mxu0
      %v4866 = vadd.f32 0.0, %v4865
      %4867 = vmatmul.bf16.gmra.mxu0 %v4787
      %v4868 = vpop.f32.mrf.mxu0
      %v4869 = vadd.f32 0.0, %v4868
      %v4870 = vpop.f32.mrf.mxu0
      %v4871 = vadd.f32 0.0, %v4870
      %4872 = vmatmul.bf16.gmra.mxu0 %v4790
      %v4873 = vpop.f32.mrf.mxu0
      %v4874 = vadd.f32 0.0, %v4873
      %v4875 = vpop.f32.mrf.mxu0
      %v4876 = vadd.f32 0.0, %v4875
      %4877 = vmatmul.bf16.gmra.mxu0 %v4793
      %v4878 = vpop.f32.mrf.mxu0
      %v4879 = vadd.f32 0.0, %v4878
      %v4880 = vpop.f32.mrf.mxu0
      %v4881 = vadd.f32 0.0, %v4880
      %4882 = vmatmul.bf16.gmra.mxu0 %v4796
      %v4883 = vpop.f32.mrf.mxu0
      %v4884 = vadd.f32 0.0, %v4883
      %v4885 = vpop.f32.mrf.mxu0
      %v4886 = vadd.f32 0.0, %v4885
      %4887 = vmatmul.bf16.gmra.mxu0 %v4799
      %v4888 = vpop.f32.mrf.mxu0
      %v4889 = vadd.f32 0.0, %v4888
      %v4890 = vpop.f32.mrf.mxu0
      %v4891 = vadd.f32 0.0, %v4890
      %4892 = vdwg.mxu0
      %v4893 = vadd.f32 %v4496, %v4814
      %v4894 = vadd.f32 %v4497, %v4816
      %v4895 = vadd.f32 %v4498, %v4819
      %v4896 = vadd.f32 %v4499, %v4821
      %v4897 = vadd.f32 %v4500, %v4824
      %v4898 = vadd.f32 %v4501, %v4826
      %v4899 = vadd.f32 %v4502, %v4829
      %v4900 = vadd.f32 %v4503, %v4831
      %v4901 = vadd.f32 %v4504, %v4834
      %v4902 = vadd.f32 %v4505, %v4836
      %v4903 = vadd.f32 %v4506, %v4839
      %v4904 = vadd.f32 %v4507, %v4841
      %v4905 = vadd.f32 %v4508, %v4844
      %v4906 = vadd.f32 %v4509, %v4846
      %v4907 = vadd.f32 %v4510, %v4849
      %v4908 = vadd.f32 %v4511, %v4851
      %v4909 = vadd.f32 %v4512, %v4854
      %v4910 = vadd.f32 %v4513, %v4856
      %v4911 = vadd.f32 %v4514, %v4859
      %v4912 = vadd.f32 %v4515, %v4861
      %v4913 = vadd.f32 %v4516, %v4864
      %v4914 = vadd.f32 %v4517, %v4866
      %v4915 = vadd.f32 %v4518, %v4869
      %v4916 = vadd.f32 %v4519, %v4871
      %v4917 = vadd.f32 %v4520, %v4874
      %v4918 = vadd.f32 %v4521, %v4876
      %v4919 = vadd.f32 %v4522, %v4879
      %v4920 = vadd.f32 %v4523, %v4881
      %v4921 = vadd.f32 %v4524, %v4884
      %v4922 = vadd.f32 %v4525, %v4886
      %v4923 = vadd.f32 %v4526, %v4889
      %v4924 = vadd.f32 %v4527, %v4891
      %v4925 = vsel %vm1507, %v4893, 0.0
      %v4926 = vsel %vm1507, %v4894, 0.0
      %v4927 = vadd.f32 %v4925, %v4926
      %v4928 = vsel %vm1507, %v4895, 0.0
      %v4929 = vadd.f32 %v4927, %v4928
      %v4930 = vsel %vm1507, %v4896, 0.0
      %v4931 = vadd.f32 %v4929, %v4930
      %v4932 = vsel %vm1507, %v4897, 0.0
      %v4933 = vadd.f32 %v4931, %v4932
      %v4934 = vsel %vm1507, %v4898, 0.0
      %v4935 = vadd.f32 %v4933, %v4934
      %v4936 = vsel %vm1507, %v4899, 0.0
      %v4937 = vadd.f32 %v4935, %v4936
      %v4938 = vsel %vm1507, %v4900, 0.0
      %v4939 = vadd.f32 %v4937, %v4938
      %v4940 = vsel %vm1507, %v4901, 0.0
      %v4941 = vadd.f32 %v4939, %v4940
      %v4942 = vsel %vm1507, %v4902, 0.0
      %v4943 = vadd.f32 %v4941, %v4942
      %v4944 = vsel %vm1507, %v4903, 0.0
      %v4945 = vadd.f32 %v4943, %v4944
      %v4946 = vsel %vm1507, %v4904, 0.0
      %v4947 = vadd.f32 %v4945, %v4946
      %v4948 = vsel %vm1507, %v4905, 0.0
      %v4949 = vadd.f32 %v4947, %v4948
      %v4950 = vsel %vm1507, %v4906, 0.0
      %v4951 = vadd.f32 %v4949, %v4950
      %v4952 = vsel %vm1507, %v4907, 0.0
      %v4953 = vadd.f32 %v4951, %v4952
      %v4954 = vsel %vm1507, %v4908, 0.0
      %v4955 = vadd.f32 %v4953, %v4954
      %v4956 = vsel %vm1507, %v4909, 0.0
      %v4957 = vadd.f32 %v4955, %v4956
      %v4958 = vsel %vm1507, %v4910, 0.0
      %v4959 = vadd.f32 %v4957, %v4958
      %v4960 = vsel %vm1507, %v4911, 0.0
      %v4961 = vadd.f32 %v4959, %v4960
      %v4962 = vsel %vm1507, %v4912, 0.0
      %v4963 = vadd.f32 %v4961, %v4962
      %v4964 = vsel %vm1507, %v4913, 0.0
      %v4965 = vadd.f32 %v4963, %v4964
      %v4966 = vsel %vm1507, %v4914, 0.0
      %v4967 = vadd.f32 %v4965, %v4966
      %v4968 = vsel %vm1507, %v4915, 0.0
      %v4969 = vadd.f32 %v4967, %v4968
      %v4970 = vsel %vm1507, %v4916, 0.0
      %v4971 = vadd.f32 %v4969, %v4970
      %v4972 = vsel %vm1507, %v4917, 0.0
      %v4973 = vadd.f32 %v4971, %v4972
      %v4974 = vsel %vm1507, %v4918, 0.0
      %v4975 = vadd.f32 %v4973, %v4974
      %v4976 = vsel %vm1507, %v4919, 0.0
      %v4977 = vadd.f32 %v4975, %v4976
      %v4978 = vsel %vm1507, %v4920, 0.0
      %v4979 = vadd.f32 %v4977, %v4978
      %v4980 = vsel %vm1507, %v4921, 0.0
      %v4981 = vadd.f32 %v4979, %v4980
      %v4982 = vsel %vm1507, %v4922, 0.0
      %v4983 = vadd.f32 %v4981, %v4982
      %v4984 = vsel %vm1507, %v4923, 0.0
      %v4985 = vadd.f32 %v4983, %v4984
      %v4986 = vsel %vm1507, %v4924, 0.0
      %v4987 = vadd.f32 %v4985, %v4986
      %v4988 = vrot.slane %v4987, 4
      %v4989 = vadd.f32 %v4987, %v4988
      %v4990 = vrot.slane %v4989, 2
      %v4991 = vadd.f32 %v4989, %v4990
      %v4992 = vrot.slane %v4991, 1
      %v4993 = vadd.f32 %v4991, %v4992
      %v4994 = vmul.f32 %v4893, %v4893
      %v4995 = vmul.f32 %v4894, %v4894
      %v4996 = vmul.f32 %v4895, %v4895
      %v4997 = vmul.f32 %v4896, %v4896
      %v4998 = vmul.f32 %v4897, %v4897
      %v4999 = vmul.f32 %v4898, %v4898
      %v5000 = vmul.f32 %v4899, %v4899
      %v5001 = vmul.f32 %v4900, %v4900
      %v5002 = vmul.f32 %v4901, %v4901
      %v5003 = vmul.f32 %v4902, %v4902
      %v5004 = vmul.f32 %v4903, %v4903
      %v5005 = vmul.f32 %v4904, %v4904
      %v5006 = vmul.f32 %v4905, %v4905
      %v5007 = vmul.f32 %v4906, %v4906
      %v5008 = vmul.f32 %v4907, %v4907
      %v5009 = vmul.f32 %v4908, %v4908
      %v5010 = vmul.f32 %v4909, %v4909
      %v5011 = vmul.f32 %v4910, %v4910
      %v5012 = vmul.f32 %v4911, %v4911
      %v5013 = vmul.f32 %v4912, %v4912
      %v5014 = vmul.f32 %v4913, %v4913
      %v5015 = vmul.f32 %v4914, %v4914
      %v5016 = vmul.f32 %v4915, %v4915
      %v5017 = vmul.f32 %v4916, %v4916
      %v5018 = vmul.f32 %v4917, %v4917
      %v5019 = vmul.f32 %v4918, %v4918
      %v5020 = vmul.f32 %v4919, %v4919
      %v5021 = vmul.f32 %v4920, %v4920
      %v5022 = vmul.f32 %v4921, %v4921
      %v5023 = vmul.f32 %v4922, %v4922
      %v5024 = vmul.f32 %v4923, %v4923
      %v5025 = vmul.f32 %v4924, %v4924
      %v5026 = vsel %vm1507, %v4994, 0.0
      %v5027 = vsel %vm1507, %v4995, 0.0
      %v5028 = vadd.f32 %v5026, %v5027
      %v5029 = vsel %vm1507, %v4996, 0.0
      %v5030 = vadd.f32 %v5028, %v5029
      %v5031 = vsel %vm1507, %v4997, 0.0
      %v5032 = vadd.f32 %v5030, %v5031
      %v5033 = vsel %vm1507, %v4998, 0.0
      %v5034 = vadd.f32 %v5032, %v5033
      %v5035 = vsel %vm1507, %v4999, 0.0
      %v5036 = vadd.f32 %v5034, %v5035
      %v5037 = vsel %vm1507, %v5000, 0.0
      %v5038 = vadd.f32 %v5036, %v5037
      %v5039 = vsel %vm1507, %v5001, 0.0
      %v5040 = vadd.f32 %v5038, %v5039
      %v5041 = vsel %vm1507, %v5002, 0.0
      %v5042 = vadd.f32 %v5040, %v5041
      %v5043 = vsel %vm1507, %v5003, 0.0
      %v5044 = vadd.f32 %v5042, %v5043
      %v5045 = vsel %vm1507, %v5004, 0.0
      %v5046 = vadd.f32 %v5044, %v5045
      %v5047 = vsel %vm1507, %v5005, 0.0
      %v5048 = vadd.f32 %v5046, %v5047
      %v5049 = vsel %vm1507, %v5006, 0.0
      %v5050 = vadd.f32 %v5048, %v5049
      %v5051 = vsel %vm1507, %v5007, 0.0
      %v5052 = vadd.f32 %v5050, %v5051
      %v5053 = vsel %vm1507, %v5008, 0.0
      %v5054 = vadd.f32 %v5052, %v5053
      %v5055 = vsel %vm1507, %v5009, 0.0
      %v5056 = vadd.f32 %v5054, %v5055
      %v5057 = vsel %vm1507, %v5010, 0.0
      %v5058 = vadd.f32 %v5056, %v5057
      %v5059 = vsel %vm1507, %v5011, 0.0
      %v5060 = vadd.f32 %v5058, %v5059
      %v5061 = vsel %vm1507, %v5012, 0.0
      %v5062 = vadd.f32 %v5060, %v5061
      %v5063 = vsel %vm1507, %v5013, 0.0
      %v5064 = vadd.f32 %v5062, %v5063
      %v5065 = vsel %vm1507, %v5014, 0.0
      %v5066 = vadd.f32 %v5064, %v5065
      %v5067 = vsel %vm1507, %v5015, 0.0
      %v5068 = vadd.f32 %v5066, %v5067
      %v5069 = vsel %vm1507, %v5016, 0.0
      %v5070 = vadd.f32 %v5068, %v5069
      %v5071 = vsel %vm1507, %v5017, 0.0
      %v5072 = vadd.f32 %v5070, %v5071
      %v5073 = vsel %vm1507, %v5018, 0.0
      %v5074 = vadd.f32 %v5072, %v5073
      %v5075 = vsel %vm1507, %v5019, 0.0
      %v5076 = vadd.f32 %v5074, %v5075
      %v5077 = vsel %vm1507, %v5020, 0.0
      %v5078 = vadd.f32 %v5076, %v5077
      %v5079 = vsel %vm1507, %v5021, 0.0
      %v5080 = vadd.f32 %v5078, %v5079
      %v5081 = vsel %vm1507, %v5022, 0.0
      %v5082 = vadd.f32 %v5080, %v5081
      %v5083 = vsel %vm1507, %v5023, 0.0
      %v5084 = vadd.f32 %v5082, %v5083
      %v5085 = vsel %vm1507, %v5024, 0.0
      %v5086 = vadd.f32 %v5084, %v5085
      %v5087 = vsel %vm1507, %v5025, 0.0
      %v5088 = vadd.f32 %v5086, %v5087
      %v5089 = vrot.slane %v5088, 4
      %v5090 = vadd.f32 %v5088, %v5089
      %v5091 = vrot.slane %v5090, 2
      %v5092 = vadd.f32 %v5090, %v5091
      %v5093 = vrot.slane %v5092, 1
      %v5094 = vadd.f32 %v5092, %v5093
      %vm5095 = vcmask 1040384
      %v5096 = vsel %vm5095, %v4993, %v5094
      %vm5097 = vcmask 58368
      %5098 = vst.msk [vmem:[%s314] sm:$0x3] %vm5097, %v5096
      %v5099 = vld [vmem:[%s299] sm:$0x1]
      %v5101 = vperm.slane %v5099, 0
      %v5103 = vadd.f32 %v4893, %v5101
      %v5104 = vadd.f32 %v4894, %v5101
      %v5105 = vadd.f32 %v4895, %v5101
      %v5106 = vadd.f32 %v4896, %v5101
      %v5107 = vadd.f32 %v4897, %v5101
      %v5108 = vadd.f32 %v4898, %v5101
      %v5109 = vadd.f32 %v4899, %v5101
      %v5110 = vadd.f32 %v4900, %v5101
      %v5111 = vadd.f32 %v4901, %v5101
      %v5112 = vadd.f32 %v4902, %v5101
      %v5113 = vadd.f32 %v4903, %v5101
      %v5114 = vadd.f32 %v4904, %v5101
      %v5115 = vadd.f32 %v4905, %v5101
      %v5116 = vadd.f32 %v4906, %v5101
      %v5117 = vadd.f32 %v4907, %v5101
      %v5118 = vadd.f32 %v4908, %v5101
      %v5119 = vadd.f32 %v4909, %v5101
      %v5120 = vadd.f32 %v4910, %v5101
      %v5121 = vadd.f32 %v4911, %v5101
      %v5122 = vadd.f32 %v4912, %v5101
      %v5123 = vadd.f32 %v4913, %v5101
      %v5124 = vadd.f32 %v4914, %v5101
      %v5125 = vadd.f32 %v4915, %v5101
      %v5126 = vadd.f32 %v4916, %v5101
      %v5127 = vadd.f32 %v4917, %v5101
      %v5128 = vadd.f32 %v4918, %v5101
      %v5129 = vadd.f32 %v4919, %v5101
      %v5130 = vadd.f32 %v4920, %v5101
      %v5131 = vadd.f32 %v4921, %v5101
      %v5132 = vadd.f32 %v4922, %v5101
      %v5133 = vadd.f32 %v4923, %v5101
      %v5134 = vadd.f32 %v4924, %v5101
      %v5135 = vpack.c.bf16 %v5103, %v5103
      %v5136 = vpack.c.bf16 %v5104, %v5104
      %v5137 = vpack.c.bf16 %v5105, %v5105
      %v5138 = vpack.c.bf16 %v5106, %v5106
      %v5139 = vpack.c.bf16 %v5107, %v5107
      %v5140 = vpack.c.bf16 %v5108, %v5108
      %v5141 = vpack.c.bf16 %v5109, %v5109
      %v5142 = vpack.c.bf16 %v5110, %v5110
      %v5143 = vpack.c.bf16 %v5111, %v5111
      %v5144 = vpack.c.bf16 %v5112, %v5112
      %v5145 = vpack.c.bf16 %v5113, %v5113
      %v5146 = vpack.c.bf16 %v5114, %v5114
      %v5147 = vpack.c.bf16 %v5115, %v5115
      %v5148 = vpack.c.bf16 %v5116, %v5116
      %v5149 = vpack.c.bf16 %v5117, %v5117
      %v5150 = vpack.c.bf16 %v5118, %v5118
      %v5151 = vpack.c.bf16 %v5119, %v5119
      %v5152 = vpack.c.bf16 %v5120, %v5120
      %v5153 = vpack.c.bf16 %v5121, %v5121
      %v5154 = vpack.c.bf16 %v5122, %v5122
      %v5155 = vpack.c.bf16 %v5123, %v5123
      %v5156 = vpack.c.bf16 %v5124, %v5124
      %v5157 = vpack.c.bf16 %v5125, %v5125
      %v5158 = vpack.c.bf16 %v5126, %v5126
      %v5159 = vpack.c.bf16 %v5127, %v5127
      %v5160 = vpack.c.bf16 %v5128, %v5128
      %v5161 = vpack.c.bf16 %v5129, %v5129
      %v5162 = vpack.c.bf16 %v5130, %v5130
      %v5163 = vpack.c.bf16 %v5131, %v5131
      %v5164 = vpack.c.bf16 %v5132, %v5132
      %v5165 = vpack.c.bf16 %v5133, %v5133
      %v5166 = vpack.c.bf16 %v5134, %v5134
      %vm5167 = vcmask 60416
      %5168 = vst.msk [vmem:[%s307] sm:$0xf] %vm5167, %v5135
      %5169 = vst.msk [vmem:[%s307 + $0x4] sm:$0xf] %vm5167, %v5136
      %5170 = vst.msk [vmem:[%s307 + $0x8] sm:$0xf] %vm5167, %v5137
      %5171 = vst.msk [vmem:[%s307 + $0xc] sm:$0xf] %vm5167, %v5138
      %5172 = vst.msk [vmem:[%s307 + $0x10] sm:$0xf] %vm5167, %v5139
      %5173 = vst.msk [vmem:[%s307 + $0x14] sm:$0xf] %vm5167, %v5140
      %5174 = vst.msk [vmem:[%s307 + $0x18] sm:$0xf] %vm5167, %v5141
      %5175 = vst.msk [vmem:[%s307 + $0x1c] sm:$0xf] %vm5167, %v5142
      %5176 = vst.msk [vmem:[%s307 + $0x20] sm:$0xf] %vm5167, %v5143
      %5177 = vst.msk [vmem:[%s307 + $0x24] sm:$0xf] %vm5167, %v5144
      %5178 = vst.msk [vmem:[%s307 + $0x28] sm:$0xf] %vm5167, %v5145
      %5179 = vst.msk [vmem:[%s307 + $0x2c] sm:$0xf] %vm5167, %v5146
      %5180 = vst.msk [vmem:[%s307 + $0x30] sm:$0xf] %vm5167, %v5147
      %5181 = vst.msk [vmem:[%s307 + $0x34] sm:$0xf] %vm5167, %v5148
      %5182 = vst.msk [vmem:[%s307 + $0x38] sm:$0xf] %vm5167, %v5149
      %5183 = vst.msk [vmem:[%s307 + $0x3c] sm:$0xf] %vm5167, %v5150
      %5184 = vst.msk [vmem:[%s307 + $0x40] sm:$0xf] %vm5167, %v5151
      %5185 = vst.msk [vmem:[%s307 + $0x44] sm:$0xf] %vm5167, %v5152
      %5186 = vst.msk [vmem:[%s307 + $0x48] sm:$0xf] %vm5167, %v5153
      %5187 = vst.msk [vmem:[%s307 + $0x4c] sm:$0xf] %vm5167, %v5154
      %5188 = vst.msk [vmem:[%s307 + $0x50] sm:$0xf] %vm5167, %v5155
      %5189 = vst.msk [vmem:[%s307 + $0x54] sm:$0xf] %vm5167, %v5156
      %5190 = vst.msk [vmem:[%s307 + $0x58] sm:$0xf] %vm5167, %v5157
      %5191 = vst.msk [vmem:[%s307 + $0x5c] sm:$0xf] %vm5167, %v5158
      %5192 = vst.msk [vmem:[%s307 + $0x60] sm:$0xf] %vm5167, %v5159
      %5193 = vst.msk [vmem:[%s307 + $0x64] sm:$0xf] %vm5167, %v5160
      %5194 = vst.msk [vmem:[%s307 + $0x68] sm:$0xf] %vm5167, %v5161
      %5195 = vst.msk [vmem:[%s307 + $0x6c] sm:$0xf] %vm5167, %v5162
      %5196 = vst.msk [vmem:[%s307 + $0x70] sm:$0xf] %vm5167, %v5163
      %5197 = vst.msk [vmem:[%s307 + $0x74] sm:$0xf] %vm5167, %v5164
      %5198 = vst.msk [vmem:[%s307 + $0x78] sm:$0xf] %vm5167, %v5165
      %5199 = vst.msk [vmem:[%s307 + $0x7c] sm:$0xf] %vm5167, %v5166
      %p5200 = scmp.lt.s32.totalorder %s21, 1
      %s5201 = scalar_select %p5200, %s21, 1
      %p5202 = scmp.lt.s32.totalorder %s22, 0
      %s5203 = scalar_select %p5202, %s22, 0
      %s5204 = smul.addr %s5201, 32
      %s5205 = sadd.s32 %s5203, %s5204
      %s5206 = smul.addr %s5205, 4
      %s5207 = scalar_lea.vmem %s4, %s5206
      %p5208 = scmp.lt.s32.totalorder %s21, 1
      %s5209 = scalar_select %p5208, %s21, 1
      %p5210 = scmp.lt.s32.totalorder %s22, 0
      %s5211 = scalar_select %p5210, %s22, 0
      %s5212 = sadd.s32 %s5211, %s5209
      %s5213 = smul.addr %s5212, 2
      %s5214 = scalar_lea.vmem %s5, %s5213
      // Predicated region
      $region41: #{up_forward.3} parent=35 // pred_check
        %p5215 = pneg %p153
      $region42: #{up_forward.3} parent=35 // pred_check_branch
        %5217 = sbr.rel (%p5215) target = $region44
      $region43: #{up_forward.3} parent=35 // pred_region
        _
      $region44: #{up_forward.3} parent=35 // pred_fallthru
        _
      // Predicated region
      $region45: #{up_forward.3} parent=35 // pred_check
        %p5218 = pneg %p181
      $region46: #{up_forward.3} parent=35 // pred_check_branch
        %5220 = sbr.rel (%p5218) target = $region48
      $region47: #{up_forward.3} parent=35 // pred_region
        _
      $region48: #{up_forward.3} parent=35 // pred_fallthru
        _
    $region36: #{up_forward.3} parent=5 // pred_fallthru
      _
    %p5221 = scmp.le.s32.totalorder 2, %s12
    // Predicated region
    $region49: #{up_forward.3} parent=5 // pred_check
      %p5222 = pneg %p5221
    $region50: #{up_forward.3} parent=5 // pred_check_branch
      %5224 = sbr.rel (%p5222) target = $region52
    $region51: #{up_forward.3} parent=5 // pred_region
      %s5225 = ssub.s32 %s12, 2
      // Predicated region
      $region53: #{up_forward.3} parent=51 // pred_check
        %p5226 = pneg %p159
      $region54: #{up_forward.3} parent=51 // pred_check_branch
        %5228 = sbr.rel (%p5226) target = $region56
      $region55: #{up_forward.3} parent=51 // pred_region
        %p5229 = scmp.lt.s32.totalorder %s23, 1
        %s5230 = scalar_select %p5229, %s23, 1
        %p5231 = scmp.lt.s32.totalorder %s24, 0
        %s5232 = scalar_select %p5231, %s24, 0
        %s5233 = smul.addr %s5230, 32
        %s5234 = sadd.s32 %s5232, %s5233
        %s5235 = smul.addr %s5234, 4
        %s5236 = scalar_lea.vmem %s4, %s5235
      $region56: #{up_forward.3} parent=51 // pred_fallthru
        _
      // Predicated region
      $region57: #{up_forward.3} parent=51 // pred_check
        %p5237 = pneg %p187
      $region58: #{up_forward.3} parent=51 // pred_check_branch
        %5239 = sbr.rel (%p5237) target = $region60
      $region59: #{up_forward.3} parent=51 // pred_region
        %p5240 = scmp.lt.s32.totalorder %s23, 1
        %s5241 = scalar_select %p5240, %s23, 1
        %p5242 = scmp.lt.s32.totalorder %s24, 0
        %s5243 = scalar_select %p5242, %s24, 0
        %s5244 = sadd.s32 %s5243, %s5241
        %s5245 = smul.addr %s5244, 2
        %s5246 = scalar_lea.vmem %s5, %s5245
      $region60: #{up_forward.3} parent=51 // pred_fallthru
        _
    $region52: #{up_forward.3} parent=5 // pred_fallthru
      _
  $region6: #{up_forward.3} parent=0 // loop_footer
    %s16 = sadd.s32 1, %s12
  $region7: #{up_forward.3} parent=0 // loop_footer_branch
    %11 = sbr.rel target = $region3
  $region8: #{up_forward.3} parent=0 // loop_exit
    _

</llo_original>
